<compile_context>
chip_gen: v5e
topology: v5e:2x2
jax: 0.10.0
libtpu: 0.0.40
codegen_flags: <defaults>
</compile_context>

<pallas_src>
import functools
import math

import jax
import jax.numpy as jnp
from jax.experimental import pallas as pl
from jax.experimental.pallas import tpu as pltpu

_VMEM_LIMIT = 48 * 1024 * 1024      # <= v7x 64 MiB physical
_ROW_PAD = 256                      # all row counts padded to a multiple of this
_LANE = 128


def _round_up(x, m):
    return ((x + m - 1) // m) * m


def _row_block(n_pad):
    """Row block (256 or 512) dividing n_pad; >=2 row blocks when n_pad allows
    (v7x has 2 TensorCores), never smaller than 256 (no tiny-tile cliff)."""
    if n_pad >= 1024 and n_pad % 512 == 0:
        return 512
    return min(256, n_pad)


def _k_block(n_pad):
    """Reduction block for the adj contraction: largest of 1024/512/256 dividing
    n_pad (n_pad is always a multiple of 256)."""
    for c in (1024, 512, 256):
        if c <= n_pad and n_pad % c == 0:
            return c
    return n_pad


def _pad_rows(x, n_pad):
    n = x.shape[0]
    if n == n_pad:
        return x
    return jnp.pad(x, ((0, n_pad - n),) + ((0, 0),) * (x.ndim - 1))


def _pad_cols(x, d_pad):
    d = x.shape[-1]
    if d == d_pad:
        return x
    return jnp.pad(x, ((0, 0),) * (x.ndim - 1) + ((0, d_pad - d),))


# --------------------------------------------------------------------------
# Row-tiled matmul (no bias):  o = x @ W          (x @ W1 of the GCN)
# --------------------------------------------------------------------------

def _matmul_kernel(x_ref, w_ref, o_ref):
    o_ref[...] = jnp.dot(x_ref[...], w_ref[...],
                         preferred_element_type=jnp.float32)


def matmul_rows(x, w):
    n, d_in = x.shape
    d_out = w.shape[1]
    bm = _row_block(n)
    cost = pl.CostEstimate(
        flops=2 * n * d_in * d_out, transcendentals=0,
        bytes_accessed=4 * (n * d_in + d_in * d_out + n * d_out))
    return pl.pallas_call(
        _matmul_kernel,
        grid=(n // bm,),
        in_specs=[pl.BlockSpec((bm, d_in), lambda i: (i, 0)),
                  pl.BlockSpec((d_in, d_out), lambda i: (0, 0))],
        out_specs=pl.BlockSpec((bm, d_out), lambda i: (i, 0)),
        out_shape=jax.ShapeDtypeStruct((n, d_out), jnp.float32),
        compiler_params=pltpu.CompilerParams(
            dimension_semantics=("parallel",),
            vmem_limit_bytes=_VMEM_LIMIT),
        cost_estimate=cost,
    )(x, w)


# --------------------------------------------------------------------------
# GCN aggregation: out_rows = f(adj_rows @ h).  adj streamed as (bm, bk) tiles
# with the k-reduction on the last ("arbitrary") grid axis and an f32 VMEM
# accumulator; h is pinned whole in VMEM (index_map -> (0,0)) and sliced with
# pl.ds, so adj owns the DMA slot.  Layer 1 fuses bias + relu + (h @ W2) into
# its finalize, so adj is streamed exactly twice per forward.
# --------------------------------------------------------------------------

def _gcn_layer1_kernel(bk, adj_ref, h_ref, b1_ref, w2_ref, o_ref, acc_ref):
    k = pl.program_id(1)

    @pl.when(k == 0)
    def _():
        acc_ref[...] = jnp.zeros_like(acc_ref)

    start = pl.multiple_of(k * bk, bk)
    h_strip = h_ref[pl.ds(start, bk), :]
    acc_ref[...] += jnp.dot(adj_ref[...], h_strip,
                            preferred_element_type=jnp.float32)

    @pl.when(k == pl.num_programs(1) - 1)
    def _():
        h_relu = jnp.maximum(acc_ref[...] + b1_ref[...], 0.0)   # F.relu
        # F.dropout in eval mode == identity
        o_ref[...] = jnp.dot(h_relu, w2_ref[...],
                             preferred_element_type=jnp.float32)


def _gcn_layer2_kernel(bk, adj_ref, h_ref, b2_ref, o_ref, acc_ref):
    k = pl.program_id(1)

    @pl.when(k == 0)
    def _():
        acc_ref[...] = jnp.zeros_like(acc_ref)

    start = pl.multiple_of(k * bk, bk)
    h_strip = h_ref[pl.ds(start, bk), :]
    acc_ref[...] += jnp.dot(adj_ref[...], h_strip,
                            preferred_element_type=jnp.float32)

    @pl.when(k == pl.num_programs(1) - 1)
    def _():
        o_ref[...] = acc_ref[...] + b2_ref[...]


def _gcn_agg(kernel_fn, adj, h, bias_row, extra_w, d_out, extra_flops=0):
    n = adj.shape[0]
    d_h = h.shape[1]
    bm = _row_block(n)
    bk = _k_block(n)
    grid = (n // bm, n // bk)

    in_specs = [
        pl.BlockSpec((bm, bk), lambda i, k: (i, k)),              # adj tile (streamed)
        pl.BlockSpec((n, d_h), lambda i, k: (0, 0)),              # h pinned whole in VMEM
        pl.BlockSpec((1, bias_row.shape[1]), lambda i, k: (0, 0)),
    ]
    args = [adj, h, bias_row]
    if extra_w is not None:
        in_specs.append(pl.BlockSpec(extra_w.shape, lambda i, k: (0, 0)))
        args.append(extra_w)

    cost = pl.CostEstimate(
        flops=2 * n * n * d_h + extra_flops,
        transcendentals=0,
        bytes_accessed=4 * (n * n + n * d_h + n * d_out))

    return pl.pallas_call(
        functools.partial(kernel_fn, bk),
        grid=grid,
        in_specs=in_specs,
        out_specs=pl.BlockSpec((bm, d_out), lambda i, k: (i, 0)),
        out_shape=jax.ShapeDtypeStruct((n, d_out), jnp.float32),
        scratch_shapes=[pltpu.VMEM((bm, d_h), jnp.float32)],
        compiler_params=pltpu.CompilerParams(
            dimension_semantics=("parallel", "arbitrary"),
            vmem_limit_bytes=_VMEM_LIMIT),
        cost_estimate=cost,
    )(*args)


def gcn(ent_x_pad, adj_pad, w1_pad, b1_row, w2_pad, b2_row):
    """2-layer Kipf GCN: gph = adj @ (relu(adj @ (x@W1) + b1) @ W2) + b2.
    Hidden dims are 128-padded (zero pads) so every stream is lane-dense."""
    n = adj_pad.shape[0]
    xw1 = matmul_rows(ent_x_pad, w1_pad)                          # (N_pad, 128)
    hw2 = _gcn_agg(_gcn_layer1_kernel, adj_pad, xw1, b1_row, w2_pad,
                   w2_pad.shape[1],
                   extra_flops=2 * n * w2_pad.shape[0] * w2_pad.shape[1])
    gph = _gcn_agg(_gcn_layer2_kernel, adj_pad, hw2, b2_row, None,
                   hw2.shape[1])
    return gph                                                     # (N_pad, 128)


# --------------------------------------------------------------------------
# Fused modality kernel: 6 linear projections + L2 normalize + softmax-weight
# scaling in a single row-tiled pass.  Writes exactly two lane-dense 384-wide
# (3 x 128) slabs via direct static-offset slab stores:
#   modal slab: [img | rel | att | name | char | ocr | 0-pad]   (260 -> 384)
#   joint slab: [w*img | w*att | w*rel | w*gph | w*name | w*char | w*ocr | 0-pad]
#               (292 -> 384), each piece L2-normalized then scaled.
# --------------------------------------------------------------------------

def _modal_fused_kernel(dims, d_gph, wn_ref,
                        img_x, rel_x, att_x, name_x, char_x, ocr_x, gph_x,
                        img_w, img_b, rel_w, rel_b, att_w, att_b,
                        name_w, name_b, char_w, char_b, ocr_w, ocr_b,
                        modal_o, joint_o):
    d_img, d_rel, d_att, d_name, d_char, d_ocr = dims

    def proj(x_ref, w_ref, b_ref):
        return jnp.dot(x_ref[...], w_ref[...],
                       preferred_element_type=jnp.float32) + b_ref[...]

    def l2n(e):
        # F.normalize(p=2, dim=1, eps=1e-12): x / max(||x||_2, 1e-12)
        ss = jnp.sum(e * e, axis=1, keepdims=True)
        return e * jax.lax.rsqrt(jnp.maximum(ss, 1e-24))

    img_e = proj(img_x, img_w, img_b)
    rel_e = proj(rel_x, rel_w, rel_b)
    att_e = proj(att_x, att_w, att_b)
    name_e = proj(name_x, name_w, name_b)
    char_e = proj(char_x, char_w, char_b)
    ocr_e = proj(ocr_x, ocr_w, ocr_b)
    gph_e = gph_x[:, :d_gph]                 # drop the GCN lane padding

    rows = modal_o.shape[0]

    # ---- raw per-modality slab ------------------------------------------
    d_modal = d_img + d_rel + d_att + d_name + d_char + d_ocr
    off = 0
    for e, d in ((img_e, d_img), (rel_e, d_rel), (att_e, d_att),
                 (name_e, d_name), (char_e, d_char), (ocr_e, d_ocr)):
        modal_o[:, off:off + d] = e
        off += d
    pad_m = modal_o.shape[1] - d_modal
    if pad_m:
        modal_o[:, d_modal:] = jnp.zeros((rows, pad_m), jnp.float32)

    # ---- weighted / normalized joint slab (fusion order) ----------------
    d_joint = d_img + d_att + d_rel + d_gph + d_name + d_char + d_ocr
    off = 0
    for idx, (e, d) in enumerate(((img_e, d_img), (att_e, d_att),
                                  (rel_e, d_rel), (gph_e, d_gph),
                                  (name_e, d_name), (char_e, d_char),
                                  (ocr_e, d_ocr))):
        joint_o[:, off:off + d] = l2n(e) * wn_ref[idx]
        off += d
    pad_j = joint_o.shape[1] - d_joint
    if pad_j:
        joint_o[:, d_joint:] = jnp.zeros((rows, pad_j), jnp.float32)


def fused_modalities(weight_norm,
                     img_x, rel_x, att_x, name_x, char_x, ocr_x, gph_pad,
                     img_w, img_b, rel_w, rel_b, att_w, att_b,
                     name_w, name_b, char_w, char_b, ocr_w, ocr_b,
                     d_gph):
    n = img_x.shape[0]
    bm = _row_block(n)

    dims = (img_w.shape[1], rel_w.shape[1], att_w.shape[1],
            name_w.shape[1], char_w.shape[1], ocr_w.shape[1])
    d_img, d_rel, d_att, d_name, d_char, d_ocr = dims
    d_modal = sum(dims)                                             # 260
    d_joint = d_img + d_att + d_rel + d_gph + d_name + d_char + d_ocr   # 292
    d_modal_pad = _round_up(d_modal, _LANE)                         # 384
    d_joint_pad = _round_up(d_joint, _LANE)                         # 384

    def row_spec(d):
        return pl.BlockSpec((bm, d), lambda i: (i, 0))

    def pinned(shape):
        return pl.BlockSpec(shape, lambda i: (0, 0))

    in_specs = [
        pl.BlockSpec(memory_space=pltpu.MemorySpace.SMEM),          # softmax weights (7,)
        row_spec(img_x.shape[1]), row_spec(rel_x.shape[1]),
        row_spec(att_x.shape[1]), row_spec(name_x.shape[1]),
        row_spec(char_x.shape[1]), row_spec(ocr_x.shape[1]),
        row_spec(gph_pad.shape[1]),
        pinned(img_w.shape), pinned((1, d_img)),
        pinned(rel_w.shape), pinned((1, d_rel)),
        pinned(att_w.shape), pinned((1, d_att)),
        pinned(name_w.shape), pinned((1, d_name)),
        pinned(char_w.shape), pinned((1, d_char)),
        pinned(ocr_w.shape), pinned((1, d_ocr)),
    ]
    out_specs = (row_spec(d_modal_pad), row_spec(d_joint_pad))
    out_shape = (jax.ShapeDtypeStruct((n, d_modal_pad), jnp.float32),
                 jax.ShapeDtypeStruct((n, d_joint_pad), jnp.float32))

    flops = 2 * n * (img_x.shape[1] * d_img + rel_x.shape[1] * d_rel
                     + att_x.shape[1] * d_att + name_x.shape[1] * d_name
                     + char_x.shape[1] * d_char + ocr_x.shape[1] * d_ocr)
    bytes_in = 4 * n * (img_x.shape[1] + rel_x.shape[1] + att_x.shape[1]
                        + name_x.shape[1] + char_x.shape[1] + ocr_x.shape[1]
                        + gph_pad.shape[1])
    bytes_w = 4 * (img_w.size + rel_w.size + att_w.size + name_w.size
                   + char_w.size + ocr_w.size)
    bytes_out = 4 * n * (d_modal_pad + d_joint_pad)
    cost = pl.CostEstimate(flops=flops, transcendentals=7 * n,
                           bytes_accessed=bytes_in + bytes_w + bytes_out)

    return pl.pallas_call(
        functools.partial(_modal_fused_kernel, dims, d_gph),
        grid=(n // bm,),
        in_specs=in_specs,
        out_specs=out_specs,
        out_shape=out_shape,
        compiler_params=pltpu.CompilerParams(
            dimension_semantics=("parallel",),
            vmem_limit_bytes=_VMEM_LIMIT),
        cost_estimate=cost,
    )(weight_norm,
      img_x, rel_x, att_x, name_x, char_x, ocr_x, gph_pad,
      img_w, img_b.reshape(1, -1), rel_w, rel_b.reshape(1, -1),
      att_w, att_b.reshape(1, -1), name_w, name_b.reshape(1, -1),
      char_w, char_b.reshape(1, -1), ocr_w, ocr_b.reshape(1, -1))


# --------------------------------------------------------------------------
# parameter setup (mirrors the PyTorch module's layers / initializers)
# --------------------------------------------------------------------------

def init_params(key, *, ent_num, input_dim, nhid, nout,
                img_feature_dim, img_dim, attr_dim, char_dim,
                char_feature_dim, ocr_feature_dim, modal_num):
    ks = jax.random.split(key, 16)

    def lin(k, d_in, d_out):
        kw, kb = jax.random.split(k)
        w = jax.random.normal(kw, (d_in, d_out), jnp.float32) * (1.0 / math.sqrt(d_in))
        b = jax.random.normal(kb, (d_out,), jnp.float32) * 0.01
        return w, b

    p = {}
    p["entity_emb"] = (jax.random.normal(ks[0], (ent_num, input_dim), jnp.float32)
                       * (1.0 / math.sqrt(ent_num)))
    p["gc1_w"], p["gc1_b"] = lin(ks[1], input_dim, nhid)
    p["gc2_w"], p["gc2_b"] = lin(ks[2], nhid, nout)
    p["rel_w"], p["rel_b"] = lin(ks[3], 1000, attr_dim)
    p["att_w"], p["att_b"] = lin(ks[4], 1000, attr_dim)
    p["img_w"], p["img_b"] = lin(ks[5], img_feature_dim, img_dim)
    p["name_w"], p["name_b"] = lin(ks[6], 300, char_dim)
    p["char_w"], p["char_b"] = lin(ks[7], char_feature_dim, char_dim)
    p["ocr_w"], p["ocr_b"] = lin(ks[8], ocr_feature_dim, 100)
    p["fusion_w"] = jnp.ones((modal_num, 1), jnp.float32)
    return p


# --------------------------------------------------------------------------
# forward pass (jitted; MultiModalFusion's "modal weight" print is host-side)
# --------------------------------------------------------------------------

@jax.jit
def ocr_multimodal_forward(params, input_idx, adj, img_features, rel_features,
                           att_features, name_features, char_features,
                           ocr_features):
    n = adj.shape[0]
    n_pad = _round_up(max(n, _ROW_PAD), _ROW_PAD)

    # Embedding lookup (XLA gather glue) + zero row/col padding to a multiple
    # of 256 so all Pallas blocks are >= (256, 128)-aligned.
    ent_x = _pad_rows(params["entity_emb"][input_idx], n_pad)
    adj_p = _pad_rows(_pad_cols(adj, n_pad), n_pad)
    img_x = _pad_rows(img_features, n_pad)
    rel_x = _pad_rows(rel_features, n_pad)
    att_x = _pad_rows(att_features, n_pad)
    name_x = _pad_rows(name_features, n_pad)
    char_x = _pad_rows(char_features, n_pad)
    ocr_x = _pad_rows(ocr_features, n_pad)

    # GCN hidden dims zero-padded to 128 lanes (exact result, lane-dense streams).
    nout = params["gc2_w"].shape[1]
    nhid_p = _round_up(params["gc1_w"].shape[1], _LANE)
    nout_p = _round_up(nout, _LANE)
    w1_p = _pad_cols(params["gc1_w"], nhid_p)
    b1_p = _pad_cols(params["gc1_b"].reshape(1, -1), nhid_p)
    w2_p = _pad_cols(_pad_rows(params["gc2_w"], nhid_p), nout_p)
    b2_p = _pad_cols(params["gc2_b"].reshape(1, -1), nout_p)

    gph_pad = gcn(ent_x, adj_p, w1_p, b1_p, w2_p, b2_p)       # (n_pad, nout_p)

    # MultiModalFusion softmax weights, order (img, att, rel, gph, name, char, ocr).
    weight_norm = jax.nn.softmax(params["fusion_w"], axis=0)[:, 0]   # (7,)

    modal_slab, joint_slab = fused_modalities(
        weight_norm,
        img_x, rel_x, att_x, name_x, char_x, ocr_x, gph_pad,
        params["img_w"], params["img_b"], params["rel_w"], params["rel_b"],
        params["att_w"], params["att_b"], params["name_w"], params["name_b"],
        params["char_w"], params["char_b"], params["ocr_w"], params["ocr_b"],
        d_gph=nout)

    d_img = params["img_w"].shape[1]
    d_rel = params["rel_w"].shape[1]
    d_att = params["att_w"].shape[1]
    d_name = params["name_w"].shape[1]
    d_char = params["char_w"].shape[1]
    d_ocr = params["ocr_w"].shape[1]
    d_joint = d_img + d_att + d_rel + nout + d_name + d_char + d_ocr

    o = 0
    img_emb = modal_slab[:n, o:o + d_img]; o += d_img
    rel_emb = modal_slab[:n, o:o + d_rel]; o += d_rel
    att_emb = modal_slab[:n, o:o + d_att]; o += d_att
    name_emb = modal_slab[:n, o:o + d_name]; o += d_name
    char_emb = modal_slab[:n, o:o + d_char]; o += d_char
    ocr_emb = modal_slab[:n, o:o + d_ocr]
    joint_emb = joint_slab[:n, :d_joint]
    gph_emb = gph_pad[:n, :nout]

    return (gph_emb, img_emb, rel_emb, att_emb, name_emb, char_emb,
            joint_emb, ocr_emb)


# --------------------------------------------------------------------------
# demo
# --------------------------------------------------------------------------

if __name__ == "__main__":
    ENT_NUM = 16
    N_UNITS = [32, 32, 32]          # args.hidden_units = "32,32,32"
    IMG_FEATURE_DIM, IMG_DIM = 64, 32
    ATTR_DIM = 32
    CHAR_DIM = 32
    CHAR_FEATURE_DIM = 64
    OCR_FEATURE_DIM = 64
    MODAL_NUM = 7                   # args.inner_view_num

    key = jax.random.PRNGKey(0)
    kp, k_adj, k_img, k_rel, k_att, k_name, k_char, k_ocr = jax.random.split(key, 8)

    params = init_params(
        kp, ent_num=ENT_NUM, input_dim=N_UNITS[0], nhid=N_UNITS[1], nout=N_UNITS[2],
        img_feature_dim=IMG_FEATURE_DIM, img_dim=IMG_DIM, attr_dim=ATTR_DIM,
        char_dim=CHAR_DIM, char_feature_dim=CHAR_FEATURE_DIM,
        ocr_feature_dim=OCR_FEATURE_DIM, modal_num=MODAL_NUM)

    input_idx = jnp.arange(ENT_NUM, dtype=jnp.int32)
    adj_raw = jax.random.uniform(k_adj, (ENT_NUM, ENT_NUM), jnp.float32)
    adj = adj_raw / jnp.sum(adj_raw, axis=1, keepdims=True)   # row-normalized adjacency
    img_features = jax.random.normal(k_img, (ENT_NUM, IMG_FEATURE_DIM), jnp.float32)
    rel_features = jax.random.normal(k_rel, (ENT_NUM, 1000), jnp.float32)
    att_features = jax.random.normal(k_att, (ENT_NUM, 1000), jnp.float32)
    name_features = jax.random.normal(k_name, (ENT_NUM, 300), jnp.float32)
    char_features = jax.random.normal(k_char, (ENT_NUM, CHAR_FEATURE_DIM), jnp.float32)
    ocr_features = jax.random.normal(k_ocr, (ENT_NUM, OCR_FEATURE_DIM), jnp.float32)

    # MultiModalFusion's host-side print, kept outside the jitted forward.
    print("modal weight:")
    print(jax.nn.softmax(params["fusion_w"], axis=0))

    outs = ocr_multimodal_forward(
        params, input_idx, adj, img_features, rel_features, att_features,
        name_features, char_features, ocr_features)
    outs = jax.block_until_ready(outs)

    (gph_emb, img_emb, rel_emb, att_emb, name_emb, char_emb,
     joint_emb, ocr_emb) = outs
    assert gph_emb.shape == (ENT_NUM, N_UNITS[2])
    assert img_emb.shape == (ENT_NUM, IMG_DIM)
    assert ocr_emb.shape == (ENT_NUM, 100)
    assert joint_emb.shape == (ENT_NUM, 6 * 32 + 100)
    assert all(bool(jnp.all(jnp.isfinite(o))) for o in outs)

    print("KERNEL_OK")
</pallas_src>

<mosaic_0001>
module attributes {stable_mosaic.version = 11 : i64} {
  func.func @_matmul_kernel(%arg0: i32, %arg1: memref<256x32xf32, #tpu.memory_space<vmem>>, %arg2: memref<32x128xf32, #tpu.memory_space<vmem>>, %arg3: memref<256x128xf32, #tpu.memory_space<vmem>>) attributes {dimension_semantics = [#tpu.dimension_semantics<parallel>], iteration_bounds = array<i64: 1>, scalar_prefetch = 0 : i64, scratch_operands = 0 : i64, tpu.core_type = #tpu.core_type<tc>, window_params = [{transform_indices = @transform_0, window_bounds = array<i64: 256, 32>}, {pipeline_mode = #tpu.pipeline_mode<synchronous>, transform_indices = @transform_1, window_bounds = array<i64: 32, 128>}, {transform_indices = @transform_2, window_bounds = array<i64: 256, 128>}]} {
    %c0 = arith.constant 0 : index
    %c0_0 = arith.constant 0 : index
    %0 = vector.load %arg1[%c0, %c0_0] : memref<256x32xf32, #tpu.memory_space<vmem>>, vector<256x32xf32>
    %c0_1 = arith.constant 0 : index
    %c0_2 = arith.constant 0 : index
    %1 = vector.load %arg2[%c0_1, %c0_2] : memref<32x128xf32, #tpu.memory_space<vmem>>, vector<32x128xf32>
    %cst = arith.constant dense<0.000000e+00> : vector<256x128xf32>
    %2 = tpu.matmul %0, %1, %cst {dimension_numbers = #tpu.dot_dimension_numbers<[1], [0], [0], [1], [0, 0, 1, 1], [], []>} : vector<256x32xf32>, vector<32x128xf32>, vector<256x128xf32> -> vector<256x128xf32>
    %c0_3 = arith.constant 0 : index
    %c0_4 = arith.constant 0 : index
    %3 = vector.load %arg3[%c0_3, %c0_4] : memref<256x128xf32, #tpu.memory_space<vmem>>, vector<256x128xf32>
    tpu.vector_store %arg3[%c0_3, %c0_4], %2 {strides = array<i32>} : memref<256x128xf32, #tpu.memory_space<vmem>>, vector<256x128xf32>,
    return
  }
  func.func @transform_0(%arg0: i32) -> (i32, i32) {
    %c0_i32 = arith.constant 0 : i32
    %c0_i32_0 = arith.constant 0 : i32
    return %arg0, %c0_i32 : i32, i32
  }
  func.func @transform_1(%arg0: i32) -> (i32, i32) {
    %c0_i32 = arith.constant 0 : i32
    %c0_i32_0 = arith.constant 0 : i32
    %c0_i32_1 = arith.constant 0 : i32
    return %c0_i32, %c0_i32_0 : i32, i32
  }
  func.func @transform_2(%arg0: i32) -> (i32, i32) {
    %c0_i32 = arith.constant 0 : i32
    %c0_i32_0 = arith.constant 0 : i32
    return %arg0, %c0_i32 : i32, i32
  }
}

module attributes {stable_mosaic.version = 11 : i64} {
  func.func @_gcn_layer1_kernel(%arg0: i32, %arg1: i32, %arg2: memref<256x256xf32, #tpu.memory_space<vmem>>, %arg3: memref<256x128xf32, #tpu.memory_space<vmem>>, %arg4: memref<1x128xf32, #tpu.memory_space<vmem>>, %arg5: memref<128x128xf32, #tpu.memory_space<vmem>>, %arg6: memref<256x128xf32, #tpu.memory_space<vmem>>, %arg7: memref<256x128xf32, #tpu.memory_space<vmem>>) attributes {dimension_semantics = [#tpu.dimension_semantics<parallel>, #tpu.dimension_semantics<arbitrary>], iteration_bounds = array<i64: 1, 1>, scalar_prefetch = 0 : i64, scratch_operands = 1 : i64, tpu.core_type = #tpu.core_type<tc>, window_params = [{transform_indices = @transform_0, window_bounds = array<i64: 256, 256>}, {pipeline_mode = #tpu.pipeline_mode<synchronous>, transform_indices = @transform_1, window_bounds = array<i64: 256, 128>}, {pipeline_mode = #tpu.pipeline_mode<synchronous>, transform_indices = @transform_2, window_bounds = array<i64: 1, 128>}, {pipeline_mode = #tpu.pipeline_mode<synchronous>, transform_indices = @transform_3, window_bounds = array<i64: 128, 128>}, {transform_indices = @transform_4, window_bounds = array<i64: 256, 128>}]} {
    %c0_i32 = arith.constant 0 : i32
    %0 = arith.cmpi eq, %arg1, %c0_i32 : i32
    %1 = arith.extui %0 : i1 to i32
    %c0_i32_0 = arith.constant 0 : i32
    %2 = arith.cmpi ne, %1, %c0_i32_0 : i32
    scf.if %2 {
      %cst_9 = arith.constant 0.000000e+00 : f32
      %15 = vector.broadcast %cst_9 : f32 to vector<256x128xf32>
      %c0_10 = arith.constant 0 : index
      %c0_11 = arith.constant 0 : index
      %16 = vector.load %arg7[%c0_10, %c0_11] : memref<256x128xf32, #tpu.memory_space<vmem>>, vector<256x128xf32>
      tpu.vector_store %arg7[%c0_10, %c0_11], %15 {strides = array<i32>} : memref<256x128xf32, #tpu.memory_space<vmem>>, vector<256x128xf32>,
    } else {
    }
    %c256_i32 = arith.constant 256 : i32
    %3 = arith.muli %arg1, %c256_i32 : i32
    %4 = tpu.assume_multiple %3, 256 : i32
    %5 = arith.index_cast %4 : i32 to index
    %c0 = arith.constant 0 : index
    %6 = vector.load %arg3[%5, %c0] : memref<256x128xf32, #tpu.memory_space<vmem>>, vector<256x128xf32>
    %c0_1 = arith.constant 0 : index
    %c0_2 = arith.constant 0 : index
    %7 = vector.load %arg7[%c0_1, %c0_2] : memref<256x128xf32, #tpu.memory_space<vmem>>, vector<256x128xf32>
    %c0_3 = arith.constant 0 : index
    %c0_4 = arith.constant 0 : index
    %8 = vector.load %arg2[%c0_3, %c0_4] : memref<256x256xf32, #tpu.memory_space<vmem>>, vector<256x256xf32>
    %cst = arith.constant dense<0.000000e+00> : vector<256x128xf32>
    %9 = tpu.matmul %8, %6, %cst {dimension_numbers = #tpu.dot_dimension_numbers<[1], [0], [0], [1], [0, 0, 1, 1], [], []>} : vector<256x256xf32>, vector<256x128xf32>, vector<256x128xf32> -> vector<256x128xf32>
    %10 = arith.addf %7, %9 : vector<256x128xf32>
    %c0_5 = arith.constant 0 : index
    %c0_6 = arith.constant 0 : index
    %11 = vector.load %arg7[%c0_5, %c0_6] : memref<256x128xf32, #tpu.memory_space<vmem>>, vector<256x128xf32>
    tpu.vector_store %arg7[%c0_5, %c0_6], %10 {strides = array<i32>} : memref<256x128xf32, #tpu.memory_space<vmem>>, vector<256x128xf32>,
    %c0_i32_7 = arith.constant 0 : i32
    %12 = arith.cmpi eq, %arg1, %c0_i32_7 : i32
    %13 = arith.extui %12 : i1 to i32
    %c0_i32_8 = arith.constant 0 : i32
    %14 = arith.cmpi ne, %13, %c0_i32_8 : i32
    scf.if %14 {
      %c0_9 = arith.constant 0 : index
      %c0_10 = arith.constant 0 : index
      %15 = vector.load %arg7[%c0_9, %c0_10] : memref<256x128xf32, #tpu.memory_space<vmem>>, vector<256x128xf32>
      %c0_11 = arith.constant 0 : index
      %c0_12 = arith.constant 0 : index
      %16 = vector.load %arg4[%c0_11, %c0_12] : memref<1x128xf32, #tpu.memory_space<vmem>>, vector<1x128xf32>
      %17 = vector.broadcast %16 : vector<1x128xf32> to vector<256x128xf32>
      %18 = arith.addf %15, %17 : vector<256x128xf32>
      %cst_13 = arith.constant 0.000000e+00 : f32
      %19 = vector.broadcast %cst_13 : f32 to vector<256x128xf32>
      %20 = arith.maximumf %18, %19 : vector<256x128xf32>
      %c0_14 = arith.constant 0 : index
      %c0_15 = arith.constant 0 : index
      %21 = vector.load %arg5[%c0_14, %c0_15] : memref<128x128xf32, #tpu.memory_space<vmem>>, vector<128x128xf32>
      %cst_16 = arith.constant dense<0.000000e+00> : vector<256x128xf32>
      %22 = tpu.matmul %20, %21, %cst_16 {dimension_numbers = #tpu.dot_dimension_numbers<[1], [0], [0], [1], [0, 0, 1, 1], [], []>} : vector<256x128xf32>, vector<128x128xf32>, vector<256x128xf32> -> vector<256x128xf32>
      %c0_17 = arith.constant 0 : index
      %c0_18 = arith.constant 0 : index
      %23 = vector.load %arg6[%c0_17, %c0_18] : memref<256x128xf32, #tpu.memory_space<vmem>>, vector<256x128xf32>
      tpu.vector_store %arg6[%c0_17, %c0_18], %22 {strides = array<i32>} : memref<256x128xf32, #tpu.memory_space<vmem>>, vector<256x128xf32>,
    } else {
    }
    return
  }
  func.func @transform_0(%arg0: i32, %arg1: i32) -> (i32, i32) {
    %c0_i32 = arith.constant 0 : i32
    return %arg0, %arg1 : i32, i32
  }
  func.func @transform_1(%arg0: i32, %arg1: i32) -> (i32, i32) {
    %c0_i32 = arith.constant 0 : i32
    %c0_i32_0 = arith.constant 0 : i32
    %c0_i32_1 = arith.constant 0 : i32
    return %c0_i32, %c0_i32_0 : i32, i32
  }
  func.func @transform_2(%arg0: i32, %arg1: i32) -> (i32, i32) {
    %c0_i32 = arith.constant 0 : i32
    %c0_i32_0 = arith.constant 0 : i32
    %c0_i32_1 = arith.constant 0 : i32
    return %c0_i32, %c0_i32_0 : i32, i32
  }
  func.func @transform_3(%arg0: i32, %arg1: i32) -> (i32, i32) {
    %c0_i32 = arith.constant 0 : i32
    %c0_i32_0 = arith.constant 0 : i32
    %c0_i32_1 = arith.constant 0 : i32
    return %c0_i32, %c0_i32_0 : i32, i32
  }
  func.func @transform_4(%arg0: i32, %arg1: i32) -> (i32, i32) {
    %c0_i32 = arith.constant 0 : i32
    %c0_i32_0 = arith.constant 0 : i32
    return %arg0, %c0_i32 : i32, i32
  }
}

module attributes {stable_mosaic.version = 11 : i64} {
  func.func @_gcn_layer2_kernel(%arg0: i32, %arg1: i32, %arg2: memref<256x256xf32, #tpu.memory_space<vmem>>, %arg3: memref<256x128xf32, #tpu.memory_space<vmem>>, %arg4: memref<1x128xf32, #tpu.memory_space<vmem>>, %arg5: memref<256x128xf32, #tpu.memory_space<vmem>>, %arg6: memref<256x128xf32, #tpu.memory_space<vmem>>) attributes {dimension_semantics = [#tpu.dimension_semantics<parallel>, #tpu.dimension_semantics<arbitrary>], iteration_bounds = array<i64: 1, 1>, scalar_prefetch = 0 : i64, scratch_operands = 1 : i64, tpu.core_type = #tpu.core_type<tc>, window_params = [{transform_indices = @transform_0, window_bounds = array<i64: 256, 256>}, {pipeline_mode = #tpu.pipeline_mode<synchronous>, transform_indices = @transform_1, window_bounds = array<i64: 256, 128>}, {pipeline_mode = #tpu.pipeline_mode<synchronous>, transform_indices = @transform_2, window_bounds = array<i64: 1, 128>}, {transform_indices = @transform_3, window_bounds = array<i64: 256, 128>}]} {
    %c0_i32 = arith.constant 0 : i32
    %0 = arith.cmpi eq, %arg1, %c0_i32 : i32
    %1 = arith.extui %0 : i1 to i32
    %c0_i32_0 = arith.constant 0 : i32
    %2 = arith.cmpi ne, %1, %c0_i32_0 : i32
    scf.if %2 {
      %cst_9 = arith.constant 0.000000e+00 : f32
      %15 = vector.broadcast %cst_9 : f32 to vector<256x128xf32>
      %c0_10 = arith.constant 0 : index
      %c0_11 = arith.constant 0 : index
      %16 = vector.load %arg6[%c0_10, %c0_11] : memref<256x128xf32, #tpu.memory_space<vmem>>, vector<256x128xf32>
      tpu.vector_store %arg6[%c0_10, %c0_11], %15 {strides = array<i32>} : memref<256x128xf32, #tpu.memory_space<vmem>>, vector<256x128xf32>,
    } else {
    }
    %c256_i32 = arith.constant 256 : i32
    %3 = arith.muli %arg1, %c256_i32 : i32
    %4 = tpu.assume_multiple %3, 256 : i32
    %5 = arith.index_cast %4 : i32 to index
    %c0 = arith.constant 0 : index
    %6 = vector.load %arg3[%5, %c0] : memref<256x128xf32, #tpu.memory_space<vmem>>, vector<256x128xf32>
    %c0_1 = arith.constant 0 : index
    %c0_2 = arith.constant 0 : index
    %7 = vector.load %arg6[%c0_1, %c0_2] : memref<256x128xf32, #tpu.memory_space<vmem>>, vector<256x128xf32>
    %c0_3 = arith.constant 0 : index
    %c0_4 = arith.constant 0 : index
    %8 = vector.load %arg2[%c0_3, %c0_4] : memref<256x256xf32, #tpu.memory_space<vmem>>, vector<256x256xf32>
    %cst = arith.constant dense<0.000000e+00> : vector<256x128xf32>
    %9 = tpu.matmul %8, %6, %cst {dimension_numbers = #tpu.dot_dimension_numbers<[1], [0], [0], [1], [0, 0, 1, 1], [], []>} : vector<256x256xf32>, vector<256x128xf32>, vector<256x128xf32> -> vector<256x128xf32>
    %10 = arith.addf %7, %9 : vector<256x128xf32>
    %c0_5 = arith.constant 0 : index
    %c0_6 = arith.constant 0 : index
    %11 = vector.load %arg6[%c0_5, %c0_6] : memref<256x128xf32, #tpu.memory_space<vmem>>, vector<256x128xf32>
    tpu.vector_store %arg6[%c0_5, %c0_6], %10 {strides = array<i32>} : memref<256x128xf32, #tpu.memory_space<vmem>>, vector<256x128xf32>,
    %c0_i32_7 = arith.constant 0 : i32
    %12 = arith.cmpi eq, %arg1, %c0_i32_7 : i32
    %13 = arith.extui %12 : i1 to i32
    %c0_i32_8 = arith.constant 0 : i32
    %14 = arith.cmpi ne, %13, %c0_i32_8 : i32
    scf.if %14 {
      %c0_9 = arith.constant 0 : index
      %c0_10 = arith.constant 0 : index
      %15 = vector.load %arg6[%c0_9, %c0_10] : memref<256x128xf32, #tpu.memory_space<vmem>>, vector<256x128xf32>
      %c0_11 = arith.constant 0 : index
      %c0_12 = arith.constant 0 : index
      %16 = vector.load %arg4[%c0_11, %c0_12] : memref<1x128xf32, #tpu.memory_space<vmem>>, vector<1x128xf32>
      %17 = vector.broadcast %16 : vector<1x128xf32> to vector<256x128xf32>
      %18 = arith.addf %15, %17 : vector<256x128xf32>
      %c0_13 = arith.constant 0 : index
      %c0_14 = arith.constant 0 : index
      %19 = vector.load %arg5[%c0_13, %c0_14] : memref<256x128xf32, #tpu.memory_space<vmem>>, vector<256x128xf32>
      tpu.vector_store %arg5[%c0_13, %c0_14], %18 {strides = array<i32>} : memref<256x128xf32, #tpu.memory_space<vmem>>, vector<256x128xf32>,
    } else {
    }
    return
  }
  func.func @transform_0(%arg0: i32, %arg1: i32) -> (i32, i32) {
    %c0_i32 = arith.constant 0 : i32
    return %arg0, %arg1 : i32, i32
  }
  func.func @transform_1(%arg0: i32, %arg1: i32) -> (i32, i32) {
    %c0_i32 = arith.constant 0 : i32
    %c0_i32_0 = arith.constant 0 : i32
    %c0_i32_1 = arith.constant 0 : i32
    return %c0_i32, %c0_i32_0 : i32, i32
  }
  func.func @transform_2(%arg0: i32, %arg1: i32) -> (i32, i32) {
    %c0_i32 = arith.constant 0 : i32
    %c0_i32_0 = arith.constant 0 : i32
    %c0_i32_1 = arith.constant 0 : i32
    return %c0_i32, %c0_i32_0 : i32, i32
  }
  func.func @transform_3(%arg0: i32, %arg1: i32) -> (i32, i32) {
    %c0_i32 = arith.constant 0 : i32
    %c0_i32_0 = arith.constant 0 : i32
    return %arg0, %c0_i32 : i32, i32
  }
}

module attributes {stable_mosaic.version = 11 : i64} {
  func.func @_modal_fused_kernel(%arg0: i32, %arg1: memref<7xf32, #tpu.memory_space<smem>>, %arg2: memref<256x64xf32, #tpu.memory_space<vmem>>, %arg3: memref<256x1000xf32, #tpu.memory_space<vmem>>, %arg4: memref<256x1000xf32, #tpu.memory_space<vmem>>, %arg5: memref<256x300xf32, #tpu.memory_space<vmem>>, %arg6: memref<256x64xf32, #tpu.memory_space<vmem>>, %arg7: memref<256x64xf32, #tpu.memory_space<vmem>>, %arg8: memref<256x128xf32, #tpu.memory_space<vmem>>, %arg9: memref<64x32xf32, #tpu.memory_space<vmem>>, %arg10: memref<1x32xf32, #tpu.memory_space<vmem>>, %arg11: memref<1000x32xf32, #tpu.memory_space<vmem>>, %arg12: memref<1x32xf32, #tpu.memory_space<vmem>>, %arg13: memref<1000x32xf32, #tpu.memory_space<vmem>>, %arg14: memref<1x32xf32, #tpu.memory_space<vmem>>, %arg15: memref<300x32xf32, #tpu.memory_space<vmem>>, %arg16: memref<1x32xf32, #tpu.memory_space<vmem>>, %arg17: memref<64x32xf32, #tpu.memory_space<vmem>>, %arg18: memref<1x32xf32, #tpu.memory_space<vmem>>, %arg19: memref<64x100xf32, #tpu.memory_space<vmem>>, %arg20: memref<1x100xf32, #tpu.memory_space<vmem>>, %arg21: memref<256x384xf32, #tpu.memory_space<vmem>>, %arg22: memref<256x384xf32, #tpu.memory_space<vmem>>) attributes {dimension_semantics = [#tpu.dimension_semantics<parallel>], iteration_bounds = array<i64: 1>, scalar_prefetch = 0 : i64, scratch_operands = 0 : i64, tpu.core_type = #tpu.core_type<tc>, window_params = [{transform_indices = @transform_0, window_bounds = array<i64: 7>}, {transform_indices = @transform_1, window_bounds = array<i64: 256, 64>}, {transform_indices = @transform_2, window_bounds = array<i64: 256, 1000>}, {transform_indices = @transform_3, window_bounds = array<i64: 256, 1000>}, {transform_indices = @transform_4, window_bounds = array<i64: 256, 300>}, {transform_indices = @transform_5, window_bounds = array<i64: 256, 64>}, {transform_indices = @transform_6, window_bounds = array<i64: 256, 64>}, {transform_indices = @transform_7, window_bounds = array<i64: 256, 128>}, {pipeline_mode = #tpu.pipeline_mode<synchronous>, transform_indices = @transform_8, window_bounds = array<i64: 64, 32>}, {pipeline_mode = #tpu.pipeline_mode<synchronous>, transform_indices = @transform_9, window_bounds = array<i64: 1, 32>}, {pipeline_mode = #tpu.pipeline_mode<synchronous>, transform_indices = @transform_10, window_bounds = array<i64: 1000, 32>}, {pipeline_mode = #tpu.pipeline_mode<synchronous>, transform_indices = @transform_11, window_bounds = array<i64: 1, 32>}, {pipeline_mode = #tpu.pipeline_mode<synchronous>, transform_indices = @transform_12, window_bounds = array<i64: 1000, 32>}, {pipeline_mode = #tpu.pipeline_mode<synchronous>, transform_indices = @transform_13, window_bounds = array<i64: 1, 32>}, {pipeline_mode = #tpu.pipeline_mode<synchronous>, transform_indices = @transform_14, window_bounds = array<i64: 300, 32>}, {pipeline_mode = #tpu.pipeline_mode<synchronous>, transform_indices = @transform_15, window_bounds = array<i64: 1, 32>}, {pipeline_mode = #tpu.pipeline_mode<synchronous>, transform_indices = @transform_16, window_bounds = array<i64: 64, 32>}, {pipeline_mode = #tpu.pipeline_mode<synchronous>, transform_indices = @transform_17, window_bounds = array<i64: 1, 32>}, {pipeline_mode = #tpu.pipeline_mode<synchronous>, transform_indices = @transform_18, window_bounds = array<i64: 64, 100>}, {pipeline_mode = #tpu.pipeline_mode<synchronous>, transform_indices = @transform_19, window_bounds = array<i64: 1, 100>}, {transform_indices = @transform_20, window_bounds = array<i64: 256, 384>}, {transform_indices = @transform_21, window_bounds = array<i64: 256, 384>}]} {
    %c0 = arith.constant 0 : index
    %c0_0 = arith.constant 0 : index
    %0 = vector.load %arg2[%c0, %c0_0] : memref<256x64xf32, #tpu.memory_space<vmem>>, vector<256x64xf32>
    %c0_1 = arith.constant 0 : index
    %c0_2 = arith.constant 0 : index
    %1 = vector.load %arg9[%c0_1, %c0_2] : memref<64x32xf32, #tpu.memory_space<vmem>>, vector<64x32xf32>
    %cst = arith.constant dense<0.000000e+00> : vector<256x32xf32>
    %2 = tpu.matmul %0, %1, %cst {dimension_numbers = #tpu.dot_dimension_numbers<[1], [0], [0], [1], [0, 0, 1, 1], [], []>} : vector<256x64xf32>, vector<64x32xf32>, vector<256x32xf32> -> vector<256x32xf32>
    %c0_3 = arith.constant 0 : index
    %c0_4 = arith.constant 0 : index
    %3 = vector.load %arg10[%c0_3, %c0_4] : memref<1x32xf32, #tpu.memory_space<vmem>>, vector<1x32xf32>
    %4 = vector.broadcast %3 : vector<1x32xf32> to vector<256x32xf32>
    %5 = arith.addf %2, %4 : vector<256x32xf32>
    %c0_5 = arith.constant 0 : index
    %c0_6 = arith.constant 0 : index
    %6 = vector.load %arg3[%c0_5, %c0_6] : memref<256x1000xf32, #tpu.memory_space<vmem>>, vector<256x1000xf32>
    %c0_7 = arith.constant 0 : index
    %c0_8 = arith.constant 0 : index
    %7 = vector.load %arg11[%c0_7, %c0_8] : memref<1000x32xf32, #tpu.memory_space<vmem>>, vector<1000x32xf32>
    %cst_9 = arith.constant dense<0.000000e+00> : vector<256x32xf32>
    %8 = tpu.matmul %6, %7, %cst_9 {dimension_numbers = #tpu.dot_dimension_numbers<[1], [0], [0], [1], [0, 0, 1, 1], [], []>} : vector<256x1000xf32>, vector<1000x32xf32>, vector<256x32xf32> -> vector<256x32xf32>
    %c0_10 = arith.constant 0 : index
    %c0_11 = arith.constant 0 : index
    %9 = vector.load %arg12[%c0_10, %c0_11] : memref<1x32xf32, #tpu.memory_space<vmem>>, vector<1x32xf32>
    %10 = vector.broadcast %9 : vector<1x32xf32> to vector<256x32xf32>
    %11 = arith.addf %8, %10 : vector<256x32xf32>
    %c0_12 = arith.constant 0 : index
    %c0_13 = arith.constant 0 : index
    %12 = vector.load %arg4[%c0_12, %c0_13] : memref<256x1000xf32, #tpu.memory_space<vmem>>, vector<256x1000xf32>
    %c0_14 = arith.constant 0 : index
    %c0_15 = arith.constant 0 : index
    %13 = vector.load %arg13[%c0_14, %c0_15] : memref<1000x32xf32, #tpu.memory_space<vmem>>, vector<1000x32xf32>
    %cst_16 = arith.constant dense<0.000000e+00> : vector<256x32xf32>
    %14 = tpu.matmul %12, %13, %cst_16 {dimension_numbers = #tpu.dot_dimension_numbers<[1], [0], [0], [1], [0, 0, 1, 1], [], []>} : vector<256x1000xf32>, vector<1000x32xf32>, vector<256x32xf32> -> vector<256x32xf32>
    %c0_17 = arith.constant 0 : index
    %c0_18 = arith.constant 0 : index
    %15 = vector.load %arg14[%c0_17, %c0_18] : memref<1x32xf32, #tpu.memory_space<vmem>>, vector<1x32xf32>
    %16 = vector.broadcast %15 : vector<1x32xf32> to vector<256x32xf32>
    %17 = arith.addf %14, %16 : vector<256x32xf32>
    %c0_19 = arith.constant 0 : index
    %c0_20 = arith.constant 0 : index
    %18 = vector.load %arg5[%c0_19, %c0_20] : memref<256x300xf32, #tpu.memory_space<vmem>>, vector<256x300xf32>
    %c0_21 = arith.constant 0 : index
    %c0_22 = arith.constant 0 : index
    %19 = vector.load %arg15[%c0_21, %c0_22] : memref<300x32xf32, #tpu.memory_space<vmem>>, vector<300x32xf32>
    %cst_23 = arith.constant dense<0.000000e+00> : vector<256x32xf32>
    %20 = tpu.matmul %18, %19, %cst_23 {dimension_numbers = #tpu.dot_dimension_numbers<[1], [0], [0], [1], [0, 0, 1, 1], [], []>} : vector<256x300xf32>, vector<300x32xf32>, vector<256x32xf32> -> vector<256x32xf32>
    %c0_24 = arith.constant 0 : index
    %c0_25 = arith.constant 0 : index
    %21 = vector.load %arg16[%c0_24, %c0_25] : memref<1x32xf32, #tpu.memory_space<vmem>>, vector<1x32xf32>
    %22 = vector.broadcast %21 : vector<1x32xf32> to vector<256x32xf32>
    %23 = arith.addf %20, %22 : vector<256x32xf32>
    %c0_26 = arith.constant 0 : index
    %c0_27 = arith.constant 0 : index
    %24 = vector.load %arg6[%c0_26, %c0_27] : memref<256x64xf32, #tpu.memory_space<vmem>>, vector<256x64xf32>
    %c0_28 = arith.constant 0 : index
    %c0_29 = arith.constant 0 : index
    %25 = vector.load %arg17[%c0_28, %c0_29] : memref<64x32xf32, #tpu.memory_space<vmem>>, vector<64x32xf32>
    %cst_30 = arith.constant dense<0.000000e+00> : vector<256x32xf32>
    %26 = tpu.matmul %24, %25, %cst_30 {dimension_numbers = #tpu.dot_dimension_numbers<[1], [0], [0], [1], [0, 0, 1, 1], [], []>} : vector<256x64xf32>, vector<64x32xf32>, vector<256x32xf32> -> vector<256x32xf32>
    %c0_31 = arith.constant 0 : index
    %c0_32 = arith.constant 0 : index
    %27 = vector.load %arg18[%c0_31, %c0_32] : memref<1x32xf32, #tpu.memory_space<vmem>>, vector<1x32xf32>
    %28 = vector.broadcast %27 : vector<1x32xf32> to vector<256x32xf32>
    %29 = arith.addf %26, %28 : vector<256x32xf32>
    %c0_33 = arith.constant 0 : index
    %c0_34 = arith.constant 0 : index
    %30 = vector.load %arg7[%c0_33, %c0_34] : memref<256x64xf32, #tpu.memory_space<vmem>>, vector<256x64xf32>
    %c0_35 = arith.constant 0 : index
    %c0_36 = arith.constant 0 : index
    %31 = vector.load %arg19[%c0_35, %c0_36] : memref<64x100xf32, #tpu.memory_space<vmem>>, vector<64x100xf32>
    %cst_37 = arith.constant dense<0.000000e+00> : vector<256x100xf32>
    %32 = tpu.matmul %30, %31, %cst_37 {dimension_numbers = #tpu.dot_dimension_numbers<[1], [0], [0], [1], [0, 0, 1, 1], [], []>} : vector<256x64xf32>, vector<64x100xf32>, vector<256x100xf32> -> vector<256x100xf32>
    %c0_38 = arith.constant 0 : index
    %c0_39 = arith.constant 0 : index
    %33 = vector.load %arg20[%c0_38, %c0_39] : memref<1x100xf32, #tpu.memory_space<vmem>>, vector<1x100xf32>
    %34 = vector.broadcast %33 : vector<1x100xf32> to vector<256x100xf32>
    %35 = arith.addf %32, %34 : vector<256x100xf32>
    %c0_40 = arith.constant 0 : index
    %c0_41 = arith.constant 0 : index
    %36 = vector.load %arg8[%c0_40, %c0_41] : memref<256x128xf32, #tpu.memory_space<vmem>>, vector<256x32xf32>
    %c0_42 = arith.constant 0 : index
    %c0_43 = arith.constant 0 : index
    %37 = vector.load %arg21[%c0_42, %c0_43] : memref<256x384xf32, #tpu.memory_space<vmem>>, vector<256x32xf32>
    tpu.vector_store %arg21[%c0_42, %c0_43], %5 {strides = array<i32>} : memref<256x384xf32, #tpu.memory_space<vmem>>, vector<256x32xf32>,
    %c0_44 = arith.constant 0 : index
    %c32 = arith.constant 32 : index
    %38 = vector.load %arg21[%c0_44, %c32] : memref<256x384xf32, #tpu.memory_space<vmem>>, vector<256x32xf32>
    tpu.vector_store %arg21[%c0_44, %c32], %11 {strides = array<i32>} : memref<256x384xf32, #tpu.memory_space<vmem>>, vector<256x32xf32>,
    %c0_45 = arith.constant 0 : index
    %c64 = arith.constant 64 : index
    %39 = vector.load %arg21[%c0_45, %c64] : memref<256x384xf32, #tpu.memory_space<vmem>>, vector<256x32xf32>
    tpu.vector_store %arg21[%c0_45, %c64], %17 {strides = array<i32>} : memref<256x384xf32, #tpu.memory_space<vmem>>, vector<256x32xf32>,
    %c0_46 = arith.constant 0 : index
    %c96 = arith.constant 96 : index
    %40 = vector.load %arg21[%c0_46, %c96] : memref<256x384xf32, #tpu.memory_space<vmem>>, vector<256x32xf32>
    tpu.vector_store %arg21[%c0_46, %c96], %23 {strides = array<i32>} : memref<256x384xf32, #tpu.memory_space<vmem>>, vector<256x32xf32>,
    %c0_47 = arith.constant 0 : index
    %c128 = arith.constant 128 : index
    %41 = vector.load %arg21[%c0_47, %c128] : memref<256x384xf32, #tpu.memory_space<vmem>>, vector<256x32xf32>
    tpu.vector_store %arg21[%c0_47, %c128], %29 {strides = array<i32>} : memref<256x384xf32, #tpu.memory_space<vmem>>, vector<256x32xf32>,
    %c0_48 = arith.constant 0 : index
    %c160 = arith.constant 160 : index
    %42 = vector.load %arg21[%c0_48, %c160] : memref<256x384xf32, #tpu.memory_space<vmem>>, vector<256x100xf32>
    tpu.vector_store %arg21[%c0_48, %c160], %35 {strides = array<i32>} : memref<256x384xf32, #tpu.memory_space<vmem>>, vector<256x100xf32>,
    %cst_49 = arith.constant 0.000000e+00 : f32
    %43 = vector.broadcast %cst_49 : f32 to vector<256x124xf32>
    %c0_50 = arith.constant 0 : index
    %c260 = arith.constant 260 : index
    %44 = vector.load %arg21[%c0_50, %c260] : memref<256x384xf32, #tpu.memory_space<vmem>>, vector<256x124xf32>
    tpu.vector_store %arg21[%c0_50, %c260], %43 {strides = array<i32>} : memref<256x384xf32, #tpu.memory_space<vmem>>, vector<256x124xf32>,
    %45 = arith.mulf %5, %5 : vector<256x32xf32>
    %cst_51 = arith.constant dense<0.000000e+00> : vector<256xf32>
    %46 = vector.multi_reduction <add>, %45, %cst_51 [1] : vector<256x32xf32> to vector<256xf32>
    %47 = vector.shape_cast %46 : vector<256xf32> to vector<256x1xf32>
    %cst_52 = arith.constant 1.000000e-24 : f32
    %48 = vector.broadcast %cst_52 : f32 to vector<256x1xf32>
    %49 = arith.maximumf %47, %48 : vector<256x1xf32>
    %50 = math.rsqrt %49 : vector<256x1xf32>
    %51 = vector.broadcast %50 : vector<256x1xf32> to vector<256x32xf32>
    %52 = arith.mulf %5, %51 : vector<256x32xf32>
    %c0_53 = arith.constant 0 : index
    %53 = memref.load %arg1[%c0_53] : memref<7xf32, #tpu.memory_space<smem>>
    %54 = vector.broadcast %53 : f32 to vector<256x32xf32>
    %55 = arith.mulf %52, %54 : vector<256x32xf32>
    %c0_54 = arith.constant 0 : index
    %c0_55 = arith.constant 0 : index
    %56 = vector.load %arg22[%c0_54, %c0_55] : memref<256x384xf32, #tpu.memory_space<vmem>>, vector<256x32xf32>
    tpu.vector_store %arg22[%c0_54, %c0_55], %55 {strides = array<i32>} : memref<256x384xf32, #tpu.memory_space<vmem>>, vector<256x32xf32>,
    %57 = arith.mulf %17, %17 : vector<256x32xf32>
    %cst_56 = arith.constant dense<0.000000e+00> : vector<256xf32>
    %58 = vector.multi_reduction <add>, %57, %cst_56 [1] : vector<256x32xf32> to vector<256xf32>
    %59 = vector.shape_cast %58 : vector<256xf32> to vector<256x1xf32>
    %cst_57 = arith.constant 1.000000e-24 : f32
    %60 = vector.broadcast %cst_57 : f32 to vector<256x1xf32>
    %61 = arith.maximumf %59, %60 : vector<256x1xf32>
    %62 = math.rsqrt %61 : vector<256x1xf32>
    %63 = vector.broadcast %62 : vector<256x1xf32> to vector<256x32xf32>
    %64 = arith.mulf %17, %63 : vector<256x32xf32>
    %c1 = arith.constant 1 : index
    %65 = memref.load %arg1[%c1] : memref<7xf32, #tpu.memory_space<smem>>
    %66 = vector.broadcast %65 : f32 to vector<256x32xf32>
    %67 = arith.mulf %64, %66 : vector<256x32xf32>
    %c0_58 = arith.constant 0 : index
    %c32_59 = arith.constant 32 : index
    %68 = vector.load %arg22[%c0_58, %c32_59] : memref<256x384xf32, #tpu.memory_space<vmem>>, vector<256x32xf32>
    tpu.vector_store %arg22[%c0_58, %c32_59], %67 {strides = array<i32>} : memref<256x384xf32, #tpu.memory_space<vmem>>, vector<256x32xf32>,
    %69 = arith.mulf %11, %11 : vector<256x32xf32>
    %cst_60 = arith.constant dense<0.000000e+00> : vector<256xf32>
    %70 = vector.multi_reduction <add>, %69, %cst_60 [1] : vector<256x32xf32> to vector<256xf32>
    %71 = vector.shape_cast %70 : vector<256xf32> to vector<256x1xf32>
    %cst_61 = arith.constant 1.000000e-24 : f32
    %72 = vector.broadcast %cst_61 : f32 to vector<256x1xf32>
    %73 = arith.maximumf %71, %72 : vector<256x1xf32>
    %74 = math.rsqrt %73 : vector<256x1xf32>
    %75 = vector.broadcast %74 : vector<256x1xf32> to vector<256x32xf32>
    %76 = arith.mulf %11, %75 : vector<256x32xf32>
    %c2 = arith.constant 2 : index
    %77 = memref.load %arg1[%c2] : memref<7xf32, #tpu.memory_space<smem>>
    %78 = vector.broadcast %77 : f32 to vector<256x32xf32>
    %79 = arith.mulf %76, %78 : vector<256x32xf32>
    %c0_62 = arith.constant 0 : index
    %c64_63 = arith.constant 64 : index
    %80 = vector.load %arg22[%c0_62, %c64_63] : memref<256x384xf32, #tpu.memory_space<vmem>>, vector<256x32xf32>
    tpu.vector_store %arg22[%c0_62, %c64_63], %79 {strides = array<i32>} : memref<256x384xf32, #tpu.memory_space<vmem>>, vector<256x32xf32>,
    %81 = arith.mulf %36, %36 : vector<256x32xf32>
    %cst_64 = arith.constant dense<0.000000e+00> : vector<256xf32>
    %82 = vector.multi_reduction <add>, %81, %cst_64 [1] : vector<256x32xf32> to vector<256xf32>
    %83 = vector.shape_cast %82 : vector<256xf32> to vector<256x1xf32>
    %cst_65 = arith.constant 1.000000e-24 : f32
    %84 = vector.broadcast %cst_65 : f32 to vector<256x1xf32>
    %85 = arith.maximumf %83, %84 : vector<256x1xf32>
    %86 = math.rsqrt %85 : vector<256x1xf32>
    %87 = vector.broadcast %86 : vector<256x1xf32> to vector<256x32xf32>
    %88 = arith.mulf %36, %87 : vector<256x32xf32>
    %c3 = arith.constant 3 : index
    %89 = memref.load %arg1[%c3] : memref<7xf32, #tpu.memory_space<smem>>
    %90 = vector.broadcast %89 : f32 to vector<256x32xf32>
    %91 = arith.mulf %88, %90 : vector<256x32xf32>
    %c0_66 = arith.constant 0 : index
    %c96_67 = arith.constant 96 : index
    %92 = vector.load %arg22[%c0_66, %c96_67] : memref<256x384xf32, #tpu.memory_space<vmem>>, vector<256x32xf32>
    tpu.vector_store %arg22[%c0_66, %c96_67], %91 {strides = array<i32>} : memref<256x384xf32, #tpu.memory_space<vmem>>, vector<256x32xf32>,
    %93 = arith.mulf %23, %23 : vector<256x32xf32>
    %cst_68 = arith.constant dense<0.000000e+00> : vector<256xf32>
    %94 = vector.multi_reduction <add>, %93, %cst_68 [1] : vector<256x32xf32> to vector<256xf32>
    %95 = vector.shape_cast %94 : vector<256xf32> to vector<256x1xf32>
    %cst_69 = arith.constant 1.000000e-24 : f32
    %96 = vector.broadcast %cst_69 : f32 to vector<256x1xf32>
    %97 = arith.maximumf %95, %96 : vector<256x1xf32>
    %98 = math.rsqrt %97 : vector<256x1xf32>
    %99 = vector.broadcast %98 : vector<256x1xf32> to vector<256x32xf32>
    %100 = arith.mulf %23, %99 : vector<256x32xf32>
    %c4 = arith.constant 4 : index
    %101 = memref.load %arg1[%c4] : memref<7xf32, #tpu.memory_space<smem>>
    %102 = vector.broadcast %101 : f32 to vector<256x32xf32>
    %103 = arith.mulf %100, %102 : vector<256x32xf32>
    %c0_70 = arith.constant 0 : index
    %c128_71 = arith.constant 128 : index
    %104 = vector.load %arg22[%c0_70, %c128_71] : memref<256x384xf32, #tpu.memory_space<vmem>>, vector<256x32xf32>
    tpu.vector_store %arg22[%c0_70, %c128_71], %103 {strides = array<i32>} : memref<256x384xf32, #tpu.memory_space<vmem>>, vector<256x32xf32>,
    %105 = arith.mulf %29, %29 : vector<256x32xf32>
    %cst_72 = arith.constant dense<0.000000e+00> : vector<256xf32>
    %106 = vector.multi_reduction <add>, %105, %cst_72 [1] : vector<256x32xf32> to vector<256xf32>
    %107 = vector.shape_cast %106 : vector<256xf32> to vector<256x1xf32>
    %cst_73 = arith.constant 1.000000e-24 : f32
    %108 = vector.broadcast %cst_73 : f32 to vector<256x1xf32>
    %109 = arith.maximumf %107, %108 : vector<256x1xf32>
    %110 = math.rsqrt %109 : vector<256x1xf32>
    %111 = vector.broadcast %110 : vector<256x1xf32> to vector<256x32xf32>
    %112 = arith.mulf %29, %111 : vector<256x32xf32>
    %c5 = arith.constant 5 : index
    %113 = memref.load %arg1[%c5] : memref<7xf32, #tpu.memory_space<smem>>
    %114 = vector.broadcast %113 : f32 to vector<256x32xf32>
    %115 = arith.mulf %112, %114 : vector<256x32xf32>
    %c0_74 = arith.constant 0 : index
    %c160_75 = arith.constant 160 : index
    %116 = vector.load %arg22[%c0_74, %c160_75] : memref<256x384xf32, #tpu.memory_space<vmem>>, vector<256x32xf32>
    tpu.vector_store %arg22[%c0_74, %c160_75], %115 {strides = array<i32>} : memref<256x384xf32, #tpu.memory_space<vmem>>, vector<256x32xf32>,
    %117 = arith.mulf %35, %35 : vector<256x100xf32>
    %cst_76 = arith.constant dense<0.000000e+00> : vector<256xf32>
    %118 = vector.multi_reduction <add>, %117, %cst_76 [1] : vector<256x100xf32> to vector<256xf32>
    %119 = vector.shape_cast %118 : vector<256xf32> to vector<256x1xf32>
    %cst_77 = arith.constant 1.000000e-24 : f32
    %120 = vector.broadcast %cst_77 : f32 to vector<256x1xf32>
    %121 = arith.maximumf %119, %120 : vector<256x1xf32>
    %122 = math.rsqrt %121 : vector<256x1xf32>
    %123 = vector.broadcast %122 : vector<256x1xf32> to vector<256x100xf32>
    %124 = arith.mulf %35, %123 : vector<256x100xf32>
    %c6 = arith.constant 6 : index
    %125 = memref.load %arg1[%c6] : memref<7xf32, #tpu.memory_space<smem>>
    %126 = vector.broadcast %125 : f32 to vector<256x100xf32>
    %127 = arith.mulf %124, %126 : vector<256x100xf32>
    %c0_78 = arith.constant 0 : index
    %c192 = arith.constant 192 : index
    %128 = vector.load %arg22[%c0_78, %c192] : memref<256x384xf32, #tpu.memory_space<vmem>>, vector<256x100xf32>
    tpu.vector_store %arg22[%c0_78, %c192], %127 {strides = array<i32>} : memref<256x384xf32, #tpu.memory_space<vmem>>, vector<256x100xf32>,
    %cst_79 = arith.constant 0.000000e+00 : f32
    %129 = vector.broadcast %cst_79 : f32 to vector<256x92xf32>
    %c0_80 = arith.constant 0 : index
    %c292 = arith.constant 292 : index
    %130 = vector.load %arg22[%c0_80, %c292] : memref<256x384xf32, #tpu.memory_space<vmem>>, vector<256x92xf32>
    tpu.vector_store %arg22[%c0_80, %c292], %129 {strides = array<i32>} : memref<256x384xf32, #tpu.memory_space<vmem>>, vector<256x92xf32>,
    return
  }
  func.func @transform_0(%arg0: i32) -> i32 {
    %c0_i32 = arith.constant 0 : i32
    %c0_i32_0 = arith.constant 0 : i32
    return %c0_i32 : i32
  }
  func.func @transform_1(%arg0: i32) -> (i32, i32) {
    %c0_i32 = arith.constant 0 : i32
    %c0_i32_0 = arith.constant 0 : i32
    return %arg0, %c0_i32 : i32, i32
  }
  func.func @transform_2(%arg0: i32) -> (i32, i32) {
    %c0_i32 = arith.constant 0 : i32
    %c0_i32_0 = arith.constant 0 : i32
    return %arg0, %c0_i32 : i32, i32
  }
  func.func @transform_3(%arg0: i32) -> (i32, i32) {
    %c0_i32 = arith.constant 0 : i32
    %c0_i32_0 = arith.constant 0 : i32
    return %arg0, %c0_i32 : i32, i32
  }
  func.func @transform_4(%arg0: i32) -> (i32, i32) {
    %c0_i32 = arith.constant 0 : i32
    %c0_i32_0 = arith.constant 0 : i32
    return %arg0, %c0_i32 : i32, i32
  }
  func.func @transform_5(%arg0: i32) -> (i32, i32) {
    %c0_i32 = arith.constant 0 : i32
    %c0_i32_0 = arith.constant 0 : i32
    return %arg0, %c0_i32 : i32, i32
  }
  func.func @transform_6(%arg0: i32) -> (i32, i32) {
    %c0_i32 = arith.constant 0 : i32
    %c0_i32_0 = arith.constant 0 : i32
    return %arg0, %c0_i32 : i32, i32
  }
  func.func @transform_7(%arg0: i32) -> (i32, i32) {
    %c0_i32 = arith.constant 0 : i32
    %c0_i32_0 = arith.constant 0 : i32
    return %arg0, %c0_i32 : i32, i32
  }
  func.func @transform_8(%arg0: i32) -> (i32, i32) {
    %c0_i32 = arith.constant 0 : i32
    %c0_i32_0 = arith.constant 0 : i32
    %c0_i32_1 = arith.constant 0 : i32
    return %c0_i32, %c0_i32_0 : i32, i32
  }
  func.func @transform_9(%arg0: i32) -> (i32, i32) {
    %c0_i32 = arith.constant 0 : i32
    %c0_i32_0 = arith.constant 0 : i32
    %c0_i32_1 = arith.constant 0 : i32
    return %c0_i32, %c0_i32_0 : i32, i32
  }
  func.func @transform_10(%arg0: i32) -> (i32, i32) {
    %c0_i32 = arith.constant 0 : i32
    %c0_i32_0 = arith.constant 0 : i32
    %c0_i32_1 = arith.constant 0 : i32
    return %c0_i32, %c0_i32_0 : i32, i32
  }
  func.func @transform_11(%arg0: i32) -> (i32, i32) {
    %c0_i32 = arith.constant 0 : i32
    %c0_i32_0 = arith.constant 0 : i32
    %c0_i32_1 = arith.constant 0 : i32
    return %c0_i32, %c0_i32_0 : i32, i32
  }
  func.func @transform_12(%arg0: i32) -> (i32, i32) {
    %c0_i32 = arith.constant 0 : i32
    %c0_i32_0 = arith.constant 0 : i32
    %c0_i32_1 = arith.constant 0 : i32
    return %c0_i32, %c0_i32_0 : i32, i32
  }
  func.func @transform_13(%arg0: i32) -> (i32, i32) {
    %c0_i32 = arith.constant 0 : i32
    %c0_i32_0 = arith.constant 0 : i32
    %c0_i32_1 = arith.constant 0 : i32
    return %c0_i32, %c0_i32_0 : i32, i32
  }
  func.func @transform_14(%arg0: i32) -> (i32, i32) {
    %c0_i32 = arith.constant 0 : i32
    %c0_i32_0 = arith.constant 0 : i32
    %c0_i32_1 = arith.constant 0 : i32
    return %c0_i32, %c0_i32_0 : i32, i32
  }
  func.func @transform_15(%arg0: i32) -> (i32, i32) {
    %c0_i32 = arith.constant 0 : i32
    %c0_i32_0 = arith.constant 0 : i32
    %c0_i32_1 = arith.constant 0 : i32
    return %c0_i32, %c0_i32_0 : i32, i32
  }
  func.func @transform_16(%arg0: i32) -> (i32, i32) {
    %c0_i32 = arith.constant 0 : i32
    %c0_i32_0 = arith.constant 0 : i32
    %c0_i32_1 = arith.constant 0 : i32
    return %c0_i32, %c0_i32_0 : i32, i32
  }
  func.func @transform_17(%arg0: i32) -> (i32, i32) {
    %c0_i32 = arith.constant 0 : i32
    %c0_i32_0 = arith.constant 0 : i32
    %c0_i32_1 = arith.constant 0 : i32
    return %c0_i32, %c0_i32_0 : i32, i32
  }
  func.func @transform_18(%arg0: i32) -> (i32, i32) {
    %c0_i32 = arith.constant 0 : i32
    %c0_i32_0 = arith.constant 0 : i32
    %c0_i32_1 = arith.constant 0 : i32
    return %c0_i32, %c0_i32_0 : i32, i32
  }
  func.func @transform_19(%arg0: i32) -> (i32, i32) {
    %c0_i32 = arith.constant 0 : i32
    %c0_i32_0 = arith.constant 0 : i32
    %c0_i32_1 = arith.constant 0 : i32
    return %c0_i32, %c0_i32_0 : i32, i32
  }
  func.func @transform_20(%arg0: i32) -> (i32, i32) {
    %c0_i32 = arith.constant 0 : i32
    %c0_i32_0 = arith.constant 0 : i32
    return %arg0, %c0_i32 : i32, i32
  }
  func.func @transform_21(%arg0: i32) -> (i32, i32) {
    %c0_i32 = arith.constant 0 : i32
    %c0_i32_0 = arith.constant 0 : i32
    return %arg0, %c0_i32 : i32, i32
  }
}

</mosaic_0001>

<llo_original>
// kernel: ocr_multimodal_forward.4
$region0: #{ocr_multimodal_forward.4}
  #allocation0 [shape = 'u32[]', space=smem, size = 0x4, offset = 0x4, fixed_abs, tag = 'smem constant byte address 0x4 - core index']
  #allocation1 [shape = 'u32[72,128]{1,0:T(1,128)}', space=vmem, size = 0x9000, scoped, tag = 'internal scratch']
  %s0 = inlined_call_operand.vmem [shape: f32[256,32], index: 0, kind: input, shape index: {}]
  %s1 = inlined_call_operand.vmem [shape: f32[32,128], index: 1, kind: input, shape index: {}]
  %s2 = inlined_call_operand.vmem [shape: f32[256,128], index: 2, kind: output, shape index: {}]
  %s3 = sld [smem:[#allocation0]]
  $region18: #{ocr_multimodal_forward.4} parent=0
    _
  %s5 = ssub.s32 1, %s3
  %s6 = scalar_select 0, %s5, %s3
  // Predicated region
  $region2: #{ocr_multimodal_forward.4} parent=0 // pred_check
    _
  $region3: #{ocr_multimodal_forward.4} parent=0 // pred_check_branch
    %8 = sbr.rel (0) target = $region5
  $region4: #{ocr_multimodal_forward.4} parent=0 // pred_region
    _
  $region5: #{ocr_multimodal_forward.4} parent=0 // pred_fallthru
    _
  // Predicated region
  $region6: #{ocr_multimodal_forward.4} parent=0 // pred_check
    _
  $region7: #{ocr_multimodal_forward.4} parent=0 // pred_check_branch
    %10 = sbr.rel (0) target = $region9
  $region8: #{ocr_multimodal_forward.4} parent=0 // pred_region
    _
  $region9: #{ocr_multimodal_forward.4} parent=0 // pred_fallthru
    _
  %v11 = vld [vmem:[%s0] sm:$0xff]
  %v12 = vld [vmem:[%s0 + $0x8] sm:$0xff]
  %v13 = vld [vmem:[%s0 + $0x10] sm:$0xff]
  %v14 = vld [vmem:[%s0 + $0x18] sm:$0xff]
  %v15 = vld [vmem:[%s0 + $0x20] sm:$0xff]
  %v16 = vld [vmem:[%s0 + $0x28] sm:$0xff]
  %v17 = vld [vmem:[%s0 + $0x30] sm:$0xff]
  %v18 = vld [vmem:[%s0 + $0x38] sm:$0xff]
  %v19 = vld [vmem:[%s0 + $0x40] sm:$0xff]
  %v20 = vld [vmem:[%s0 + $0x48] sm:$0xff]
  %v21 = vld [vmem:[%s0 + $0x50] sm:$0xff]
  %v22 = vld [vmem:[%s0 + $0x58] sm:$0xff]
  %v23 = vld [vmem:[%s0 + $0x60] sm:$0xff]
  %v24 = vld [vmem:[%s0 + $0x68] sm:$0xff]
  %v25 = vld [vmem:[%s0 + $0x70] sm:$0xff]
  %v26 = vld [vmem:[%s0 + $0x78] sm:$0xff]
  %v27 = vld [vmem:[%s0 + $0x80] sm:$0xff]
  %v28 = vld [vmem:[%s0 + $0x88] sm:$0xff]
  %v29 = vld [vmem:[%s0 + $0x90] sm:$0xff]
  %v30 = vld [vmem:[%s0 + $0x98] sm:$0xff]
  %v31 = vld [vmem:[%s0 + $0xa0] sm:$0xff]
  %v32 = vld [vmem:[%s0 + $0xa8] sm:$0xff]
  %v33 = vld [vmem:[%s0 + $0xb0] sm:$0xff]
  %v34 = vld [vmem:[%s0 + $0xb8] sm:$0xff]
  %v35 = vld [vmem:[%s0 + $0xc0] sm:$0xff]
  %v36 = vld [vmem:[%s0 + $0xc8] sm:$0xff]
  %v37 = vld [vmem:[%s0 + $0xd0] sm:$0xff]
  %v38 = vld [vmem:[%s0 + $0xd8] sm:$0xff]
  %v39 = vld [vmem:[%s0 + $0xe0] sm:$0xff]
  %v40 = vld [vmem:[%s0 + $0xe8] sm:$0xff]
  %v41 = vld [vmem:[%s0 + $0xf0] sm:$0xff]
  %v42 = vld [vmem:[%s0 + $0xf8] sm:$0xff]
  %v43 = vld [vmem:[%s1] sm:$0xff]
  %v44 = vld [vmem:[%s1 + $0x8] sm:$0xff]
  %v45 = vld [vmem:[%s1 + $0x10] sm:$0xff]
  %v46 = vld [vmem:[%s1 + $0x18] sm:$0xff]
  %vm47 = vcmask 261120
  %v49 = vsel %vm47, %v11, 0
  %v52 = vsel %vm47, %v12, 0
  %v55 = vsel %vm47, %v13, 0
  %v58 = vsel %vm47, %v14, 0
  %v61 = vsel %vm47, %v15, 0
  %v64 = vsel %vm47, %v16, 0
  %v67 = vsel %vm47, %v17, 0
  %v70 = vsel %vm47, %v18, 0
  %v73 = vsel %vm47, %v19, 0
  %v76 = vsel %vm47, %v20, 0
  %v79 = vsel %vm47, %v21, 0
  %v82 = vsel %vm47, %v22, 0
  %v85 = vsel %vm47, %v23, 0
  %v88 = vsel %vm47, %v24, 0
  %v91 = vsel %vm47, %v25, 0
  %v94 = vsel %vm47, %v26, 0
  %v97 = vsel %vm47, %v27, 0
  %v100 = vsel %vm47, %v28, 0
  %v103 = vsel %vm47, %v29, 0
  %v106 = vsel %vm47, %v30, 0
  %v109 = vsel %vm47, %v31, 0
  %v112 = vsel %vm47, %v32, 0
  %v115 = vsel %vm47, %v33, 0
  %v118 = vsel %vm47, %v34, 0
  %v121 = vsel %vm47, %v35, 0
  %v124 = vsel %vm47, %v36, 0
  %v127 = vsel %vm47, %v37, 0
  %v130 = vsel %vm47, %v38, 0
  %v133 = vsel %vm47, %v39, 0
  %v136 = vsel %vm47, %v40, 0
  %v139 = vsel %vm47, %v41, 0
  %v142 = vsel %vm47, %v42, 0
  %144 = vmatpush.msra.mxu0 0.0
  %145 = vmatpush.msra.mxu0 0.0
  %146 = vmatpush.msra.mxu0 0.0
  %147 = vmatpush.msra.mxu0 0.0
  %148 = vmatpush.msra.mxu0 0.0
  %149 = vmatpush.msra.mxu0 0.0
  %150 = vmatpush.msra.mxu0 0.0
  %151 = vmatpush.msra.mxu0 0.0
  %152 = vmatpush.msra.mxu0 0.0
  %153 = vmatpush.msra.mxu0 0.0
  %154 = vmatpush.msra.mxu0 0.0
  %155 = vmatpush.msra.mxu0 0.0
  %156 = vmatpush.msra.mxu0 %v46
  %157 = vmatpush.msra.mxu0 %v45
  %158 = vmatpush.msra.mxu0 %v44
  %159 = vmatpush.msra.mxu0 %v43
  %160 = vmatmul.f32.gmra.mxu0 %v49
  %v161 = vpop.f32.mrf.mxu0
  %v162 = vadd.f32 0.0, %v161
  %163 = vmatmul.f32.gmra.mxu0 %v52
  %v164 = vpop.f32.mrf.mxu0
  %v165 = vadd.f32 0.0, %v164
  %166 = vmatmul.f32.gmra.mxu0 %v55
  %v167 = vpop.f32.mrf.mxu0
  %v168 = vadd.f32 0.0, %v167
  %169 = vmatmul.f32.gmra.mxu0 %v58
  %v170 = vpop.f32.mrf.mxu0
  %v171 = vadd.f32 0.0, %v170
  %172 = vmatmul.f32.gmra.mxu0 %v61
  %v173 = vpop.f32.mrf.mxu0
  %v174 = vadd.f32 0.0, %v173
  %175 = vmatmul.f32.gmra.mxu0 %v64
  %v176 = vpop.f32.mrf.mxu0
  %v177 = vadd.f32 0.0, %v176
  %178 = vmatmul.f32.gmra.mxu0 %v67
  %v179 = vpop.f32.mrf.mxu0
  %v180 = vadd.f32 0.0, %v179
  %181 = vmatmul.f32.gmra.mxu0 %v70
  %v182 = vpop.f32.mrf.mxu0
  %v183 = vadd.f32 0.0, %v182
  %184 = vmatmul.f32.gmra.mxu0 %v73
  %v185 = vpop.f32.mrf.mxu0
  %v186 = vadd.f32 0.0, %v185
  %187 = vmatmul.f32.gmra.mxu0 %v76
  %v188 = vpop.f32.mrf.mxu0
  %v189 = vadd.f32 0.0, %v188
  %190 = vmatmul.f32.gmra.mxu0 %v79
  %v191 = vpop.f32.mrf.mxu0
  %v192 = vadd.f32 0.0, %v191
  %193 = vmatmul.f32.gmra.mxu0 %v82
  %v194 = vpop.f32.mrf.mxu0
  %v195 = vadd.f32 0.0, %v194
  %196 = vmatmul.f32.gmra.mxu0 %v85
  %v197 = vpop.f32.mrf.mxu0
  %v198 = vadd.f32 0.0, %v197
  %199 = vmatmul.f32.gmra.mxu0 %v88
  %v200 = vpop.f32.mrf.mxu0
  %v201 = vadd.f32 0.0, %v200
  %202 = vmatmul.f32.gmra.mxu0 %v91
  %v203 = vpop.f32.mrf.mxu0
  %v204 = vadd.f32 0.0, %v203
  %205 = vmatmul.f32.gmra.mxu0 %v94
  %v206 = vpop.f32.mrf.mxu0
  %v207 = vadd.f32 0.0, %v206
  %208 = vmatmul.f32.gmra.mxu0 %v97
  %v209 = vpop.f32.mrf.mxu0
  %v210 = vadd.f32 0.0, %v209
  %211 = vmatmul.f32.gmra.mxu0 %v100
  %v212 = vpop.f32.mrf.mxu0
  %v213 = vadd.f32 0.0, %v212
  %214 = vmatmul.f32.gmra.mxu0 %v103
  %v215 = vpop.f32.mrf.mxu0
  %v216 = vadd.f32 0.0, %v215
  %217 = vmatmul.f32.gmra.mxu0 %v106
  %v218 = vpop.f32.mrf.mxu0
  %v219 = vadd.f32 0.0, %v218
  %220 = vmatmul.f32.gmra.mxu0 %v109
  %v221 = vpop.f32.mrf.mxu0
  %v222 = vadd.f32 0.0, %v221
  %223 = vmatmul.f32.gmra.mxu0 %v112
  %v224 = vpop.f32.mrf.mxu0
  %v225 = vadd.f32 0.0, %v224
  %226 = vmatmul.f32.gmra.mxu0 %v115
  %v227 = vpop.f32.mrf.mxu0
  %v228 = vadd.f32 0.0, %v227
  %229 = vmatmul.f32.gmra.mxu0 %v118
  %v230 = vpop.f32.mrf.mxu0
  %v231 = vadd.f32 0.0, %v230
  %232 = vmatmul.f32.gmra.mxu0 %v121
  %v233 = vpop.f32.mrf.mxu0
  %v234 = vadd.f32 0.0, %v233
  %235 = vmatmul.f32.gmra.mxu0 %v124
  %v236 = vpop.f32.mrf.mxu0
  %v237 = vadd.f32 0.0, %v236
  %238 = vmatmul.f32.gmra.mxu0 %v127
  %v239 = vpop.f32.mrf.mxu0
  %v240 = vadd.f32 0.0, %v239
  %241 = vmatmul.f32.gmra.mxu0 %v130
  %v242 = vpop.f32.mrf.mxu0
  %v243 = vadd.f32 0.0, %v242
  %244 = vmatmul.f32.gmra.mxu0 %v133
  %v245 = vpop.f32.mrf.mxu0
  %v246 = vadd.f32 0.0, %v245
  %247 = vmatmul.f32.gmra.mxu0 %v136
  %v248 = vpop.f32.mrf.mxu0
  %v249 = vadd.f32 0.0, %v248
  %250 = vmatmul.f32.gmra.mxu0 %v139
  %v251 = vpop.f32.mrf.mxu0
  %v252 = vadd.f32 0.0, %v251
  %253 = vmatmul.f32.gmra.mxu0 %v142
  %v254 = vpop.f32.mrf.mxu0
  %v255 = vadd.f32 0.0, %v254
  %256 = vdwg.mxu0
  %257 = vst [vmem:[%s2] sm:$0xff] %v162
  %258 = vst [vmem:[%s2 + $0x8] sm:$0xff] %v165
  %259 = vst [vmem:[%s2 + $0x10] sm:$0xff] %v168
  %260 = vst [vmem:[%s2 + $0x18] sm:$0xff] %v171
  %261 = vst [vmem:[%s2 + $0x20] sm:$0xff] %v174
  %262 = vst [vmem:[%s2 + $0x28] sm:$0xff] %v177
  %263 = vst [vmem:[%s2 + $0x30] sm:$0xff] %v180
  %264 = vst [vmem:[%s2 + $0x38] sm:$0xff] %v183
  %265 = vst [vmem:[%s2 + $0x40] sm:$0xff] %v186
  %266 = vst [vmem:[%s2 + $0x48] sm:$0xff] %v189
  %267 = vst [vmem:[%s2 + $0x50] sm:$0xff] %v192
  %268 = vst [vmem:[%s2 + $0x58] sm:$0xff] %v195
  %269 = vst [vmem:[%s2 + $0x60] sm:$0xff] %v198
  %270 = vst [vmem:[%s2 + $0x68] sm:$0xff] %v201
  %271 = vst [vmem:[%s2 + $0x70] sm:$0xff] %v204
  %272 = vst [vmem:[%s2 + $0x78] sm:$0xff] %v207
  %273 = vst [vmem:[%s2 + $0x80] sm:$0xff] %v210
  %274 = vst [vmem:[%s2 + $0x88] sm:$0xff] %v213
  %275 = vst [vmem:[%s2 + $0x90] sm:$0xff] %v216
  %276 = vst [vmem:[%s2 + $0x98] sm:$0xff] %v219
  %277 = vst [vmem:[%s2 + $0xa0] sm:$0xff] %v222
  %278 = vst [vmem:[%s2 + $0xa8] sm:$0xff] %v225
  %279 = vst [vmem:[%s2 + $0xb0] sm:$0xff] %v228
  %280 = vst [vmem:[%s2 + $0xb8] sm:$0xff] %v231
  %281 = vst [vmem:[%s2 + $0xc0] sm:$0xff] %v234
  %282 = vst [vmem:[%s2 + $0xc8] sm:$0xff] %v237
  %283 = vst [vmem:[%s2 + $0xd0] sm:$0xff] %v240
  %284 = vst [vmem:[%s2 + $0xd8] sm:$0xff] %v243
  %285 = vst [vmem:[%s2 + $0xe0] sm:$0xff] %v246
  %286 = vst [vmem:[%s2 + $0xe8] sm:$0xff] %v249
  %287 = vst [vmem:[%s2 + $0xf0] sm:$0xff] %v252
  %288 = vst [vmem:[%s2 + $0xf8] sm:$0xff] %v255
  // Predicated region
  $region10: #{ocr_multimodal_forward.4} parent=0 // pred_check
    _
  $region11: #{ocr_multimodal_forward.4} parent=0 // pred_check_branch
    %290 = sbr.rel (0) target = $region13
  $region12: #{ocr_multimodal_forward.4} parent=0 // pred_region
    _
  $region13: #{ocr_multimodal_forward.4} parent=0 // pred_fallthru
    _
  // Predicated region
  $region14: #{ocr_multimodal_forward.4} parent=0 // pred_check
    _
  $region15: #{ocr_multimodal_forward.4} parent=0 // pred_check_branch
    %292 = sbr.rel (0) target = $region17
  $region16: #{ocr_multimodal_forward.4} parent=0 // pred_region
    _
  $region17: #{ocr_multimodal_forward.4} parent=0 // pred_fallthru
    _

// kernel: ocr_multimodal_forward.6
$region0: #{ocr_multimodal_forward.6}
  #allocation0 [shape = 'u32[]', space=smem, size = 0x4, offset = 0x4, fixed_abs, tag = 'smem constant byte address 0x4 - core index']
  #allocation1 [shape = 'u32[72,128]{1,0:T(1,128)}', space=vmem, size = 0x9000, scoped, tag = 'internal scratch']
  #allocation2 [shape = 'f32[256,128]{1,0:T(8,128)}', space=vmem, size = 0x20000, scoped, tag = 'scratch operand']
  %s0 = inlined_call_operand.vmem [shape: f32[256,256], index: 0, kind: input, shape index: {}]
  %s1 = inlined_call_operand.vmem [shape: f32[256,128], index: 1, kind: input, shape index: {}]
  %s2 = inlined_call_operand.vmem [shape: f32[1,128], index: 2, kind: input, shape index: {}]
  %s3 = inlined_call_operand.vmem [shape: f32[256,128], index: 3, kind: output, shape index: {}]
  %s4 = sld [smem:[#allocation0]]
  $region30: #{ocr_multimodal_forward.6} parent=0
    _
  %s6 = ssub.s32 1, %s4
  %s7 = scalar_select 0, %s6, %s4
  // Predicated region
  $region2: #{ocr_multimodal_forward.6} parent=0 // pred_check
    _
  $region3: #{ocr_multimodal_forward.6} parent=0 // pred_check_branch
    %9 = sbr.rel (0) target = $region5
  $region4: #{ocr_multimodal_forward.6} parent=0 // pred_region
    _
  $region5: #{ocr_multimodal_forward.6} parent=0 // pred_fallthru
    _
  // Predicated region
  $region6: #{ocr_multimodal_forward.6} parent=0 // pred_check
    _
  $region7: #{ocr_multimodal_forward.6} parent=0 // pred_check_branch
    %11 = sbr.rel (0) target = $region9
  $region8: #{ocr_multimodal_forward.6} parent=0 // pred_region
    _
  $region9: #{ocr_multimodal_forward.6} parent=0 // pred_fallthru
    _
  // Predicated region
  $region10: #{ocr_multimodal_forward.6} parent=0 // pred_check
    _
  $region11: #{ocr_multimodal_forward.6} parent=0 // pred_check_branch
    %13 = sbr.rel (0) target = $region13
  $region12: #{ocr_multimodal_forward.6} parent=0 // pred_region
    _
  $region13: #{ocr_multimodal_forward.6} parent=0 // pred_fallthru
    _
  %p14 = scmp.eq.s32.totalorder 0, 0
  // Predicated region
  $region14: #{ocr_multimodal_forward.6} parent=0 // pred_check
    %p15 = pneg %p14
  $region15: #{ocr_multimodal_forward.6} parent=0 // pred_check_branch
    %17 = sbr.rel (%p15) target = $region17
  $region16: #{ocr_multimodal_forward.6} parent=0 // pred_region
    %18 = vst [vmem:[#allocation2] sm:$0xff] 0.0
    %19 = vst [vmem:[#allocation2 + $0x8] sm:$0xff] 0.0
    %20 = vst [vmem:[#allocation2 + $0x10] sm:$0xff] 0.0
    %21 = vst [vmem:[#allocation2 + $0x18] sm:$0xff] 0.0
    %22 = vst [vmem:[#allocation2 + $0x20] sm:$0xff] 0.0
    %23 = vst [vmem:[#allocation2 + $0x28] sm:$0xff] 0.0
    %24 = vst [vmem:[#allocation2 + $0x30] sm:$0xff] 0.0
    %25 = vst [vmem:[#allocation2 + $0x38] sm:$0xff] 0.0
    %26 = vst [vmem:[#allocation2 + $0x40] sm:$0xff] 0.0
    %27 = vst [vmem:[#allocation2 + $0x48] sm:$0xff] 0.0
    %28 = vst [vmem:[#allocation2 + $0x50] sm:$0xff] 0.0
    %29 = vst [vmem:[#allocation2 + $0x58] sm:$0xff] 0.0
    %30 = vst [vmem:[#allocation2 + $0x60] sm:$0xff] 0.0
    %31 = vst [vmem:[#allocation2 + $0x68] sm:$0xff] 0.0
    %32 = vst [vmem:[#allocation2 + $0x70] sm:$0xff] 0.0
    %33 = vst [vmem:[#allocation2 + $0x78] sm:$0xff] 0.0
    %34 = vst [vmem:[#allocation2 + $0x80] sm:$0xff] 0.0
    %35 = vst [vmem:[#allocation2 + $0x88] sm:$0xff] 0.0
    %36 = vst [vmem:[#allocation2 + $0x90] sm:$0xff] 0.0
    %37 = vst [vmem:[#allocation2 + $0x98] sm:$0xff] 0.0
    %38 = vst [vmem:[#allocation2 + $0xa0] sm:$0xff] 0.0
    %39 = vst [vmem:[#allocation2 + $0xa8] sm:$0xff] 0.0
    %40 = vst [vmem:[#allocation2 + $0xb0] sm:$0xff] 0.0
    %41 = vst [vmem:[#allocation2 + $0xb8] sm:$0xff] 0.0
    %42 = vst [vmem:[#allocation2 + $0xc0] sm:$0xff] 0.0
    %43 = vst [vmem:[#allocation2 + $0xc8] sm:$0xff] 0.0
    %44 = vst [vmem:[#allocation2 + $0xd0] sm:$0xff] 0.0
    %45 = vst [vmem:[#allocation2 + $0xd8] sm:$0xff] 0.0
    %46 = vst [vmem:[#allocation2 + $0xe0] sm:$0xff] 0.0
    %47 = vst [vmem:[#allocation2 + $0xe8] sm:$0xff] 0.0
    %48 = vst [vmem:[#allocation2 + $0xf0] sm:$0xff] 0.0
    %49 = vst [vmem:[#allocation2 + $0xf8] sm:$0xff] 0.0
  $region17: #{ocr_multimodal_forward.6} parent=0 // pred_fallthru
    _
  %s50 = smul.u32 0, 256
  %s51 = scalar_lea.vmem %s1, %s50
  %v52 = vld [vmem:[%s51] sm:$0xff]
  %v53 = vld [vmem:[%s51 + $0x8] sm:$0xff]
  %v54 = vld [vmem:[%s51 + $0x10] sm:$0xff]
  %v55 = vld [vmem:[%s51 + $0x18] sm:$0xff]
  %v56 = vld [vmem:[%s51 + $0x20] sm:$0xff]
  %v57 = vld [vmem:[%s51 + $0x28] sm:$0xff]
  %v58 = vld [vmem:[%s51 + $0x30] sm:$0xff]
  %v59 = vld [vmem:[%s51 + $0x38] sm:$0xff]
  %v60 = vld [vmem:[%s51 + $0x40] sm:$0xff]
  %v61 = vld [vmem:[%s51 + $0x48] sm:$0xff]
  %v62 = vld [vmem:[%s51 + $0x50] sm:$0xff]
  %v63 = vld [vmem:[%s51 + $0x58] sm:$0xff]
  %v64 = vld [vmem:[%s51 + $0x60] sm:$0xff]
  %v65 = vld [vmem:[%s51 + $0x68] sm:$0xff]
  %v66 = vld [vmem:[%s51 + $0x70] sm:$0xff]
  %v67 = vld [vmem:[%s51 + $0x78] sm:$0xff]
  %v68 = vld [vmem:[%s51 + $0x80] sm:$0xff]
  %v69 = vld [vmem:[%s51 + $0x88] sm:$0xff]
  %v70 = vld [vmem:[%s51 + $0x90] sm:$0xff]
  %v71 = vld [vmem:[%s51 + $0x98] sm:$0xff]
  %v72 = vld [vmem:[%s51 + $0xa0] sm:$0xff]
  %v73 = vld [vmem:[%s51 + $0xa8] sm:$0xff]
  %v74 = vld [vmem:[%s51 + $0xb0] sm:$0xff]
  %v75 = vld [vmem:[%s51 + $0xb8] sm:$0xff]
  %v76 = vld [vmem:[%s51 + $0xc0] sm:$0xff]
  %v77 = vld [vmem:[%s51 + $0xc8] sm:$0xff]
  %v78 = vld [vmem:[%s51 + $0xd0] sm:$0xff]
  %v79 = vld [vmem:[%s51 + $0xd8] sm:$0xff]
  %v80 = vld [vmem:[%s51 + $0xe0] sm:$0xff]
  %v81 = vld [vmem:[%s51 + $0xe8] sm:$0xff]
  %v82 = vld [vmem:[%s51 + $0xf0] sm:$0xff]
  %v83 = vld [vmem:[%s51 + $0xf8] sm:$0xff]
  %v84 = vld [vmem:[#allocation2] sm:$0xff]
  %v85 = vld [vmem:[#allocation2 + $0x8] sm:$0xff]
  %v86 = vld [vmem:[#allocation2 + $0x10] sm:$0xff]
  %v87 = vld [vmem:[#allocation2 + $0x18] sm:$0xff]
  %v88 = vld [vmem:[#allocation2 + $0x20] sm:$0xff]
  %v89 = vld [vmem:[#allocation2 + $0x28] sm:$0xff]
  %v90 = vld [vmem:[#allocation2 + $0x30] sm:$0xff]
  %v91 = vld [vmem:[#allocation2 + $0x38] sm:$0xff]
  %v92 = vld [vmem:[#allocation2 + $0x40] sm:$0xff]
  %v93 = vld [vmem:[#allocation2 + $0x48] sm:$0xff]
  %v94 = vld [vmem:[#allocation2 + $0x50] sm:$0xff]
  %v95 = vld [vmem:[#allocation2 + $0x58] sm:$0xff]
  %v96 = vld [vmem:[#allocation2 + $0x60] sm:$0xff]
  %v97 = vld [vmem:[#allocation2 + $0x68] sm:$0xff]
  %v98 = vld [vmem:[#allocation2 + $0x70] sm:$0xff]
  %v99 = vld [vmem:[#allocation2 + $0x78] sm:$0xff]
  %v100 = vld [vmem:[#allocation2 + $0x80] sm:$0xff]
  %v101 = vld [vmem:[#allocation2 + $0x88] sm:$0xff]
  %v102 = vld [vmem:[#allocation2 + $0x90] sm:$0xff]
  %v103 = vld [vmem:[#allocation2 + $0x98] sm:$0xff]
  %v104 = vld [vmem:[#allocation2 + $0xa0] sm:$0xff]
  %v105 = vld [vmem:[#allocation2 + $0xa8] sm:$0xff]
  %v106 = vld [vmem:[#allocation2 + $0xb0] sm:$0xff]
  %v107 = vld [vmem:[#allocation2 + $0xb8] sm:$0xff]
  %v108 = vld [vmem:[#allocation2 + $0xc0] sm:$0xff]
  %v109 = vld [vmem:[#allocation2 + $0xc8] sm:$0xff]
  %v110 = vld [vmem:[#allocation2 + $0xd0] sm:$0xff]
  %v111 = vld [vmem:[#allocation2 + $0xd8] sm:$0xff]
  %v112 = vld [vmem:[#allocation2 + $0xe0] sm:$0xff]
  %v113 = vld [vmem:[#allocation2 + $0xe8] sm:$0xff]
  %v114 = vld [vmem:[#allocation2 + $0xf0] sm:$0xff]
  %v115 = vld [vmem:[#allocation2 + $0xf8] sm:$0xff]
  %v116 = vld [vmem:[%s0] sm:$0xff]
  %v117 = vld [vmem:[%s0 + $0x8] sm:$0xff]
  %v118 = vld [vmem:[%s0 + $0x10] sm:$0xff]
  %v119 = vld [vmem:[%s0 + $0x18] sm:$0xff]
  %v120 = vld [vmem:[%s0 + $0x20] sm:$0xff]
  %v121 = vld [vmem:[%s0 + $0x28] sm:$0xff]
  %v122 = vld [vmem:[%s0 + $0x30] sm:$0xff]
  %v123 = vld [vmem:[%s0 + $0x38] sm:$0xff]
  %v124 = vld [vmem:[%s0 + $0x40] sm:$0xff]
  %v125 = vld [vmem:[%s0 + $0x48] sm:$0xff]
  %v126 = vld [vmem:[%s0 + $0x50] sm:$0xff]
  %v127 = vld [vmem:[%s0 + $0x58] sm:$0xff]
  %v128 = vld [vmem:[%s0 + $0x60] sm:$0xff]
  %v129 = vld [vmem:[%s0 + $0x68] sm:$0xff]
  %v130 = vld [vmem:[%s0 + $0x70] sm:$0xff]
  %v131 = vld [vmem:[%s0 + $0x78] sm:$0xff]
  %v132 = vld [vmem:[%s0 + $0x80] sm:$0xff]
  %v133 = vld [vmem:[%s0 + $0x88] sm:$0xff]
  %v134 = vld [vmem:[%s0 + $0x90] sm:$0xff]
  %v135 = vld [vmem:[%s0 + $0x98] sm:$0xff]
  %v136 = vld [vmem:[%s0 + $0xa0] sm:$0xff]
  %v137 = vld [vmem:[%s0 + $0xa8] sm:$0xff]
  %v138 = vld [vmem:[%s0 + $0xb0] sm:$0xff]
  %v139 = vld [vmem:[%s0 + $0xb8] sm:$0xff]
  %v140 = vld [vmem:[%s0 + $0xc0] sm:$0xff]
  %v141 = vld [vmem:[%s0 + $0xc8] sm:$0xff]
  %v142 = vld [vmem:[%s0 + $0xd0] sm:$0xff]
  %v143 = vld [vmem:[%s0 + $0xd8] sm:$0xff]
  %v144 = vld [vmem:[%s0 + $0xe0] sm:$0xff]
  %v145 = vld [vmem:[%s0 + $0xe8] sm:$0xff]
  %v146 = vld [vmem:[%s0 + $0xf0] sm:$0xff]
  %v147 = vld [vmem:[%s0 + $0xf8] sm:$0xff]
  %v148 = vld [vmem:[%s0 + $0x100] sm:$0xff]
  %v149 = vld [vmem:[%s0 + $0x108] sm:$0xff]
  %v150 = vld [vmem:[%s0 + $0x110] sm:$0xff]
  %v151 = vld [vmem:[%s0 + $0x118] sm:$0xff]
  %v152 = vld [vmem:[%s0 + $0x120] sm:$0xff]
  %v153 = vld [vmem:[%s0 + $0x128] sm:$0xff]
  %v154 = vld [vmem:[%s0 + $0x130] sm:$0xff]
  %v155 = vld [vmem:[%s0 + $0x138] sm:$0xff]
  %v156 = vld [vmem:[%s0 + $0x140] sm:$0xff]
  %v157 = vld [vmem:[%s0 + $0x148] sm:$0xff]
  %v158 = vld [vmem:[%s0 + $0x150] sm:$0xff]
  %v159 = vld [vmem:[%s0 + $0x158] sm:$0xff]
  %v160 = vld [vmem:[%s0 + $0x160] sm:$0xff]
  %v161 = vld [vmem:[%s0 + $0x168] sm:$0xff]
  %v162 = vld [vmem:[%s0 + $0x170] sm:$0xff]
  %v163 = vld [vmem:[%s0 + $0x178] sm:$0xff]
  %v164 = vld [vmem:[%s0 + $0x180] sm:$0xff]
  %v165 = vld [vmem:[%s0 + $0x188] sm:$0xff]
  %v166 = vld [vmem:[%s0 + $0x190] sm:$0xff]
  %v167 = vld [vmem:[%s0 + $0x198] sm:$0xff]
  %v168 = vld [vmem:[%s0 + $0x1a0] sm:$0xff]
  %v169 = vld [vmem:[%s0 + $0x1a8] sm:$0xff]
  %v170 = vld [vmem:[%s0 + $0x1b0] sm:$0xff]
  %v171 = vld [vmem:[%s0 + $0x1b8] sm:$0xff]
  %v172 = vld [vmem:[%s0 + $0x1c0] sm:$0xff]
  %v173 = vld [vmem:[%s0 + $0x1c8] sm:$0xff]
  %v174 = vld [vmem:[%s0 + $0x1d0] sm:$0xff]
  %v175 = vld [vmem:[%s0 + $0x1d8] sm:$0xff]
  %v176 = vld [vmem:[%s0 + $0x1e0] sm:$0xff]
  %v177 = vld [vmem:[%s0 + $0x1e8] sm:$0xff]
  %v178 = vld [vmem:[%s0 + $0x1f0] sm:$0xff]
  %v179 = vld [vmem:[%s0 + $0x1f8] sm:$0xff]
  %180 = vmatpush.msra.mxu0 %v67
  %181 = vmatpush.msra.mxu0 %v66
  %182 = vmatpush.msra.mxu0 %v65
  %183 = vmatpush.msra.mxu0 %v64
  %184 = vmatpush.msra.mxu0 %v63
  %185 = vmatpush.msra.mxu0 %v62
  %186 = vmatpush.msra.mxu0 %v61
  %187 = vmatpush.msra.mxu0 %v60
  %188 = vmatpush.msra.mxu0 %v59
  %189 = vmatpush.msra.mxu0 %v58
  %190 = vmatpush.msra.mxu0 %v57
  %191 = vmatpush.msra.mxu0 %v56
  %192 = vmatpush.msra.mxu0 %v55
  %193 = vmatpush.msra.mxu0 %v54
  %194 = vmatpush.msra.mxu0 %v53
  %195 = vmatpush.msra.mxu0 %v52
  %196 = vmatmul.f32.gmra.mxu0 %v116
  %v197 = vpop.f32.mrf.mxu0
  %v198 = vadd.f32 0.0, %v197
  %199 = vmatmul.f32.gmra.mxu0 %v118
  %v200 = vpop.f32.mrf.mxu0
  %v201 = vadd.f32 0.0, %v200
  %202 = vmatmul.f32.gmra.mxu0 %v120
  %v203 = vpop.f32.mrf.mxu0
  %v204 = vadd.f32 0.0, %v203
  %205 = vmatmul.f32.gmra.mxu0 %v122
  %v206 = vpop.f32.mrf.mxu0
  %v207 = vadd.f32 0.0, %v206
  %208 = vmatmul.f32.gmra.mxu0 %v124
  %v209 = vpop.f32.mrf.mxu0
  %v210 = vadd.f32 0.0, %v209
  %211 = vmatmul.f32.gmra.mxu0 %v126
  %v212 = vpop.f32.mrf.mxu0
  %v213 = vadd.f32 0.0, %v212
  %214 = vmatmul.f32.gmra.mxu0 %v128
  %v215 = vpop.f32.mrf.mxu0
  %v216 = vadd.f32 0.0, %v215
  %217 = vmatmul.f32.gmra.mxu0 %v130
  %v218 = vpop.f32.mrf.mxu0
  %v219 = vadd.f32 0.0, %v218
  %220 = vmatmul.f32.gmra.mxu0 %v132
  %v221 = vpop.f32.mrf.mxu0
  %v222 = vadd.f32 0.0, %v221
  %223 = vmatmul.f32.gmra.mxu0 %v134
  %v224 = vpop.f32.mrf.mxu0
  %v225 = vadd.f32 0.0, %v224
  %226 = vmatmul.f32.gmra.mxu0 %v136
  %v227 = vpop.f32.mrf.mxu0
  %v228 = vadd.f32 0.0, %v227
  %229 = vmatmul.f32.gmra.mxu0 %v138
  %v230 = vpop.f32.mrf.mxu0
  %v231 = vadd.f32 0.0, %v230
  %232 = vmatmul.f32.gmra.mxu0 %v140
  %v233 = vpop.f32.mrf.mxu0
  %v234 = vadd.f32 0.0, %v233
  %235 = vmatmul.f32.gmra.mxu0 %v142
  %v236 = vpop.f32.mrf.mxu0
  %v237 = vadd.f32 0.0, %v236
  %238 = vmatmul.f32.gmra.mxu0 %v144
  %v239 = vpop.f32.mrf.mxu0
  %v240 = vadd.f32 0.0, %v239
  %241 = vmatmul.f32.gmra.mxu0 %v146
  %v242 = vpop.f32.mrf.mxu0
  %v243 = vadd.f32 0.0, %v242
  %244 = vmatmul.f32.gmra.mxu0 %v148
  %v245 = vpop.f32.mrf.mxu0
  %v246 = vadd.f32 0.0, %v245
  %247 = vmatmul.f32.gmra.mxu0 %v150
  %v248 = vpop.f32.mrf.mxu0
  %v249 = vadd.f32 0.0, %v248
  %250 = vmatmul.f32.gmra.mxu0 %v152
  %v251 = vpop.f32.mrf.mxu0
  %v252 = vadd.f32 0.0, %v251
  %253 = vmatmul.f32.gmra.mxu0 %v154
  %v254 = vpop.f32.mrf.mxu0
  %v255 = vadd.f32 0.0, %v254
  %256 = vmatmul.f32.gmra.mxu0 %v156
  %v257 = vpop.f32.mrf.mxu0
  %v258 = vadd.f32 0.0, %v257
  %259 = vmatmul.f32.gmra.mxu0 %v158
  %v260 = vpop.f32.mrf.mxu0
  %v261 = vadd.f32 0.0, %v260
  %262 = vmatmul.f32.gmra.mxu0 %v160
  %v263 = vpop.f32.mrf.mxu0
  %v264 = vadd.f32 0.0, %v263
  %265 = vmatmul.f32.gmra.mxu0 %v162
  %v266 = vpop.f32.mrf.mxu0
  %v267 = vadd.f32 0.0, %v266
  %268 = vmatmul.f32.gmra.mxu0 %v164
  %v269 = vpop.f32.mrf.mxu0
  %v270 = vadd.f32 0.0, %v269
  %271 = vmatmul.f32.gmra.mxu0 %v166
  %v272 = vpop.f32.mrf.mxu0
  %v273 = vadd.f32 0.0, %v272
  %274 = vmatmul.f32.gmra.mxu0 %v168
  %v275 = vpop.f32.mrf.mxu0
  %v276 = vadd.f32 0.0, %v275
  %277 = vmatmul.f32.gmra.mxu0 %v170
  %v278 = vpop.f32.mrf.mxu0
  %v279 = vadd.f32 0.0, %v278
  %280 = vmatmul.f32.gmra.mxu0 %v172
  %v281 = vpop.f32.mrf.mxu0
  %v282 = vadd.f32 0.0, %v281
  %283 = vmatmul.f32.gmra.mxu0 %v174
  %v284 = vpop.f32.mrf.mxu0
  %v285 = vadd.f32 0.0, %v284
  %286 = vmatmul.f32.gmra.mxu0 %v176
  %v287 = vpop.f32.mrf.mxu0
  %v288 = vadd.f32 0.0, %v287
  %289 = vmatmul.f32.gmra.mxu0 %v178
  %v290 = vpop.f32.mrf.mxu0
  %v291 = vadd.f32 0.0, %v290
  %292 = vdwg.mxu0
  %293 = vmatpush.msra.mxu0 %v83
  %294 = vmatpush.msra.mxu0 %v82
  %295 = vmatpush.msra.mxu0 %v81
  %296 = vmatpush.msra.mxu0 %v80
  %297 = vmatpush.msra.mxu0 %v79
  %298 = vmatpush.msra.mxu0 %v78
  %299 = vmatpush.msra.mxu0 %v77
  %300 = vmatpush.msra.mxu0 %v76
  %301 = vmatpush.msra.mxu0 %v75
  %302 = vmatpush.msra.mxu0 %v74
  %303 = vmatpush.msra.mxu0 %v73
  %304 = vmatpush.msra.mxu0 %v72
  %305 = vmatpush.msra.mxu0 %v71
  %306 = vmatpush.msra.mxu0 %v70
  %307 = vmatpush.msra.mxu0 %v69
  %308 = vmatpush.msra.mxu0 %v68
  %309 = vmatmul.f32.gmra.mxu0 %v117
  %v310 = vpop.f32.mrf.mxu0
  %v311 = vadd.f32 %v198, %v310
  %312 = vmatmul.f32.gmra.mxu0 %v119
  %v313 = vpop.f32.mrf.mxu0
  %v314 = vadd.f32 %v201, %v313
  %315 = vmatmul.f32.gmra.mxu0 %v121
  %v316 = vpop.f32.mrf.mxu0
  %v317 = vadd.f32 %v204, %v316
  %318 = vmatmul.f32.gmra.mxu0 %v123
  %v319 = vpop.f32.mrf.mxu0
  %v320 = vadd.f32 %v207, %v319
  %321 = vmatmul.f32.gmra.mxu0 %v125
  %v322 = vpop.f32.mrf.mxu0
  %v323 = vadd.f32 %v210, %v322
  %324 = vmatmul.f32.gmra.mxu0 %v127
  %v325 = vpop.f32.mrf.mxu0
  %v326 = vadd.f32 %v213, %v325
  %327 = vmatmul.f32.gmra.mxu0 %v129
  %v328 = vpop.f32.mrf.mxu0
  %v329 = vadd.f32 %v216, %v328
  %330 = vmatmul.f32.gmra.mxu0 %v131
  %v331 = vpop.f32.mrf.mxu0
  %v332 = vadd.f32 %v219, %v331
  %333 = vmatmul.f32.gmra.mxu0 %v133
  %v334 = vpop.f32.mrf.mxu0
  %v335 = vadd.f32 %v222, %v334
  %336 = vmatmul.f32.gmra.mxu0 %v135
  %v337 = vpop.f32.mrf.mxu0
  %v338 = vadd.f32 %v225, %v337
  %339 = vmatmul.f32.gmra.mxu0 %v137
  %v340 = vpop.f32.mrf.mxu0
  %v341 = vadd.f32 %v228, %v340
  %342 = vmatmul.f32.gmra.mxu0 %v139
  %v343 = vpop.f32.mrf.mxu0
  %v344 = vadd.f32 %v231, %v343
  %345 = vmatmul.f32.gmra.mxu0 %v141
  %v346 = vpop.f32.mrf.mxu0
  %v347 = vadd.f32 %v234, %v346
  %348 = vmatmul.f32.gmra.mxu0 %v143
  %v349 = vpop.f32.mrf.mxu0
  %v350 = vadd.f32 %v237, %v349
  %351 = vmatmul.f32.gmra.mxu0 %v145
  %v352 = vpop.f32.mrf.mxu0
  %v353 = vadd.f32 %v240, %v352
  %354 = vmatmul.f32.gmra.mxu0 %v147
  %v355 = vpop.f32.mrf.mxu0
  %v356 = vadd.f32 %v243, %v355
  %357 = vmatmul.f32.gmra.mxu0 %v149
  %v358 = vpop.f32.mrf.mxu0
  %v359 = vadd.f32 %v246, %v358
  %360 = vmatmul.f32.gmra.mxu0 %v151
  %v361 = vpop.f32.mrf.mxu0
  %v362 = vadd.f32 %v249, %v361
  %363 = vmatmul.f32.gmra.mxu0 %v153
  %v364 = vpop.f32.mrf.mxu0
  %v365 = vadd.f32 %v252, %v364
  %366 = vmatmul.f32.gmra.mxu0 %v155
  %v367 = vpop.f32.mrf.mxu0
  %v368 = vadd.f32 %v255, %v367
  %369 = vmatmul.f32.gmra.mxu0 %v157
  %v370 = vpop.f32.mrf.mxu0
  %v371 = vadd.f32 %v258, %v370
  %372 = vmatmul.f32.gmra.mxu0 %v159
  %v373 = vpop.f32.mrf.mxu0
  %v374 = vadd.f32 %v261, %v373
  %375 = vmatmul.f32.gmra.mxu0 %v161
  %v376 = vpop.f32.mrf.mxu0
  %v377 = vadd.f32 %v264, %v376
  %378 = vmatmul.f32.gmra.mxu0 %v163
  %v379 = vpop.f32.mrf.mxu0
  %v380 = vadd.f32 %v267, %v379
  %381 = vmatmul.f32.gmra.mxu0 %v165
  %v382 = vpop.f32.mrf.mxu0
  %v383 = vadd.f32 %v270, %v382
  %384 = vmatmul.f32.gmra.mxu0 %v167
  %v385 = vpop.f32.mrf.mxu0
  %v386 = vadd.f32 %v273, %v385
  %387 = vmatmul.f32.gmra.mxu0 %v169
  %v388 = vpop.f32.mrf.mxu0
  %v389 = vadd.f32 %v276, %v388
  %390 = vmatmul.f32.gmra.mxu0 %v171
  %v391 = vpop.f32.mrf.mxu0
  %v392 = vadd.f32 %v279, %v391
  %393 = vmatmul.f32.gmra.mxu0 %v173
  %v394 = vpop.f32.mrf.mxu0
  %v395 = vadd.f32 %v282, %v394
  %396 = vmatmul.f32.gmra.mxu0 %v175
  %v397 = vpop.f32.mrf.mxu0
  %v398 = vadd.f32 %v285, %v397
  %399 = vmatmul.f32.gmra.mxu0 %v177
  %v400 = vpop.f32.mrf.mxu0
  %v401 = vadd.f32 %v288, %v400
  %402 = vmatmul.f32.gmra.mxu0 %v179
  %v403 = vpop.f32.mrf.mxu0
  %v404 = vadd.f32 %v291, %v403
  %405 = vdwg.mxu0
  %v406 = vadd.f32 %v84, %v311
  %v407 = vadd.f32 %v85, %v314
  %v408 = vadd.f32 %v86, %v317
  %v409 = vadd.f32 %v87, %v320
  %v410 = vadd.f32 %v88, %v323
  %v411 = vadd.f32 %v89, %v326
  %v412 = vadd.f32 %v90, %v329
  %v413 = vadd.f32 %v91, %v332
  %v414 = vadd.f32 %v92, %v335
  %v415 = vadd.f32 %v93, %v338
  %v416 = vadd.f32 %v94, %v341
  %v417 = vadd.f32 %v95, %v344
  %v418 = vadd.f32 %v96, %v347
  %v419 = vadd.f32 %v97, %v350
  %v420 = vadd.f32 %v98, %v353
  %v421 = vadd.f32 %v99, %v356
  %v422 = vadd.f32 %v100, %v359
  %v423 = vadd.f32 %v101, %v362
  %v424 = vadd.f32 %v102, %v365
  %v425 = vadd.f32 %v103, %v368
  %v426 = vadd.f32 %v104, %v371
  %v427 = vadd.f32 %v105, %v374
  %v428 = vadd.f32 %v106, %v377
  %v429 = vadd.f32 %v107, %v380
  %v430 = vadd.f32 %v108, %v383
  %v431 = vadd.f32 %v109, %v386
  %v432 = vadd.f32 %v110, %v389
  %v433 = vadd.f32 %v111, %v392
  %v434 = vadd.f32 %v112, %v395
  %v435 = vadd.f32 %v113, %v398
  %v436 = vadd.f32 %v114, %v401
  %v437 = vadd.f32 %v115, %v404
  %438 = vst [vmem:[#allocation2] sm:$0xff] %v406
  %439 = vst [vmem:[#allocation2 + $0x8] sm:$0xff] %v407
  %440 = vst [vmem:[#allocation2 + $0x10] sm:$0xff] %v408
  %441 = vst [vmem:[#allocation2 + $0x18] sm:$0xff] %v409
  %442 = vst [vmem:[#allocation2 + $0x20] sm:$0xff] %v410
  %443 = vst [vmem:[#allocation2 + $0x28] sm:$0xff] %v411
  %444 = vst [vmem:[#allocation2 + $0x30] sm:$0xff] %v412
  %445 = vst [vmem:[#allocation2 + $0x38] sm:$0xff] %v413
  %446 = vst [vmem:[#allocation2 + $0x40] sm:$0xff] %v414
  %447 = vst [vmem:[#allocation2 + $0x48] sm:$0xff] %v415
  %448 = vst [vmem:[#allocation2 + $0x50] sm:$0xff] %v416
  %449 = vst [vmem:[#allocation2 + $0x58] sm:$0xff] %v417
  %450 = vst [vmem:[#allocation2 + $0x60] sm:$0xff] %v418
  %451 = vst [vmem:[#allocation2 + $0x68] sm:$0xff] %v419
  %452 = vst [vmem:[#allocation2 + $0x70] sm:$0xff] %v420
  %453 = vst [vmem:[#allocation2 + $0x78] sm:$0xff] %v421
  %454 = vst [vmem:[#allocation2 + $0x80] sm:$0xff] %v422
  %455 = vst [vmem:[#allocation2 + $0x88] sm:$0xff] %v423
  %456 = vst [vmem:[#allocation2 + $0x90] sm:$0xff] %v424
  %457 = vst [vmem:[#allocation2 + $0x98] sm:$0xff] %v425
  %458 = vst [vmem:[#allocation2 + $0xa0] sm:$0xff] %v426
  %459 = vst [vmem:[#allocation2 + $0xa8] sm:$0xff] %v427
  %460 = vst [vmem:[#allocation2 + $0xb0] sm:$0xff] %v428
  %461 = vst [vmem:[#allocation2 + $0xb8] sm:$0xff] %v429
  %462 = vst [vmem:[#allocation2 + $0xc0] sm:$0xff] %v430
  %463 = vst [vmem:[#allocation2 + $0xc8] sm:$0xff] %v431
  %464 = vst [vmem:[#allocation2 + $0xd0] sm:$0xff] %v432
  %465 = vst [vmem:[#allocation2 + $0xd8] sm:$0xff] %v433
  %466 = vst [vmem:[#allocation2 + $0xe0] sm:$0xff] %v434
  %467 = vst [vmem:[#allocation2 + $0xe8] sm:$0xff] %v435
  %468 = vst [vmem:[#allocation2 + $0xf0] sm:$0xff] %v436
  %469 = vst [vmem:[#allocation2 + $0xf8] sm:$0xff] %v437
  // Predicated region
  $region18: #{ocr_multimodal_forward.6} parent=0 // pred_check
    %p470 = pneg %p14
  $region19: #{ocr_multimodal_forward.6} parent=0 // pred_check_branch
    %472 = sbr.rel (%p470) target = $region21
  $region20: #{ocr_multimodal_forward.6} parent=0 // pred_region
    %v473 = vld [vmem:[#allocation2] sm:$0xff]
    %v474 = vld [vmem:[#allocation2 + $0x8] sm:$0xff]
    %v475 = vld [vmem:[#allocation2 + $0x10] sm:$0xff]
    %v476 = vld [vmem:[#allocation2 + $0x18] sm:$0xff]
    %v477 = vld [vmem:[#allocation2 + $0x20] sm:$0xff]
    %v478 = vld [vmem:[#allocation2 + $0x28] sm:$0xff]
    %v479 = vld [vmem:[#allocation2 + $0x30] sm:$0xff]
    %v480 = vld [vmem:[#allocation2 + $0x38] sm:$0xff]
    %v481 = vld [vmem:[#allocation2 + $0x40] sm:$0xff]
    %v482 = vld [vmem:[#allocation2 + $0x48] sm:$0xff]
    %v483 = vld [vmem:[#allocation2 + $0x50] sm:$0xff]
    %v484 = vld [vmem:[#allocation2 + $0x58] sm:$0xff]
    %v485 = vld [vmem:[#allocation2 + $0x60] sm:$0xff]
    %v486 = vld [vmem:[#allocation2 + $0x68] sm:$0xff]
    %v487 = vld [vmem:[#allocation2 + $0x70] sm:$0xff]
    %v488 = vld [vmem:[#allocation2 + $0x78] sm:$0xff]
    %v489 = vld [vmem:[#allocation2 + $0x80] sm:$0xff]
    %v490 = vld [vmem:[#allocation2 + $0x88] sm:$0xff]
    %v491 = vld [vmem:[#allocation2 + $0x90] sm:$0xff]
    %v492 = vld [vmem:[#allocation2 + $0x98] sm:$0xff]
    %v493 = vld [vmem:[#allocation2 + $0xa0] sm:$0xff]
    %v494 = vld [vmem:[#allocation2 + $0xa8] sm:$0xff]
    %v495 = vld [vmem:[#allocation2 + $0xb0] sm:$0xff]
    %v496 = vld [vmem:[#allocation2 + $0xb8] sm:$0xff]
    %v497 = vld [vmem:[#allocation2 + $0xc0] sm:$0xff]
    %v498 = vld [vmem:[#allocation2 + $0xc8] sm:$0xff]
    %v499 = vld [vmem:[#allocation2 + $0xd0] sm:$0xff]
    %v500 = vld [vmem:[#allocation2 + $0xd8] sm:$0xff]
    %v501 = vld [vmem:[#allocation2 + $0xe0] sm:$0xff]
    %v502 = vld [vmem:[#allocation2 + $0xe8] sm:$0xff]
    %v503 = vld [vmem:[#allocation2 + $0xf0] sm:$0xff]
    %v504 = vld [vmem:[#allocation2 + $0xf8] sm:$0xff]
    %v505 = vld [vmem:[%s2] sm:$0x1]
    %v507 = vperm.slane %v505, 0
    %v509 = vadd.f32 %v473, %v507
    %v510 = vadd.f32 %v474, %v507
    %v511 = vadd.f32 %v475, %v507
    %v512 = vadd.f32 %v476, %v507
    %v513 = vadd.f32 %v477, %v507
    %v514 = vadd.f32 %v478, %v507
    %v515 = vadd.f32 %v479, %v507
    %v516 = vadd.f32 %v480, %v507
    %v517 = vadd.f32 %v481, %v507
    %v518 = vadd.f32 %v482, %v507
    %v519 = vadd.f32 %v483, %v507
    %v520 = vadd.f32 %v484, %v507
    %v521 = vadd.f32 %v485, %v507
    %v522 = vadd.f32 %v486, %v507
    %v523 = vadd.f32 %v487, %v507
    %v524 = vadd.f32 %v488, %v507
    %v525 = vadd.f32 %v489, %v507
    %v526 = vadd.f32 %v490, %v507
    %v527 = vadd.f32 %v491, %v507
    %v528 = vadd.f32 %v492, %v507
    %v529 = vadd.f32 %v493, %v507
    %v530 = vadd.f32 %v494, %v507
    %v531 = vadd.f32 %v495, %v507
    %v532 = vadd.f32 %v496, %v507
    %v533 = vadd.f32 %v497, %v507
    %v534 = vadd.f32 %v498, %v507
    %v535 = vadd.f32 %v499, %v507
    %v536 = vadd.f32 %v500, %v507
    %v537 = vadd.f32 %v501, %v507
    %v538 = vadd.f32 %v502, %v507
    %v539 = vadd.f32 %v503, %v507
    %v540 = vadd.f32 %v504, %v507
    %541 = vst [vmem:[%s3] sm:$0xff] %v509
    %542 = vst [vmem:[%s3 + $0x8] sm:$0xff] %v510
    %543 = vst [vmem:[%s3 + $0x10] sm:$0xff] %v511
    %544 = vst [vmem:[%s3 + $0x18] sm:$0xff] %v512
    %545 = vst [vmem:[%s3 + $0x20] sm:$0xff] %v513
    %546 = vst [vmem:[%s3 + $0x28] sm:$0xff] %v514
    %547 = vst [vmem:[%s3 + $0x30] sm:$0xff] %v515
    %548 = vst [vmem:[%s3 + $0x38] sm:$0xff] %v516
    %549 = vst [vmem:[%s3 + $0x40] sm:$0xff] %v517
    %550 = vst [vmem:[%s3 + $0x48] sm:$0xff] %v518
    %551 = vst [vmem:[%s3 + $0x50] sm:$0xff] %v519
    %552 = vst [vmem:[%s3 + $0x58] sm:$0xff] %v520
    %553 = vst [vmem:[%s3 + $0x60] sm:$0xff] %v521
    %554 = vst [vmem:[%s3 + $0x68] sm:$0xff] %v522
    %555 = vst [vmem:[%s3 + $0x70] sm:$0xff] %v523
    %556 = vst [vmem:[%s3 + $0x78] sm:$0xff] %v524
    %557 = vst [vmem:[%s3 + $0x80] sm:$0xff] %v525
    %558 = vst [vmem:[%s3 + $0x88] sm:$0xff] %v526
    %559 = vst [vmem:[%s3 + $0x90] sm:$0xff] %v527
    %560 = vst [vmem:[%s3 + $0x98] sm:$0xff] %v528
    %561 = vst [vmem:[%s3 + $0xa0] sm:$0xff] %v529
    %562 = vst [vmem:[%s3 + $0xa8] sm:$0xff] %v530
    %563 = vst [vmem:[%s3 + $0xb0] sm:$0xff] %v531
    %564 = vst [vmem:[%s3 + $0xb8] sm:$0xff] %v532
    %565 = vst [vmem:[%s3 + $0xc0] sm:$0xff] %v533
    %566 = vst [vmem:[%s3 + $0xc8] sm:$0xff] %v534
    %567 = vst [vmem:[%s3 + $0xd0] sm:$0xff] %v535
    %568 = vst [vmem:[%s3 + $0xd8] sm:$0xff] %v536
    %569 = vst [vmem:[%s3 + $0xe0] sm:$0xff] %v537
    %570 = vst [vmem:[%s3 + $0xe8] sm:$0xff] %v538
    %571 = vst [vmem:[%s3 + $0xf0] sm:$0xff] %v539
    %572 = vst [vmem:[%s3 + $0xf8] sm:$0xff] %v540
  $region21: #{ocr_multimodal_forward.6} parent=0 // pred_fallthru
    _
  // Predicated region
  $region22: #{ocr_multimodal_forward.6} parent=0 // pred_check
    _
  $region23: #{ocr_multimodal_forward.6} parent=0 // pred_check_branch
    %574 = sbr.rel (0) target = $region25
  $region24: #{ocr_multimodal_forward.6} parent=0 // pred_region
    _
  $region25: #{ocr_multimodal_forward.6} parent=0 // pred_fallthru
    _
  // Predicated region
  $region26: #{ocr_multimodal_forward.6} parent=0 // pred_check
    _
  $region27: #{ocr_multimodal_forward.6} parent=0 // pred_check_branch
    %576 = sbr.rel (0) target = $region29
  $region28: #{ocr_multimodal_forward.6} parent=0 // pred_region
    _
  $region29: #{ocr_multimodal_forward.6} parent=0 // pred_fallthru
    _

// kernel: ocr_multimodal_forward.5
$region0: #{ocr_multimodal_forward.5}
  #allocation0 [shape = 'u32[]', space=smem, size = 0x4, offset = 0x4, fixed_abs, tag = 'smem constant byte address 0x4 - core index']
  #allocation1 [shape = 'u32[72,128]{1,0:T(1,128)}', space=vmem, size = 0x9000, scoped, tag = 'internal scratch']
  #allocation2 [shape = 'f32[256,128]{1,0:T(8,128)}', space=vmem, size = 0x20000, scoped, tag = 'scratch operand']
  %s0 = inlined_call_operand.vmem [shape: f32[256,256], index: 0, kind: input, shape index: {}]
  %s1 = inlined_call_operand.vmem [shape: f32[256,128], index: 1, kind: input, shape index: {}]
  %s2 = inlined_call_operand.vmem [shape: f32[1,128], index: 2, kind: input, shape index: {}]
  %s3 = inlined_call_operand.vmem [shape: f32[128,128], index: 3, kind: input, shape index: {}]
  %s4 = inlined_call_operand.vmem [shape: f32[256,128], index: 4, kind: output, shape index: {}]
  %s5 = sld [smem:[#allocation0]]
  $region34: #{ocr_multimodal_forward.5} parent=0
    _
  %s7 = ssub.s32 1, %s5
  %s8 = scalar_select 0, %s7, %s5
  // Predicated region
  $region2: #{ocr_multimodal_forward.5} parent=0 // pred_check
    _
  $region3: #{ocr_multimodal_forward.5} parent=0 // pred_check_branch
    %10 = sbr.rel (0) target = $region5
  $region4: #{ocr_multimodal_forward.5} parent=0 // pred_region
    _
  $region5: #{ocr_multimodal_forward.5} parent=0 // pred_fallthru
    _
  // Predicated region
  $region6: #{ocr_multimodal_forward.5} parent=0 // pred_check
    _
  $region7: #{ocr_multimodal_forward.5} parent=0 // pred_check_branch
    %12 = sbr.rel (0) target = $region9
  $region8: #{ocr_multimodal_forward.5} parent=0 // pred_region
    _
  $region9: #{ocr_multimodal_forward.5} parent=0 // pred_fallthru
    _
  // Predicated region
  $region10: #{ocr_multimodal_forward.5} parent=0 // pred_check
    _
  $region11: #{ocr_multimodal_forward.5} parent=0 // pred_check_branch
    %14 = sbr.rel (0) target = $region13
  $region12: #{ocr_multimodal_forward.5} parent=0 // pred_region
    _
  $region13: #{ocr_multimodal_forward.5} parent=0 // pred_fallthru
    _
  // Predicated region
  $region14: #{ocr_multimodal_forward.5} parent=0 // pred_check
    _
  $region15: #{ocr_multimodal_forward.5} parent=0 // pred_check_branch
    %16 = sbr.rel (0) target = $region17
  $region16: #{ocr_multimodal_forward.5} parent=0 // pred_region
    _
  $region17: #{ocr_multimodal_forward.5} parent=0 // pred_fallthru
    _
  %p17 = scmp.eq.s32.totalorder 0, 0
  // Predicated region
  $region18: #{ocr_multimodal_forward.5} parent=0 // pred_check
    %p18 = pneg %p17
  $region19: #{ocr_multimodal_forward.5} parent=0 // pred_check_branch
    %20 = sbr.rel (%p18) target = $region21
  $region20: #{ocr_multimodal_forward.5} parent=0 // pred_region
    %21 = vst [vmem:[#allocation2] sm:$0xff] 0.0
    %22 = vst [vmem:[#allocation2 + $0x8] sm:$0xff] 0.0
    %23 = vst [vmem:[#allocation2 + $0x10] sm:$0xff] 0.0
    %24 = vst [vmem:[#allocation2 + $0x18] sm:$0xff] 0.0
    %25 = vst [vmem:[#allocation2 + $0x20] sm:$0xff] 0.0
    %26 = vst [vmem:[#allocation2 + $0x28] sm:$0xff] 0.0
    %27 = vst [vmem:[#allocation2 + $0x30] sm:$0xff] 0.0
    %28 = vst [vmem:[#allocation2 + $0x38] sm:$0xff] 0.0
    %29 = vst [vmem:[#allocation2 + $0x40] sm:$0xff] 0.0
    %30 = vst [vmem:[#allocation2 + $0x48] sm:$0xff] 0.0
    %31 = vst [vmem:[#allocation2 + $0x50] sm:$0xff] 0.0
    %32 = vst [vmem:[#allocation2 + $0x58] sm:$0xff] 0.0
    %33 = vst [vmem:[#allocation2 + $0x60] sm:$0xff] 0.0
    %34 = vst [vmem:[#allocation2 + $0x68] sm:$0xff] 0.0
    %35 = vst [vmem:[#allocation2 + $0x70] sm:$0xff] 0.0
    %36 = vst [vmem:[#allocation2 + $0x78] sm:$0xff] 0.0
    %37 = vst [vmem:[#allocation2 + $0x80] sm:$0xff] 0.0
    %38 = vst [vmem:[#allocation2 + $0x88] sm:$0xff] 0.0
    %39 = vst [vmem:[#allocation2 + $0x90] sm:$0xff] 0.0
    %40 = vst [vmem:[#allocation2 + $0x98] sm:$0xff] 0.0
    %41 = vst [vmem:[#allocation2 + $0xa0] sm:$0xff] 0.0
    %42 = vst [vmem:[#allocation2 + $0xa8] sm:$0xff] 0.0
    %43 = vst [vmem:[#allocation2 + $0xb0] sm:$0xff] 0.0
    %44 = vst [vmem:[#allocation2 + $0xb8] sm:$0xff] 0.0
    %45 = vst [vmem:[#allocation2 + $0xc0] sm:$0xff] 0.0
    %46 = vst [vmem:[#allocation2 + $0xc8] sm:$0xff] 0.0
    %47 = vst [vmem:[#allocation2 + $0xd0] sm:$0xff] 0.0
    %48 = vst [vmem:[#allocation2 + $0xd8] sm:$0xff] 0.0
    %49 = vst [vmem:[#allocation2 + $0xe0] sm:$0xff] 0.0
    %50 = vst [vmem:[#allocation2 + $0xe8] sm:$0xff] 0.0
    %51 = vst [vmem:[#allocation2 + $0xf0] sm:$0xff] 0.0
    %52 = vst [vmem:[#allocation2 + $0xf8] sm:$0xff] 0.0
  $region21: #{ocr_multimodal_forward.5} parent=0 // pred_fallthru
    _
  %s53 = smul.u32 0, 256
  %s54 = scalar_lea.vmem %s1, %s53
  %v55 = vld [vmem:[%s54] sm:$0xff]
  %v56 = vld [vmem:[%s54 + $0x8] sm:$0xff]
  %v57 = vld [vmem:[%s54 + $0x10] sm:$0xff]
  %v58 = vld [vmem:[%s54 + $0x18] sm:$0xff]
  %v59 = vld [vmem:[%s54 + $0x20] sm:$0xff]
  %v60 = vld [vmem:[%s54 + $0x28] sm:$0xff]
  %v61 = vld [vmem:[%s54 + $0x30] sm:$0xff]
  %v62 = vld [vmem:[%s54 + $0x38] sm:$0xff]
  %v63 = vld [vmem:[%s54 + $0x40] sm:$0xff]
  %v64 = vld [vmem:[%s54 + $0x48] sm:$0xff]
  %v65 = vld [vmem:[%s54 + $0x50] sm:$0xff]
  %v66 = vld [vmem:[%s54 + $0x58] sm:$0xff]
  %v67 = vld [vmem:[%s54 + $0x60] sm:$0xff]
  %v68 = vld [vmem:[%s54 + $0x68] sm:$0xff]
  %v69 = vld [vmem:[%s54 + $0x70] sm:$0xff]
  %v70 = vld [vmem:[%s54 + $0x78] sm:$0xff]
  %v71 = vld [vmem:[%s54 + $0x80] sm:$0xff]
  %v72 = vld [vmem:[%s54 + $0x88] sm:$0xff]
  %v73 = vld [vmem:[%s54 + $0x90] sm:$0xff]
  %v74 = vld [vmem:[%s54 + $0x98] sm:$0xff]
  %v75 = vld [vmem:[%s54 + $0xa0] sm:$0xff]
  %v76 = vld [vmem:[%s54 + $0xa8] sm:$0xff]
  %v77 = vld [vmem:[%s54 + $0xb0] sm:$0xff]
  %v78 = vld [vmem:[%s54 + $0xb8] sm:$0xff]
  %v79 = vld [vmem:[%s54 + $0xc0] sm:$0xff]
  %v80 = vld [vmem:[%s54 + $0xc8] sm:$0xff]
  %v81 = vld [vmem:[%s54 + $0xd0] sm:$0xff]
  %v82 = vld [vmem:[%s54 + $0xd8] sm:$0xff]
  %v83 = vld [vmem:[%s54 + $0xe0] sm:$0xff]
  %v84 = vld [vmem:[%s54 + $0xe8] sm:$0xff]
  %v85 = vld [vmem:[%s54 + $0xf0] sm:$0xff]
  %v86 = vld [vmem:[%s54 + $0xf8] sm:$0xff]
  %v87 = vld [vmem:[#allocation2] sm:$0xff]
  %v88 = vld [vmem:[#allocation2 + $0x8] sm:$0xff]
  %v89 = vld [vmem:[#allocation2 + $0x10] sm:$0xff]
  %v90 = vld [vmem:[#allocation2 + $0x18] sm:$0xff]
  %v91 = vld [vmem:[#allocation2 + $0x20] sm:$0xff]
  %v92 = vld [vmem:[#allocation2 + $0x28] sm:$0xff]
  %v93 = vld [vmem:[#allocation2 + $0x30] sm:$0xff]
  %v94 = vld [vmem:[#allocation2 + $0x38] sm:$0xff]
  %v95 = vld [vmem:[#allocation2 + $0x40] sm:$0xff]
  %v96 = vld [vmem:[#allocation2 + $0x48] sm:$0xff]
  %v97 = vld [vmem:[#allocation2 + $0x50] sm:$0xff]
  %v98 = vld [vmem:[#allocation2 + $0x58] sm:$0xff]
  %v99 = vld [vmem:[#allocation2 + $0x60] sm:$0xff]
  %v100 = vld [vmem:[#allocation2 + $0x68] sm:$0xff]
  %v101 = vld [vmem:[#allocation2 + $0x70] sm:$0xff]
  %v102 = vld [vmem:[#allocation2 + $0x78] sm:$0xff]
  %v103 = vld [vmem:[#allocation2 + $0x80] sm:$0xff]
  %v104 = vld [vmem:[#allocation2 + $0x88] sm:$0xff]
  %v105 = vld [vmem:[#allocation2 + $0x90] sm:$0xff]
  %v106 = vld [vmem:[#allocation2 + $0x98] sm:$0xff]
  %v107 = vld [vmem:[#allocation2 + $0xa0] sm:$0xff]
  %v108 = vld [vmem:[#allocation2 + $0xa8] sm:$0xff]
  %v109 = vld [vmem:[#allocation2 + $0xb0] sm:$0xff]
  %v110 = vld [vmem:[#allocation2 + $0xb8] sm:$0xff]
  %v111 = vld [vmem:[#allocation2 + $0xc0] sm:$0xff]
  %v112 = vld [vmem:[#allocation2 + $0xc8] sm:$0xff]
  %v113 = vld [vmem:[#allocation2 + $0xd0] sm:$0xff]
  %v114 = vld [vmem:[#allocation2 + $0xd8] sm:$0xff]
  %v115 = vld [vmem:[#allocation2 + $0xe0] sm:$0xff]
  %v116 = vld [vmem:[#allocation2 + $0xe8] sm:$0xff]
  %v117 = vld [vmem:[#allocation2 + $0xf0] sm:$0xff]
  %v118 = vld [vmem:[#allocation2 + $0xf8] sm:$0xff]
  %v119 = vld [vmem:[%s0] sm:$0xff]
  %v120 = vld [vmem:[%s0 + $0x8] sm:$0xff]
  %v121 = vld [vmem:[%s0 + $0x10] sm:$0xff]
  %v122 = vld [vmem:[%s0 + $0x18] sm:$0xff]
  %v123 = vld [vmem:[%s0 + $0x20] sm:$0xff]
  %v124 = vld [vmem:[%s0 + $0x28] sm:$0xff]
  %v125 = vld [vmem:[%s0 + $0x30] sm:$0xff]
  %v126 = vld [vmem:[%s0 + $0x38] sm:$0xff]
  %v127 = vld [vmem:[%s0 + $0x40] sm:$0xff]
  %v128 = vld [vmem:[%s0 + $0x48] sm:$0xff]
  %v129 = vld [vmem:[%s0 + $0x50] sm:$0xff]
  %v130 = vld [vmem:[%s0 + $0x58] sm:$0xff]
  %v131 = vld [vmem:[%s0 + $0x60] sm:$0xff]
  %v132 = vld [vmem:[%s0 + $0x68] sm:$0xff]
  %v133 = vld [vmem:[%s0 + $0x70] sm:$0xff]
  %v134 = vld [vmem:[%s0 + $0x78] sm:$0xff]
  %v135 = vld [vmem:[%s0 + $0x80] sm:$0xff]
  %v136 = vld [vmem:[%s0 + $0x88] sm:$0xff]
  %v137 = vld [vmem:[%s0 + $0x90] sm:$0xff]
  %v138 = vld [vmem:[%s0 + $0x98] sm:$0xff]
  %v139 = vld [vmem:[%s0 + $0xa0] sm:$0xff]
  %v140 = vld [vmem:[%s0 + $0xa8] sm:$0xff]
  %v141 = vld [vmem:[%s0 + $0xb0] sm:$0xff]
  %v142 = vld [vmem:[%s0 + $0xb8] sm:$0xff]
  %v143 = vld [vmem:[%s0 + $0xc0] sm:$0xff]
  %v144 = vld [vmem:[%s0 + $0xc8] sm:$0xff]
  %v145 = vld [vmem:[%s0 + $0xd0] sm:$0xff]
  %v146 = vld [vmem:[%s0 + $0xd8] sm:$0xff]
  %v147 = vld [vmem:[%s0 + $0xe0] sm:$0xff]
  %v148 = vld [vmem:[%s0 + $0xe8] sm:$0xff]
  %v149 = vld [vmem:[%s0 + $0xf0] sm:$0xff]
  %v150 = vld [vmem:[%s0 + $0xf8] sm:$0xff]
  %v151 = vld [vmem:[%s0 + $0x100] sm:$0xff]
  %v152 = vld [vmem:[%s0 + $0x108] sm:$0xff]
  %v153 = vld [vmem:[%s0 + $0x110] sm:$0xff]
  %v154 = vld [vmem:[%s0 + $0x118] sm:$0xff]
  %v155 = vld [vmem:[%s0 + $0x120] sm:$0xff]
  %v156 = vld [vmem:[%s0 + $0x128] sm:$0xff]
  %v157 = vld [vmem:[%s0 + $0x130] sm:$0xff]
  %v158 = vld [vmem:[%s0 + $0x138] sm:$0xff]
  %v159 = vld [vmem:[%s0 + $0x140] sm:$0xff]
  %v160 = vld [vmem:[%s0 + $0x148] sm:$0xff]
  %v161 = vld [vmem:[%s0 + $0x150] sm:$0xff]
  %v162 = vld [vmem:[%s0 + $0x158] sm:$0xff]
  %v163 = vld [vmem:[%s0 + $0x160] sm:$0xff]
  %v164 = vld [vmem:[%s0 + $0x168] sm:$0xff]
  %v165 = vld [vmem:[%s0 + $0x170] sm:$0xff]
  %v166 = vld [vmem:[%s0 + $0x178] sm:$0xff]
  %v167 = vld [vmem:[%s0 + $0x180] sm:$0xff]
  %v168 = vld [vmem:[%s0 + $0x188] sm:$0xff]
  %v169 = vld [vmem:[%s0 + $0x190] sm:$0xff]
  %v170 = vld [vmem:[%s0 + $0x198] sm:$0xff]
  %v171 = vld [vmem:[%s0 + $0x1a0] sm:$0xff]
  %v172 = vld [vmem:[%s0 + $0x1a8] sm:$0xff]
  %v173 = vld [vmem:[%s0 + $0x1b0] sm:$0xff]
  %v174 = vld [vmem:[%s0 + $0x1b8] sm:$0xff]
  %v175 = vld [vmem:[%s0 + $0x1c0] sm:$0xff]
  %v176 = vld [vmem:[%s0 + $0x1c8] sm:$0xff]
  %v177 = vld [vmem:[%s0 + $0x1d0] sm:$0xff]
  %v178 = vld [vmem:[%s0 + $0x1d8] sm:$0xff]
  %v179 = vld [vmem:[%s0 + $0x1e0] sm:$0xff]
  %v180 = vld [vmem:[%s0 + $0x1e8] sm:$0xff]
  %v181 = vld [vmem:[%s0 + $0x1f0] sm:$0xff]
  %v182 = vld [vmem:[%s0 + $0x1f8] sm:$0xff]
  %183 = vmatpush.msra.mxu0 %v70
  %184 = vmatpush.msra.mxu0 %v69
  %185 = vmatpush.msra.mxu0 %v68
  %186 = vmatpush.msra.mxu0 %v67
  %187 = vmatpush.msra.mxu0 %v66
  %188 = vmatpush.msra.mxu0 %v65
  %189 = vmatpush.msra.mxu0 %v64
  %190 = vmatpush.msra.mxu0 %v63
  %191 = vmatpush.msra.mxu0 %v62
  %192 = vmatpush.msra.mxu0 %v61
  %193 = vmatpush.msra.mxu0 %v60
  %194 = vmatpush.msra.mxu0 %v59
  %195 = vmatpush.msra.mxu0 %v58
  %196 = vmatpush.msra.mxu0 %v57
  %197 = vmatpush.msra.mxu0 %v56
  %198 = vmatpush.msra.mxu0 %v55
  %199 = vmatmul.f32.gmra.mxu0 %v119
  %v200 = vpop.f32.mrf.mxu0
  %v201 = vadd.f32 0.0, %v200
  %202 = vmatmul.f32.gmra.mxu0 %v121
  %v203 = vpop.f32.mrf.mxu0
  %v204 = vadd.f32 0.0, %v203
  %205 = vmatmul.f32.gmra.mxu0 %v123
  %v206 = vpop.f32.mrf.mxu0
  %v207 = vadd.f32 0.0, %v206
  %208 = vmatmul.f32.gmra.mxu0 %v125
  %v209 = vpop.f32.mrf.mxu0
  %v210 = vadd.f32 0.0, %v209
  %211 = vmatmul.f32.gmra.mxu0 %v127
  %v212 = vpop.f32.mrf.mxu0
  %v213 = vadd.f32 0.0, %v212
  %214 = vmatmul.f32.gmra.mxu0 %v129
  %v215 = vpop.f32.mrf.mxu0
  %v216 = vadd.f32 0.0, %v215
  %217 = vmatmul.f32.gmra.mxu0 %v131
  %v218 = vpop.f32.mrf.mxu0
  %v219 = vadd.f32 0.0, %v218
  %220 = vmatmul.f32.gmra.mxu0 %v133
  %v221 = vpop.f32.mrf.mxu0
  %v222 = vadd.f32 0.0, %v221
  %223 = vmatmul.f32.gmra.mxu0 %v135
  %v224 = vpop.f32.mrf.mxu0
  %v225 = vadd.f32 0.0, %v224
  %226 = vmatmul.f32.gmra.mxu0 %v137
  %v227 = vpop.f32.mrf.mxu0
  %v228 = vadd.f32 0.0, %v227
  %229 = vmatmul.f32.gmra.mxu0 %v139
  %v230 = vpop.f32.mrf.mxu0
  %v231 = vadd.f32 0.0, %v230
  %232 = vmatmul.f32.gmra.mxu0 %v141
  %v233 = vpop.f32.mrf.mxu0
  %v234 = vadd.f32 0.0, %v233
  %235 = vmatmul.f32.gmra.mxu0 %v143
  %v236 = vpop.f32.mrf.mxu0
  %v237 = vadd.f32 0.0, %v236
  %238 = vmatmul.f32.gmra.mxu0 %v145
  %v239 = vpop.f32.mrf.mxu0
  %v240 = vadd.f32 0.0, %v239
  %241 = vmatmul.f32.gmra.mxu0 %v147
  %v242 = vpop.f32.mrf.mxu0
  %v243 = vadd.f32 0.0, %v242
  %244 = vmatmul.f32.gmra.mxu0 %v149
  %v245 = vpop.f32.mrf.mxu0
  %v246 = vadd.f32 0.0, %v245
  %247 = vmatmul.f32.gmra.mxu0 %v151
  %v248 = vpop.f32.mrf.mxu0
  %v249 = vadd.f32 0.0, %v248
  %250 = vmatmul.f32.gmra.mxu0 %v153
  %v251 = vpop.f32.mrf.mxu0
  %v252 = vadd.f32 0.0, %v251
  %253 = vmatmul.f32.gmra.mxu0 %v155
  %v254 = vpop.f32.mrf.mxu0
  %v255 = vadd.f32 0.0, %v254
  %256 = vmatmul.f32.gmra.mxu0 %v157
  %v257 = vpop.f32.mrf.mxu0
  %v258 = vadd.f32 0.0, %v257
  %259 = vmatmul.f32.gmra.mxu0 %v159
  %v260 = vpop.f32.mrf.mxu0
  %v261 = vadd.f32 0.0, %v260
  %262 = vmatmul.f32.gmra.mxu0 %v161
  %v263 = vpop.f32.mrf.mxu0
  %v264 = vadd.f32 0.0, %v263
  %265 = vmatmul.f32.gmra.mxu0 %v163
  %v266 = vpop.f32.mrf.mxu0
  %v267 = vadd.f32 0.0, %v266
  %268 = vmatmul.f32.gmra.mxu0 %v165
  %v269 = vpop.f32.mrf.mxu0
  %v270 = vadd.f32 0.0, %v269
  %271 = vmatmul.f32.gmra.mxu0 %v167
  %v272 = vpop.f32.mrf.mxu0
  %v273 = vadd.f32 0.0, %v272
  %274 = vmatmul.f32.gmra.mxu0 %v169
  %v275 = vpop.f32.mrf.mxu0
  %v276 = vadd.f32 0.0, %v275
  %277 = vmatmul.f32.gmra.mxu0 %v171
  %v278 = vpop.f32.mrf.mxu0
  %v279 = vadd.f32 0.0, %v278
  %280 = vmatmul.f32.gmra.mxu0 %v173
  %v281 = vpop.f32.mrf.mxu0
  %v282 = vadd.f32 0.0, %v281
  %283 = vmatmul.f32.gmra.mxu0 %v175
  %v284 = vpop.f32.mrf.mxu0
  %v285 = vadd.f32 0.0, %v284
  %286 = vmatmul.f32.gmra.mxu0 %v177
  %v287 = vpop.f32.mrf.mxu0
  %v288 = vadd.f32 0.0, %v287
  %289 = vmatmul.f32.gmra.mxu0 %v179
  %v290 = vpop.f32.mrf.mxu0
  %v291 = vadd.f32 0.0, %v290
  %292 = vmatmul.f32.gmra.mxu0 %v181
  %v293 = vpop.f32.mrf.mxu0
  %v294 = vadd.f32 0.0, %v293
  %295 = vdwg.mxu0
  %296 = vmatpush.msra.mxu0 %v86
  %297 = vmatpush.msra.mxu0 %v85
  %298 = vmatpush.msra.mxu0 %v84
  %299 = vmatpush.msra.mxu0 %v83
  %300 = vmatpush.msra.mxu0 %v82
  %301 = vmatpush.msra.mxu0 %v81
  %302 = vmatpush.msra.mxu0 %v80
  %303 = vmatpush.msra.mxu0 %v79
  %304 = vmatpush.msra.mxu0 %v78
  %305 = vmatpush.msra.mxu0 %v77
  %306 = vmatpush.msra.mxu0 %v76
  %307 = vmatpush.msra.mxu0 %v75
  %308 = vmatpush.msra.mxu0 %v74
  %309 = vmatpush.msra.mxu0 %v73
  %310 = vmatpush.msra.mxu0 %v72
  %311 = vmatpush.msra.mxu0 %v71
  %312 = vmatmul.f32.gmra.mxu0 %v120
  %v313 = vpop.f32.mrf.mxu0
  %v314 = vadd.f32 %v201, %v313
  %315 = vmatmul.f32.gmra.mxu0 %v122
  %v316 = vpop.f32.mrf.mxu0
  %v317 = vadd.f32 %v204, %v316
  %318 = vmatmul.f32.gmra.mxu0 %v124
  %v319 = vpop.f32.mrf.mxu0
  %v320 = vadd.f32 %v207, %v319
  %321 = vmatmul.f32.gmra.mxu0 %v126
  %v322 = vpop.f32.mrf.mxu0
  %v323 = vadd.f32 %v210, %v322
  %324 = vmatmul.f32.gmra.mxu0 %v128
  %v325 = vpop.f32.mrf.mxu0
  %v326 = vadd.f32 %v213, %v325
  %327 = vmatmul.f32.gmra.mxu0 %v130
  %v328 = vpop.f32.mrf.mxu0
  %v329 = vadd.f32 %v216, %v328
  %330 = vmatmul.f32.gmra.mxu0 %v132
  %v331 = vpop.f32.mrf.mxu0
  %v332 = vadd.f32 %v219, %v331
  %333 = vmatmul.f32.gmra.mxu0 %v134
  %v334 = vpop.f32.mrf.mxu0
  %v335 = vadd.f32 %v222, %v334
  %336 = vmatmul.f32.gmra.mxu0 %v136
  %v337 = vpop.f32.mrf.mxu0
  %v338 = vadd.f32 %v225, %v337
  %339 = vmatmul.f32.gmra.mxu0 %v138
  %v340 = vpop.f32.mrf.mxu0
  %v341 = vadd.f32 %v228, %v340
  %342 = vmatmul.f32.gmra.mxu0 %v140
  %v343 = vpop.f32.mrf.mxu0
  %v344 = vadd.f32 %v231, %v343
  %345 = vmatmul.f32.gmra.mxu0 %v142
  %v346 = vpop.f32.mrf.mxu0
  %v347 = vadd.f32 %v234, %v346
  %348 = vmatmul.f32.gmra.mxu0 %v144
  %v349 = vpop.f32.mrf.mxu0
  %v350 = vadd.f32 %v237, %v349
  %351 = vmatmul.f32.gmra.mxu0 %v146
  %v352 = vpop.f32.mrf.mxu0
  %v353 = vadd.f32 %v240, %v352
  %354 = vmatmul.f32.gmra.mxu0 %v148
  %v355 = vpop.f32.mrf.mxu0
  %v356 = vadd.f32 %v243, %v355
  %357 = vmatmul.f32.gmra.mxu0 %v150
  %v358 = vpop.f32.mrf.mxu0
  %v359 = vadd.f32 %v246, %v358
  %360 = vmatmul.f32.gmra.mxu0 %v152
  %v361 = vpop.f32.mrf.mxu0
  %v362 = vadd.f32 %v249, %v361
  %363 = vmatmul.f32.gmra.mxu0 %v154
  %v364 = vpop.f32.mrf.mxu0
  %v365 = vadd.f32 %v252, %v364
  %366 = vmatmul.f32.gmra.mxu0 %v156
  %v367 = vpop.f32.mrf.mxu0
  %v368 = vadd.f32 %v255, %v367
  %369 = vmatmul.f32.gmra.mxu0 %v158
  %v370 = vpop.f32.mrf.mxu0
  %v371 = vadd.f32 %v258, %v370
  %372 = vmatmul.f32.gmra.mxu0 %v160
  %v373 = vpop.f32.mrf.mxu0
  %v374 = vadd.f32 %v261, %v373
  %375 = vmatmul.f32.gmra.mxu0 %v162
  %v376 = vpop.f32.mrf.mxu0
  %v377 = vadd.f32 %v264, %v376
  %378 = vmatmul.f32.gmra.mxu0 %v164
  %v379 = vpop.f32.mrf.mxu0
  %v380 = vadd.f32 %v267, %v379
  %381 = vmatmul.f32.gmra.mxu0 %v166
  %v382 = vpop.f32.mrf.mxu0
  %v383 = vadd.f32 %v270, %v382
  %384 = vmatmul.f32.gmra.mxu0 %v168
  %v385 = vpop.f32.mrf.mxu0
  %v386 = vadd.f32 %v273, %v385
  %387 = vmatmul.f32.gmra.mxu0 %v170
  %v388 = vpop.f32.mrf.mxu0
  %v389 = vadd.f32 %v276, %v388
  %390 = vmatmul.f32.gmra.mxu0 %v172
  %v391 = vpop.f32.mrf.mxu0
  %v392 = vadd.f32 %v279, %v391
  %393 = vmatmul.f32.gmra.mxu0 %v174
  %v394 = vpop.f32.mrf.mxu0
  %v395 = vadd.f32 %v282, %v394
  %396 = vmatmul.f32.gmra.mxu0 %v176
  %v397 = vpop.f32.mrf.mxu0
  %v398 = vadd.f32 %v285, %v397
  %399 = vmatmul.f32.gmra.mxu0 %v178
  %v400 = vpop.f32.mrf.mxu0
  %v401 = vadd.f32 %v288, %v400
  %402 = vmatmul.f32.gmra.mxu0 %v180
  %v403 = vpop.f32.mrf.mxu0
  %v404 = vadd.f32 %v291, %v403
  %405 = vmatmul.f32.gmra.mxu0 %v182
  %v406 = vpop.f32.mrf.mxu0
  %v407 = vadd.f32 %v294, %v406
  %408 = vdwg.mxu0
  %v409 = vadd.f32 %v87, %v314
  %v410 = vadd.f32 %v88, %v317
  %v411 = vadd.f32 %v89, %v320
  %v412 = vadd.f32 %v90, %v323
  %v413 = vadd.f32 %v91, %v326
  %v414 = vadd.f32 %v92, %v329
  %v415 = vadd.f32 %v93, %v332
  %v416 = vadd.f32 %v94, %v335
  %v417 = vadd.f32 %v95, %v338
  %v418 = vadd.f32 %v96, %v341
  %v419 = vadd.f32 %v97, %v344
  %v420 = vadd.f32 %v98, %v347
  %v421 = vadd.f32 %v99, %v350
  %v422 = vadd.f32 %v100, %v353
  %v423 = vadd.f32 %v101, %v356
  %v424 = vadd.f32 %v102, %v359
  %v425 = vadd.f32 %v103, %v362
  %v426 = vadd.f32 %v104, %v365
  %v427 = vadd.f32 %v105, %v368
  %v428 = vadd.f32 %v106, %v371
  %v429 = vadd.f32 %v107, %v374
  %v430 = vadd.f32 %v108, %v377
  %v431 = vadd.f32 %v109, %v380
  %v432 = vadd.f32 %v110, %v383
  %v433 = vadd.f32 %v111, %v386
  %v434 = vadd.f32 %v112, %v389
  %v435 = vadd.f32 %v113, %v392
  %v436 = vadd.f32 %v114, %v395
  %v437 = vadd.f32 %v115, %v398
  %v438 = vadd.f32 %v116, %v401
  %v439 = vadd.f32 %v117, %v404
  %v440 = vadd.f32 %v118, %v407
  %441 = vst [vmem:[#allocation2] sm:$0xff] %v409
  %442 = vst [vmem:[#allocation2 + $0x8] sm:$0xff] %v410
  %443 = vst [vmem:[#allocation2 + $0x10] sm:$0xff] %v411
  %444 = vst [vmem:[#allocation2 + $0x18] sm:$0xff] %v412
  %445 = vst [vmem:[#allocation2 + $0x20] sm:$0xff] %v413
  %446 = vst [vmem:[#allocation2 + $0x28] sm:$0xff] %v414
  %447 = vst [vmem:[#allocation2 + $0x30] sm:$0xff] %v415
  %448 = vst [vmem:[#allocation2 + $0x38] sm:$0xff] %v416
  %449 = vst [vmem:[#allocation2 + $0x40] sm:$0xff] %v417
  %450 = vst [vmem:[#allocation2 + $0x48] sm:$0xff] %v418
  %451 = vst [vmem:[#allocation2 + $0x50] sm:$0xff] %v419
  %452 = vst [vmem:[#allocation2 + $0x58] sm:$0xff] %v420
  %453 = vst [vmem:[#allocation2 + $0x60] sm:$0xff] %v421
  %454 = vst [vmem:[#allocation2 + $0x68] sm:$0xff] %v422
  %455 = vst [vmem:[#allocation2 + $0x70] sm:$0xff] %v423
  %456 = vst [vmem:[#allocation2 + $0x78] sm:$0xff] %v424
  %457 = vst [vmem:[#allocation2 + $0x80] sm:$0xff] %v425
  %458 = vst [vmem:[#allocation2 + $0x88] sm:$0xff] %v426
  %459 = vst [vmem:[#allocation2 + $0x90] sm:$0xff] %v427
  %460 = vst [vmem:[#allocation2 + $0x98] sm:$0xff] %v428
  %461 = vst [vmem:[#allocation2 + $0xa0] sm:$0xff] %v429
  %462 = vst [vmem:[#allocation2 + $0xa8] sm:$0xff] %v430
  %463 = vst [vmem:[#allocation2 + $0xb0] sm:$0xff] %v431
  %464 = vst [vmem:[#allocation2 + $0xb8] sm:$0xff] %v432
  %465 = vst [vmem:[#allocation2 + $0xc0] sm:$0xff] %v433
  %466 = vst [vmem:[#allocation2 + $0xc8] sm:$0xff] %v434
  %467 = vst [vmem:[#allocation2 + $0xd0] sm:$0xff] %v435
  %468 = vst [vmem:[#allocation2 + $0xd8] sm:$0xff] %v436
  %469 = vst [vmem:[#allocation2 + $0xe0] sm:$0xff] %v437
  %470 = vst [vmem:[#allocation2 + $0xe8] sm:$0xff] %v438
  %471 = vst [vmem:[#allocation2 + $0xf0] sm:$0xff] %v439
  %472 = vst [vmem:[#allocation2 + $0xf8] sm:$0xff] %v440
  // Predicated region
  $region22: #{ocr_multimodal_forward.5} parent=0 // pred_check
    %p473 = pneg %p17
  $region23: #{ocr_multimodal_forward.5} parent=0 // pred_check_branch
    %475 = sbr.rel (%p473) target = $region25
  $region24: #{ocr_multimodal_forward.5} parent=0 // pred_region
    %v476 = vld [vmem:[#allocation2] sm:$0xff]
    %v477 = vld [vmem:[#allocation2 + $0x8] sm:$0xff]
    %v478 = vld [vmem:[#allocation2 + $0x10] sm:$0xff]
    %v479 = vld [vmem:[#allocation2 + $0x18] sm:$0xff]
    %v480 = vld [vmem:[#allocation2 + $0x20] sm:$0xff]
    %v481 = vld [vmem:[#allocation2 + $0x28] sm:$0xff]
    %v482 = vld [vmem:[#allocation2 + $0x30] sm:$0xff]
    %v483 = vld [vmem:[#allocation2 + $0x38] sm:$0xff]
    %v484 = vld [vmem:[#allocation2 + $0x40] sm:$0xff]
    %v485 = vld [vmem:[#allocation2 + $0x48] sm:$0xff]
    %v486 = vld [vmem:[#allocation2 + $0x50] sm:$0xff]
    %v487 = vld [vmem:[#allocation2 + $0x58] sm:$0xff]
    %v488 = vld [vmem:[#allocation2 + $0x60] sm:$0xff]
    %v489 = vld [vmem:[#allocation2 + $0x68] sm:$0xff]
    %v490 = vld [vmem:[#allocation2 + $0x70] sm:$0xff]
    %v491 = vld [vmem:[#allocation2 + $0x78] sm:$0xff]
    %v492 = vld [vmem:[#allocation2 + $0x80] sm:$0xff]
    %v493 = vld [vmem:[#allocation2 + $0x88] sm:$0xff]
    %v494 = vld [vmem:[#allocation2 + $0x90] sm:$0xff]
    %v495 = vld [vmem:[#allocation2 + $0x98] sm:$0xff]
    %v496 = vld [vmem:[#allocation2 + $0xa0] sm:$0xff]
    %v497 = vld [vmem:[#allocation2 + $0xa8] sm:$0xff]
    %v498 = vld [vmem:[#allocation2 + $0xb0] sm:$0xff]
    %v499 = vld [vmem:[#allocation2 + $0xb8] sm:$0xff]
    %v500 = vld [vmem:[#allocation2 + $0xc0] sm:$0xff]
    %v501 = vld [vmem:[#allocation2 + $0xc8] sm:$0xff]
    %v502 = vld [vmem:[#allocation2 + $0xd0] sm:$0xff]
    %v503 = vld [vmem:[#allocation2 + $0xd8] sm:$0xff]
    %v504 = vld [vmem:[#allocation2 + $0xe0] sm:$0xff]
    %v505 = vld [vmem:[#allocation2 + $0xe8] sm:$0xff]
    %v506 = vld [vmem:[#allocation2 + $0xf0] sm:$0xff]
    %v507 = vld [vmem:[#allocation2 + $0xf8] sm:$0xff]
    %v508 = vld [vmem:[%s2] sm:$0x1]
    %v510 = vperm.slane %v508, 0
    %v512 = vadd.f32 %v476, %v510
    %v513 = vadd.f32 %v477, %v510
    %v514 = vadd.f32 %v478, %v510
    %v515 = vadd.f32 %v479, %v510
    %v516 = vadd.f32 %v480, %v510
    %v517 = vadd.f32 %v481, %v510
    %v518 = vadd.f32 %v482, %v510
    %v519 = vadd.f32 %v483, %v510
    %v520 = vadd.f32 %v484, %v510
    %v521 = vadd.f32 %v485, %v510
    %v522 = vadd.f32 %v486, %v510
    %v523 = vadd.f32 %v487, %v510
    %v524 = vadd.f32 %v488, %v510
    %v525 = vadd.f32 %v489, %v510
    %v526 = vadd.f32 %v490, %v510
    %v527 = vadd.f32 %v491, %v510
    %v528 = vadd.f32 %v492, %v510
    %v529 = vadd.f32 %v493, %v510
    %v530 = vadd.f32 %v494, %v510
    %v531 = vadd.f32 %v495, %v510
    %v532 = vadd.f32 %v496, %v510
    %v533 = vadd.f32 %v497, %v510
    %v534 = vadd.f32 %v498, %v510
    %v535 = vadd.f32 %v499, %v510
    %v536 = vadd.f32 %v500, %v510
    %v537 = vadd.f32 %v501, %v510
    %v538 = vadd.f32 %v502, %v510
    %v539 = vadd.f32 %v503, %v510
    %v540 = vadd.f32 %v504, %v510
    %v541 = vadd.f32 %v505, %v510
    %v542 = vadd.f32 %v506, %v510
    %v543 = vadd.f32 %v507, %v510
    %v544 = vmax.f32 %v512, 0.0
    %v545 = vmax.f32 %v513, 0.0
    %v546 = vmax.f32 %v514, 0.0
    %v547 = vmax.f32 %v515, 0.0
    %v548 = vmax.f32 %v516, 0.0
    %v549 = vmax.f32 %v517, 0.0
    %v550 = vmax.f32 %v518, 0.0
    %v551 = vmax.f32 %v519, 0.0
    %v552 = vmax.f32 %v520, 0.0
    %v553 = vmax.f32 %v521, 0.0
    %v554 = vmax.f32 %v522, 0.0
    %v555 = vmax.f32 %v523, 0.0
    %v556 = vmax.f32 %v524, 0.0
    %v557 = vmax.f32 %v525, 0.0
    %v558 = vmax.f32 %v526, 0.0
    %v559 = vmax.f32 %v527, 0.0
    %v560 = vmax.f32 %v528, 0.0
    %v561 = vmax.f32 %v529, 0.0
    %v562 = vmax.f32 %v530, 0.0
    %v563 = vmax.f32 %v531, 0.0
    %v564 = vmax.f32 %v532, 0.0
    %v565 = vmax.f32 %v533, 0.0
    %v566 = vmax.f32 %v534, 0.0
    %v567 = vmax.f32 %v535, 0.0
    %v568 = vmax.f32 %v536, 0.0
    %v569 = vmax.f32 %v537, 0.0
    %v570 = vmax.f32 %v538, 0.0
    %v571 = vmax.f32 %v539, 0.0
    %v572 = vmax.f32 %v540, 0.0
    %v573 = vmax.f32 %v541, 0.0
    %v574 = vmax.f32 %v542, 0.0
    %v575 = vmax.f32 %v543, 0.0
    %v576 = vld [vmem:[%s3] sm:$0xff]
    %v577 = vld [vmem:[%s3 + $0x8] sm:$0xff]
    %v578 = vld [vmem:[%s3 + $0x10] sm:$0xff]
    %v579 = vld [vmem:[%s3 + $0x18] sm:$0xff]
    %v580 = vld [vmem:[%s3 + $0x20] sm:$0xff]
    %v581 = vld [vmem:[%s3 + $0x28] sm:$0xff]
    %v582 = vld [vmem:[%s3 + $0x30] sm:$0xff]
    %v583 = vld [vmem:[%s3 + $0x38] sm:$0xff]
    %v584 = vld [vmem:[%s3 + $0x40] sm:$0xff]
    %v585 = vld [vmem:[%s3 + $0x48] sm:$0xff]
    %v586 = vld [vmem:[%s3 + $0x50] sm:$0xff]
    %v587 = vld [vmem:[%s3 + $0x58] sm:$0xff]
    %v588 = vld [vmem:[%s3 + $0x60] sm:$0xff]
    %v589 = vld [vmem:[%s3 + $0x68] sm:$0xff]
    %v590 = vld [vmem:[%s3 + $0x70] sm:$0xff]
    %v591 = vld [vmem:[%s3 + $0x78] sm:$0xff]
    %592 = vmatpush.msra.mxu0 %v591
    %593 = vmatpush.msra.mxu0 %v590
    %594 = vmatpush.msra.mxu0 %v589
    %595 = vmatpush.msra.mxu0 %v588
    %596 = vmatpush.msra.mxu0 %v587
    %597 = vmatpush.msra.mxu0 %v586
    %598 = vmatpush.msra.mxu0 %v585
    %599 = vmatpush.msra.mxu0 %v584
    %600 = vmatpush.msra.mxu0 %v583
    %601 = vmatpush.msra.mxu0 %v582
    %602 = vmatpush.msra.mxu0 %v581
    %603 = vmatpush.msra.mxu0 %v580
    %604 = vmatpush.msra.mxu0 %v579
    %605 = vmatpush.msra.mxu0 %v578
    %606 = vmatpush.msra.mxu0 %v577
    %607 = vmatpush.msra.mxu0 %v576
    %608 = vmatmul.f32.gmra.mxu0 %v544
    %v609 = vpop.f32.mrf.mxu0
    %v610 = vadd.f32 0.0, %v609
    %611 = vmatmul.f32.gmra.mxu0 %v545
    %v612 = vpop.f32.mrf.mxu0
    %v613 = vadd.f32 0.0, %v612
    %614 = vmatmul.f32.gmra.mxu0 %v546
    %v615 = vpop.f32.mrf.mxu0
    %v616 = vadd.f32 0.0, %v615
    %617 = vmatmul.f32.gmra.mxu0 %v547
    %v618 = vpop.f32.mrf.mxu0
    %v619 = vadd.f32 0.0, %v618
    %620 = vmatmul.f32.gmra.mxu0 %v548
    %v621 = vpop.f32.mrf.mxu0
    %v622 = vadd.f32 0.0, %v621
    %623 = vmatmul.f32.gmra.mxu0 %v549
    %v624 = vpop.f32.mrf.mxu0
    %v625 = vadd.f32 0.0, %v624
    %626 = vmatmul.f32.gmra.mxu0 %v550
    %v627 = vpop.f32.mrf.mxu0
    %v628 = vadd.f32 0.0, %v627
    %629 = vmatmul.f32.gmra.mxu0 %v551
    %v630 = vpop.f32.mrf.mxu0
    %v631 = vadd.f32 0.0, %v630
    %632 = vmatmul.f32.gmra.mxu0 %v552
    %v633 = vpop.f32.mrf.mxu0
    %v634 = vadd.f32 0.0, %v633
    %635 = vmatmul.f32.gmra.mxu0 %v553
    %v636 = vpop.f32.mrf.mxu0
    %v637 = vadd.f32 0.0, %v636
    %638 = vmatmul.f32.gmra.mxu0 %v554
    %v639 = vpop.f32.mrf.mxu0
    %v640 = vadd.f32 0.0, %v639
    %641 = vmatmul.f32.gmra.mxu0 %v555
    %v642 = vpop.f32.mrf.mxu0
    %v643 = vadd.f32 0.0, %v642
    %644 = vmatmul.f32.gmra.mxu0 %v556
    %v645 = vpop.f32.mrf.mxu0
    %v646 = vadd.f32 0.0, %v645
    %647 = vmatmul.f32.gmra.mxu0 %v557
    %v648 = vpop.f32.mrf.mxu0
    %v649 = vadd.f32 0.0, %v648
    %650 = vmatmul.f32.gmra.mxu0 %v558
    %v651 = vpop.f32.mrf.mxu0
    %v652 = vadd.f32 0.0, %v651
    %653 = vmatmul.f32.gmra.mxu0 %v559
    %v654 = vpop.f32.mrf.mxu0
    %v655 = vadd.f32 0.0, %v654
    %656 = vmatmul.f32.gmra.mxu0 %v560
    %v657 = vpop.f32.mrf.mxu0
    %v658 = vadd.f32 0.0, %v657
    %659 = vmatmul.f32.gmra.mxu0 %v561
    %v660 = vpop.f32.mrf.mxu0
    %v661 = vadd.f32 0.0, %v660
    %662 = vmatmul.f32.gmra.mxu0 %v562
    %v663 = vpop.f32.mrf.mxu0
    %v664 = vadd.f32 0.0, %v663
    %665 = vmatmul.f32.gmra.mxu0 %v563
    %v666 = vpop.f32.mrf.mxu0
    %v667 = vadd.f32 0.0, %v666
    %668 = vmatmul.f32.gmra.mxu0 %v564
    %v669 = vpop.f32.mrf.mxu0
    %v670 = vadd.f32 0.0, %v669
    %671 = vmatmul.f32.gmra.mxu0 %v565
    %v672 = vpop.f32.mrf.mxu0
    %v673 = vadd.f32 0.0, %v672
    %674 = vmatmul.f32.gmra.mxu0 %v566
    %v675 = vpop.f32.mrf.mxu0
    %v676 = vadd.f32 0.0, %v675
    %677 = vmatmul.f32.gmra.mxu0 %v567
    %v678 = vpop.f32.mrf.mxu0
    %v679 = vadd.f32 0.0, %v678
    %680 = vmatmul.f32.gmra.mxu0 %v568
    %v681 = vpop.f32.mrf.mxu0
    %v682 = vadd.f32 0.0, %v681
    %683 = vmatmul.f32.gmra.mxu0 %v569
    %v684 = vpop.f32.mrf.mxu0
    %v685 = vadd.f32 0.0, %v684
    %686 = vmatmul.f32.gmra.mxu0 %v570
    %v687 = vpop.f32.mrf.mxu0
    %v688 = vadd.f32 0.0, %v687
    %689 = vmatmul.f32.gmra.mxu0 %v571
    %v690 = vpop.f32.mrf.mxu0
    %v691 = vadd.f32 0.0, %v690
    %692 = vmatmul.f32.gmra.mxu0 %v572
    %v693 = vpop.f32.mrf.mxu0
    %v694 = vadd.f32 0.0, %v693
    %695 = vmatmul.f32.gmra.mxu0 %v573
    %v696 = vpop.f32.mrf.mxu0
    %v697 = vadd.f32 0.0, %v696
    %698 = vmatmul.f32.gmra.mxu0 %v574
    %v699 = vpop.f32.mrf.mxu0
    %v700 = vadd.f32 0.0, %v699
    %701 = vmatmul.f32.gmra.mxu0 %v575
    %v702 = vpop.f32.mrf.mxu0
    %v703 = vadd.f32 0.0, %v702
    %704 = vdwg.mxu0
    %705 = vst [vmem:[%s4] sm:$0xff] %v610
    %706 = vst [vmem:[%s4 + $0x8] sm:$0xff] %v613
    %707 = vst [vmem:[%s4 + $0x10] sm:$0xff] %v616
    %708 = vst [vmem:[%s4 + $0x18] sm:$0xff] %v619
    %709 = vst [vmem:[%s4 + $0x20] sm:$0xff] %v622
    %710 = vst [vmem:[%s4 + $0x28] sm:$0xff] %v625
    %711 = vst [vmem:[%s4 + $0x30] sm:$0xff] %v628
    %712 = vst [vmem:[%s4 + $0x38] sm:$0xff] %v631
    %713 = vst [vmem:[%s4 + $0x40] sm:$0xff] %v634
    %714 = vst [vmem:[%s4 + $0x48] sm:$0xff] %v637
    %715 = vst [vmem:[%s4 + $0x50] sm:$0xff] %v640
    %716 = vst [vmem:[%s4 + $0x58] sm:$0xff] %v643
    %717 = vst [vmem:[%s4 + $0x60] sm:$0xff] %v646
    %718 = vst [vmem:[%s4 + $0x68] sm:$0xff] %v649
    %719 = vst [vmem:[%s4 + $0x70] sm:$0xff] %v652
    %720 = vst [vmem:[%s4 + $0x78] sm:$0xff] %v655
    %721 = vst [vmem:[%s4 + $0x80] sm:$0xff] %v658
    %722 = vst [vmem:[%s4 + $0x88] sm:$0xff] %v661
    %723 = vst [vmem:[%s4 + $0x90] sm:$0xff] %v664
    %724 = vst [vmem:[%s4 + $0x98] sm:$0xff] %v667
    %725 = vst [vmem:[%s4 + $0xa0] sm:$0xff] %v670
    %726 = vst [vmem:[%s4 + $0xa8] sm:$0xff] %v673
    %727 = vst [vmem:[%s4 + $0xb0] sm:$0xff] %v676
    %728 = vst [vmem:[%s4 + $0xb8] sm:$0xff] %v679
    %729 = vst [vmem:[%s4 + $0xc0] sm:$0xff] %v682
    %730 = vst [vmem:[%s4 + $0xc8] sm:$0xff] %v685
    %731 = vst [vmem:[%s4 + $0xd0] sm:$0xff] %v688
    %732 = vst [vmem:[%s4 + $0xd8] sm:$0xff] %v691
    %733 = vst [vmem:[%s4 + $0xe0] sm:$0xff] %v694
    %734 = vst [vmem:[%s4 + $0xe8] sm:$0xff] %v697
    %735 = vst [vmem:[%s4 + $0xf0] sm:$0xff] %v700
    %736 = vst [vmem:[%s4 + $0xf8] sm:$0xff] %v703
  $region25: #{ocr_multimodal_forward.5} parent=0 // pred_fallthru
    _
  // Predicated region
  $region26: #{ocr_multimodal_forward.5} parent=0 // pred_check
    _
  $region27: #{ocr_multimodal_forward.5} parent=0 // pred_check_branch
    %738 = sbr.rel (0) target = $region29
  $region28: #{ocr_multimodal_forward.5} parent=0 // pred_region
    _
  $region29: #{ocr_multimodal_forward.5} parent=0 // pred_fallthru
    _
  // Predicated region
  $region30: #{ocr_multimodal_forward.5} parent=0 // pred_check
    _
  $region31: #{ocr_multimodal_forward.5} parent=0 // pred_check_branch
    %740 = sbr.rel (0) target = $region33
  $region32: #{ocr_multimodal_forward.5} parent=0 // pred_region
    _
  $region33: #{ocr_multimodal_forward.5} parent=0 // pred_fallthru
    _

// kernel: ocr_multimodal_forward.7
$region0: #{ocr_multimodal_forward.7}
  #allocation0 [shape = 'u32[]', space=smem, size = 0x4, offset = 0x4, fixed_abs, tag = 'smem constant byte address 0x4 - core index']
  #allocation1 [shape = 'u32[72,128]{1,0:T(1,128)}', space=vmem, size = 0x9000, scoped, tag = 'internal scratch']
  %s0 = inlined_call_operand.vmem [shape: f32[7], index: 0, kind: input, shape index: {}]
  %s1 = inlined_call_operand.vmem [shape: f32[256,64], index: 1, kind: input, shape index: {}]
  %s2 = inlined_call_operand.vmem [shape: f32[256,1000], index: 2, kind: input, shape index: {}]
  %s3 = inlined_call_operand.vmem [shape: f32[256,1000], index: 3, kind: input, shape index: {}]
  %s4 = inlined_call_operand.vmem [shape: f32[256,300], index: 4, kind: input, shape index: {}]
  %s5 = inlined_call_operand.vmem [shape: f32[256,64], index: 5, kind: input, shape index: {}]
  %s6 = inlined_call_operand.vmem [shape: f32[256,64], index: 6, kind: input, shape index: {}]
  %s7 = inlined_call_operand.vmem [shape: f32[256,128], index: 7, kind: input, shape index: {}]
  %s8 = inlined_call_operand.vmem [shape: f32[64,32], index: 8, kind: input, shape index: {}]
  %s9 = inlined_call_operand.vmem [shape: f32[1,32], index: 9, kind: input, shape index: {}]
  %s10 = inlined_call_operand.vmem [shape: f32[1000,32], index: 10, kind: input, shape index: {}]
  %s11 = inlined_call_operand.vmem [shape: f32[1,32], index: 11, kind: input, shape index: {}]
  %s12 = inlined_call_operand.vmem [shape: f32[1000,32], index: 12, kind: input, shape index: {}]
  %s13 = inlined_call_operand.vmem [shape: f32[1,32], index: 13, kind: input, shape index: {}]
  %s14 = inlined_call_operand.vmem [shape: f32[300,32], index: 14, kind: input, shape index: {}]
  %s15 = inlined_call_operand.vmem [shape: f32[1,32], index: 15, kind: input, shape index: {}]
  %s16 = inlined_call_operand.vmem [shape: f32[64,32], index: 16, kind: input, shape index: {}]
  %s17 = inlined_call_operand.vmem [shape: f32[1,32], index: 17, kind: input, shape index: {}]
  %s18 = inlined_call_operand.vmem [shape: f32[64,100], index: 18, kind: input, shape index: {}]
  %s19 = inlined_call_operand.vmem [shape: f32[1,100], index: 19, kind: input, shape index: {}]
  %s20 = inlined_call_operand.vmem [shape: f32[256,384], index: 20, kind: output, shape index: {0}]
  %s21 = inlined_call_operand.vmem [shape: f32[256,384], index: 21, kind: output, shape index: {1}]
  %22 = xla_tuple %s20, %s21
  %s23 = sld [smem:[#allocation0]]
  $region102: #{ocr_multimodal_forward.7} parent=0
    _
  %s25 = ssub.s32 1, %s23
  %s26 = scalar_select 0, %s25, %s23
  $region1: #{ocr_multimodal_forward.7} parent=0
    #allocation2 [shape = 'u8[512]{0}', space=smem, size = 0x200, scoped, tag = 'input window, operand 0, single buffered']
    #allocation3 [shape = 's32[1]{0}', space=sflag, size = 0x4, scoped, tag = 'scoped memory for ocr_multimodal_forward.7']
    %27 = vsyncpa [#allocation3], 0
    // Predicated region
    $region2: #{ocr_multimodal_forward.7} parent=1 // pred_check
      _
    $region3: #{ocr_multimodal_forward.7} parent=1 // pred_check_branch
      %29 = sbr.rel (0) target = $region5
    $region4: #{ocr_multimodal_forward.7} parent=1 // pred_region
      %31 = vsyncadd [#allocation3], 0
      %s33 = sshll.u32 %s0, 4
      %s34 = int_to_ptr.vmem [resolvable:$true] %s33
      %36 = dma.vmem_to_smem %s34, 16, [#allocation2], [#allocation3]
    $region5: #{ocr_multimodal_forward.7} parent=1 // pred_fallthru
      _
    // Predicated region
    $region6: #{ocr_multimodal_forward.7} parent=1 // pred_check
      _
    $region7: #{ocr_multimodal_forward.7} parent=1 // pred_check_branch
      %38 = sbr.rel (0) target = $region9
    $region8: #{ocr_multimodal_forward.7} parent=1 // pred_region
      _
    $region9: #{ocr_multimodal_forward.7} parent=1 // pred_fallthru
      _
    // Predicated region
    $region10: #{ocr_multimodal_forward.7} parent=1 // pred_check
      _
    $region11: #{ocr_multimodal_forward.7} parent=1 // pred_check_branch
      %40 = sbr.rel (0) target = $region13
    $region12: #{ocr_multimodal_forward.7} parent=1 // pred_region
      _
    $region13: #{ocr_multimodal_forward.7} parent=1 // pred_fallthru
      _
    // Predicated region
    $region14: #{ocr_multimodal_forward.7} parent=1 // pred_check
      _
    $region15: #{ocr_multimodal_forward.7} parent=1 // pred_check_branch
      %42 = sbr.rel (0) target = $region17
    $region16: #{ocr_multimodal_forward.7} parent=1 // pred_region
      _
    $region17: #{ocr_multimodal_forward.7} parent=1 // pred_fallthru
      _
    // Predicated region
    $region18: #{ocr_multimodal_forward.7} parent=1 // pred_check
      _
    $region19: #{ocr_multimodal_forward.7} parent=1 // pred_check_branch
      %44 = sbr.rel (0) target = $region21
    $region20: #{ocr_multimodal_forward.7} parent=1 // pred_region
      _
    $region21: #{ocr_multimodal_forward.7} parent=1 // pred_fallthru
      _
    // Predicated region
    $region22: #{ocr_multimodal_forward.7} parent=1 // pred_check
      _
    $region23: #{ocr_multimodal_forward.7} parent=1 // pred_check_branch
      %46 = sbr.rel (0) target = $region25
    $region24: #{ocr_multimodal_forward.7} parent=1 // pred_region
      _
    $region25: #{ocr_multimodal_forward.7} parent=1 // pred_fallthru
      _
    // Predicated region
    $region26: #{ocr_multimodal_forward.7} parent=1 // pred_check
      _
    $region27: #{ocr_multimodal_forward.7} parent=1 // pred_check_branch
      %48 = sbr.rel (0) target = $region29
    $region28: #{ocr_multimodal_forward.7} parent=1 // pred_region
      _
    $region29: #{ocr_multimodal_forward.7} parent=1 // pred_fallthru
      _
    // Predicated region
    $region30: #{ocr_multimodal_forward.7} parent=1 // pred_check
      _
    $region31: #{ocr_multimodal_forward.7} parent=1 // pred_check_branch
      %50 = sbr.rel (0) target = $region33
    $region32: #{ocr_multimodal_forward.7} parent=1 // pred_region
      _
    $region33: #{ocr_multimodal_forward.7} parent=1 // pred_fallthru
      _
    // Predicated region
    $region34: #{ocr_multimodal_forward.7} parent=1 // pred_check
      _
    $region35: #{ocr_multimodal_forward.7} parent=1 // pred_check_branch
      %52 = sbr.rel (0) target = $region37
    $region36: #{ocr_multimodal_forward.7} parent=1 // pred_region
      _
    $region37: #{ocr_multimodal_forward.7} parent=1 // pred_fallthru
      _
    // Predicated region
    $region38: #{ocr_multimodal_forward.7} parent=1 // pred_check
      _
    $region39: #{ocr_multimodal_forward.7} parent=1 // pred_check_branch
      %54 = sbr.rel (0) target = $region41
    $region40: #{ocr_multimodal_forward.7} parent=1 // pred_region
      _
    $region41: #{ocr_multimodal_forward.7} parent=1 // pred_fallthru
      _
    // Predicated region
    $region42: #{ocr_multimodal_forward.7} parent=1 // pred_check
      _
    $region43: #{ocr_multimodal_forward.7} parent=1 // pred_check_branch
      %56 = sbr.rel (0) target = $region45
    $region44: #{ocr_multimodal_forward.7} parent=1 // pred_region
      _
    $region45: #{ocr_multimodal_forward.7} parent=1 // pred_fallthru
      _
    // Predicated region
    $region46: #{ocr_multimodal_forward.7} parent=1 // pred_check
      _
    $region47: #{ocr_multimodal_forward.7} parent=1 // pred_check_branch
      %58 = sbr.rel (0) target = $region49
    $region48: #{ocr_multimodal_forward.7} parent=1 // pred_region
      _
    $region49: #{ocr_multimodal_forward.7} parent=1 // pred_fallthru
      _
    // Predicated region
    $region50: #{ocr_multimodal_forward.7} parent=1 // pred_check
      _
    $region51: #{ocr_multimodal_forward.7} parent=1 // pred_check_branch
      %60 = sbr.rel (0) target = $region53
    $region52: #{ocr_multimodal_forward.7} parent=1 // pred_region
      _
    $region53: #{ocr_multimodal_forward.7} parent=1 // pred_fallthru
      _
    // Predicated region
    $region54: #{ocr_multimodal_forward.7} parent=1 // pred_check
      _
    $region55: #{ocr_multimodal_forward.7} parent=1 // pred_check_branch
      %62 = sbr.rel (0) target = $region57
    $region56: #{ocr_multimodal_forward.7} parent=1 // pred_region
      _
    $region57: #{ocr_multimodal_forward.7} parent=1 // pred_fallthru
      _
    // Predicated region
    $region58: #{ocr_multimodal_forward.7} parent=1 // pred_check
      _
    $region59: #{ocr_multimodal_forward.7} parent=1 // pred_check_branch
      %64 = sbr.rel (0) target = $region61
    $region60: #{ocr_multimodal_forward.7} parent=1 // pred_region
      _
    $region61: #{ocr_multimodal_forward.7} parent=1 // pred_fallthru
      _
    // Predicated region
    $region62: #{ocr_multimodal_forward.7} parent=1 // pred_check
      _
    $region63: #{ocr_multimodal_forward.7} parent=1 // pred_check_branch
      %66 = sbr.rel (0) target = $region65
    $region64: #{ocr_multimodal_forward.7} parent=1 // pred_region
      _
    $region65: #{ocr_multimodal_forward.7} parent=1 // pred_fallthru
      _
    // Predicated region
    $region66: #{ocr_multimodal_forward.7} parent=1 // pred_check
      _
    $region67: #{ocr_multimodal_forward.7} parent=1 // pred_check_branch
      %68 = sbr.rel (0) target = $region69
    $region68: #{ocr_multimodal_forward.7} parent=1 // pred_region
      _
    $region69: #{ocr_multimodal_forward.7} parent=1 // pred_fallthru
      _
    // Predicated region
    $region70: #{ocr_multimodal_forward.7} parent=1 // pred_check
      _
    $region71: #{ocr_multimodal_forward.7} parent=1 // pred_check_branch
      %70 = sbr.rel (0) target = $region73
    $region72: #{ocr_multimodal_forward.7} parent=1 // pred_region
      _
    $region73: #{ocr_multimodal_forward.7} parent=1 // pred_fallthru
      _
    // Predicated region
    $region74: #{ocr_multimodal_forward.7} parent=1 // pred_check
      _
    $region75: #{ocr_multimodal_forward.7} parent=1 // pred_check_branch
      %72 = sbr.rel (0) target = $region77
    $region76: #{ocr_multimodal_forward.7} parent=1 // pred_region
      _
    $region77: #{ocr_multimodal_forward.7} parent=1 // pred_fallthru
      _
    // Predicated region
    $region78: #{ocr_multimodal_forward.7} parent=1 // pred_check
      _
    $region79: #{ocr_multimodal_forward.7} parent=1 // pred_check_branch
      %74 = sbr.rel (0) target = $region81
    $region80: #{ocr_multimodal_forward.7} parent=1 // pred_region
      _
    $region81: #{ocr_multimodal_forward.7} parent=1 // pred_fallthru
      _
    // Predicated region
    $region82: #{ocr_multimodal_forward.7} parent=1 // pred_check
      _
    $region83: #{ocr_multimodal_forward.7} parent=1 // pred_check_branch
      %76 = sbr.rel (0) target = $region85
    $region84: #{ocr_multimodal_forward.7} parent=1 // pred_region
      %78 = dma.done [#allocation3], 16
    $region85: #{ocr_multimodal_forward.7} parent=1 // pred_fallthru
      _
    %79 = sfence
    %v80 = vld [vmem:[%s1] sm:$0xff]
    %v81 = vld [vmem:[%s1 + $0x8] sm:$0xff]
    %v82 = vld [vmem:[%s1 + $0x10] sm:$0xff]
    %v83 = vld [vmem:[%s1 + $0x18] sm:$0xff]
    %v84 = vld [vmem:[%s1 + $0x20] sm:$0xff]
    %v85 = vld [vmem:[%s1 + $0x28] sm:$0xff]
    %v86 = vld [vmem:[%s1 + $0x30] sm:$0xff]
    %v87 = vld [vmem:[%s1 + $0x38] sm:$0xff]
    %v88 = vld [vmem:[%s1 + $0x40] sm:$0xff]
    %v89 = vld [vmem:[%s1 + $0x48] sm:$0xff]
    %v90 = vld [vmem:[%s1 + $0x50] sm:$0xff]
    %v91 = vld [vmem:[%s1 + $0x58] sm:$0xff]
    %v92 = vld [vmem:[%s1 + $0x60] sm:$0xff]
    %v93 = vld [vmem:[%s1 + $0x68] sm:$0xff]
    %v94 = vld [vmem:[%s1 + $0x70] sm:$0xff]
    %v95 = vld [vmem:[%s1 + $0x78] sm:$0xff]
    %v96 = vld [vmem:[%s1 + $0x80] sm:$0xff]
    %v97 = vld [vmem:[%s1 + $0x88] sm:$0xff]
    %v98 = vld [vmem:[%s1 + $0x90] sm:$0xff]
    %v99 = vld [vmem:[%s1 + $0x98] sm:$0xff]
    %v100 = vld [vmem:[%s1 + $0xa0] sm:$0xff]
    %v101 = vld [vmem:[%s1 + $0xa8] sm:$0xff]
    %v102 = vld [vmem:[%s1 + $0xb0] sm:$0xff]
    %v103 = vld [vmem:[%s1 + $0xb8] sm:$0xff]
    %v104 = vld [vmem:[%s1 + $0xc0] sm:$0xff]
    %v105 = vld [vmem:[%s1 + $0xc8] sm:$0xff]
    %v106 = vld [vmem:[%s1 + $0xd0] sm:$0xff]
    %v107 = vld [vmem:[%s1 + $0xd8] sm:$0xff]
    %v108 = vld [vmem:[%s1 + $0xe0] sm:$0xff]
    %v109 = vld [vmem:[%s1 + $0xe8] sm:$0xff]
    %v110 = vld [vmem:[%s1 + $0xf0] sm:$0xff]
    %v111 = vld [vmem:[%s1 + $0xf8] sm:$0xff]
    %v112 = vld [vmem:[%s8] sm:$0xff]
    %v113 = vld [vmem:[%s8 + $0x8] sm:$0xff]
    %v114 = vld [vmem:[%s8 + $0x10] sm:$0xff]
    %v115 = vld [vmem:[%s8 + $0x18] sm:$0xff]
    %v116 = vld [vmem:[%s8 + $0x20] sm:$0xff]
    %v117 = vld [vmem:[%s8 + $0x28] sm:$0xff]
    %v118 = vld [vmem:[%s8 + $0x30] sm:$0xff]
    %v119 = vld [vmem:[%s8 + $0x38] sm:$0xff]
    %v120 = vld [vmem:[%s9] sm:$0x1]
    %v122 = vperm.slane %v120, 0
    %vm124 = vcmask 523264
    %v126 = vsel %vm124, %v80, 0
    %v129 = vsel %vm124, %v81, 0
    %v132 = vsel %vm124, %v82, 0
    %v135 = vsel %vm124, %v83, 0
    %v138 = vsel %vm124, %v84, 0
    %v141 = vsel %vm124, %v85, 0
    %v144 = vsel %vm124, %v86, 0
    %v147 = vsel %vm124, %v87, 0
    %v150 = vsel %vm124, %v88, 0
    %v153 = vsel %vm124, %v89, 0
    %v156 = vsel %vm124, %v90, 0
    %v159 = vsel %vm124, %v91, 0
    %v162 = vsel %vm124, %v92, 0
    %v165 = vsel %vm124, %v93, 0
    %v168 = vsel %vm124, %v94, 0
    %v171 = vsel %vm124, %v95, 0
    %v174 = vsel %vm124, %v96, 0
    %v177 = vsel %vm124, %v97, 0
    %v180 = vsel %vm124, %v98, 0
    %v183 = vsel %vm124, %v99, 0
    %v186 = vsel %vm124, %v100, 0
    %v189 = vsel %vm124, %v101, 0
    %v192 = vsel %vm124, %v102, 0
    %v195 = vsel %vm124, %v103, 0
    %v198 = vsel %vm124, %v104, 0
    %v201 = vsel %vm124, %v105, 0
    %v204 = vsel %vm124, %v106, 0
    %v207 = vsel %vm124, %v107, 0
    %v210 = vsel %vm124, %v108, 0
    %v213 = vsel %vm124, %v109, 0
    %v216 = vsel %vm124, %v110, 0
    %v219 = vsel %vm124, %v111, 0
    %221 = vmatpush.msra.mxu0 0.0
    %222 = vmatpush.msra.mxu0 0.0
    %223 = vmatpush.msra.mxu0 0.0
    %224 = vmatpush.msra.mxu0 0.0
    %225 = vmatpush.msra.mxu0 0.0
    %226 = vmatpush.msra.mxu0 0.0
    %227 = vmatpush.msra.mxu0 0.0
    %228 = vmatpush.msra.mxu0 0.0
    %229 = vmatpush.msra.mxu0 %v119
    %230 = vmatpush.msra.mxu0 %v118
    %231 = vmatpush.msra.mxu0 %v117
    %232 = vmatpush.msra.mxu0 %v116
    %233 = vmatpush.msra.mxu0 %v115
    %234 = vmatpush.msra.mxu0 %v114
    %235 = vmatpush.msra.mxu0 %v113
    %236 = vmatpush.msra.mxu0 %v112
    %237 = vmatmul.f32.gmra.mxu0 %v126
    %v238 = vpop.f32.mrf.mxu0
    %v239 = vadd.f32 %v122, %v238
    %240 = vmatmul.f32.gmra.mxu0 %v129
    %v241 = vpop.f32.mrf.mxu0
    %v242 = vadd.f32 %v122, %v241
    %243 = vmatmul.f32.gmra.mxu0 %v132
    %v244 = vpop.f32.mrf.mxu0
    %v245 = vadd.f32 %v122, %v244
    %246 = vmatmul.f32.gmra.mxu0 %v135
    %v247 = vpop.f32.mrf.mxu0
    %v248 = vadd.f32 %v122, %v247
    %249 = vmatmul.f32.gmra.mxu0 %v138
    %v250 = vpop.f32.mrf.mxu0
    %v251 = vadd.f32 %v122, %v250
    %252 = vmatmul.f32.gmra.mxu0 %v141
    %v253 = vpop.f32.mrf.mxu0
    %v254 = vadd.f32 %v122, %v253
    %255 = vmatmul.f32.gmra.mxu0 %v144
    %v256 = vpop.f32.mrf.mxu0
    %v257 = vadd.f32 %v122, %v256
    %258 = vmatmul.f32.gmra.mxu0 %v147
    %v259 = vpop.f32.mrf.mxu0
    %v260 = vadd.f32 %v122, %v259
    %261 = vmatmul.f32.gmra.mxu0 %v150
    %v262 = vpop.f32.mrf.mxu0
    %v263 = vadd.f32 %v122, %v262
    %264 = vmatmul.f32.gmra.mxu0 %v153
    %v265 = vpop.f32.mrf.mxu0
    %v266 = vadd.f32 %v122, %v265
    %267 = vmatmul.f32.gmra.mxu0 %v156
    %v268 = vpop.f32.mrf.mxu0
    %v269 = vadd.f32 %v122, %v268
    %270 = vmatmul.f32.gmra.mxu0 %v159
    %v271 = vpop.f32.mrf.mxu0
    %v272 = vadd.f32 %v122, %v271
    %273 = vmatmul.f32.gmra.mxu0 %v162
    %v274 = vpop.f32.mrf.mxu0
    %v275 = vadd.f32 %v122, %v274
    %276 = vmatmul.f32.gmra.mxu0 %v165
    %v277 = vpop.f32.mrf.mxu0
    %v278 = vadd.f32 %v122, %v277
    %279 = vmatmul.f32.gmra.mxu0 %v168
    %v280 = vpop.f32.mrf.mxu0
    %v281 = vadd.f32 %v122, %v280
    %282 = vmatmul.f32.gmra.mxu0 %v171
    %v283 = vpop.f32.mrf.mxu0
    %v284 = vadd.f32 %v122, %v283
    %285 = vmatmul.f32.gmra.mxu0 %v174
    %v286 = vpop.f32.mrf.mxu0
    %v287 = vadd.f32 %v122, %v286
    %288 = vmatmul.f32.gmra.mxu0 %v177
    %v289 = vpop.f32.mrf.mxu0
    %v290 = vadd.f32 %v122, %v289
    %291 = vmatmul.f32.gmra.mxu0 %v180
    %v292 = vpop.f32.mrf.mxu0
    %v293 = vadd.f32 %v122, %v292
    %294 = vmatmul.f32.gmra.mxu0 %v183
    %v295 = vpop.f32.mrf.mxu0
    %v296 = vadd.f32 %v122, %v295
    %297 = vmatmul.f32.gmra.mxu0 %v186
    %v298 = vpop.f32.mrf.mxu0
    %v299 = vadd.f32 %v122, %v298
    %300 = vmatmul.f32.gmra.mxu0 %v189
    %v301 = vpop.f32.mrf.mxu0
    %v302 = vadd.f32 %v122, %v301
    %303 = vmatmul.f32.gmra.mxu0 %v192
    %v304 = vpop.f32.mrf.mxu0
    %v305 = vadd.f32 %v122, %v304
    %306 = vmatmul.f32.gmra.mxu0 %v195
    %v307 = vpop.f32.mrf.mxu0
    %v308 = vadd.f32 %v122, %v307
    %309 = vmatmul.f32.gmra.mxu0 %v198
    %v310 = vpop.f32.mrf.mxu0
    %v311 = vadd.f32 %v122, %v310
    %312 = vmatmul.f32.gmra.mxu0 %v201
    %v313 = vpop.f32.mrf.mxu0
    %v314 = vadd.f32 %v122, %v313
    %315 = vmatmul.f32.gmra.mxu0 %v204
    %v316 = vpop.f32.mrf.mxu0
    %v317 = vadd.f32 %v122, %v316
    %318 = vmatmul.f32.gmra.mxu0 %v207
    %v319 = vpop.f32.mrf.mxu0
    %v320 = vadd.f32 %v122, %v319
    %321 = vmatmul.f32.gmra.mxu0 %v210
    %v322 = vpop.f32.mrf.mxu0
    %v323 = vadd.f32 %v122, %v322
    %324 = vmatmul.f32.gmra.mxu0 %v213
    %v325 = vpop.f32.mrf.mxu0
    %v326 = vadd.f32 %v122, %v325
    %327 = vmatmul.f32.gmra.mxu0 %v216
    %v328 = vpop.f32.mrf.mxu0
    %v329 = vadd.f32 %v122, %v328
    %330 = vmatmul.f32.gmra.mxu0 %v219
    %v331 = vpop.f32.mrf.mxu0
    %v332 = vadd.f32 %v122, %v331
    %333 = vdwg.mxu0
    %v334 = vld [vmem:[%s2] sm:$0xff]
    %v335 = vld [vmem:[%s2 + $0x8] sm:$0xff]
    %v336 = vld [vmem:[%s2 + $0x10] sm:$0xff]
    %v337 = vld [vmem:[%s2 + $0x18] sm:$0xff]
    %v338 = vld [vmem:[%s2 + $0x20] sm:$0xff]
    %v339 = vld [vmem:[%s2 + $0x28] sm:$0xff]
    %v340 = vld [vmem:[%s2 + $0x30] sm:$0xff]
    %v341 = vld [vmem:[%s2 + $0x38] sm:$0xff]
    %v342 = vld [vmem:[%s2 + $0x40] sm:$0xff]
    %v343 = vld [vmem:[%s2 + $0x48] sm:$0xff]
    %v344 = vld [vmem:[%s2 + $0x50] sm:$0xff]
    %v345 = vld [vmem:[%s2 + $0x58] sm:$0xff]
    %v346 = vld [vmem:[%s2 + $0x60] sm:$0xff]
    %v347 = vld [vmem:[%s2 + $0x68] sm:$0xff]
    %v348 = vld [vmem:[%s2 + $0x70] sm:$0xff]
    %v349 = vld [vmem:[%s2 + $0x78] sm:$0xff]
    %v350 = vld [vmem:[%s2 + $0x80] sm:$0xff]
    %v351 = vld [vmem:[%s2 + $0x88] sm:$0xff]
    %v352 = vld [vmem:[%s2 + $0x90] sm:$0xff]
    %v353 = vld [vmem:[%s2 + $0x98] sm:$0xff]
    %v354 = vld [vmem:[%s2 + $0xa0] sm:$0xff]
    %v355 = vld [vmem:[%s2 + $0xa8] sm:$0xff]
    %v356 = vld [vmem:[%s2 + $0xb0] sm:$0xff]
    %v357 = vld [vmem:[%s2 + $0xb8] sm:$0xff]
    %v358 = vld [vmem:[%s2 + $0xc0] sm:$0xff]
    %v359 = vld [vmem:[%s2 + $0xc8] sm:$0xff]
    %v360 = vld [vmem:[%s2 + $0xd0] sm:$0xff]
    %v361 = vld [vmem:[%s2 + $0xd8] sm:$0xff]
    %v362 = vld [vmem:[%s2 + $0xe0] sm:$0xff]
    %v363 = vld [vmem:[%s2 + $0xe8] sm:$0xff]
    %v364 = vld [vmem:[%s2 + $0xf0] sm:$0xff]
    %v365 = vld [vmem:[%s2 + $0xf8] sm:$0xff]
    %v366 = vld [vmem:[%s2 + $0x100] sm:$0xff]
    %v367 = vld [vmem:[%s2 + $0x108] sm:$0xff]
    %v368 = vld [vmem:[%s2 + $0x110] sm:$0xff]
    %v369 = vld [vmem:[%s2 + $0x118] sm:$0xff]
    %v370 = vld [vmem:[%s2 + $0x120] sm:$0xff]
    %v371 = vld [vmem:[%s2 + $0x128] sm:$0xff]
    %v372 = vld [vmem:[%s2 + $0x130] sm:$0xff]
    %v373 = vld [vmem:[%s2 + $0x138] sm:$0xff]
    %v374 = vld [vmem:[%s2 + $0x140] sm:$0xff]
    %v375 = vld [vmem:[%s2 + $0x148] sm:$0xff]
    %v376 = vld [vmem:[%s2 + $0x150] sm:$0xff]
    %v377 = vld [vmem:[%s2 + $0x158] sm:$0xff]
    %v378 = vld [vmem:[%s2 + $0x160] sm:$0xff]
    %v379 = vld [vmem:[%s2 + $0x168] sm:$0xff]
    %v380 = vld [vmem:[%s2 + $0x170] sm:$0xff]
    %v381 = vld [vmem:[%s2 + $0x178] sm:$0xff]
    %v382 = vld [vmem:[%s2 + $0x180] sm:$0xff]
    %v383 = vld [vmem:[%s2 + $0x188] sm:$0xff]
    %v384 = vld [vmem:[%s2 + $0x190] sm:$0xff]
    %v385 = vld [vmem:[%s2 + $0x198] sm:$0xff]
    %v386 = vld [vmem:[%s2 + $0x1a0] sm:$0xff]
    %v387 = vld [vmem:[%s2 + $0x1a8] sm:$0xff]
    %v388 = vld [vmem:[%s2 + $0x1b0] sm:$0xff]
    %v389 = vld [vmem:[%s2 + $0x1b8] sm:$0xff]
    %v390 = vld [vmem:[%s2 + $0x1c0] sm:$0xff]
    %v391 = vld [vmem:[%s2 + $0x1c8] sm:$0xff]
    %v392 = vld [vmem:[%s2 + $0x1d0] sm:$0xff]
    %v393 = vld [vmem:[%s2 + $0x1d8] sm:$0xff]
    %v394 = vld [vmem:[%s2 + $0x1e0] sm:$0xff]
    %v395 = vld [vmem:[%s2 + $0x1e8] sm:$0xff]
    %v396 = vld [vmem:[%s2 + $0x1f0] sm:$0xff]
    %v397 = vld [vmem:[%s2 + $0x1f8] sm:$0xff]
    %v398 = vld [vmem:[%s2 + $0x200] sm:$0xff]
    %v399 = vld [vmem:[%s2 + $0x208] sm:$0xff]
    %v400 = vld [vmem:[%s2 + $0x210] sm:$0xff]
    %v401 = vld [vmem:[%s2 + $0x218] sm:$0xff]
    %v402 = vld [vmem:[%s2 + $0x220] sm:$0xff]
    %v403 = vld [vmem:[%s2 + $0x228] sm:$0xff]
    %v404 = vld [vmem:[%s2 + $0x230] sm:$0xff]
    %v405 = vld [vmem:[%s2 + $0x238] sm:$0xff]
    %v406 = vld [vmem:[%s2 + $0x240] sm:$0xff]
    %v407 = vld [vmem:[%s2 + $0x248] sm:$0xff]
    %v408 = vld [vmem:[%s2 + $0x250] sm:$0xff]
    %v409 = vld [vmem:[%s2 + $0x258] sm:$0xff]
    %v410 = vld [vmem:[%s2 + $0x260] sm:$0xff]
    %v411 = vld [vmem:[%s2 + $0x268] sm:$0xff]
    %v412 = vld [vmem:[%s2 + $0x270] sm:$0xff]
    %v413 = vld [vmem:[%s2 + $0x278] sm:$0xff]
    %v414 = vld [vmem:[%s2 + $0x280] sm:$0xff]
    %v415 = vld [vmem:[%s2 + $0x288] sm:$0xff]
    %v416 = vld [vmem:[%s2 + $0x290] sm:$0xff]
    %v417 = vld [vmem:[%s2 + $0x298] sm:$0xff]
    %v418 = vld [vmem:[%s2 + $0x2a0] sm:$0xff]
    %v419 = vld [vmem:[%s2 + $0x2a8] sm:$0xff]
    %v420 = vld [vmem:[%s2 + $0x2b0] sm:$0xff]
    %v421 = vld [vmem:[%s2 + $0x2b8] sm:$0xff]
    %v422 = vld [vmem:[%s2 + $0x2c0] sm:$0xff]
    %v423 = vld [vmem:[%s2 + $0x2c8] sm:$0xff]
    %v424 = vld [vmem:[%s2 + $0x2d0] sm:$0xff]
    %v425 = vld [vmem:[%s2 + $0x2d8] sm:$0xff]
    %v426 = vld [vmem:[%s2 + $0x2e0] sm:$0xff]
    %v427 = vld [vmem:[%s2 + $0x2e8] sm:$0xff]
    %v428 = vld [vmem:[%s2 + $0x2f0] sm:$0xff]
    %v429 = vld [vmem:[%s2 + $0x2f8] sm:$0xff]
    %v430 = vld [vmem:[%s2 + $0x300] sm:$0xff]
    %v431 = vld [vmem:[%s2 + $0x308] sm:$0xff]
    %v432 = vld [vmem:[%s2 + $0x310] sm:$0xff]
    %v433 = vld [vmem:[%s2 + $0x318] sm:$0xff]
    %v434 = vld [vmem:[%s2 + $0x320] sm:$0xff]
    %v435 = vld [vmem:[%s2 + $0x328] sm:$0xff]
    %v436 = vld [vmem:[%s2 + $0x330] sm:$0xff]
    %v437 = vld [vmem:[%s2 + $0x338] sm:$0xff]
    %v438 = vld [vmem:[%s2 + $0x340] sm:$0xff]
    %v439 = vld [vmem:[%s2 + $0x348] sm:$0xff]
    %v440 = vld [vmem:[%s2 + $0x350] sm:$0xff]
    %v441 = vld [vmem:[%s2 + $0x358] sm:$0xff]
    %v442 = vld [vmem:[%s2 + $0x360] sm:$0xff]
    %v443 = vld [vmem:[%s2 + $0x368] sm:$0xff]
    %v444 = vld [vmem:[%s2 + $0x370] sm:$0xff]
    %v445 = vld [vmem:[%s2 + $0x378] sm:$0xff]
    %v446 = vld [vmem:[%s2 + $0x380] sm:$0xff]
    %v447 = vld [vmem:[%s2 + $0x388] sm:$0xff]
    %v448 = vld [vmem:[%s2 + $0x390] sm:$0xff]
    %v449 = vld [vmem:[%s2 + $0x398] sm:$0xff]
    %v450 = vld [vmem:[%s2 + $0x3a0] sm:$0xff]
    %v451 = vld [vmem:[%s2 + $0x3a8] sm:$0xff]
    %v452 = vld [vmem:[%s2 + $0x3b0] sm:$0xff]
    %v453 = vld [vmem:[%s2 + $0x3b8] sm:$0xff]
    %v454 = vld [vmem:[%s2 + $0x3c0] sm:$0xff]
    %v455 = vld [vmem:[%s2 + $0x3c8] sm:$0xff]
    %v456 = vld [vmem:[%s2 + $0x3d0] sm:$0xff]
    %v457 = vld [vmem:[%s2 + $0x3d8] sm:$0xff]
    %v458 = vld [vmem:[%s2 + $0x3e0] sm:$0xff]
    %v459 = vld [vmem:[%s2 + $0x3e8] sm:$0xff]
    %v460 = vld [vmem:[%s2 + $0x3f0] sm:$0xff]
    %v461 = vld [vmem:[%s2 + $0x3f8] sm:$0xff]
    %v462 = vld [vmem:[%s2 + $0x400] sm:$0xff]
    %v463 = vld [vmem:[%s2 + $0x408] sm:$0xff]
    %v464 = vld [vmem:[%s2 + $0x410] sm:$0xff]
    %v465 = vld [vmem:[%s2 + $0x418] sm:$0xff]
    %v466 = vld [vmem:[%s2 + $0x420] sm:$0xff]
    %v467 = vld [vmem:[%s2 + $0x428] sm:$0xff]
    %v468 = vld [vmem:[%s2 + $0x430] sm:$0xff]
    %v469 = vld [vmem:[%s2 + $0x438] sm:$0xff]
    %v470 = vld [vmem:[%s2 + $0x440] sm:$0xff]
    %v471 = vld [vmem:[%s2 + $0x448] sm:$0xff]
    %v472 = vld [vmem:[%s2 + $0x450] sm:$0xff]
    %v473 = vld [vmem:[%s2 + $0x458] sm:$0xff]
    %v474 = vld [vmem:[%s2 + $0x460] sm:$0xff]
    %v475 = vld [vmem:[%s2 + $0x468] sm:$0xff]
    %v476 = vld [vmem:[%s2 + $0x470] sm:$0xff]
    %v477 = vld [vmem:[%s2 + $0x478] sm:$0xff]
    %v478 = vld [vmem:[%s2 + $0x480] sm:$0xff]
    %v479 = vld [vmem:[%s2 + $0x488] sm:$0xff]
    %v480 = vld [vmem:[%s2 + $0x490] sm:$0xff]
    %v481 = vld [vmem:[%s2 + $0x498] sm:$0xff]
    %v482 = vld [vmem:[%s2 + $0x4a0] sm:$0xff]
    %v483 = vld [vmem:[%s2 + $0x4a8] sm:$0xff]
    %v484 = vld [vmem:[%s2 + $0x4b0] sm:$0xff]
    %v485 = vld [vmem:[%s2 + $0x4b8] sm:$0xff]
    %v486 = vld [vmem:[%s2 + $0x4c0] sm:$0xff]
    %v487 = vld [vmem:[%s2 + $0x4c8] sm:$0xff]
    %v488 = vld [vmem:[%s2 + $0x4d0] sm:$0xff]
    %v489 = vld [vmem:[%s2 + $0x4d8] sm:$0xff]
    %v490 = vld [vmem:[%s2 + $0x4e0] sm:$0xff]
    %v491 = vld [vmem:[%s2 + $0x4e8] sm:$0xff]
    %v492 = vld [vmem:[%s2 + $0x4f0] sm:$0xff]
    %v493 = vld [vmem:[%s2 + $0x4f8] sm:$0xff]
    %v494 = vld [vmem:[%s2 + $0x500] sm:$0xff]
    %v495 = vld [vmem:[%s2 + $0x508] sm:$0xff]
    %v496 = vld [vmem:[%s2 + $0x510] sm:$0xff]
    %v497 = vld [vmem:[%s2 + $0x518] sm:$0xff]
    %v498 = vld [vmem:[%s2 + $0x520] sm:$0xff]
    %v499 = vld [vmem:[%s2 + $0x528] sm:$0xff]
    %v500 = vld [vmem:[%s2 + $0x530] sm:$0xff]
    %v501 = vld [vmem:[%s2 + $0x538] sm:$0xff]
    %v502 = vld [vmem:[%s2 + $0x540] sm:$0xff]
    %v503 = vld [vmem:[%s2 + $0x548] sm:$0xff]
    %v504 = vld [vmem:[%s2 + $0x550] sm:$0xff]
    %v505 = vld [vmem:[%s2 + $0x558] sm:$0xff]
    %v506 = vld [vmem:[%s2 + $0x560] sm:$0xff]
    %v507 = vld [vmem:[%s2 + $0x568] sm:$0xff]
    %v508 = vld [vmem:[%s2 + $0x570] sm:$0xff]
    %v509 = vld [vmem:[%s2 + $0x578] sm:$0xff]
    %v510 = vld [vmem:[%s2 + $0x580] sm:$0xff]
    %v511 = vld [vmem:[%s2 + $0x588] sm:$0xff]
    %v512 = vld [vmem:[%s2 + $0x590] sm:$0xff]
    %v513 = vld [vmem:[%s2 + $0x598] sm:$0xff]
    %v514 = vld [vmem:[%s2 + $0x5a0] sm:$0xff]
    %v515 = vld [vmem:[%s2 + $0x5a8] sm:$0xff]
    %v516 = vld [vmem:[%s2 + $0x5b0] sm:$0xff]
    %v517 = vld [vmem:[%s2 + $0x5b8] sm:$0xff]
    %v518 = vld [vmem:[%s2 + $0x5c0] sm:$0xff]
    %v519 = vld [vmem:[%s2 + $0x5c8] sm:$0xff]
    %v520 = vld [vmem:[%s2 + $0x5d0] sm:$0xff]
    %v521 = vld [vmem:[%s2 + $0x5d8] sm:$0xff]
    %v522 = vld [vmem:[%s2 + $0x5e0] sm:$0xff]
    %v523 = vld [vmem:[%s2 + $0x5e8] sm:$0xff]
    %v524 = vld [vmem:[%s2 + $0x5f0] sm:$0xff]
    %v525 = vld [vmem:[%s2 + $0x5f8] sm:$0xff]
    %v526 = vld [vmem:[%s2 + $0x600] sm:$0xff]
    %v527 = vld [vmem:[%s2 + $0x608] sm:$0xff]
    %v528 = vld [vmem:[%s2 + $0x610] sm:$0xff]
    %v529 = vld [vmem:[%s2 + $0x618] sm:$0xff]
    %v530 = vld [vmem:[%s2 + $0x620] sm:$0xff]
    %v531 = vld [vmem:[%s2 + $0x628] sm:$0xff]
    %v532 = vld [vmem:[%s2 + $0x630] sm:$0xff]
    %v533 = vld [vmem:[%s2 + $0x638] sm:$0xff]
    %v534 = vld [vmem:[%s2 + $0x640] sm:$0xff]
    %v535 = vld [vmem:[%s2 + $0x648] sm:$0xff]
    %v536 = vld [vmem:[%s2 + $0x650] sm:$0xff]
    %v537 = vld [vmem:[%s2 + $0x658] sm:$0xff]
    %v538 = vld [vmem:[%s2 + $0x660] sm:$0xff]
    %v539 = vld [vmem:[%s2 + $0x668] sm:$0xff]
    %v540 = vld [vmem:[%s2 + $0x670] sm:$0xff]
    %v541 = vld [vmem:[%s2 + $0x678] sm:$0xff]
    %v542 = vld [vmem:[%s2 + $0x680] sm:$0xff]
    %v543 = vld [vmem:[%s2 + $0x688] sm:$0xff]
    %v544 = vld [vmem:[%s2 + $0x690] sm:$0xff]
    %v545 = vld [vmem:[%s2 + $0x698] sm:$0xff]
    %v546 = vld [vmem:[%s2 + $0x6a0] sm:$0xff]
    %v547 = vld [vmem:[%s2 + $0x6a8] sm:$0xff]
    %v548 = vld [vmem:[%s2 + $0x6b0] sm:$0xff]
    %v549 = vld [vmem:[%s2 + $0x6b8] sm:$0xff]
    %v550 = vld [vmem:[%s2 + $0x6c0] sm:$0xff]
    %v551 = vld [vmem:[%s2 + $0x6c8] sm:$0xff]
    %v552 = vld [vmem:[%s2 + $0x6d0] sm:$0xff]
    %v553 = vld [vmem:[%s2 + $0x6d8] sm:$0xff]
    %v554 = vld [vmem:[%s2 + $0x6e0] sm:$0xff]
    %v555 = vld [vmem:[%s2 + $0x6e8] sm:$0xff]
    %v556 = vld [vmem:[%s2 + $0x6f0] sm:$0xff]
    %v557 = vld [vmem:[%s2 + $0x6f8] sm:$0xff]
    %v558 = vld [vmem:[%s2 + $0x700] sm:$0xff]
    %v559 = vld [vmem:[%s2 + $0x708] sm:$0xff]
    %v560 = vld [vmem:[%s2 + $0x710] sm:$0xff]
    %v561 = vld [vmem:[%s2 + $0x718] sm:$0xff]
    %v562 = vld [vmem:[%s2 + $0x720] sm:$0xff]
    %v563 = vld [vmem:[%s2 + $0x728] sm:$0xff]
    %v564 = vld [vmem:[%s2 + $0x730] sm:$0xff]
    %v565 = vld [vmem:[%s2 + $0x738] sm:$0xff]
    %v566 = vld [vmem:[%s2 + $0x740] sm:$0xff]
    %v567 = vld [vmem:[%s2 + $0x748] sm:$0xff]
    %v568 = vld [vmem:[%s2 + $0x750] sm:$0xff]
    %v569 = vld [vmem:[%s2 + $0x758] sm:$0xff]
    %v570 = vld [vmem:[%s2 + $0x760] sm:$0xff]
    %v571 = vld [vmem:[%s2 + $0x768] sm:$0xff]
    %v572 = vld [vmem:[%s2 + $0x770] sm:$0xff]
    %v573 = vld [vmem:[%s2 + $0x778] sm:$0xff]
    %v574 = vld [vmem:[%s2 + $0x780] sm:$0xff]
    %v575 = vld [vmem:[%s2 + $0x788] sm:$0xff]
    %v576 = vld [vmem:[%s2 + $0x790] sm:$0xff]
    %v577 = vld [vmem:[%s2 + $0x798] sm:$0xff]
    %v578 = vld [vmem:[%s2 + $0x7a0] sm:$0xff]
    %v579 = vld [vmem:[%s2 + $0x7a8] sm:$0xff]
    %v580 = vld [vmem:[%s2 + $0x7b0] sm:$0xff]
    %v581 = vld [vmem:[%s2 + $0x7b8] sm:$0xff]
    %v582 = vld [vmem:[%s2 + $0x7c0] sm:$0xff]
    %v583 = vld [vmem:[%s2 + $0x7c8] sm:$0xff]
    %v584 = vld [vmem:[%s2 + $0x7d0] sm:$0xff]
    %v585 = vld [vmem:[%s2 + $0x7d8] sm:$0xff]
    %v586 = vld [vmem:[%s2 + $0x7e0] sm:$0xff]
    %v587 = vld [vmem:[%s2 + $0x7e8] sm:$0xff]
    %v588 = vld [vmem:[%s2 + $0x7f0] sm:$0xff]
    %v589 = vld [vmem:[%s2 + $0x7f8] sm:$0xff]
    %v590 = vld [vmem:[%s10] sm:$0xff]
    %v591 = vld [vmem:[%s10 + $0x8] sm:$0xff]
    %v592 = vld [vmem:[%s10 + $0x10] sm:$0xff]
    %v593 = vld [vmem:[%s10 + $0x18] sm:$0xff]
    %v594 = vld [vmem:[%s10 + $0x20] sm:$0xff]
    %v595 = vld [vmem:[%s10 + $0x28] sm:$0xff]
    %v596 = vld [vmem:[%s10 + $0x30] sm:$0xff]
    %v597 = vld [vmem:[%s10 + $0x38] sm:$0xff]
    %v598 = vld [vmem:[%s10 + $0x40] sm:$0xff]
    %v599 = vld [vmem:[%s10 + $0x48] sm:$0xff]
    %v600 = vld [vmem:[%s10 + $0x50] sm:$0xff]
    %v601 = vld [vmem:[%s10 + $0x58] sm:$0xff]
    %v602 = vld [vmem:[%s10 + $0x60] sm:$0xff]
    %v603 = vld [vmem:[%s10 + $0x68] sm:$0xff]
    %v604 = vld [vmem:[%s10 + $0x70] sm:$0xff]
    %v605 = vld [vmem:[%s10 + $0x78] sm:$0xff]
    %v606 = vld [vmem:[%s10 + $0x80] sm:$0xff]
    %v607 = vld [vmem:[%s10 + $0x88] sm:$0xff]
    %v608 = vld [vmem:[%s10 + $0x90] sm:$0xff]
    %v609 = vld [vmem:[%s10 + $0x98] sm:$0xff]
    %v610 = vld [vmem:[%s10 + $0xa0] sm:$0xff]
    %v611 = vld [vmem:[%s10 + $0xa8] sm:$0xff]
    %v612 = vld [vmem:[%s10 + $0xb0] sm:$0xff]
    %v613 = vld [vmem:[%s10 + $0xb8] sm:$0xff]
    %v614 = vld [vmem:[%s10 + $0xc0] sm:$0xff]
    %v615 = vld [vmem:[%s10 + $0xc8] sm:$0xff]
    %v616 = vld [vmem:[%s10 + $0xd0] sm:$0xff]
    %v617 = vld [vmem:[%s10 + $0xd8] sm:$0xff]
    %v618 = vld [vmem:[%s10 + $0xe0] sm:$0xff]
    %v619 = vld [vmem:[%s10 + $0xe8] sm:$0xff]
    %v620 = vld [vmem:[%s10 + $0xf0] sm:$0xff]
    %v621 = vld [vmem:[%s10 + $0xf8] sm:$0xff]
    %v622 = vld [vmem:[%s10 + $0x100] sm:$0xff]
    %v623 = vld [vmem:[%s10 + $0x108] sm:$0xff]
    %v624 = vld [vmem:[%s10 + $0x110] sm:$0xff]
    %v625 = vld [vmem:[%s10 + $0x118] sm:$0xff]
    %v626 = vld [vmem:[%s10 + $0x120] sm:$0xff]
    %v627 = vld [vmem:[%s10 + $0x128] sm:$0xff]
    %v628 = vld [vmem:[%s10 + $0x130] sm:$0xff]
    %v629 = vld [vmem:[%s10 + $0x138] sm:$0xff]
    %v630 = vld [vmem:[%s10 + $0x140] sm:$0xff]
    %v631 = vld [vmem:[%s10 + $0x148] sm:$0xff]
    %v632 = vld [vmem:[%s10 + $0x150] sm:$0xff]
    %v633 = vld [vmem:[%s10 + $0x158] sm:$0xff]
    %v634 = vld [vmem:[%s10 + $0x160] sm:$0xff]
    %v635 = vld [vmem:[%s10 + $0x168] sm:$0xff]
    %v636 = vld [vmem:[%s10 + $0x170] sm:$0xff]
    %v637 = vld [vmem:[%s10 + $0x178] sm:$0xff]
    %v638 = vld [vmem:[%s10 + $0x180] sm:$0xff]
    %v639 = vld [vmem:[%s10 + $0x188] sm:$0xff]
    %v640 = vld [vmem:[%s10 + $0x190] sm:$0xff]
    %v641 = vld [vmem:[%s10 + $0x198] sm:$0xff]
    %v642 = vld [vmem:[%s10 + $0x1a0] sm:$0xff]
    %v643 = vld [vmem:[%s10 + $0x1a8] sm:$0xff]
    %v644 = vld [vmem:[%s10 + $0x1b0] sm:$0xff]
    %v645 = vld [vmem:[%s10 + $0x1b8] sm:$0xff]
    %v646 = vld [vmem:[%s10 + $0x1c0] sm:$0xff]
    %v647 = vld [vmem:[%s10 + $0x1c8] sm:$0xff]
    %v648 = vld [vmem:[%s10 + $0x1d0] sm:$0xff]
    %v649 = vld [vmem:[%s10 + $0x1d8] sm:$0xff]
    %v650 = vld [vmem:[%s10 + $0x1e0] sm:$0xff]
    %v651 = vld [vmem:[%s10 + $0x1e8] sm:$0xff]
    %v652 = vld [vmem:[%s10 + $0x1f0] sm:$0xff]
    %v653 = vld [vmem:[%s10 + $0x1f8] sm:$0xff]
    %v654 = vld [vmem:[%s10 + $0x200] sm:$0xff]
    %v655 = vld [vmem:[%s10 + $0x208] sm:$0xff]
    %v656 = vld [vmem:[%s10 + $0x210] sm:$0xff]
    %v657 = vld [vmem:[%s10 + $0x218] sm:$0xff]
    %v658 = vld [vmem:[%s10 + $0x220] sm:$0xff]
    %v659 = vld [vmem:[%s10 + $0x228] sm:$0xff]
    %v660 = vld [vmem:[%s10 + $0x230] sm:$0xff]
    %v661 = vld [vmem:[%s10 + $0x238] sm:$0xff]
    %v662 = vld [vmem:[%s10 + $0x240] sm:$0xff]
    %v663 = vld [vmem:[%s10 + $0x248] sm:$0xff]
    %v664 = vld [vmem:[%s10 + $0x250] sm:$0xff]
    %v665 = vld [vmem:[%s10 + $0x258] sm:$0xff]
    %v666 = vld [vmem:[%s10 + $0x260] sm:$0xff]
    %v667 = vld [vmem:[%s10 + $0x268] sm:$0xff]
    %v668 = vld [vmem:[%s10 + $0x270] sm:$0xff]
    %v669 = vld [vmem:[%s10 + $0x278] sm:$0xff]
    %v670 = vld [vmem:[%s10 + $0x280] sm:$0xff]
    %v671 = vld [vmem:[%s10 + $0x288] sm:$0xff]
    %v672 = vld [vmem:[%s10 + $0x290] sm:$0xff]
    %v673 = vld [vmem:[%s10 + $0x298] sm:$0xff]
    %v674 = vld [vmem:[%s10 + $0x2a0] sm:$0xff]
    %v675 = vld [vmem:[%s10 + $0x2a8] sm:$0xff]
    %v676 = vld [vmem:[%s10 + $0x2b0] sm:$0xff]
    %v677 = vld [vmem:[%s10 + $0x2b8] sm:$0xff]
    %v678 = vld [vmem:[%s10 + $0x2c0] sm:$0xff]
    %v679 = vld [vmem:[%s10 + $0x2c8] sm:$0xff]
    %v680 = vld [vmem:[%s10 + $0x2d0] sm:$0xff]
    %v681 = vld [vmem:[%s10 + $0x2d8] sm:$0xff]
    %v682 = vld [vmem:[%s10 + $0x2e0] sm:$0xff]
    %v683 = vld [vmem:[%s10 + $0x2e8] sm:$0xff]
    %v684 = vld [vmem:[%s10 + $0x2f0] sm:$0xff]
    %v685 = vld [vmem:[%s10 + $0x2f8] sm:$0xff]
    %v686 = vld [vmem:[%s10 + $0x300] sm:$0xff]
    %v687 = vld [vmem:[%s10 + $0x308] sm:$0xff]
    %v688 = vld [vmem:[%s10 + $0x310] sm:$0xff]
    %v689 = vld [vmem:[%s10 + $0x318] sm:$0xff]
    %v690 = vld [vmem:[%s10 + $0x320] sm:$0xff]
    %v691 = vld [vmem:[%s10 + $0x328] sm:$0xff]
    %v692 = vld [vmem:[%s10 + $0x330] sm:$0xff]
    %v693 = vld [vmem:[%s10 + $0x338] sm:$0xff]
    %v694 = vld [vmem:[%s10 + $0x340] sm:$0xff]
    %v695 = vld [vmem:[%s10 + $0x348] sm:$0xff]
    %v696 = vld [vmem:[%s10 + $0x350] sm:$0xff]
    %v697 = vld [vmem:[%s10 + $0x358] sm:$0xff]
    %v698 = vld [vmem:[%s10 + $0x360] sm:$0xff]
    %v699 = vld [vmem:[%s10 + $0x368] sm:$0xff]
    %v700 = vld [vmem:[%s10 + $0x370] sm:$0xff]
    %v701 = vld [vmem:[%s10 + $0x378] sm:$0xff]
    %v702 = vld [vmem:[%s10 + $0x380] sm:$0xff]
    %v703 = vld [vmem:[%s10 + $0x388] sm:$0xff]
    %v704 = vld [vmem:[%s10 + $0x390] sm:$0xff]
    %v705 = vld [vmem:[%s10 + $0x398] sm:$0xff]
    %v706 = vld [vmem:[%s10 + $0x3a0] sm:$0xff]
    %v707 = vld [vmem:[%s10 + $0x3a8] sm:$0xff]
    %v708 = vld [vmem:[%s10 + $0x3b0] sm:$0xff]
    %v709 = vld [vmem:[%s10 + $0x3b8] sm:$0xff]
    %v710 = vld [vmem:[%s10 + $0x3c0] sm:$0xff]
    %v711 = vld [vmem:[%s10 + $0x3c8] sm:$0xff]
    %v712 = vld [vmem:[%s10 + $0x3d0] sm:$0xff]
    %v713 = vld [vmem:[%s10 + $0x3d8] sm:$0xff]
    %v714 = vld [vmem:[%s10 + $0x3e0] sm:$0xff]
    %v715 = vld [vmem:[%s11] sm:$0x1]
    %v717 = vperm.slane %v715, 0
    %vm719 = vcmask 850944
    %v721 = vsel %vm719, %v341, 0
    %v724 = vsel %vm719, %v349, 0
    %v727 = vsel %vm719, %v357, 0
    %v730 = vsel %vm719, %v365, 0
    %v733 = vsel %vm719, %v373, 0
    %v736 = vsel %vm719, %v381, 0
    %v739 = vsel %vm719, %v389, 0
    %v742 = vsel %vm719, %v397, 0
    %v745 = vsel %vm719, %v405, 0
    %v748 = vsel %vm719, %v413, 0
    %v751 = vsel %vm719, %v421, 0
    %v754 = vsel %vm719, %v429, 0
    %v757 = vsel %vm719, %v437, 0
    %v760 = vsel %vm719, %v445, 0
    %v763 = vsel %vm719, %v453, 0
    %v766 = vsel %vm719, %v461, 0
    %v769 = vsel %vm719, %v469, 0
    %v772 = vsel %vm719, %v477, 0
    %v775 = vsel %vm719, %v485, 0
    %v778 = vsel %vm719, %v493, 0
    %v781 = vsel %vm719, %v501, 0
    %v784 = vsel %vm719, %v509, 0
    %v787 = vsel %vm719, %v517, 0
    %v790 = vsel %vm719, %v525, 0
    %v793 = vsel %vm719, %v533, 0
    %v796 = vsel %vm719, %v541, 0
    %v799 = vsel %vm719, %v549, 0
    %v802 = vsel %vm719, %v557, 0
    %v805 = vsel %vm719, %v565, 0
    %v808 = vsel %vm719, %v573, 0
    %v811 = vsel %vm719, %v581, 0
    %v814 = vsel %vm719, %v589, 0
    %816 = vmatpush.msra.mxu0 %v605
    %817 = vmatpush.msra.mxu0 %v604
    %818 = vmatpush.msra.mxu0 %v603
    %819 = vmatpush.msra.mxu0 %v602
    %820 = vmatpush.msra.mxu0 %v601
    %821 = vmatpush.msra.mxu0 %v600
    %822 = vmatpush.msra.mxu0 %v599
    %823 = vmatpush.msra.mxu0 %v598
    %824 = vmatpush.msra.mxu0 %v597
    %825 = vmatpush.msra.mxu0 %v596
    %826 = vmatpush.msra.mxu0 %v595
    %827 = vmatpush.msra.mxu0 %v594
    %828 = vmatpush.msra.mxu0 %v593
    %829 = vmatpush.msra.mxu0 %v592
    %830 = vmatpush.msra.mxu0 %v591
    %831 = vmatpush.msra.mxu0 %v590
    %832 = vmatmul.f32.gmra.mxu0 %v334
    %v833 = vpop.f32.mrf.mxu0
    %v834 = vadd.f32 %v717, %v833
    %835 = vmatmul.f32.gmra.mxu0 %v342
    %v836 = vpop.f32.mrf.mxu0
    %v837 = vadd.f32 %v717, %v836
    %838 = vmatmul.f32.gmra.mxu0 %v350
    %v839 = vpop.f32.mrf.mxu0
    %v840 = vadd.f32 %v717, %v839
    %841 = vmatmul.f32.gmra.mxu0 %v358
    %v842 = vpop.f32.mrf.mxu0
    %v843 = vadd.f32 %v717, %v842
    %844 = vmatmul.f32.gmra.mxu0 %v366
    %v845 = vpop.f32.mrf.mxu0
    %v846 = vadd.f32 %v717, %v845
    %847 = vmatmul.f32.gmra.mxu0 %v374
    %v848 = vpop.f32.mrf.mxu0
    %v849 = vadd.f32 %v717, %v848
    %850 = vmatmul.f32.gmra.mxu0 %v382
    %v851 = vpop.f32.mrf.mxu0
    %v852 = vadd.f32 %v717, %v851
    %853 = vmatmul.f32.gmra.mxu0 %v390
    %v854 = vpop.f32.mrf.mxu0
    %v855 = vadd.f32 %v717, %v854
    %856 = vmatmul.f32.gmra.mxu0 %v398
    %v857 = vpop.f32.mrf.mxu0
    %v858 = vadd.f32 %v717, %v857
    %859 = vmatmul.f32.gmra.mxu0 %v406
    %v860 = vpop.f32.mrf.mxu0
    %v861 = vadd.f32 %v717, %v860
    %862 = vmatmul.f32.gmra.mxu0 %v414
    %v863 = vpop.f32.mrf.mxu0
    %v864 = vadd.f32 %v717, %v863
    %865 = vmatmul.f32.gmra.mxu0 %v422
    %v866 = vpop.f32.mrf.mxu0
    %v867 = vadd.f32 %v717, %v866
    %868 = vmatmul.f32.gmra.mxu0 %v430
    %v869 = vpop.f32.mrf.mxu0
    %v870 = vadd.f32 %v717, %v869
    %871 = vmatmul.f32.gmra.mxu0 %v438
    %v872 = vpop.f32.mrf.mxu0
    %v873 = vadd.f32 %v717, %v872
    %874 = vmatmul.f32.gmra.mxu0 %v446
    %v875 = vpop.f32.mrf.mxu0
    %v876 = vadd.f32 %v717, %v875
    %877 = vmatmul.f32.gmra.mxu0 %v454
    %v878 = vpop.f32.mrf.mxu0
    %v879 = vadd.f32 %v717, %v878
    %880 = vmatmul.f32.gmra.mxu0 %v462
    %v881 = vpop.f32.mrf.mxu0
    %v882 = vadd.f32 %v717, %v881
    %883 = vmatmul.f32.gmra.mxu0 %v470
    %v884 = vpop.f32.mrf.mxu0
    %v885 = vadd.f32 %v717, %v884
    %886 = vmatmul.f32.gmra.mxu0 %v478
    %v887 = vpop.f32.mrf.mxu0
    %v888 = vadd.f32 %v717, %v887
    %889 = vmatmul.f32.gmra.mxu0 %v486
    %v890 = vpop.f32.mrf.mxu0
    %v891 = vadd.f32 %v717, %v890
    %892 = vmatmul.f32.gmra.mxu0 %v494
    %v893 = vpop.f32.mrf.mxu0
    %v894 = vadd.f32 %v717, %v893
    %895 = vmatmul.f32.gmra.mxu0 %v502
    %v896 = vpop.f32.mrf.mxu0
    %v897 = vadd.f32 %v717, %v896
    %898 = vmatmul.f32.gmra.mxu0 %v510
    %v899 = vpop.f32.mrf.mxu0
    %v900 = vadd.f32 %v717, %v899
    %901 = vmatmul.f32.gmra.mxu0 %v518
    %v902 = vpop.f32.mrf.mxu0
    %v903 = vadd.f32 %v717, %v902
    %904 = vmatmul.f32.gmra.mxu0 %v526
    %v905 = vpop.f32.mrf.mxu0
    %v906 = vadd.f32 %v717, %v905
    %907 = vmatmul.f32.gmra.mxu0 %v534
    %v908 = vpop.f32.mrf.mxu0
    %v909 = vadd.f32 %v717, %v908
    %910 = vmatmul.f32.gmra.mxu0 %v542
    %v911 = vpop.f32.mrf.mxu0
    %v912 = vadd.f32 %v717, %v911
    %913 = vmatmul.f32.gmra.mxu0 %v550
    %v914 = vpop.f32.mrf.mxu0
    %v915 = vadd.f32 %v717, %v914
    %916 = vmatmul.f32.gmra.mxu0 %v558
    %v917 = vpop.f32.mrf.mxu0
    %v918 = vadd.f32 %v717, %v917
    %919 = vmatmul.f32.gmra.mxu0 %v566
    %v920 = vpop.f32.mrf.mxu0
    %v921 = vadd.f32 %v717, %v920
    %922 = vmatmul.f32.gmra.mxu0 %v574
    %v923 = vpop.f32.mrf.mxu0
    %v924 = vadd.f32 %v717, %v923
    %925 = vmatmul.f32.gmra.mxu0 %v582
    %v926 = vpop.f32.mrf.mxu0
    %v927 = vadd.f32 %v717, %v926
    %928 = vdwg.mxu0
    %929 = vmatpush.msra.mxu0 %v621
    %930 = vmatpush.msra.mxu0 %v620
    %931 = vmatpush.msra.mxu0 %v619
    %932 = vmatpush.msra.mxu0 %v618
    %933 = vmatpush.msra.mxu0 %v617
    %934 = vmatpush.msra.mxu0 %v616
    %935 = vmatpush.msra.mxu0 %v615
    %936 = vmatpush.msra.mxu0 %v614
    %937 = vmatpush.msra.mxu0 %v613
    %938 = vmatpush.msra.mxu0 %v612
    %939 = vmatpush.msra.mxu0 %v611
    %940 = vmatpush.msra.mxu0 %v610
    %941 = vmatpush.msra.mxu0 %v609
    %942 = vmatpush.msra.mxu0 %v608
    %943 = vmatpush.msra.mxu0 %v607
    %944 = vmatpush.msra.mxu0 %v606
    %945 = vmatmul.f32.gmra.mxu0 %v335
    %v946 = vpop.f32.mrf.mxu0
    %v947 = vadd.f32 %v834, %v946
    %948 = vmatmul.f32.gmra.mxu0 %v343
    %v949 = vpop.f32.mrf.mxu0
    %v950 = vadd.f32 %v837, %v949
    %951 = vmatmul.f32.gmra.mxu0 %v351
    %v952 = vpop.f32.mrf.mxu0
    %v953 = vadd.f32 %v840, %v952
    %954 = vmatmul.f32.gmra.mxu0 %v359
    %v955 = vpop.f32.mrf.mxu0
    %v956 = vadd.f32 %v843, %v955
    %957 = vmatmul.f32.gmra.mxu0 %v367
    %v958 = vpop.f32.mrf.mxu0
    %v959 = vadd.f32 %v846, %v958
    %960 = vmatmul.f32.gmra.mxu0 %v375
    %v961 = vpop.f32.mrf.mxu0
    %v962 = vadd.f32 %v849, %v961
    %963 = vmatmul.f32.gmra.mxu0 %v383
    %v964 = vpop.f32.mrf.mxu0
    %v965 = vadd.f32 %v852, %v964
    %966 = vmatmul.f32.gmra.mxu0 %v391
    %v967 = vpop.f32.mrf.mxu0
    %v968 = vadd.f32 %v855, %v967
    %969 = vmatmul.f32.gmra.mxu0 %v399
    %v970 = vpop.f32.mrf.mxu0
    %v971 = vadd.f32 %v858, %v970
    %972 = vmatmul.f32.gmra.mxu0 %v407
    %v973 = vpop.f32.mrf.mxu0
    %v974 = vadd.f32 %v861, %v973
    %975 = vmatmul.f32.gmra.mxu0 %v415
    %v976 = vpop.f32.mrf.mxu0
    %v977 = vadd.f32 %v864, %v976
    %978 = vmatmul.f32.gmra.mxu0 %v423
    %v979 = vpop.f32.mrf.mxu0
    %v980 = vadd.f32 %v867, %v979
    %981 = vmatmul.f32.gmra.mxu0 %v431
    %v982 = vpop.f32.mrf.mxu0
    %v983 = vadd.f32 %v870, %v982
    %984 = vmatmul.f32.gmra.mxu0 %v439
    %v985 = vpop.f32.mrf.mxu0
    %v986 = vadd.f32 %v873, %v985
    %987 = vmatmul.f32.gmra.mxu0 %v447
    %v988 = vpop.f32.mrf.mxu0
    %v989 = vadd.f32 %v876, %v988
    %990 = vmatmul.f32.gmra.mxu0 %v455
    %v991 = vpop.f32.mrf.mxu0
    %v992 = vadd.f32 %v879, %v991
    %993 = vmatmul.f32.gmra.mxu0 %v463
    %v994 = vpop.f32.mrf.mxu0
    %v995 = vadd.f32 %v882, %v994
    %996 = vmatmul.f32.gmra.mxu0 %v471
    %v997 = vpop.f32.mrf.mxu0
    %v998 = vadd.f32 %v885, %v997
    %999 = vmatmul.f32.gmra.mxu0 %v479
    %v1000 = vpop.f32.mrf.mxu0
    %v1001 = vadd.f32 %v888, %v1000
    %1002 = vmatmul.f32.gmra.mxu0 %v487
    %v1003 = vpop.f32.mrf.mxu0
    %v1004 = vadd.f32 %v891, %v1003
    %1005 = vmatmul.f32.gmra.mxu0 %v495
    %v1006 = vpop.f32.mrf.mxu0
    %v1007 = vadd.f32 %v894, %v1006
    %1008 = vmatmul.f32.gmra.mxu0 %v503
    %v1009 = vpop.f32.mrf.mxu0
    %v1010 = vadd.f32 %v897, %v1009
    %1011 = vmatmul.f32.gmra.mxu0 %v511
    %v1012 = vpop.f32.mrf.mxu0
    %v1013 = vadd.f32 %v900, %v1012
    %1014 = vmatmul.f32.gmra.mxu0 %v519
    %v1015 = vpop.f32.mrf.mxu0
    %v1016 = vadd.f32 %v903, %v1015
    %1017 = vmatmul.f32.gmra.mxu0 %v527
    %v1018 = vpop.f32.mrf.mxu0
    %v1019 = vadd.f32 %v906, %v1018
    %1020 = vmatmul.f32.gmra.mxu0 %v535
    %v1021 = vpop.f32.mrf.mxu0
    %v1022 = vadd.f32 %v909, %v1021
    %1023 = vmatmul.f32.gmra.mxu0 %v543
    %v1024 = vpop.f32.mrf.mxu0
    %v1025 = vadd.f32 %v912, %v1024
    %1026 = vmatmul.f32.gmra.mxu0 %v551
    %v1027 = vpop.f32.mrf.mxu0
    %v1028 = vadd.f32 %v915, %v1027
    %1029 = vmatmul.f32.gmra.mxu0 %v559
    %v1030 = vpop.f32.mrf.mxu0
    %v1031 = vadd.f32 %v918, %v1030
    %1032 = vmatmul.f32.gmra.mxu0 %v567
    %v1033 = vpop.f32.mrf.mxu0
    %v1034 = vadd.f32 %v921, %v1033
    %1035 = vmatmul.f32.gmra.mxu0 %v575
    %v1036 = vpop.f32.mrf.mxu0
    %v1037 = vadd.f32 %v924, %v1036
    %1038 = vmatmul.f32.gmra.mxu0 %v583
    %v1039 = vpop.f32.mrf.mxu0
    %v1040 = vadd.f32 %v927, %v1039
    %1041 = vdwg.mxu0
    %1042 = vmatpush.msra.mxu0 %v637
    %1043 = vmatpush.msra.mxu0 %v636
    %1044 = vmatpush.msra.mxu0 %v635
    %1045 = vmatpush.msra.mxu0 %v634
    %1046 = vmatpush.msra.mxu0 %v633
    %1047 = vmatpush.msra.mxu0 %v632
    %1048 = vmatpush.msra.mxu0 %v631
    %1049 = vmatpush.msra.mxu0 %v630
    %1050 = vmatpush.msra.mxu0 %v629
    %1051 = vmatpush.msra.mxu0 %v628
    %1052 = vmatpush.msra.mxu0 %v627
    %1053 = vmatpush.msra.mxu0 %v626
    %1054 = vmatpush.msra.mxu0 %v625
    %1055 = vmatpush.msra.mxu0 %v624
    %1056 = vmatpush.msra.mxu0 %v623
    %1057 = vmatpush.msra.mxu0 %v622
    %1058 = vmatmul.f32.gmra.mxu0 %v336
    %v1059 = vpop.f32.mrf.mxu0
    %v1060 = vadd.f32 %v947, %v1059
    %1061 = vmatmul.f32.gmra.mxu0 %v344
    %v1062 = vpop.f32.mrf.mxu0
    %v1063 = vadd.f32 %v950, %v1062
    %1064 = vmatmul.f32.gmra.mxu0 %v352
    %v1065 = vpop.f32.mrf.mxu0
    %v1066 = vadd.f32 %v953, %v1065
    %1067 = vmatmul.f32.gmra.mxu0 %v360
    %v1068 = vpop.f32.mrf.mxu0
    %v1069 = vadd.f32 %v956, %v1068
    %1070 = vmatmul.f32.gmra.mxu0 %v368
    %v1071 = vpop.f32.mrf.mxu0
    %v1072 = vadd.f32 %v959, %v1071
    %1073 = vmatmul.f32.gmra.mxu0 %v376
    %v1074 = vpop.f32.mrf.mxu0
    %v1075 = vadd.f32 %v962, %v1074
    %1076 = vmatmul.f32.gmra.mxu0 %v384
    %v1077 = vpop.f32.mrf.mxu0
    %v1078 = vadd.f32 %v965, %v1077
    %1079 = vmatmul.f32.gmra.mxu0 %v392
    %v1080 = vpop.f32.mrf.mxu0
    %v1081 = vadd.f32 %v968, %v1080
    %1082 = vmatmul.f32.gmra.mxu0 %v400
    %v1083 = vpop.f32.mrf.mxu0
    %v1084 = vadd.f32 %v971, %v1083
    %1085 = vmatmul.f32.gmra.mxu0 %v408
    %v1086 = vpop.f32.mrf.mxu0
    %v1087 = vadd.f32 %v974, %v1086
    %1088 = vmatmul.f32.gmra.mxu0 %v416
    %v1089 = vpop.f32.mrf.mxu0
    %v1090 = vadd.f32 %v977, %v1089
    %1091 = vmatmul.f32.gmra.mxu0 %v424
    %v1092 = vpop.f32.mrf.mxu0
    %v1093 = vadd.f32 %v980, %v1092
    %1094 = vmatmul.f32.gmra.mxu0 %v432
    %v1095 = vpop.f32.mrf.mxu0
    %v1096 = vadd.f32 %v983, %v1095
    %1097 = vmatmul.f32.gmra.mxu0 %v440
    %v1098 = vpop.f32.mrf.mxu0
    %v1099 = vadd.f32 %v986, %v1098
    %1100 = vmatmul.f32.gmra.mxu0 %v448
    %v1101 = vpop.f32.mrf.mxu0
    %v1102 = vadd.f32 %v989, %v1101
    %1103 = vmatmul.f32.gmra.mxu0 %v456
    %v1104 = vpop.f32.mrf.mxu0
    %v1105 = vadd.f32 %v992, %v1104
    %1106 = vmatmul.f32.gmra.mxu0 %v464
    %v1107 = vpop.f32.mrf.mxu0
    %v1108 = vadd.f32 %v995, %v1107
    %1109 = vmatmul.f32.gmra.mxu0 %v472
    %v1110 = vpop.f32.mrf.mxu0
    %v1111 = vadd.f32 %v998, %v1110
    %1112 = vmatmul.f32.gmra.mxu0 %v480
    %v1113 = vpop.f32.mrf.mxu0
    %v1114 = vadd.f32 %v1001, %v1113
    %1115 = vmatmul.f32.gmra.mxu0 %v488
    %v1116 = vpop.f32.mrf.mxu0
    %v1117 = vadd.f32 %v1004, %v1116
    %1118 = vmatmul.f32.gmra.mxu0 %v496
    %v1119 = vpop.f32.mrf.mxu0
    %v1120 = vadd.f32 %v1007, %v1119
    %1121 = vmatmul.f32.gmra.mxu0 %v504
    %v1122 = vpop.f32.mrf.mxu0
    %v1123 = vadd.f32 %v1010, %v1122
    %1124 = vmatmul.f32.gmra.mxu0 %v512
    %v1125 = vpop.f32.mrf.mxu0
    %v1126 = vadd.f32 %v1013, %v1125
    %1127 = vmatmul.f32.gmra.mxu0 %v520
    %v1128 = vpop.f32.mrf.mxu0
    %v1129 = vadd.f32 %v1016, %v1128
    %1130 = vmatmul.f32.gmra.mxu0 %v528
    %v1131 = vpop.f32.mrf.mxu0
    %v1132 = vadd.f32 %v1019, %v1131
    %1133 = vmatmul.f32.gmra.mxu0 %v536
    %v1134 = vpop.f32.mrf.mxu0
    %v1135 = vadd.f32 %v1022, %v1134
    %1136 = vmatmul.f32.gmra.mxu0 %v544
    %v1137 = vpop.f32.mrf.mxu0
    %v1138 = vadd.f32 %v1025, %v1137
    %1139 = vmatmul.f32.gmra.mxu0 %v552
    %v1140 = vpop.f32.mrf.mxu0
    %v1141 = vadd.f32 %v1028, %v1140
    %1142 = vmatmul.f32.gmra.mxu0 %v560
    %v1143 = vpop.f32.mrf.mxu0
    %v1144 = vadd.f32 %v1031, %v1143
    %1145 = vmatmul.f32.gmra.mxu0 %v568
    %v1146 = vpop.f32.mrf.mxu0
    %v1147 = vadd.f32 %v1034, %v1146
    %1148 = vmatmul.f32.gmra.mxu0 %v576
    %v1149 = vpop.f32.mrf.mxu0
    %v1150 = vadd.f32 %v1037, %v1149
    %1151 = vmatmul.f32.gmra.mxu0 %v584
    %v1152 = vpop.f32.mrf.mxu0
    %v1153 = vadd.f32 %v1040, %v1152
    %1154 = vdwg.mxu0
    %1155 = vmatpush.msra.mxu0 %v653
    %1156 = vmatpush.msra.mxu0 %v652
    %1157 = vmatpush.msra.mxu0 %v651
    %1158 = vmatpush.msra.mxu0 %v650
    %1159 = vmatpush.msra.mxu0 %v649
    %1160 = vmatpush.msra.mxu0 %v648
    %1161 = vmatpush.msra.mxu0 %v647
    %1162 = vmatpush.msra.mxu0 %v646
    %1163 = vmatpush.msra.mxu0 %v645
    %1164 = vmatpush.msra.mxu0 %v644
    %1165 = vmatpush.msra.mxu0 %v643
    %1166 = vmatpush.msra.mxu0 %v642
    %1167 = vmatpush.msra.mxu0 %v641
    %1168 = vmatpush.msra.mxu0 %v640
    %1169 = vmatpush.msra.mxu0 %v639
    %1170 = vmatpush.msra.mxu0 %v638
    %1171 = vmatmul.f32.gmra.mxu0 %v337
    %v1172 = vpop.f32.mrf.mxu0
    %v1173 = vadd.f32 %v1060, %v1172
    %1174 = vmatmul.f32.gmra.mxu0 %v345
    %v1175 = vpop.f32.mrf.mxu0
    %v1176 = vadd.f32 %v1063, %v1175
    %1177 = vmatmul.f32.gmra.mxu0 %v353
    %v1178 = vpop.f32.mrf.mxu0
    %v1179 = vadd.f32 %v1066, %v1178
    %1180 = vmatmul.f32.gmra.mxu0 %v361
    %v1181 = vpop.f32.mrf.mxu0
    %v1182 = vadd.f32 %v1069, %v1181
    %1183 = vmatmul.f32.gmra.mxu0 %v369
    %v1184 = vpop.f32.mrf.mxu0
    %v1185 = vadd.f32 %v1072, %v1184
    %1186 = vmatmul.f32.gmra.mxu0 %v377
    %v1187 = vpop.f32.mrf.mxu0
    %v1188 = vadd.f32 %v1075, %v1187
    %1189 = vmatmul.f32.gmra.mxu0 %v385
    %v1190 = vpop.f32.mrf.mxu0
    %v1191 = vadd.f32 %v1078, %v1190
    %1192 = vmatmul.f32.gmra.mxu0 %v393
    %v1193 = vpop.f32.mrf.mxu0
    %v1194 = vadd.f32 %v1081, %v1193
    %1195 = vmatmul.f32.gmra.mxu0 %v401
    %v1196 = vpop.f32.mrf.mxu0
    %v1197 = vadd.f32 %v1084, %v1196
    %1198 = vmatmul.f32.gmra.mxu0 %v409
    %v1199 = vpop.f32.mrf.mxu0
    %v1200 = vadd.f32 %v1087, %v1199
    %1201 = vmatmul.f32.gmra.mxu0 %v417
    %v1202 = vpop.f32.mrf.mxu0
    %v1203 = vadd.f32 %v1090, %v1202
    %1204 = vmatmul.f32.gmra.mxu0 %v425
    %v1205 = vpop.f32.mrf.mxu0
    %v1206 = vadd.f32 %v1093, %v1205
    %1207 = vmatmul.f32.gmra.mxu0 %v433
    %v1208 = vpop.f32.mrf.mxu0
    %v1209 = vadd.f32 %v1096, %v1208
    %1210 = vmatmul.f32.gmra.mxu0 %v441
    %v1211 = vpop.f32.mrf.mxu0
    %v1212 = vadd.f32 %v1099, %v1211
    %1213 = vmatmul.f32.gmra.mxu0 %v449
    %v1214 = vpop.f32.mrf.mxu0
    %v1215 = vadd.f32 %v1102, %v1214
    %1216 = vmatmul.f32.gmra.mxu0 %v457
    %v1217 = vpop.f32.mrf.mxu0
    %v1218 = vadd.f32 %v1105, %v1217
    %1219 = vmatmul.f32.gmra.mxu0 %v465
    %v1220 = vpop.f32.mrf.mxu0
    %v1221 = vadd.f32 %v1108, %v1220
    %1222 = vmatmul.f32.gmra.mxu0 %v473
    %v1223 = vpop.f32.mrf.mxu0
    %v1224 = vadd.f32 %v1111, %v1223
    %1225 = vmatmul.f32.gmra.mxu0 %v481
    %v1226 = vpop.f32.mrf.mxu0
    %v1227 = vadd.f32 %v1114, %v1226
    %1228 = vmatmul.f32.gmra.mxu0 %v489
    %v1229 = vpop.f32.mrf.mxu0
    %v1230 = vadd.f32 %v1117, %v1229
    %1231 = vmatmul.f32.gmra.mxu0 %v497
    %v1232 = vpop.f32.mrf.mxu0
    %v1233 = vadd.f32 %v1120, %v1232
    %1234 = vmatmul.f32.gmra.mxu0 %v505
    %v1235 = vpop.f32.mrf.mxu0
    %v1236 = vadd.f32 %v1123, %v1235
    %1237 = vmatmul.f32.gmra.mxu0 %v513
    %v1238 = vpop.f32.mrf.mxu0
    %v1239 = vadd.f32 %v1126, %v1238
    %1240 = vmatmul.f32.gmra.mxu0 %v521
    %v1241 = vpop.f32.mrf.mxu0
    %v1242 = vadd.f32 %v1129, %v1241
    %1243 = vmatmul.f32.gmra.mxu0 %v529
    %v1244 = vpop.f32.mrf.mxu0
    %v1245 = vadd.f32 %v1132, %v1244
    %1246 = vmatmul.f32.gmra.mxu0 %v537
    %v1247 = vpop.f32.mrf.mxu0
    %v1248 = vadd.f32 %v1135, %v1247
    %1249 = vmatmul.f32.gmra.mxu0 %v545
    %v1250 = vpop.f32.mrf.mxu0
    %v1251 = vadd.f32 %v1138, %v1250
    %1252 = vmatmul.f32.gmra.mxu0 %v553
    %v1253 = vpop.f32.mrf.mxu0
    %v1254 = vadd.f32 %v1141, %v1253
    %1255 = vmatmul.f32.gmra.mxu0 %v561
    %v1256 = vpop.f32.mrf.mxu0
    %v1257 = vadd.f32 %v1144, %v1256
    %1258 = vmatmul.f32.gmra.mxu0 %v569
    %v1259 = vpop.f32.mrf.mxu0
    %v1260 = vadd.f32 %v1147, %v1259
    %1261 = vmatmul.f32.gmra.mxu0 %v577
    %v1262 = vpop.f32.mrf.mxu0
    %v1263 = vadd.f32 %v1150, %v1262
    %1264 = vmatmul.f32.gmra.mxu0 %v585
    %v1265 = vpop.f32.mrf.mxu0
    %v1266 = vadd.f32 %v1153, %v1265
    %1267 = vdwg.mxu0
    %1268 = vmatpush.msra.mxu0 %v669
    %1269 = vmatpush.msra.mxu0 %v668
    %1270 = vmatpush.msra.mxu0 %v667
    %1271 = vmatpush.msra.mxu0 %v666
    %1272 = vmatpush.msra.mxu0 %v665
    %1273 = vmatpush.msra.mxu0 %v664
    %1274 = vmatpush.msra.mxu0 %v663
    %1275 = vmatpush.msra.mxu0 %v662
    %1276 = vmatpush.msra.mxu0 %v661
    %1277 = vmatpush.msra.mxu0 %v660
    %1278 = vmatpush.msra.mxu0 %v659
    %1279 = vmatpush.msra.mxu0 %v658
    %1280 = vmatpush.msra.mxu0 %v657
    %1281 = vmatpush.msra.mxu0 %v656
    %1282 = vmatpush.msra.mxu0 %v655
    %1283 = vmatpush.msra.mxu0 %v654
    %1284 = vmatmul.f32.gmra.mxu0 %v338
    %v1285 = vpop.f32.mrf.mxu0
    %v1286 = vadd.f32 %v1173, %v1285
    %1287 = vmatmul.f32.gmra.mxu0 %v346
    %v1288 = vpop.f32.mrf.mxu0
    %v1289 = vadd.f32 %v1176, %v1288
    %1290 = vmatmul.f32.gmra.mxu0 %v354
    %v1291 = vpop.f32.mrf.mxu0
    %v1292 = vadd.f32 %v1179, %v1291
    %1293 = vmatmul.f32.gmra.mxu0 %v362
    %v1294 = vpop.f32.mrf.mxu0
    %v1295 = vadd.f32 %v1182, %v1294
    %1296 = vmatmul.f32.gmra.mxu0 %v370
    %v1297 = vpop.f32.mrf.mxu0
    %v1298 = vadd.f32 %v1185, %v1297
    %1299 = vmatmul.f32.gmra.mxu0 %v378
    %v1300 = vpop.f32.mrf.mxu0
    %v1301 = vadd.f32 %v1188, %v1300
    %1302 = vmatmul.f32.gmra.mxu0 %v386
    %v1303 = vpop.f32.mrf.mxu0
    %v1304 = vadd.f32 %v1191, %v1303
    %1305 = vmatmul.f32.gmra.mxu0 %v394
    %v1306 = vpop.f32.mrf.mxu0
    %v1307 = vadd.f32 %v1194, %v1306
    %1308 = vmatmul.f32.gmra.mxu0 %v402
    %v1309 = vpop.f32.mrf.mxu0
    %v1310 = vadd.f32 %v1197, %v1309
    %1311 = vmatmul.f32.gmra.mxu0 %v410
    %v1312 = vpop.f32.mrf.mxu0
    %v1313 = vadd.f32 %v1200, %v1312
    %1314 = vmatmul.f32.gmra.mxu0 %v418
    %v1315 = vpop.f32.mrf.mxu0
    %v1316 = vadd.f32 %v1203, %v1315
    %1317 = vmatmul.f32.gmra.mxu0 %v426
    %v1318 = vpop.f32.mrf.mxu0
    %v1319 = vadd.f32 %v1206, %v1318
    %1320 = vmatmul.f32.gmra.mxu0 %v434
    %v1321 = vpop.f32.mrf.mxu0
    %v1322 = vadd.f32 %v1209, %v1321
    %1323 = vmatmul.f32.gmra.mxu0 %v442
    %v1324 = vpop.f32.mrf.mxu0
    %v1325 = vadd.f32 %v1212, %v1324
    %1326 = vmatmul.f32.gmra.mxu0 %v450
    %v1327 = vpop.f32.mrf.mxu0
    %v1328 = vadd.f32 %v1215, %v1327
    %1329 = vmatmul.f32.gmra.mxu0 %v458
    %v1330 = vpop.f32.mrf.mxu0
    %v1331 = vadd.f32 %v1218, %v1330
    %1332 = vmatmul.f32.gmra.mxu0 %v466
    %v1333 = vpop.f32.mrf.mxu0
    %v1334 = vadd.f32 %v1221, %v1333
    %1335 = vmatmul.f32.gmra.mxu0 %v474
    %v1336 = vpop.f32.mrf.mxu0
    %v1337 = vadd.f32 %v1224, %v1336
    %1338 = vmatmul.f32.gmra.mxu0 %v482
    %v1339 = vpop.f32.mrf.mxu0
    %v1340 = vadd.f32 %v1227, %v1339
    %1341 = vmatmul.f32.gmra.mxu0 %v490
    %v1342 = vpop.f32.mrf.mxu0
    %v1343 = vadd.f32 %v1230, %v1342
    %1344 = vmatmul.f32.gmra.mxu0 %v498
    %v1345 = vpop.f32.mrf.mxu0
    %v1346 = vadd.f32 %v1233, %v1345
    %1347 = vmatmul.f32.gmra.mxu0 %v506
    %v1348 = vpop.f32.mrf.mxu0
    %v1349 = vadd.f32 %v1236, %v1348
    %1350 = vmatmul.f32.gmra.mxu0 %v514
    %v1351 = vpop.f32.mrf.mxu0
    %v1352 = vadd.f32 %v1239, %v1351
    %1353 = vmatmul.f32.gmra.mxu0 %v522
    %v1354 = vpop.f32.mrf.mxu0
    %v1355 = vadd.f32 %v1242, %v1354
    %1356 = vmatmul.f32.gmra.mxu0 %v530
    %v1357 = vpop.f32.mrf.mxu0
    %v1358 = vadd.f32 %v1245, %v1357
    %1359 = vmatmul.f32.gmra.mxu0 %v538
    %v1360 = vpop.f32.mrf.mxu0
    %v1361 = vadd.f32 %v1248, %v1360
    %1362 = vmatmul.f32.gmra.mxu0 %v546
    %v1363 = vpop.f32.mrf.mxu0
    %v1364 = vadd.f32 %v1251, %v1363
    %1365 = vmatmul.f32.gmra.mxu0 %v554
    %v1366 = vpop.f32.mrf.mxu0
    %v1367 = vadd.f32 %v1254, %v1366
    %1368 = vmatmul.f32.gmra.mxu0 %v562
    %v1369 = vpop.f32.mrf.mxu0
    %v1370 = vadd.f32 %v1257, %v1369
    %1371 = vmatmul.f32.gmra.mxu0 %v570
    %v1372 = vpop.f32.mrf.mxu0
    %v1373 = vadd.f32 %v1260, %v1372
    %1374 = vmatmul.f32.gmra.mxu0 %v578
    %v1375 = vpop.f32.mrf.mxu0
    %v1376 = vadd.f32 %v1263, %v1375
    %1377 = vmatmul.f32.gmra.mxu0 %v586
    %v1378 = vpop.f32.mrf.mxu0
    %v1379 = vadd.f32 %v1266, %v1378
    %1380 = vdwg.mxu0
    %1381 = vmatpush.msra.mxu0 %v685
    %1382 = vmatpush.msra.mxu0 %v684
    %1383 = vmatpush.msra.mxu0 %v683
    %1384 = vmatpush.msra.mxu0 %v682
    %1385 = vmatpush.msra.mxu0 %v681
    %1386 = vmatpush.msra.mxu0 %v680
    %1387 = vmatpush.msra.mxu0 %v679
    %1388 = vmatpush.msra.mxu0 %v678
    %1389 = vmatpush.msra.mxu0 %v677
    %1390 = vmatpush.msra.mxu0 %v676
    %1391 = vmatpush.msra.mxu0 %v675
    %1392 = vmatpush.msra.mxu0 %v674
    %1393 = vmatpush.msra.mxu0 %v673
    %1394 = vmatpush.msra.mxu0 %v672
    %1395 = vmatpush.msra.mxu0 %v671
    %1396 = vmatpush.msra.mxu0 %v670
    %1397 = vmatmul.f32.gmra.mxu0 %v339
    %v1398 = vpop.f32.mrf.mxu0
    %v1399 = vadd.f32 %v1286, %v1398
    %1400 = vmatmul.f32.gmra.mxu0 %v347
    %v1401 = vpop.f32.mrf.mxu0
    %v1402 = vadd.f32 %v1289, %v1401
    %1403 = vmatmul.f32.gmra.mxu0 %v355
    %v1404 = vpop.f32.mrf.mxu0
    %v1405 = vadd.f32 %v1292, %v1404
    %1406 = vmatmul.f32.gmra.mxu0 %v363
    %v1407 = vpop.f32.mrf.mxu0
    %v1408 = vadd.f32 %v1295, %v1407
    %1409 = vmatmul.f32.gmra.mxu0 %v371
    %v1410 = vpop.f32.mrf.mxu0
    %v1411 = vadd.f32 %v1298, %v1410
    %1412 = vmatmul.f32.gmra.mxu0 %v379
    %v1413 = vpop.f32.mrf.mxu0
    %v1414 = vadd.f32 %v1301, %v1413
    %1415 = vmatmul.f32.gmra.mxu0 %v387
    %v1416 = vpop.f32.mrf.mxu0
    %v1417 = vadd.f32 %v1304, %v1416
    %1418 = vmatmul.f32.gmra.mxu0 %v395
    %v1419 = vpop.f32.mrf.mxu0
    %v1420 = vadd.f32 %v1307, %v1419
    %1421 = vmatmul.f32.gmra.mxu0 %v403
    %v1422 = vpop.f32.mrf.mxu0
    %v1423 = vadd.f32 %v1310, %v1422
    %1424 = vmatmul.f32.gmra.mxu0 %v411
    %v1425 = vpop.f32.mrf.mxu0
    %v1426 = vadd.f32 %v1313, %v1425
    %1427 = vmatmul.f32.gmra.mxu0 %v419
    %v1428 = vpop.f32.mrf.mxu0
    %v1429 = vadd.f32 %v1316, %v1428
    %1430 = vmatmul.f32.gmra.mxu0 %v427
    %v1431 = vpop.f32.mrf.mxu0
    %v1432 = vadd.f32 %v1319, %v1431
    %1433 = vmatmul.f32.gmra.mxu0 %v435
    %v1434 = vpop.f32.mrf.mxu0
    %v1435 = vadd.f32 %v1322, %v1434
    %1436 = vmatmul.f32.gmra.mxu0 %v443
    %v1437 = vpop.f32.mrf.mxu0
    %v1438 = vadd.f32 %v1325, %v1437
    %1439 = vmatmul.f32.gmra.mxu0 %v451
    %v1440 = vpop.f32.mrf.mxu0
    %v1441 = vadd.f32 %v1328, %v1440
    %1442 = vmatmul.f32.gmra.mxu0 %v459
    %v1443 = vpop.f32.mrf.mxu0
    %v1444 = vadd.f32 %v1331, %v1443
    %1445 = vmatmul.f32.gmra.mxu0 %v467
    %v1446 = vpop.f32.mrf.mxu0
    %v1447 = vadd.f32 %v1334, %v1446
    %1448 = vmatmul.f32.gmra.mxu0 %v475
    %v1449 = vpop.f32.mrf.mxu0
    %v1450 = vadd.f32 %v1337, %v1449
    %1451 = vmatmul.f32.gmra.mxu0 %v483
    %v1452 = vpop.f32.mrf.mxu0
    %v1453 = vadd.f32 %v1340, %v1452
    %1454 = vmatmul.f32.gmra.mxu0 %v491
    %v1455 = vpop.f32.mrf.mxu0
    %v1456 = vadd.f32 %v1343, %v1455
    %1457 = vmatmul.f32.gmra.mxu0 %v499
    %v1458 = vpop.f32.mrf.mxu0
    %v1459 = vadd.f32 %v1346, %v1458
    %1460 = vmatmul.f32.gmra.mxu0 %v507
    %v1461 = vpop.f32.mrf.mxu0
    %v1462 = vadd.f32 %v1349, %v1461
    %1463 = vmatmul.f32.gmra.mxu0 %v515
    %v1464 = vpop.f32.mrf.mxu0
    %v1465 = vadd.f32 %v1352, %v1464
    %1466 = vmatmul.f32.gmra.mxu0 %v523
    %v1467 = vpop.f32.mrf.mxu0
    %v1468 = vadd.f32 %v1355, %v1467
    %1469 = vmatmul.f32.gmra.mxu0 %v531
    %v1470 = vpop.f32.mrf.mxu0
    %v1471 = vadd.f32 %v1358, %v1470
    %1472 = vmatmul.f32.gmra.mxu0 %v539
    %v1473 = vpop.f32.mrf.mxu0
    %v1474 = vadd.f32 %v1361, %v1473
    %1475 = vmatmul.f32.gmra.mxu0 %v547
    %v1476 = vpop.f32.mrf.mxu0
    %v1477 = vadd.f32 %v1364, %v1476
    %1478 = vmatmul.f32.gmra.mxu0 %v555
    %v1479 = vpop.f32.mrf.mxu0
    %v1480 = vadd.f32 %v1367, %v1479
    %1481 = vmatmul.f32.gmra.mxu0 %v563
    %v1482 = vpop.f32.mrf.mxu0
    %v1483 = vadd.f32 %v1370, %v1482
    %1484 = vmatmul.f32.gmra.mxu0 %v571
    %v1485 = vpop.f32.mrf.mxu0
    %v1486 = vadd.f32 %v1373, %v1485
    %1487 = vmatmul.f32.gmra.mxu0 %v579
    %v1488 = vpop.f32.mrf.mxu0
    %v1489 = vadd.f32 %v1376, %v1488
    %1490 = vmatmul.f32.gmra.mxu0 %v587
    %v1491 = vpop.f32.mrf.mxu0
    %v1492 = vadd.f32 %v1379, %v1491
    %1493 = vdwg.mxu0
    %1494 = vmatpush.msra.mxu0 %v701
    %1495 = vmatpush.msra.mxu0 %v700
    %1496 = vmatpush.msra.mxu0 %v699
    %1497 = vmatpush.msra.mxu0 %v698
    %1498 = vmatpush.msra.mxu0 %v697
    %1499 = vmatpush.msra.mxu0 %v696
    %1500 = vmatpush.msra.mxu0 %v695
    %1501 = vmatpush.msra.mxu0 %v694
    %1502 = vmatpush.msra.mxu0 %v693
    %1503 = vmatpush.msra.mxu0 %v692
    %1504 = vmatpush.msra.mxu0 %v691
    %1505 = vmatpush.msra.mxu0 %v690
    %1506 = vmatpush.msra.mxu0 %v689
    %1507 = vmatpush.msra.mxu0 %v688
    %1508 = vmatpush.msra.mxu0 %v687
    %1509 = vmatpush.msra.mxu0 %v686
    %1510 = vmatmul.f32.gmra.mxu0 %v340
    %v1511 = vpop.f32.mrf.mxu0
    %v1512 = vadd.f32 %v1399, %v1511
    %1513 = vmatmul.f32.gmra.mxu0 %v348
    %v1514 = vpop.f32.mrf.mxu0
    %v1515 = vadd.f32 %v1402, %v1514
    %1516 = vmatmul.f32.gmra.mxu0 %v356
    %v1517 = vpop.f32.mrf.mxu0
    %v1518 = vadd.f32 %v1405, %v1517
    %1519 = vmatmul.f32.gmra.mxu0 %v364
    %v1520 = vpop.f32.mrf.mxu0
    %v1521 = vadd.f32 %v1408, %v1520
    %1522 = vmatmul.f32.gmra.mxu0 %v372
    %v1523 = vpop.f32.mrf.mxu0
    %v1524 = vadd.f32 %v1411, %v1523
    %1525 = vmatmul.f32.gmra.mxu0 %v380
    %v1526 = vpop.f32.mrf.mxu0
    %v1527 = vadd.f32 %v1414, %v1526
    %1528 = vmatmul.f32.gmra.mxu0 %v388
    %v1529 = vpop.f32.mrf.mxu0
    %v1530 = vadd.f32 %v1417, %v1529
    %1531 = vmatmul.f32.gmra.mxu0 %v396
    %v1532 = vpop.f32.mrf.mxu0
    %v1533 = vadd.f32 %v1420, %v1532
    %1534 = vmatmul.f32.gmra.mxu0 %v404
    %v1535 = vpop.f32.mrf.mxu0
    %v1536 = vadd.f32 %v1423, %v1535
    %1537 = vmatmul.f32.gmra.mxu0 %v412
    %v1538 = vpop.f32.mrf.mxu0
    %v1539 = vadd.f32 %v1426, %v1538
    %1540 = vmatmul.f32.gmra.mxu0 %v420
    %v1541 = vpop.f32.mrf.mxu0
    %v1542 = vadd.f32 %v1429, %v1541
    %1543 = vmatmul.f32.gmra.mxu0 %v428
    %v1544 = vpop.f32.mrf.mxu0
    %v1545 = vadd.f32 %v1432, %v1544
    %1546 = vmatmul.f32.gmra.mxu0 %v436
    %v1547 = vpop.f32.mrf.mxu0
    %v1548 = vadd.f32 %v1435, %v1547
    %1549 = vmatmul.f32.gmra.mxu0 %v444
    %v1550 = vpop.f32.mrf.mxu0
    %v1551 = vadd.f32 %v1438, %v1550
    %1552 = vmatmul.f32.gmra.mxu0 %v452
    %v1553 = vpop.f32.mrf.mxu0
    %v1554 = vadd.f32 %v1441, %v1553
    %1555 = vmatmul.f32.gmra.mxu0 %v460
    %v1556 = vpop.f32.mrf.mxu0
    %v1557 = vadd.f32 %v1444, %v1556
    %1558 = vmatmul.f32.gmra.mxu0 %v468
    %v1559 = vpop.f32.mrf.mxu0
    %v1560 = vadd.f32 %v1447, %v1559
    %1561 = vmatmul.f32.gmra.mxu0 %v476
    %v1562 = vpop.f32.mrf.mxu0
    %v1563 = vadd.f32 %v1450, %v1562
    %1564 = vmatmul.f32.gmra.mxu0 %v484
    %v1565 = vpop.f32.mrf.mxu0
    %v1566 = vadd.f32 %v1453, %v1565
    %1567 = vmatmul.f32.gmra.mxu0 %v492
    %v1568 = vpop.f32.mrf.mxu0
    %v1569 = vadd.f32 %v1456, %v1568
    %1570 = vmatmul.f32.gmra.mxu0 %v500
    %v1571 = vpop.f32.mrf.mxu0
    %v1572 = vadd.f32 %v1459, %v1571
    %1573 = vmatmul.f32.gmra.mxu0 %v508
    %v1574 = vpop.f32.mrf.mxu0
    %v1575 = vadd.f32 %v1462, %v1574
    %1576 = vmatmul.f32.gmra.mxu0 %v516
    %v1577 = vpop.f32.mrf.mxu0
    %v1578 = vadd.f32 %v1465, %v1577
    %1579 = vmatmul.f32.gmra.mxu0 %v524
    %v1580 = vpop.f32.mrf.mxu0
    %v1581 = vadd.f32 %v1468, %v1580
    %1582 = vmatmul.f32.gmra.mxu0 %v532
    %v1583 = vpop.f32.mrf.mxu0
    %v1584 = vadd.f32 %v1471, %v1583
    %1585 = vmatmul.f32.gmra.mxu0 %v540
    %v1586 = vpop.f32.mrf.mxu0
    %v1587 = vadd.f32 %v1474, %v1586
    %1588 = vmatmul.f32.gmra.mxu0 %v548
    %v1589 = vpop.f32.mrf.mxu0
    %v1590 = vadd.f32 %v1477, %v1589
    %1591 = vmatmul.f32.gmra.mxu0 %v556
    %v1592 = vpop.f32.mrf.mxu0
    %v1593 = vadd.f32 %v1480, %v1592
    %1594 = vmatmul.f32.gmra.mxu0 %v564
    %v1595 = vpop.f32.mrf.mxu0
    %v1596 = vadd.f32 %v1483, %v1595
    %1597 = vmatmul.f32.gmra.mxu0 %v572
    %v1598 = vpop.f32.mrf.mxu0
    %v1599 = vadd.f32 %v1486, %v1598
    %1600 = vmatmul.f32.gmra.mxu0 %v580
    %v1601 = vpop.f32.mrf.mxu0
    %v1602 = vadd.f32 %v1489, %v1601
    %1603 = vmatmul.f32.gmra.mxu0 %v588
    %v1604 = vpop.f32.mrf.mxu0
    %v1605 = vadd.f32 %v1492, %v1604
    %1606 = vdwg.mxu0
    %1607 = vmatpush.msra.mxu0 0.0
    %1608 = vmatpush.msra.mxu0 0.0
    %1609 = vmatpush.msra.mxu0 0.0
    %1610 = vmatpush.msra.mxu0 %v714
    %1611 = vmatpush.msra.mxu0 %v713
    %1612 = vmatpush.msra.mxu0 %v712
    %1613 = vmatpush.msra.mxu0 %v711
    %1614 = vmatpush.msra.mxu0 %v710
    %1615 = vmatpush.msra.mxu0 %v709
    %1616 = vmatpush.msra.mxu0 %v708
    %1617 = vmatpush.msra.mxu0 %v707
    %1618 = vmatpush.msra.mxu0 %v706
    %1619 = vmatpush.msra.mxu0 %v705
    %1620 = vmatpush.msra.mxu0 %v704
    %1621 = vmatpush.msra.mxu0 %v703
    %1622 = vmatpush.msra.mxu0 %v702
    %1623 = vmatmul.f32.gmra.mxu0 %v721
    %v1624 = vpop.f32.mrf.mxu0
    %v1625 = vadd.f32 %v1512, %v1624
    %1626 = vmatmul.f32.gmra.mxu0 %v724
    %v1627 = vpop.f32.mrf.mxu0
    %v1628 = vadd.f32 %v1515, %v1627
    %1629 = vmatmul.f32.gmra.mxu0 %v727
    %v1630 = vpop.f32.mrf.mxu0
    %v1631 = vadd.f32 %v1518, %v1630
    %1632 = vmatmul.f32.gmra.mxu0 %v730
    %v1633 = vpop.f32.mrf.mxu0
    %v1634 = vadd.f32 %v1521, %v1633
    %1635 = vmatmul.f32.gmra.mxu0 %v733
    %v1636 = vpop.f32.mrf.mxu0
    %v1637 = vadd.f32 %v1524, %v1636
    %1638 = vmatmul.f32.gmra.mxu0 %v736
    %v1639 = vpop.f32.mrf.mxu0
    %v1640 = vadd.f32 %v1527, %v1639
    %1641 = vmatmul.f32.gmra.mxu0 %v739
    %v1642 = vpop.f32.mrf.mxu0
    %v1643 = vadd.f32 %v1530, %v1642
    %1644 = vmatmul.f32.gmra.mxu0 %v742
    %v1645 = vpop.f32.mrf.mxu0
    %v1646 = vadd.f32 %v1533, %v1645
    %1647 = vmatmul.f32.gmra.mxu0 %v745
    %v1648 = vpop.f32.mrf.mxu0
    %v1649 = vadd.f32 %v1536, %v1648
    %1650 = vmatmul.f32.gmra.mxu0 %v748
    %v1651 = vpop.f32.mrf.mxu0
    %v1652 = vadd.f32 %v1539, %v1651
    %1653 = vmatmul.f32.gmra.mxu0 %v751
    %v1654 = vpop.f32.mrf.mxu0
    %v1655 = vadd.f32 %v1542, %v1654
    %1656 = vmatmul.f32.gmra.mxu0 %v754
    %v1657 = vpop.f32.mrf.mxu0
    %v1658 = vadd.f32 %v1545, %v1657
    %1659 = vmatmul.f32.gmra.mxu0 %v757
    %v1660 = vpop.f32.mrf.mxu0
    %v1661 = vadd.f32 %v1548, %v1660
    %1662 = vmatmul.f32.gmra.mxu0 %v760
    %v1663 = vpop.f32.mrf.mxu0
    %v1664 = vadd.f32 %v1551, %v1663
    %1665 = vmatmul.f32.gmra.mxu0 %v763
    %v1666 = vpop.f32.mrf.mxu0
    %v1667 = vadd.f32 %v1554, %v1666
    %1668 = vmatmul.f32.gmra.mxu0 %v766
    %v1669 = vpop.f32.mrf.mxu0
    %v1670 = vadd.f32 %v1557, %v1669
    %1671 = vmatmul.f32.gmra.mxu0 %v769
    %v1672 = vpop.f32.mrf.mxu0
    %v1673 = vadd.f32 %v1560, %v1672
    %1674 = vmatmul.f32.gmra.mxu0 %v772
    %v1675 = vpop.f32.mrf.mxu0
    %v1676 = vadd.f32 %v1563, %v1675
    %1677 = vmatmul.f32.gmra.mxu0 %v775
    %v1678 = vpop.f32.mrf.mxu0
    %v1679 = vadd.f32 %v1566, %v1678
    %1680 = vmatmul.f32.gmra.mxu0 %v778
    %v1681 = vpop.f32.mrf.mxu0
    %v1682 = vadd.f32 %v1569, %v1681
    %1683 = vmatmul.f32.gmra.mxu0 %v781
    %v1684 = vpop.f32.mrf.mxu0
    %v1685 = vadd.f32 %v1572, %v1684
    %1686 = vmatmul.f32.gmra.mxu0 %v784
    %v1687 = vpop.f32.mrf.mxu0
    %v1688 = vadd.f32 %v1575, %v1687
    %1689 = vmatmul.f32.gmra.mxu0 %v787
    %v1690 = vpop.f32.mrf.mxu0
    %v1691 = vadd.f32 %v1578, %v1690
    %1692 = vmatmul.f32.gmra.mxu0 %v790
    %v1693 = vpop.f32.mrf.mxu0
    %v1694 = vadd.f32 %v1581, %v1693
    %1695 = vmatmul.f32.gmra.mxu0 %v793
    %v1696 = vpop.f32.mrf.mxu0
    %v1697 = vadd.f32 %v1584, %v1696
    %1698 = vmatmul.f32.gmra.mxu0 %v796
    %v1699 = vpop.f32.mrf.mxu0
    %v1700 = vadd.f32 %v1587, %v1699
    %1701 = vmatmul.f32.gmra.mxu0 %v799
    %v1702 = vpop.f32.mrf.mxu0
    %v1703 = vadd.f32 %v1590, %v1702
    %1704 = vmatmul.f32.gmra.mxu0 %v802
    %v1705 = vpop.f32.mrf.mxu0
    %v1706 = vadd.f32 %v1593, %v1705
    %1707 = vmatmul.f32.gmra.mxu0 %v805
    %v1708 = vpop.f32.mrf.mxu0
    %v1709 = vadd.f32 %v1596, %v1708
    %1710 = vmatmul.f32.gmra.mxu0 %v808
    %v1711 = vpop.f32.mrf.mxu0
    %v1712 = vadd.f32 %v1599, %v1711
    %1713 = vmatmul.f32.gmra.mxu0 %v811
    %v1714 = vpop.f32.mrf.mxu0
    %v1715 = vadd.f32 %v1602, %v1714
    %1716 = vmatmul.f32.gmra.mxu0 %v814
    %v1717 = vpop.f32.mrf.mxu0
    %v1718 = vadd.f32 %v1605, %v1717
    %1719 = vdwg.mxu0
    %v1720 = vld [vmem:[%s3] sm:$0xff]
    %v1721 = vld [vmem:[%s3 + $0x8] sm:$0xff]
    %v1722 = vld [vmem:[%s3 + $0x10] sm:$0xff]
    %v1723 = vld [vmem:[%s3 + $0x18] sm:$0xff]
    %v1724 = vld [vmem:[%s3 + $0x20] sm:$0xff]
    %v1725 = vld [vmem:[%s3 + $0x28] sm:$0xff]
    %v1726 = vld [vmem:[%s3 + $0x30] sm:$0xff]
    %v1727 = vld [vmem:[%s3 + $0x38] sm:$0xff]
    %v1728 = vld [vmem:[%s3 + $0x40] sm:$0xff]
    %v1729 = vld [vmem:[%s3 + $0x48] sm:$0xff]
    %v1730 = vld [vmem:[%s3 + $0x50] sm:$0xff]
    %v1731 = vld [vmem:[%s3 + $0x58] sm:$0xff]
    %v1732 = vld [vmem:[%s3 + $0x60] sm:$0xff]
    %v1733 = vld [vmem:[%s3 + $0x68] sm:$0xff]
    %v1734 = vld [vmem:[%s3 + $0x70] sm:$0xff]
    %v1735 = vld [vmem:[%s3 + $0x78] sm:$0xff]
    %v1736 = vld [vmem:[%s3 + $0x80] sm:$0xff]
    %v1737 = vld [vmem:[%s3 + $0x88] sm:$0xff]
    %v1738 = vld [vmem:[%s3 + $0x90] sm:$0xff]
    %v1739 = vld [vmem:[%s3 + $0x98] sm:$0xff]
    %v1740 = vld [vmem:[%s3 + $0xa0] sm:$0xff]
    %v1741 = vld [vmem:[%s3 + $0xa8] sm:$0xff]
    %v1742 = vld [vmem:[%s3 + $0xb0] sm:$0xff]
    %v1743 = vld [vmem:[%s3 + $0xb8] sm:$0xff]
    %v1744 = vld [vmem:[%s3 + $0xc0] sm:$0xff]
    %v1745 = vld [vmem:[%s3 + $0xc8] sm:$0xff]
    %v1746 = vld [vmem:[%s3 + $0xd0] sm:$0xff]
    %v1747 = vld [vmem:[%s3 + $0xd8] sm:$0xff]
    %v1748 = vld [vmem:[%s3 + $0xe0] sm:$0xff]
    %v1749 = vld [vmem:[%s3 + $0xe8] sm:$0xff]
    %v1750 = vld [vmem:[%s3 + $0xf0] sm:$0xff]
    %v1751 = vld [vmem:[%s3 + $0xf8] sm:$0xff]
    %v1752 = vld [vmem:[%s3 + $0x100] sm:$0xff]
    %v1753 = vld [vmem:[%s3 + $0x108] sm:$0xff]
    %v1754 = vld [vmem:[%s3 + $0x110] sm:$0xff]
    %v1755 = vld [vmem:[%s3 + $0x118] sm:$0xff]
    %v1756 = vld [vmem:[%s3 + $0x120] sm:$0xff]
    %v1757 = vld [vmem:[%s3 + $0x128] sm:$0xff]
    %v1758 = vld [vmem:[%s3 + $0x130] sm:$0xff]
    %v1759 = vld [vmem:[%s3 + $0x138] sm:$0xff]
    %v1760 = vld [vmem:[%s3 + $0x140] sm:$0xff]
    %v1761 = vld [vmem:[%s3 + $0x148] sm:$0xff]
    %v1762 = vld [vmem:[%s3 + $0x150] sm:$0xff]
    %v1763 = vld [vmem:[%s3 + $0x158] sm:$0xff]
    %v1764 = vld [vmem:[%s3 + $0x160] sm:$0xff]
    %v1765 = vld [vmem:[%s3 + $0x168] sm:$0xff]
    %v1766 = vld [vmem:[%s3 + $0x170] sm:$0xff]
    %v1767 = vld [vmem:[%s3 + $0x178] sm:$0xff]
    %v1768 = vld [vmem:[%s3 + $0x180] sm:$0xff]
    %v1769 = vld [vmem:[%s3 + $0x188] sm:$0xff]
    %v1770 = vld [vmem:[%s3 + $0x190] sm:$0xff]
    %v1771 = vld [vmem:[%s3 + $0x198] sm:$0xff]
    %v1772 = vld [vmem:[%s3 + $0x1a0] sm:$0xff]
    %v1773 = vld [vmem:[%s3 + $0x1a8] sm:$0xff]
    %v1774 = vld [vmem:[%s3 + $0x1b0] sm:$0xff]
    %v1775 = vld [vmem:[%s3 + $0x1b8] sm:$0xff]
    %v1776 = vld [vmem:[%s3 + $0x1c0] sm:$0xff]
    %v1777 = vld [vmem:[%s3 + $0x1c8] sm:$0xff]
    %v1778 = vld [vmem:[%s3 + $0x1d0] sm:$0xff]
    %v1779 = vld [vmem:[%s3 + $0x1d8] sm:$0xff]
    %v1780 = vld [vmem:[%s3 + $0x1e0] sm:$0xff]
    %v1781 = vld [vmem:[%s3 + $0x1e8] sm:$0xff]
    %v1782 = vld [vmem:[%s3 + $0x1f0] sm:$0xff]
    %v1783 = vld [vmem:[%s3 + $0x1f8] sm:$0xff]
    %v1784 = vld [vmem:[%s3 + $0x200] sm:$0xff]
    %v1785 = vld [vmem:[%s3 + $0x208] sm:$0xff]
    %v1786 = vld [vmem:[%s3 + $0x210] sm:$0xff]
    %v1787 = vld [vmem:[%s3 + $0x218] sm:$0xff]
    %v1788 = vld [vmem:[%s3 + $0x220] sm:$0xff]
    %v1789 = vld [vmem:[%s3 + $0x228] sm:$0xff]
    %v1790 = vld [vmem:[%s3 + $0x230] sm:$0xff]
    %v1791 = vld [vmem:[%s3 + $0x238] sm:$0xff]
    %v1792 = vld [vmem:[%s3 + $0x240] sm:$0xff]
    %v1793 = vld [vmem:[%s3 + $0x248] sm:$0xff]
    %v1794 = vld [vmem:[%s3 + $0x250] sm:$0xff]
    %v1795 = vld [vmem:[%s3 + $0x258] sm:$0xff]
    %v1796 = vld [vmem:[%s3 + $0x260] sm:$0xff]
    %v1797 = vld [vmem:[%s3 + $0x268] sm:$0xff]
    %v1798 = vld [vmem:[%s3 + $0x270] sm:$0xff]
    %v1799 = vld [vmem:[%s3 + $0x278] sm:$0xff]
    %v1800 = vld [vmem:[%s3 + $0x280] sm:$0xff]
    %v1801 = vld [vmem:[%s3 + $0x288] sm:$0xff]
    %v1802 = vld [vmem:[%s3 + $0x290] sm:$0xff]
    %v1803 = vld [vmem:[%s3 + $0x298] sm:$0xff]
    %v1804 = vld [vmem:[%s3 + $0x2a0] sm:$0xff]
    %v1805 = vld [vmem:[%s3 + $0x2a8] sm:$0xff]
    %v1806 = vld [vmem:[%s3 + $0x2b0] sm:$0xff]
    %v1807 = vld [vmem:[%s3 + $0x2b8] sm:$0xff]
    %v1808 = vld [vmem:[%s3 + $0x2c0] sm:$0xff]
    %v1809 = vld [vmem:[%s3 + $0x2c8] sm:$0xff]
    %v1810 = vld [vmem:[%s3 + $0x2d0] sm:$0xff]
    %v1811 = vld [vmem:[%s3 + $0x2d8] sm:$0xff]
    %v1812 = vld [vmem:[%s3 + $0x2e0] sm:$0xff]
    %v1813 = vld [vmem:[%s3 + $0x2e8] sm:$0xff]
    %v1814 = vld [vmem:[%s3 + $0x2f0] sm:$0xff]
    %v1815 = vld [vmem:[%s3 + $0x2f8] sm:$0xff]
    %v1816 = vld [vmem:[%s3 + $0x300] sm:$0xff]
    %v1817 = vld [vmem:[%s3 + $0x308] sm:$0xff]
    %v1818 = vld [vmem:[%s3 + $0x310] sm:$0xff]
    %v1819 = vld [vmem:[%s3 + $0x318] sm:$0xff]
    %v1820 = vld [vmem:[%s3 + $0x320] sm:$0xff]
    %v1821 = vld [vmem:[%s3 + $0x328] sm:$0xff]
    %v1822 = vld [vmem:[%s3 + $0x330] sm:$0xff]
    %v1823 = vld [vmem:[%s3 + $0x338] sm:$0xff]
    %v1824 = vld [vmem:[%s3 + $0x340] sm:$0xff]
    %v1825 = vld [vmem:[%s3 + $0x348] sm:$0xff]
    %v1826 = vld [vmem:[%s3 + $0x350] sm:$0xff]
    %v1827 = vld [vmem:[%s3 + $0x358] sm:$0xff]
    %v1828 = vld [vmem:[%s3 + $0x360] sm:$0xff]
    %v1829 = vld [vmem:[%s3 + $0x368] sm:$0xff]
    %v1830 = vld [vmem:[%s3 + $0x370] sm:$0xff]
    %v1831 = vld [vmem:[%s3 + $0x378] sm:$0xff]
    %v1832 = vld [vmem:[%s3 + $0x380] sm:$0xff]
    %v1833 = vld [vmem:[%s3 + $0x388] sm:$0xff]
    %v1834 = vld [vmem:[%s3 + $0x390] sm:$0xff]
    %v1835 = vld [vmem:[%s3 + $0x398] sm:$0xff]
    %v1836 = vld [vmem:[%s3 + $0x3a0] sm:$0xff]
    %v1837 = vld [vmem:[%s3 + $0x3a8] sm:$0xff]
    %v1838 = vld [vmem:[%s3 + $0x3b0] sm:$0xff]
    %v1839 = vld [vmem:[%s3 + $0x3b8] sm:$0xff]
    %v1840 = vld [vmem:[%s3 + $0x3c0] sm:$0xff]
    %v1841 = vld [vmem:[%s3 + $0x3c8] sm:$0xff]
    %v1842 = vld [vmem:[%s3 + $0x3d0] sm:$0xff]
    %v1843 = vld [vmem:[%s3 + $0x3d8] sm:$0xff]
    %v1844 = vld [vmem:[%s3 + $0x3e0] sm:$0xff]
    %v1845 = vld [vmem:[%s3 + $0x3e8] sm:$0xff]
    %v1846 = vld [vmem:[%s3 + $0x3f0] sm:$0xff]
    %v1847 = vld [vmem:[%s3 + $0x3f8] sm:$0xff]
    %v1848 = vld [vmem:[%s3 + $0x400] sm:$0xff]
    %v1849 = vld [vmem:[%s3 + $0x408] sm:$0xff]
    %v1850 = vld [vmem:[%s3 + $0x410] sm:$0xff]
    %v1851 = vld [vmem:[%s3 + $0x418] sm:$0xff]
    %v1852 = vld [vmem:[%s3 + $0x420] sm:$0xff]
    %v1853 = vld [vmem:[%s3 + $0x428] sm:$0xff]
    %v1854 = vld [vmem:[%s3 + $0x430] sm:$0xff]
    %v1855 = vld [vmem:[%s3 + $0x438] sm:$0xff]
    %v1856 = vld [vmem:[%s3 + $0x440] sm:$0xff]
    %v1857 = vld [vmem:[%s3 + $0x448] sm:$0xff]
    %v1858 = vld [vmem:[%s3 + $0x450] sm:$0xff]
    %v1859 = vld [vmem:[%s3 + $0x458] sm:$0xff]
    %v1860 = vld [vmem:[%s3 + $0x460] sm:$0xff]
    %v1861 = vld [vmem:[%s3 + $0x468] sm:$0xff]
    %v1862 = vld [vmem:[%s3 + $0x470] sm:$0xff]
    %v1863 = vld [vmem:[%s3 + $0x478] sm:$0xff]
    %v1864 = vld [vmem:[%s3 + $0x480] sm:$0xff]
    %v1865 = vld [vmem:[%s3 + $0x488] sm:$0xff]
    %v1866 = vld [vmem:[%s3 + $0x490] sm:$0xff]
    %v1867 = vld [vmem:[%s3 + $0x498] sm:$0xff]
    %v1868 = vld [vmem:[%s3 + $0x4a0] sm:$0xff]
    %v1869 = vld [vmem:[%s3 + $0x4a8] sm:$0xff]
    %v1870 = vld [vmem:[%s3 + $0x4b0] sm:$0xff]
    %v1871 = vld [vmem:[%s3 + $0x4b8] sm:$0xff]
    %v1872 = vld [vmem:[%s3 + $0x4c0] sm:$0xff]
    %v1873 = vld [vmem:[%s3 + $0x4c8] sm:$0xff]
    %v1874 = vld [vmem:[%s3 + $0x4d0] sm:$0xff]
    %v1875 = vld [vmem:[%s3 + $0x4d8] sm:$0xff]
    %v1876 = vld [vmem:[%s3 + $0x4e0] sm:$0xff]
    %v1877 = vld [vmem:[%s3 + $0x4e8] sm:$0xff]
    %v1878 = vld [vmem:[%s3 + $0x4f0] sm:$0xff]
    %v1879 = vld [vmem:[%s3 + $0x4f8] sm:$0xff]
    %v1880 = vld [vmem:[%s3 + $0x500] sm:$0xff]
    %v1881 = vld [vmem:[%s3 + $0x508] sm:$0xff]
    %v1882 = vld [vmem:[%s3 + $0x510] sm:$0xff]
    %v1883 = vld [vmem:[%s3 + $0x518] sm:$0xff]
    %v1884 = vld [vmem:[%s3 + $0x520] sm:$0xff]
    %v1885 = vld [vmem:[%s3 + $0x528] sm:$0xff]
    %v1886 = vld [vmem:[%s3 + $0x530] sm:$0xff]
    %v1887 = vld [vmem:[%s3 + $0x538] sm:$0xff]
    %v1888 = vld [vmem:[%s3 + $0x540] sm:$0xff]
    %v1889 = vld [vmem:[%s3 + $0x548] sm:$0xff]
    %v1890 = vld [vmem:[%s3 + $0x550] sm:$0xff]
    %v1891 = vld [vmem:[%s3 + $0x558] sm:$0xff]
    %v1892 = vld [vmem:[%s3 + $0x560] sm:$0xff]
    %v1893 = vld [vmem:[%s3 + $0x568] sm:$0xff]
    %v1894 = vld [vmem:[%s3 + $0x570] sm:$0xff]
    %v1895 = vld [vmem:[%s3 + $0x578] sm:$0xff]
    %v1896 = vld [vmem:[%s3 + $0x580] sm:$0xff]
    %v1897 = vld [vmem:[%s3 + $0x588] sm:$0xff]
    %v1898 = vld [vmem:[%s3 + $0x590] sm:$0xff]
    %v1899 = vld [vmem:[%s3 + $0x598] sm:$0xff]
    %v1900 = vld [vmem:[%s3 + $0x5a0] sm:$0xff]
    %v1901 = vld [vmem:[%s3 + $0x5a8] sm:$0xff]
    %v1902 = vld [vmem:[%s3 + $0x5b0] sm:$0xff]
    %v1903 = vld [vmem:[%s3 + $0x5b8] sm:$0xff]
    %v1904 = vld [vmem:[%s3 + $0x5c0] sm:$0xff]
    %v1905 = vld [vmem:[%s3 + $0x5c8] sm:$0xff]
    %v1906 = vld [vmem:[%s3 + $0x5d0] sm:$0xff]
    %v1907 = vld [vmem:[%s3 + $0x5d8] sm:$0xff]
    %v1908 = vld [vmem:[%s3 + $0x5e0] sm:$0xff]
    %v1909 = vld [vmem:[%s3 + $0x5e8] sm:$0xff]
    %v1910 = vld [vmem:[%s3 + $0x5f0] sm:$0xff]
    %v1911 = vld [vmem:[%s3 + $0x5f8] sm:$0xff]
    %v1912 = vld [vmem:[%s3 + $0x600] sm:$0xff]
    %v1913 = vld [vmem:[%s3 + $0x608] sm:$0xff]
    %v1914 = vld [vmem:[%s3 + $0x610] sm:$0xff]
    %v1915 = vld [vmem:[%s3 + $0x618] sm:$0xff]
    %v1916 = vld [vmem:[%s3 + $0x620] sm:$0xff]
    %v1917 = vld [vmem:[%s3 + $0x628] sm:$0xff]
    %v1918 = vld [vmem:[%s3 + $0x630] sm:$0xff]
    %v1919 = vld [vmem:[%s3 + $0x638] sm:$0xff]
    %v1920 = vld [vmem:[%s3 + $0x640] sm:$0xff]
    %v1921 = vld [vmem:[%s3 + $0x648] sm:$0xff]
    %v1922 = vld [vmem:[%s3 + $0x650] sm:$0xff]
    %v1923 = vld [vmem:[%s3 + $0x658] sm:$0xff]
    %v1924 = vld [vmem:[%s3 + $0x660] sm:$0xff]
    %v1925 = vld [vmem:[%s3 + $0x668] sm:$0xff]
    %v1926 = vld [vmem:[%s3 + $0x670] sm:$0xff]
    %v1927 = vld [vmem:[%s3 + $0x678] sm:$0xff]
    %v1928 = vld [vmem:[%s3 + $0x680] sm:$0xff]
    %v1929 = vld [vmem:[%s3 + $0x688] sm:$0xff]
    %v1930 = vld [vmem:[%s3 + $0x690] sm:$0xff]
    %v1931 = vld [vmem:[%s3 + $0x698] sm:$0xff]
    %v1932 = vld [vmem:[%s3 + $0x6a0] sm:$0xff]
    %v1933 = vld [vmem:[%s3 + $0x6a8] sm:$0xff]
    %v1934 = vld [vmem:[%s3 + $0x6b0] sm:$0xff]
    %v1935 = vld [vmem:[%s3 + $0x6b8] sm:$0xff]
    %v1936 = vld [vmem:[%s3 + $0x6c0] sm:$0xff]
    %v1937 = vld [vmem:[%s3 + $0x6c8] sm:$0xff]
    %v1938 = vld [vmem:[%s3 + $0x6d0] sm:$0xff]
    %v1939 = vld [vmem:[%s3 + $0x6d8] sm:$0xff]
    %v1940 = vld [vmem:[%s3 + $0x6e0] sm:$0xff]
    %v1941 = vld [vmem:[%s3 + $0x6e8] sm:$0xff]
    %v1942 = vld [vmem:[%s3 + $0x6f0] sm:$0xff]
    %v1943 = vld [vmem:[%s3 + $0x6f8] sm:$0xff]
    %v1944 = vld [vmem:[%s3 + $0x700] sm:$0xff]
    %v1945 = vld [vmem:[%s3 + $0x708] sm:$0xff]
    %v1946 = vld [vmem:[%s3 + $0x710] sm:$0xff]
    %v1947 = vld [vmem:[%s3 + $0x718] sm:$0xff]
    %v1948 = vld [vmem:[%s3 + $0x720] sm:$0xff]
    %v1949 = vld [vmem:[%s3 + $0x728] sm:$0xff]
    %v1950 = vld [vmem:[%s3 + $0x730] sm:$0xff]
    %v1951 = vld [vmem:[%s3 + $0x738] sm:$0xff]
    %v1952 = vld [vmem:[%s3 + $0x740] sm:$0xff]
    %v1953 = vld [vmem:[%s3 + $0x748] sm:$0xff]
    %v1954 = vld [vmem:[%s3 + $0x750] sm:$0xff]
    %v1955 = vld [vmem:[%s3 + $0x758] sm:$0xff]
    %v1956 = vld [vmem:[%s3 + $0x760] sm:$0xff]
    %v1957 = vld [vmem:[%s3 + $0x768] sm:$0xff]
    %v1958 = vld [vmem:[%s3 + $0x770] sm:$0xff]
    %v1959 = vld [vmem:[%s3 + $0x778] sm:$0xff]
    %v1960 = vld [vmem:[%s3 + $0x780] sm:$0xff]
    %v1961 = vld [vmem:[%s3 + $0x788] sm:$0xff]
    %v1962 = vld [vmem:[%s3 + $0x790] sm:$0xff]
    %v1963 = vld [vmem:[%s3 + $0x798] sm:$0xff]
    %v1964 = vld [vmem:[%s3 + $0x7a0] sm:$0xff]
    %v1965 = vld [vmem:[%s3 + $0x7a8] sm:$0xff]
    %v1966 = vld [vmem:[%s3 + $0x7b0] sm:$0xff]
    %v1967 = vld [vmem:[%s3 + $0x7b8] sm:$0xff]
    %v1968 = vld [vmem:[%s3 + $0x7c0] sm:$0xff]
    %v1969 = vld [vmem:[%s3 + $0x7c8] sm:$0xff]
    %v1970 = vld [vmem:[%s3 + $0x7d0] sm:$0xff]
    %v1971 = vld [vmem:[%s3 + $0x7d8] sm:$0xff]
    %v1972 = vld [vmem:[%s3 + $0x7e0] sm:$0xff]
    %v1973 = vld [vmem:[%s3 + $0x7e8] sm:$0xff]
    %v1974 = vld [vmem:[%s3 + $0x7f0] sm:$0xff]
    %v1975 = vld [vmem:[%s3 + $0x7f8] sm:$0xff]
    %v1976 = vld [vmem:[%s12] sm:$0xff]
    %v1977 = vld [vmem:[%s12 + $0x8] sm:$0xff]
    %v1978 = vld [vmem:[%s12 + $0x10] sm:$0xff]
    %v1979 = vld [vmem:[%s12 + $0x18] sm:$0xff]
    %v1980 = vld [vmem:[%s12 + $0x20] sm:$0xff]
    %v1981 = vld [vmem:[%s12 + $0x28] sm:$0xff]
    %v1982 = vld [vmem:[%s12 + $0x30] sm:$0xff]
    %v1983 = vld [vmem:[%s12 + $0x38] sm:$0xff]
    %v1984 = vld [vmem:[%s12 + $0x40] sm:$0xff]
    %v1985 = vld [vmem:[%s12 + $0x48] sm:$0xff]
    %v1986 = vld [vmem:[%s12 + $0x50] sm:$0xff]
    %v1987 = vld [vmem:[%s12 + $0x58] sm:$0xff]
    %v1988 = vld [vmem:[%s12 + $0x60] sm:$0xff]
    %v1989 = vld [vmem:[%s12 + $0x68] sm:$0xff]
    %v1990 = vld [vmem:[%s12 + $0x70] sm:$0xff]
    %v1991 = vld [vmem:[%s12 + $0x78] sm:$0xff]
    %v1992 = vld [vmem:[%s12 + $0x80] sm:$0xff]
    %v1993 = vld [vmem:[%s12 + $0x88] sm:$0xff]
    %v1994 = vld [vmem:[%s12 + $0x90] sm:$0xff]
    %v1995 = vld [vmem:[%s12 + $0x98] sm:$0xff]
    %v1996 = vld [vmem:[%s12 + $0xa0] sm:$0xff]
    %v1997 = vld [vmem:[%s12 + $0xa8] sm:$0xff]
    %v1998 = vld [vmem:[%s12 + $0xb0] sm:$0xff]
    %v1999 = vld [vmem:[%s12 + $0xb8] sm:$0xff]
    %v2000 = vld [vmem:[%s12 + $0xc0] sm:$0xff]
    %v2001 = vld [vmem:[%s12 + $0xc8] sm:$0xff]
    %v2002 = vld [vmem:[%s12 + $0xd0] sm:$0xff]
    %v2003 = vld [vmem:[%s12 + $0xd8] sm:$0xff]
    %v2004 = vld [vmem:[%s12 + $0xe0] sm:$0xff]
    %v2005 = vld [vmem:[%s12 + $0xe8] sm:$0xff]
    %v2006 = vld [vmem:[%s12 + $0xf0] sm:$0xff]
    %v2007 = vld [vmem:[%s12 + $0xf8] sm:$0xff]
    %v2008 = vld [vmem:[%s12 + $0x100] sm:$0xff]
    %v2009 = vld [vmem:[%s12 + $0x108] sm:$0xff]
    %v2010 = vld [vmem:[%s12 + $0x110] sm:$0xff]
    %v2011 = vld [vmem:[%s12 + $0x118] sm:$0xff]
    %v2012 = vld [vmem:[%s12 + $0x120] sm:$0xff]
    %v2013 = vld [vmem:[%s12 + $0x128] sm:$0xff]
    %v2014 = vld [vmem:[%s12 + $0x130] sm:$0xff]
    %v2015 = vld [vmem:[%s12 + $0x138] sm:$0xff]
    %v2016 = vld [vmem:[%s12 + $0x140] sm:$0xff]
    %v2017 = vld [vmem:[%s12 + $0x148] sm:$0xff]
    %v2018 = vld [vmem:[%s12 + $0x150] sm:$0xff]
    %v2019 = vld [vmem:[%s12 + $0x158] sm:$0xff]
    %v2020 = vld [vmem:[%s12 + $0x160] sm:$0xff]
    %v2021 = vld [vmem:[%s12 + $0x168] sm:$0xff]
    %v2022 = vld [vmem:[%s12 + $0x170] sm:$0xff]
    %v2023 = vld [vmem:[%s12 + $0x178] sm:$0xff]
    %v2024 = vld [vmem:[%s12 + $0x180] sm:$0xff]
    %v2025 = vld [vmem:[%s12 + $0x188] sm:$0xff]
    %v2026 = vld [vmem:[%s12 + $0x190] sm:$0xff]
    %v2027 = vld [vmem:[%s12 + $0x198] sm:$0xff]
    %v2028 = vld [vmem:[%s12 + $0x1a0] sm:$0xff]
    %v2029 = vld [vmem:[%s12 + $0x1a8] sm:$0xff]
    %v2030 = vld [vmem:[%s12 + $0x1b0] sm:$0xff]
    %v2031 = vld [vmem:[%s12 + $0x1b8] sm:$0xff]
    %v2032 = vld [vmem:[%s12 + $0x1c0] sm:$0xff]
    %v2033 = vld [vmem:[%s12 + $0x1c8] sm:$0xff]
    %v2034 = vld [vmem:[%s12 + $0x1d0] sm:$0xff]
    %v2035 = vld [vmem:[%s12 + $0x1d8] sm:$0xff]
    %v2036 = vld [vmem:[%s12 + $0x1e0] sm:$0xff]
    %v2037 = vld [vmem:[%s12 + $0x1e8] sm:$0xff]
    %v2038 = vld [vmem:[%s12 + $0x1f0] sm:$0xff]
    %v2039 = vld [vmem:[%s12 + $0x1f8] sm:$0xff]
    %v2040 = vld [vmem:[%s12 + $0x200] sm:$0xff]
    %v2041 = vld [vmem:[%s12 + $0x208] sm:$0xff]
    %v2042 = vld [vmem:[%s12 + $0x210] sm:$0xff]
    %v2043 = vld [vmem:[%s12 + $0x218] sm:$0xff]
    %v2044 = vld [vmem:[%s12 + $0x220] sm:$0xff]
    %v2045 = vld [vmem:[%s12 + $0x228] sm:$0xff]
    %v2046 = vld [vmem:[%s12 + $0x230] sm:$0xff]
    %v2047 = vld [vmem:[%s12 + $0x238] sm:$0xff]
    %v2048 = vld [vmem:[%s12 + $0x240] sm:$0xff]
    %v2049 = vld [vmem:[%s12 + $0x248] sm:$0xff]
    %v2050 = vld [vmem:[%s12 + $0x250] sm:$0xff]
    %v2051 = vld [vmem:[%s12 + $0x258] sm:$0xff]
    %v2052 = vld [vmem:[%s12 + $0x260] sm:$0xff]
    %v2053 = vld [vmem:[%s12 + $0x268] sm:$0xff]
    %v2054 = vld [vmem:[%s12 + $0x270] sm:$0xff]
    %v2055 = vld [vmem:[%s12 + $0x278] sm:$0xff]
    %v2056 = vld [vmem:[%s12 + $0x280] sm:$0xff]
    %v2057 = vld [vmem:[%s12 + $0x288] sm:$0xff]
    %v2058 = vld [vmem:[%s12 + $0x290] sm:$0xff]
    %v2059 = vld [vmem:[%s12 + $0x298] sm:$0xff]
    %v2060 = vld [vmem:[%s12 + $0x2a0] sm:$0xff]
    %v2061 = vld [vmem:[%s12 + $0x2a8] sm:$0xff]
    %v2062 = vld [vmem:[%s12 + $0x2b0] sm:$0xff]
    %v2063 = vld [vmem:[%s12 + $0x2b8] sm:$0xff]
    %v2064 = vld [vmem:[%s12 + $0x2c0] sm:$0xff]
    %v2065 = vld [vmem:[%s12 + $0x2c8] sm:$0xff]
    %v2066 = vld [vmem:[%s12 + $0x2d0] sm:$0xff]
    %v2067 = vld [vmem:[%s12 + $0x2d8] sm:$0xff]
    %v2068 = vld [vmem:[%s12 + $0x2e0] sm:$0xff]
    %v2069 = vld [vmem:[%s12 + $0x2e8] sm:$0xff]
    %v2070 = vld [vmem:[%s12 + $0x2f0] sm:$0xff]
    %v2071 = vld [vmem:[%s12 + $0x2f8] sm:$0xff]
    %v2072 = vld [vmem:[%s12 + $0x300] sm:$0xff]
    %v2073 = vld [vmem:[%s12 + $0x308] sm:$0xff]
    %v2074 = vld [vmem:[%s12 + $0x310] sm:$0xff]
    %v2075 = vld [vmem:[%s12 + $0x318] sm:$0xff]
    %v2076 = vld [vmem:[%s12 + $0x320] sm:$0xff]
    %v2077 = vld [vmem:[%s12 + $0x328] sm:$0xff]
    %v2078 = vld [vmem:[%s12 + $0x330] sm:$0xff]
    %v2079 = vld [vmem:[%s12 + $0x338] sm:$0xff]
    %v2080 = vld [vmem:[%s12 + $0x340] sm:$0xff]
    %v2081 = vld [vmem:[%s12 + $0x348] sm:$0xff]
    %v2082 = vld [vmem:[%s12 + $0x350] sm:$0xff]
    %v2083 = vld [vmem:[%s12 + $0x358] sm:$0xff]
    %v2084 = vld [vmem:[%s12 + $0x360] sm:$0xff]
    %v2085 = vld [vmem:[%s12 + $0x368] sm:$0xff]
    %v2086 = vld [vmem:[%s12 + $0x370] sm:$0xff]
    %v2087 = vld [vmem:[%s12 + $0x378] sm:$0xff]
    %v2088 = vld [vmem:[%s12 + $0x380] sm:$0xff]
    %v2089 = vld [vmem:[%s12 + $0x388] sm:$0xff]
    %v2090 = vld [vmem:[%s12 + $0x390] sm:$0xff]
    %v2091 = vld [vmem:[%s12 + $0x398] sm:$0xff]
    %v2092 = vld [vmem:[%s12 + $0x3a0] sm:$0xff]
    %v2093 = vld [vmem:[%s12 + $0x3a8] sm:$0xff]
    %v2094 = vld [vmem:[%s12 + $0x3b0] sm:$0xff]
    %v2095 = vld [vmem:[%s12 + $0x3b8] sm:$0xff]
    %v2096 = vld [vmem:[%s12 + $0x3c0] sm:$0xff]
    %v2097 = vld [vmem:[%s12 + $0x3c8] sm:$0xff]
    %v2098 = vld [vmem:[%s12 + $0x3d0] sm:$0xff]
    %v2099 = vld [vmem:[%s12 + $0x3d8] sm:$0xff]
    %v2100 = vld [vmem:[%s12 + $0x3e0] sm:$0xff]
    %v2101 = vld [vmem:[%s13] sm:$0x1]
    %v2103 = vperm.slane %v2101, 0
    %v2106 = vsel %vm719, %v1727, 0
    %v2109 = vsel %vm719, %v1735, 0
    %v2112 = vsel %vm719, %v1743, 0
    %v2115 = vsel %vm719, %v1751, 0
    %v2118 = vsel %vm719, %v1759, 0
    %v2121 = vsel %vm719, %v1767, 0
    %v2124 = vsel %vm719, %v1775, 0
    %v2127 = vsel %vm719, %v1783, 0
    %v2130 = vsel %vm719, %v1791, 0
    %v2133 = vsel %vm719, %v1799, 0
    %v2136 = vsel %vm719, %v1807, 0
    %v2139 = vsel %vm719, %v1815, 0
    %v2142 = vsel %vm719, %v1823, 0
    %v2145 = vsel %vm719, %v1831, 0
    %v2148 = vsel %vm719, %v1839, 0
    %v2151 = vsel %vm719, %v1847, 0
    %v2154 = vsel %vm719, %v1855, 0
    %v2157 = vsel %vm719, %v1863, 0
    %v2160 = vsel %vm719, %v1871, 0
    %v2163 = vsel %vm719, %v1879, 0
    %v2166 = vsel %vm719, %v1887, 0
    %v2169 = vsel %vm719, %v1895, 0
    %v2172 = vsel %vm719, %v1903, 0
    %v2175 = vsel %vm719, %v1911, 0
    %v2178 = vsel %vm719, %v1919, 0
    %v2181 = vsel %vm719, %v1927, 0
    %v2184 = vsel %vm719, %v1935, 0
    %v2187 = vsel %vm719, %v1943, 0
    %v2190 = vsel %vm719, %v1951, 0
    %v2193 = vsel %vm719, %v1959, 0
    %v2196 = vsel %vm719, %v1967, 0
    %v2199 = vsel %vm719, %v1975, 0
    %2201 = vmatpush.msra.mxu0 %v1991
    %2202 = vmatpush.msra.mxu0 %v1990
    %2203 = vmatpush.msra.mxu0 %v1989
    %2204 = vmatpush.msra.mxu0 %v1988
    %2205 = vmatpush.msra.mxu0 %v1987
    %2206 = vmatpush.msra.mxu0 %v1986
    %2207 = vmatpush.msra.mxu0 %v1985
    %2208 = vmatpush.msra.mxu0 %v1984
    %2209 = vmatpush.msra.mxu0 %v1983
    %2210 = vmatpush.msra.mxu0 %v1982
    %2211 = vmatpush.msra.mxu0 %v1981
    %2212 = vmatpush.msra.mxu0 %v1980
    %2213 = vmatpush.msra.mxu0 %v1979
    %2214 = vmatpush.msra.mxu0 %v1978
    %2215 = vmatpush.msra.mxu0 %v1977
    %2216 = vmatpush.msra.mxu0 %v1976
    %2217 = vmatmul.f32.gmra.mxu0 %v1720
    %v2218 = vpop.f32.mrf.mxu0
    %v2219 = vadd.f32 %v2103, %v2218
    %2220 = vmatmul.f32.gmra.mxu0 %v1728
    %v2221 = vpop.f32.mrf.mxu0
    %v2222 = vadd.f32 %v2103, %v2221
    %2223 = vmatmul.f32.gmra.mxu0 %v1736
    %v2224 = vpop.f32.mrf.mxu0
    %v2225 = vadd.f32 %v2103, %v2224
    %2226 = vmatmul.f32.gmra.mxu0 %v1744
    %v2227 = vpop.f32.mrf.mxu0
    %v2228 = vadd.f32 %v2103, %v2227
    %2229 = vmatmul.f32.gmra.mxu0 %v1752
    %v2230 = vpop.f32.mrf.mxu0
    %v2231 = vadd.f32 %v2103, %v2230
    %2232 = vmatmul.f32.gmra.mxu0 %v1760
    %v2233 = vpop.f32.mrf.mxu0
    %v2234 = vadd.f32 %v2103, %v2233
    %2235 = vmatmul.f32.gmra.mxu0 %v1768
    %v2236 = vpop.f32.mrf.mxu0
    %v2237 = vadd.f32 %v2103, %v2236
    %2238 = vmatmul.f32.gmra.mxu0 %v1776
    %v2239 = vpop.f32.mrf.mxu0
    %v2240 = vadd.f32 %v2103, %v2239
    %2241 = vmatmul.f32.gmra.mxu0 %v1784
    %v2242 = vpop.f32.mrf.mxu0
    %v2243 = vadd.f32 %v2103, %v2242
    %2244 = vmatmul.f32.gmra.mxu0 %v1792
    %v2245 = vpop.f32.mrf.mxu0
    %v2246 = vadd.f32 %v2103, %v2245
    %2247 = vmatmul.f32.gmra.mxu0 %v1800
    %v2248 = vpop.f32.mrf.mxu0
    %v2249 = vadd.f32 %v2103, %v2248
    %2250 = vmatmul.f32.gmra.mxu0 %v1808
    %v2251 = vpop.f32.mrf.mxu0
    %v2252 = vadd.f32 %v2103, %v2251
    %2253 = vmatmul.f32.gmra.mxu0 %v1816
    %v2254 = vpop.f32.mrf.mxu0
    %v2255 = vadd.f32 %v2103, %v2254
    %2256 = vmatmul.f32.gmra.mxu0 %v1824
    %v2257 = vpop.f32.mrf.mxu0
    %v2258 = vadd.f32 %v2103, %v2257
    %2259 = vmatmul.f32.gmra.mxu0 %v1832
    %v2260 = vpop.f32.mrf.mxu0
    %v2261 = vadd.f32 %v2103, %v2260
    %2262 = vmatmul.f32.gmra.mxu0 %v1840
    %v2263 = vpop.f32.mrf.mxu0
    %v2264 = vadd.f32 %v2103, %v2263
    %2265 = vmatmul.f32.gmra.mxu0 %v1848
    %v2266 = vpop.f32.mrf.mxu0
    %v2267 = vadd.f32 %v2103, %v2266
    %2268 = vmatmul.f32.gmra.mxu0 %v1856
    %v2269 = vpop.f32.mrf.mxu0
    %v2270 = vadd.f32 %v2103, %v2269
    %2271 = vmatmul.f32.gmra.mxu0 %v1864
    %v2272 = vpop.f32.mrf.mxu0
    %v2273 = vadd.f32 %v2103, %v2272
    %2274 = vmatmul.f32.gmra.mxu0 %v1872
    %v2275 = vpop.f32.mrf.mxu0
    %v2276 = vadd.f32 %v2103, %v2275
    %2277 = vmatmul.f32.gmra.mxu0 %v1880
    %v2278 = vpop.f32.mrf.mxu0
    %v2279 = vadd.f32 %v2103, %v2278
    %2280 = vmatmul.f32.gmra.mxu0 %v1888
    %v2281 = vpop.f32.mrf.mxu0
    %v2282 = vadd.f32 %v2103, %v2281
    %2283 = vmatmul.f32.gmra.mxu0 %v1896
    %v2284 = vpop.f32.mrf.mxu0
    %v2285 = vadd.f32 %v2103, %v2284
    %2286 = vmatmul.f32.gmra.mxu0 %v1904
    %v2287 = vpop.f32.mrf.mxu0
    %v2288 = vadd.f32 %v2103, %v2287
    %2289 = vmatmul.f32.gmra.mxu0 %v1912
    %v2290 = vpop.f32.mrf.mxu0
    %v2291 = vadd.f32 %v2103, %v2290
    %2292 = vmatmul.f32.gmra.mxu0 %v1920
    %v2293 = vpop.f32.mrf.mxu0
    %v2294 = vadd.f32 %v2103, %v2293
    %2295 = vmatmul.f32.gmra.mxu0 %v1928
    %v2296 = vpop.f32.mrf.mxu0
    %v2297 = vadd.f32 %v2103, %v2296
    %2298 = vmatmul.f32.gmra.mxu0 %v1936
    %v2299 = vpop.f32.mrf.mxu0
    %v2300 = vadd.f32 %v2103, %v2299
    %2301 = vmatmul.f32.gmra.mxu0 %v1944
    %v2302 = vpop.f32.mrf.mxu0
    %v2303 = vadd.f32 %v2103, %v2302
    %2304 = vmatmul.f32.gmra.mxu0 %v1952
    %v2305 = vpop.f32.mrf.mxu0
    %v2306 = vadd.f32 %v2103, %v2305
    %2307 = vmatmul.f32.gmra.mxu0 %v1960
    %v2308 = vpop.f32.mrf.mxu0
    %v2309 = vadd.f32 %v2103, %v2308
    %2310 = vmatmul.f32.gmra.mxu0 %v1968
    %v2311 = vpop.f32.mrf.mxu0
    %v2312 = vadd.f32 %v2103, %v2311
    %2313 = vdwg.mxu0
    %2314 = vmatpush.msra.mxu0 %v2007
    %2315 = vmatpush.msra.mxu0 %v2006
    %2316 = vmatpush.msra.mxu0 %v2005
    %2317 = vmatpush.msra.mxu0 %v2004
    %2318 = vmatpush.msra.mxu0 %v2003
    %2319 = vmatpush.msra.mxu0 %v2002
    %2320 = vmatpush.msra.mxu0 %v2001
    %2321 = vmatpush.msra.mxu0 %v2000
    %2322 = vmatpush.msra.mxu0 %v1999
    %2323 = vmatpush.msra.mxu0 %v1998
    %2324 = vmatpush.msra.mxu0 %v1997
    %2325 = vmatpush.msra.mxu0 %v1996
    %2326 = vmatpush.msra.mxu0 %v1995
    %2327 = vmatpush.msra.mxu0 %v1994
    %2328 = vmatpush.msra.mxu0 %v1993
    %2329 = vmatpush.msra.mxu0 %v1992
    %2330 = vmatmul.f32.gmra.mxu0 %v1721
    %v2331 = vpop.f32.mrf.mxu0
    %v2332 = vadd.f32 %v2219, %v2331
    %2333 = vmatmul.f32.gmra.mxu0 %v1729
    %v2334 = vpop.f32.mrf.mxu0
    %v2335 = vadd.f32 %v2222, %v2334
    %2336 = vmatmul.f32.gmra.mxu0 %v1737
    %v2337 = vpop.f32.mrf.mxu0
    %v2338 = vadd.f32 %v2225, %v2337
    %2339 = vmatmul.f32.gmra.mxu0 %v1745
    %v2340 = vpop.f32.mrf.mxu0
    %v2341 = vadd.f32 %v2228, %v2340
    %2342 = vmatmul.f32.gmra.mxu0 %v1753
    %v2343 = vpop.f32.mrf.mxu0
    %v2344 = vadd.f32 %v2231, %v2343
    %2345 = vmatmul.f32.gmra.mxu0 %v1761
    %v2346 = vpop.f32.mrf.mxu0
    %v2347 = vadd.f32 %v2234, %v2346
    %2348 = vmatmul.f32.gmra.mxu0 %v1769
    %v2349 = vpop.f32.mrf.mxu0
    %v2350 = vadd.f32 %v2237, %v2349
    %2351 = vmatmul.f32.gmra.mxu0 %v1777
    %v2352 = vpop.f32.mrf.mxu0
    %v2353 = vadd.f32 %v2240, %v2352
    %2354 = vmatmul.f32.gmra.mxu0 %v1785
    %v2355 = vpop.f32.mrf.mxu0
    %v2356 = vadd.f32 %v2243, %v2355
    %2357 = vmatmul.f32.gmra.mxu0 %v1793
    %v2358 = vpop.f32.mrf.mxu0
    %v2359 = vadd.f32 %v2246, %v2358
    %2360 = vmatmul.f32.gmra.mxu0 %v1801
    %v2361 = vpop.f32.mrf.mxu0
    %v2362 = vadd.f32 %v2249, %v2361
    %2363 = vmatmul.f32.gmra.mxu0 %v1809
    %v2364 = vpop.f32.mrf.mxu0
    %v2365 = vadd.f32 %v2252, %v2364
    %2366 = vmatmul.f32.gmra.mxu0 %v1817
    %v2367 = vpop.f32.mrf.mxu0
    %v2368 = vadd.f32 %v2255, %v2367
    %2369 = vmatmul.f32.gmra.mxu0 %v1825
    %v2370 = vpop.f32.mrf.mxu0
    %v2371 = vadd.f32 %v2258, %v2370
    %2372 = vmatmul.f32.gmra.mxu0 %v1833
    %v2373 = vpop.f32.mrf.mxu0
    %v2374 = vadd.f32 %v2261, %v2373
    %2375 = vmatmul.f32.gmra.mxu0 %v1841
    %v2376 = vpop.f32.mrf.mxu0
    %v2377 = vadd.f32 %v2264, %v2376
    %2378 = vmatmul.f32.gmra.mxu0 %v1849
    %v2379 = vpop.f32.mrf.mxu0
    %v2380 = vadd.f32 %v2267, %v2379
    %2381 = vmatmul.f32.gmra.mxu0 %v1857
    %v2382 = vpop.f32.mrf.mxu0
    %v2383 = vadd.f32 %v2270, %v2382
    %2384 = vmatmul.f32.gmra.mxu0 %v1865
    %v2385 = vpop.f32.mrf.mxu0
    %v2386 = vadd.f32 %v2273, %v2385
    %2387 = vmatmul.f32.gmra.mxu0 %v1873
    %v2388 = vpop.f32.mrf.mxu0
    %v2389 = vadd.f32 %v2276, %v2388
    %2390 = vmatmul.f32.gmra.mxu0 %v1881
    %v2391 = vpop.f32.mrf.mxu0
    %v2392 = vadd.f32 %v2279, %v2391
    %2393 = vmatmul.f32.gmra.mxu0 %v1889
    %v2394 = vpop.f32.mrf.mxu0
    %v2395 = vadd.f32 %v2282, %v2394
    %2396 = vmatmul.f32.gmra.mxu0 %v1897
    %v2397 = vpop.f32.mrf.mxu0
    %v2398 = vadd.f32 %v2285, %v2397
    %2399 = vmatmul.f32.gmra.mxu0 %v1905
    %v2400 = vpop.f32.mrf.mxu0
    %v2401 = vadd.f32 %v2288, %v2400
    %2402 = vmatmul.f32.gmra.mxu0 %v1913
    %v2403 = vpop.f32.mrf.mxu0
    %v2404 = vadd.f32 %v2291, %v2403
    %2405 = vmatmul.f32.gmra.mxu0 %v1921
    %v2406 = vpop.f32.mrf.mxu0
    %v2407 = vadd.f32 %v2294, %v2406
    %2408 = vmatmul.f32.gmra.mxu0 %v1929
    %v2409 = vpop.f32.mrf.mxu0
    %v2410 = vadd.f32 %v2297, %v2409
    %2411 = vmatmul.f32.gmra.mxu0 %v1937
    %v2412 = vpop.f32.mrf.mxu0
    %v2413 = vadd.f32 %v2300, %v2412
    %2414 = vmatmul.f32.gmra.mxu0 %v1945
    %v2415 = vpop.f32.mrf.mxu0
    %v2416 = vadd.f32 %v2303, %v2415
    %2417 = vmatmul.f32.gmra.mxu0 %v1953
    %v2418 = vpop.f32.mrf.mxu0
    %v2419 = vadd.f32 %v2306, %v2418
    %2420 = vmatmul.f32.gmra.mxu0 %v1961
    %v2421 = vpop.f32.mrf.mxu0
    %v2422 = vadd.f32 %v2309, %v2421
    %2423 = vmatmul.f32.gmra.mxu0 %v1969
    %v2424 = vpop.f32.mrf.mxu0
    %v2425 = vadd.f32 %v2312, %v2424
    %2426 = vdwg.mxu0
    %2427 = vmatpush.msra.mxu0 %v2023
    %2428 = vmatpush.msra.mxu0 %v2022
    %2429 = vmatpush.msra.mxu0 %v2021
    %2430 = vmatpush.msra.mxu0 %v2020
    %2431 = vmatpush.msra.mxu0 %v2019
    %2432 = vmatpush.msra.mxu0 %v2018
    %2433 = vmatpush.msra.mxu0 %v2017
    %2434 = vmatpush.msra.mxu0 %v2016
    %2435 = vmatpush.msra.mxu0 %v2015
    %2436 = vmatpush.msra.mxu0 %v2014
    %2437 = vmatpush.msra.mxu0 %v2013
    %2438 = vmatpush.msra.mxu0 %v2012
    %2439 = vmatpush.msra.mxu0 %v2011
    %2440 = vmatpush.msra.mxu0 %v2010
    %2441 = vmatpush.msra.mxu0 %v2009
    %2442 = vmatpush.msra.mxu0 %v2008
    %2443 = vmatmul.f32.gmra.mxu0 %v1722
    %v2444 = vpop.f32.mrf.mxu0
    %v2445 = vadd.f32 %v2332, %v2444
    %2446 = vmatmul.f32.gmra.mxu0 %v1730
    %v2447 = vpop.f32.mrf.mxu0
    %v2448 = vadd.f32 %v2335, %v2447
    %2449 = vmatmul.f32.gmra.mxu0 %v1738
    %v2450 = vpop.f32.mrf.mxu0
    %v2451 = vadd.f32 %v2338, %v2450
    %2452 = vmatmul.f32.gmra.mxu0 %v1746
    %v2453 = vpop.f32.mrf.mxu0
    %v2454 = vadd.f32 %v2341, %v2453
    %2455 = vmatmul.f32.gmra.mxu0 %v1754
    %v2456 = vpop.f32.mrf.mxu0
    %v2457 = vadd.f32 %v2344, %v2456
    %2458 = vmatmul.f32.gmra.mxu0 %v1762
    %v2459 = vpop.f32.mrf.mxu0
    %v2460 = vadd.f32 %v2347, %v2459
    %2461 = vmatmul.f32.gmra.mxu0 %v1770
    %v2462 = vpop.f32.mrf.mxu0
    %v2463 = vadd.f32 %v2350, %v2462
    %2464 = vmatmul.f32.gmra.mxu0 %v1778
    %v2465 = vpop.f32.mrf.mxu0
    %v2466 = vadd.f32 %v2353, %v2465
    %2467 = vmatmul.f32.gmra.mxu0 %v1786
    %v2468 = vpop.f32.mrf.mxu0
    %v2469 = vadd.f32 %v2356, %v2468
    %2470 = vmatmul.f32.gmra.mxu0 %v1794
    %v2471 = vpop.f32.mrf.mxu0
    %v2472 = vadd.f32 %v2359, %v2471
    %2473 = vmatmul.f32.gmra.mxu0 %v1802
    %v2474 = vpop.f32.mrf.mxu0
    %v2475 = vadd.f32 %v2362, %v2474
    %2476 = vmatmul.f32.gmra.mxu0 %v1810
    %v2477 = vpop.f32.mrf.mxu0
    %v2478 = vadd.f32 %v2365, %v2477
    %2479 = vmatmul.f32.gmra.mxu0 %v1818
    %v2480 = vpop.f32.mrf.mxu0
    %v2481 = vadd.f32 %v2368, %v2480
    %2482 = vmatmul.f32.gmra.mxu0 %v1826
    %v2483 = vpop.f32.mrf.mxu0
    %v2484 = vadd.f32 %v2371, %v2483
    %2485 = vmatmul.f32.gmra.mxu0 %v1834
    %v2486 = vpop.f32.mrf.mxu0
    %v2487 = vadd.f32 %v2374, %v2486
    %2488 = vmatmul.f32.gmra.mxu0 %v1842
    %v2489 = vpop.f32.mrf.mxu0
    %v2490 = vadd.f32 %v2377, %v2489
    %2491 = vmatmul.f32.gmra.mxu0 %v1850
    %v2492 = vpop.f32.mrf.mxu0
    %v2493 = vadd.f32 %v2380, %v2492
    %2494 = vmatmul.f32.gmra.mxu0 %v1858
    %v2495 = vpop.f32.mrf.mxu0
    %v2496 = vadd.f32 %v2383, %v2495
    %2497 = vmatmul.f32.gmra.mxu0 %v1866
    %v2498 = vpop.f32.mrf.mxu0
    %v2499 = vadd.f32 %v2386, %v2498
    %2500 = vmatmul.f32.gmra.mxu0 %v1874
    %v2501 = vpop.f32.mrf.mxu0
    %v2502 = vadd.f32 %v2389, %v2501
    %2503 = vmatmul.f32.gmra.mxu0 %v1882
    %v2504 = vpop.f32.mrf.mxu0
    %v2505 = vadd.f32 %v2392, %v2504
    %2506 = vmatmul.f32.gmra.mxu0 %v1890
    %v2507 = vpop.f32.mrf.mxu0
    %v2508 = vadd.f32 %v2395, %v2507
    %2509 = vmatmul.f32.gmra.mxu0 %v1898
    %v2510 = vpop.f32.mrf.mxu0
    %v2511 = vadd.f32 %v2398, %v2510
    %2512 = vmatmul.f32.gmra.mxu0 %v1906
    %v2513 = vpop.f32.mrf.mxu0
    %v2514 = vadd.f32 %v2401, %v2513
    %2515 = vmatmul.f32.gmra.mxu0 %v1914
    %v2516 = vpop.f32.mrf.mxu0
    %v2517 = vadd.f32 %v2404, %v2516
    %2518 = vmatmul.f32.gmra.mxu0 %v1922
    %v2519 = vpop.f32.mrf.mxu0
    %v2520 = vadd.f32 %v2407, %v2519
    %2521 = vmatmul.f32.gmra.mxu0 %v1930
    %v2522 = vpop.f32.mrf.mxu0
    %v2523 = vadd.f32 %v2410, %v2522
    %2524 = vmatmul.f32.gmra.mxu0 %v1938
    %v2525 = vpop.f32.mrf.mxu0
    %v2526 = vadd.f32 %v2413, %v2525
    %2527 = vmatmul.f32.gmra.mxu0 %v1946
    %v2528 = vpop.f32.mrf.mxu0
    %v2529 = vadd.f32 %v2416, %v2528
    %2530 = vmatmul.f32.gmra.mxu0 %v1954
    %v2531 = vpop.f32.mrf.mxu0
    %v2532 = vadd.f32 %v2419, %v2531
    %2533 = vmatmul.f32.gmra.mxu0 %v1962
    %v2534 = vpop.f32.mrf.mxu0
    %v2535 = vadd.f32 %v2422, %v2534
    %2536 = vmatmul.f32.gmra.mxu0 %v1970
    %v2537 = vpop.f32.mrf.mxu0
    %v2538 = vadd.f32 %v2425, %v2537
    %2539 = vdwg.mxu0
    %2540 = vmatpush.msra.mxu0 %v2039
    %2541 = vmatpush.msra.mxu0 %v2038
    %2542 = vmatpush.msra.mxu0 %v2037
    %2543 = vmatpush.msra.mxu0 %v2036
    %2544 = vmatpush.msra.mxu0 %v2035
    %2545 = vmatpush.msra.mxu0 %v2034
    %2546 = vmatpush.msra.mxu0 %v2033
    %2547 = vmatpush.msra.mxu0 %v2032
    %2548 = vmatpush.msra.mxu0 %v2031
    %2549 = vmatpush.msra.mxu0 %v2030
    %2550 = vmatpush.msra.mxu0 %v2029
    %2551 = vmatpush.msra.mxu0 %v2028
    %2552 = vmatpush.msra.mxu0 %v2027
    %2553 = vmatpush.msra.mxu0 %v2026
    %2554 = vmatpush.msra.mxu0 %v2025
    %2555 = vmatpush.msra.mxu0 %v2024
    %2556 = vmatmul.f32.gmra.mxu0 %v1723
    %v2557 = vpop.f32.mrf.mxu0
    %v2558 = vadd.f32 %v2445, %v2557
    %2559 = vmatmul.f32.gmra.mxu0 %v1731
    %v2560 = vpop.f32.mrf.mxu0
    %v2561 = vadd.f32 %v2448, %v2560
    %2562 = vmatmul.f32.gmra.mxu0 %v1739
    %v2563 = vpop.f32.mrf.mxu0
    %v2564 = vadd.f32 %v2451, %v2563
    %2565 = vmatmul.f32.gmra.mxu0 %v1747
    %v2566 = vpop.f32.mrf.mxu0
    %v2567 = vadd.f32 %v2454, %v2566
    %2568 = vmatmul.f32.gmra.mxu0 %v1755
    %v2569 = vpop.f32.mrf.mxu0
    %v2570 = vadd.f32 %v2457, %v2569
    %2571 = vmatmul.f32.gmra.mxu0 %v1763
    %v2572 = vpop.f32.mrf.mxu0
    %v2573 = vadd.f32 %v2460, %v2572
    %2574 = vmatmul.f32.gmra.mxu0 %v1771
    %v2575 = vpop.f32.mrf.mxu0
    %v2576 = vadd.f32 %v2463, %v2575
    %2577 = vmatmul.f32.gmra.mxu0 %v1779
    %v2578 = vpop.f32.mrf.mxu0
    %v2579 = vadd.f32 %v2466, %v2578
    %2580 = vmatmul.f32.gmra.mxu0 %v1787
    %v2581 = vpop.f32.mrf.mxu0
    %v2582 = vadd.f32 %v2469, %v2581
    %2583 = vmatmul.f32.gmra.mxu0 %v1795
    %v2584 = vpop.f32.mrf.mxu0
    %v2585 = vadd.f32 %v2472, %v2584
    %2586 = vmatmul.f32.gmra.mxu0 %v1803
    %v2587 = vpop.f32.mrf.mxu0
    %v2588 = vadd.f32 %v2475, %v2587
    %2589 = vmatmul.f32.gmra.mxu0 %v1811
    %v2590 = vpop.f32.mrf.mxu0
    %v2591 = vadd.f32 %v2478, %v2590
    %2592 = vmatmul.f32.gmra.mxu0 %v1819
    %v2593 = vpop.f32.mrf.mxu0
    %v2594 = vadd.f32 %v2481, %v2593
    %2595 = vmatmul.f32.gmra.mxu0 %v1827
    %v2596 = vpop.f32.mrf.mxu0
    %v2597 = vadd.f32 %v2484, %v2596
    %2598 = vmatmul.f32.gmra.mxu0 %v1835
    %v2599 = vpop.f32.mrf.mxu0
    %v2600 = vadd.f32 %v2487, %v2599
    %2601 = vmatmul.f32.gmra.mxu0 %v1843
    %v2602 = vpop.f32.mrf.mxu0
    %v2603 = vadd.f32 %v2490, %v2602
    %2604 = vmatmul.f32.gmra.mxu0 %v1851
    %v2605 = vpop.f32.mrf.mxu0
    %v2606 = vadd.f32 %v2493, %v2605
    %2607 = vmatmul.f32.gmra.mxu0 %v1859
    %v2608 = vpop.f32.mrf.mxu0
    %v2609 = vadd.f32 %v2496, %v2608
    %2610 = vmatmul.f32.gmra.mxu0 %v1867
    %v2611 = vpop.f32.mrf.mxu0
    %v2612 = vadd.f32 %v2499, %v2611
    %2613 = vmatmul.f32.gmra.mxu0 %v1875
    %v2614 = vpop.f32.mrf.mxu0
    %v2615 = vadd.f32 %v2502, %v2614
    %2616 = vmatmul.f32.gmra.mxu0 %v1883
    %v2617 = vpop.f32.mrf.mxu0
    %v2618 = vadd.f32 %v2505, %v2617
    %2619 = vmatmul.f32.gmra.mxu0 %v1891
    %v2620 = vpop.f32.mrf.mxu0
    %v2621 = vadd.f32 %v2508, %v2620
    %2622 = vmatmul.f32.gmra.mxu0 %v1899
    %v2623 = vpop.f32.mrf.mxu0
    %v2624 = vadd.f32 %v2511, %v2623
    %2625 = vmatmul.f32.gmra.mxu0 %v1907
    %v2626 = vpop.f32.mrf.mxu0
    %v2627 = vadd.f32 %v2514, %v2626
    %2628 = vmatmul.f32.gmra.mxu0 %v1915
    %v2629 = vpop.f32.mrf.mxu0
    %v2630 = vadd.f32 %v2517, %v2629
    %2631 = vmatmul.f32.gmra.mxu0 %v1923
    %v2632 = vpop.f32.mrf.mxu0
    %v2633 = vadd.f32 %v2520, %v2632
    %2634 = vmatmul.f32.gmra.mxu0 %v1931
    %v2635 = vpop.f32.mrf.mxu0
    %v2636 = vadd.f32 %v2523, %v2635
    %2637 = vmatmul.f32.gmra.mxu0 %v1939
    %v2638 = vpop.f32.mrf.mxu0
    %v2639 = vadd.f32 %v2526, %v2638
    %2640 = vmatmul.f32.gmra.mxu0 %v1947
    %v2641 = vpop.f32.mrf.mxu0
    %v2642 = vadd.f32 %v2529, %v2641
    %2643 = vmatmul.f32.gmra.mxu0 %v1955
    %v2644 = vpop.f32.mrf.mxu0
    %v2645 = vadd.f32 %v2532, %v2644
    %2646 = vmatmul.f32.gmra.mxu0 %v1963
    %v2647 = vpop.f32.mrf.mxu0
    %v2648 = vadd.f32 %v2535, %v2647
    %2649 = vmatmul.f32.gmra.mxu0 %v1971
    %v2650 = vpop.f32.mrf.mxu0
    %v2651 = vadd.f32 %v2538, %v2650
    %2652 = vdwg.mxu0
    %2653 = vmatpush.msra.mxu0 %v2055
    %2654 = vmatpush.msra.mxu0 %v2054
    %2655 = vmatpush.msra.mxu0 %v2053
    %2656 = vmatpush.msra.mxu0 %v2052
    %2657 = vmatpush.msra.mxu0 %v2051
    %2658 = vmatpush.msra.mxu0 %v2050
    %2659 = vmatpush.msra.mxu0 %v2049
    %2660 = vmatpush.msra.mxu0 %v2048
    %2661 = vmatpush.msra.mxu0 %v2047
    %2662 = vmatpush.msra.mxu0 %v2046
    %2663 = vmatpush.msra.mxu0 %v2045
    %2664 = vmatpush.msra.mxu0 %v2044
    %2665 = vmatpush.msra.mxu0 %v2043
    %2666 = vmatpush.msra.mxu0 %v2042
    %2667 = vmatpush.msra.mxu0 %v2041
    %2668 = vmatpush.msra.mxu0 %v2040
    %2669 = vmatmul.f32.gmra.mxu0 %v1724
    %v2670 = vpop.f32.mrf.mxu0
    %v2671 = vadd.f32 %v2558, %v2670
    %2672 = vmatmul.f32.gmra.mxu0 %v1732
    %v2673 = vpop.f32.mrf.mxu0
    %v2674 = vadd.f32 %v2561, %v2673
    %2675 = vmatmul.f32.gmra.mxu0 %v1740
    %v2676 = vpop.f32.mrf.mxu0
    %v2677 = vadd.f32 %v2564, %v2676
    %2678 = vmatmul.f32.gmra.mxu0 %v1748
    %v2679 = vpop.f32.mrf.mxu0
    %v2680 = vadd.f32 %v2567, %v2679
    %2681 = vmatmul.f32.gmra.mxu0 %v1756
    %v2682 = vpop.f32.mrf.mxu0
    %v2683 = vadd.f32 %v2570, %v2682
    %2684 = vmatmul.f32.gmra.mxu0 %v1764
    %v2685 = vpop.f32.mrf.mxu0
    %v2686 = vadd.f32 %v2573, %v2685
    %2687 = vmatmul.f32.gmra.mxu0 %v1772
    %v2688 = vpop.f32.mrf.mxu0
    %v2689 = vadd.f32 %v2576, %v2688
    %2690 = vmatmul.f32.gmra.mxu0 %v1780
    %v2691 = vpop.f32.mrf.mxu0
    %v2692 = vadd.f32 %v2579, %v2691
    %2693 = vmatmul.f32.gmra.mxu0 %v1788
    %v2694 = vpop.f32.mrf.mxu0
    %v2695 = vadd.f32 %v2582, %v2694
    %2696 = vmatmul.f32.gmra.mxu0 %v1796
    %v2697 = vpop.f32.mrf.mxu0
    %v2698 = vadd.f32 %v2585, %v2697
    %2699 = vmatmul.f32.gmra.mxu0 %v1804
    %v2700 = vpop.f32.mrf.mxu0
    %v2701 = vadd.f32 %v2588, %v2700
    %2702 = vmatmul.f32.gmra.mxu0 %v1812
    %v2703 = vpop.f32.mrf.mxu0
    %v2704 = vadd.f32 %v2591, %v2703
    %2705 = vmatmul.f32.gmra.mxu0 %v1820
    %v2706 = vpop.f32.mrf.mxu0
    %v2707 = vadd.f32 %v2594, %v2706
    %2708 = vmatmul.f32.gmra.mxu0 %v1828
    %v2709 = vpop.f32.mrf.mxu0
    %v2710 = vadd.f32 %v2597, %v2709
    %2711 = vmatmul.f32.gmra.mxu0 %v1836
    %v2712 = vpop.f32.mrf.mxu0
    %v2713 = vadd.f32 %v2600, %v2712
    %2714 = vmatmul.f32.gmra.mxu0 %v1844
    %v2715 = vpop.f32.mrf.mxu0
    %v2716 = vadd.f32 %v2603, %v2715
    %2717 = vmatmul.f32.gmra.mxu0 %v1852
    %v2718 = vpop.f32.mrf.mxu0
    %v2719 = vadd.f32 %v2606, %v2718
    %2720 = vmatmul.f32.gmra.mxu0 %v1860
    %v2721 = vpop.f32.mrf.mxu0
    %v2722 = vadd.f32 %v2609, %v2721
    %2723 = vmatmul.f32.gmra.mxu0 %v1868
    %v2724 = vpop.f32.mrf.mxu0
    %v2725 = vadd.f32 %v2612, %v2724
    %2726 = vmatmul.f32.gmra.mxu0 %v1876
    %v2727 = vpop.f32.mrf.mxu0
    %v2728 = vadd.f32 %v2615, %v2727
    %2729 = vmatmul.f32.gmra.mxu0 %v1884
    %v2730 = vpop.f32.mrf.mxu0
    %v2731 = vadd.f32 %v2618, %v2730
    %2732 = vmatmul.f32.gmra.mxu0 %v1892
    %v2733 = vpop.f32.mrf.mxu0
    %v2734 = vadd.f32 %v2621, %v2733
    %2735 = vmatmul.f32.gmra.mxu0 %v1900
    %v2736 = vpop.f32.mrf.mxu0
    %v2737 = vadd.f32 %v2624, %v2736
    %2738 = vmatmul.f32.gmra.mxu0 %v1908
    %v2739 = vpop.f32.mrf.mxu0
    %v2740 = vadd.f32 %v2627, %v2739
    %2741 = vmatmul.f32.gmra.mxu0 %v1916
    %v2742 = vpop.f32.mrf.mxu0
    %v2743 = vadd.f32 %v2630, %v2742
    %2744 = vmatmul.f32.gmra.mxu0 %v1924
    %v2745 = vpop.f32.mrf.mxu0
    %v2746 = vadd.f32 %v2633, %v2745
    %2747 = vmatmul.f32.gmra.mxu0 %v1932
    %v2748 = vpop.f32.mrf.mxu0
    %v2749 = vadd.f32 %v2636, %v2748
    %2750 = vmatmul.f32.gmra.mxu0 %v1940
    %v2751 = vpop.f32.mrf.mxu0
    %v2752 = vadd.f32 %v2639, %v2751
    %2753 = vmatmul.f32.gmra.mxu0 %v1948
    %v2754 = vpop.f32.mrf.mxu0
    %v2755 = vadd.f32 %v2642, %v2754
    %2756 = vmatmul.f32.gmra.mxu0 %v1956
    %v2757 = vpop.f32.mrf.mxu0
    %v2758 = vadd.f32 %v2645, %v2757
    %2759 = vmatmul.f32.gmra.mxu0 %v1964
    %v2760 = vpop.f32.mrf.mxu0
    %v2761 = vadd.f32 %v2648, %v2760
    %2762 = vmatmul.f32.gmra.mxu0 %v1972
    %v2763 = vpop.f32.mrf.mxu0
    %v2764 = vadd.f32 %v2651, %v2763
    %2765 = vdwg.mxu0
    %2766 = vmatpush.msra.mxu0 %v2071
    %2767 = vmatpush.msra.mxu0 %v2070
    %2768 = vmatpush.msra.mxu0 %v2069
    %2769 = vmatpush.msra.mxu0 %v2068
    %2770 = vmatpush.msra.mxu0 %v2067
    %2771 = vmatpush.msra.mxu0 %v2066
    %2772 = vmatpush.msra.mxu0 %v2065
    %2773 = vmatpush.msra.mxu0 %v2064
    %2774 = vmatpush.msra.mxu0 %v2063
    %2775 = vmatpush.msra.mxu0 %v2062
    %2776 = vmatpush.msra.mxu0 %v2061
    %2777 = vmatpush.msra.mxu0 %v2060
    %2778 = vmatpush.msra.mxu0 %v2059
    %2779 = vmatpush.msra.mxu0 %v2058
    %2780 = vmatpush.msra.mxu0 %v2057
    %2781 = vmatpush.msra.mxu0 %v2056
    %2782 = vmatmul.f32.gmra.mxu0 %v1725
    %v2783 = vpop.f32.mrf.mxu0
    %v2784 = vadd.f32 %v2671, %v2783
    %2785 = vmatmul.f32.gmra.mxu0 %v1733
    %v2786 = vpop.f32.mrf.mxu0
    %v2787 = vadd.f32 %v2674, %v2786
    %2788 = vmatmul.f32.gmra.mxu0 %v1741
    %v2789 = vpop.f32.mrf.mxu0
    %v2790 = vadd.f32 %v2677, %v2789
    %2791 = vmatmul.f32.gmra.mxu0 %v1749
    %v2792 = vpop.f32.mrf.mxu0
    %v2793 = vadd.f32 %v2680, %v2792
    %2794 = vmatmul.f32.gmra.mxu0 %v1757
    %v2795 = vpop.f32.mrf.mxu0
    %v2796 = vadd.f32 %v2683, %v2795
    %2797 = vmatmul.f32.gmra.mxu0 %v1765
    %v2798 = vpop.f32.mrf.mxu0
    %v2799 = vadd.f32 %v2686, %v2798
    %2800 = vmatmul.f32.gmra.mxu0 %v1773
    %v2801 = vpop.f32.mrf.mxu0
    %v2802 = vadd.f32 %v2689, %v2801
    %2803 = vmatmul.f32.gmra.mxu0 %v1781
    %v2804 = vpop.f32.mrf.mxu0
    %v2805 = vadd.f32 %v2692, %v2804
    %2806 = vmatmul.f32.gmra.mxu0 %v1789
    %v2807 = vpop.f32.mrf.mxu0
    %v2808 = vadd.f32 %v2695, %v2807
    %2809 = vmatmul.f32.gmra.mxu0 %v1797
    %v2810 = vpop.f32.mrf.mxu0
    %v2811 = vadd.f32 %v2698, %v2810
    %2812 = vmatmul.f32.gmra.mxu0 %v1805
    %v2813 = vpop.f32.mrf.mxu0
    %v2814 = vadd.f32 %v2701, %v2813
    %2815 = vmatmul.f32.gmra.mxu0 %v1813
    %v2816 = vpop.f32.mrf.mxu0
    %v2817 = vadd.f32 %v2704, %v2816
    %2818 = vmatmul.f32.gmra.mxu0 %v1821
    %v2819 = vpop.f32.mrf.mxu0
    %v2820 = vadd.f32 %v2707, %v2819
    %2821 = vmatmul.f32.gmra.mxu0 %v1829
    %v2822 = vpop.f32.mrf.mxu0
    %v2823 = vadd.f32 %v2710, %v2822
    %2824 = vmatmul.f32.gmra.mxu0 %v1837
    %v2825 = vpop.f32.mrf.mxu0
    %v2826 = vadd.f32 %v2713, %v2825
    %2827 = vmatmul.f32.gmra.mxu0 %v1845
    %v2828 = vpop.f32.mrf.mxu0
    %v2829 = vadd.f32 %v2716, %v2828
    %2830 = vmatmul.f32.gmra.mxu0 %v1853
    %v2831 = vpop.f32.mrf.mxu0
    %v2832 = vadd.f32 %v2719, %v2831
    %2833 = vmatmul.f32.gmra.mxu0 %v1861
    %v2834 = vpop.f32.mrf.mxu0
    %v2835 = vadd.f32 %v2722, %v2834
    %2836 = vmatmul.f32.gmra.mxu0 %v1869
    %v2837 = vpop.f32.mrf.mxu0
    %v2838 = vadd.f32 %v2725, %v2837
    %2839 = vmatmul.f32.gmra.mxu0 %v1877
    %v2840 = vpop.f32.mrf.mxu0
    %v2841 = vadd.f32 %v2728, %v2840
    %2842 = vmatmul.f32.gmra.mxu0 %v1885
    %v2843 = vpop.f32.mrf.mxu0
    %v2844 = vadd.f32 %v2731, %v2843
    %2845 = vmatmul.f32.gmra.mxu0 %v1893
    %v2846 = vpop.f32.mrf.mxu0
    %v2847 = vadd.f32 %v2734, %v2846
    %2848 = vmatmul.f32.gmra.mxu0 %v1901
    %v2849 = vpop.f32.mrf.mxu0
    %v2850 = vadd.f32 %v2737, %v2849
    %2851 = vmatmul.f32.gmra.mxu0 %v1909
    %v2852 = vpop.f32.mrf.mxu0
    %v2853 = vadd.f32 %v2740, %v2852
    %2854 = vmatmul.f32.gmra.mxu0 %v1917
    %v2855 = vpop.f32.mrf.mxu0
    %v2856 = vadd.f32 %v2743, %v2855
    %2857 = vmatmul.f32.gmra.mxu0 %v1925
    %v2858 = vpop.f32.mrf.mxu0
    %v2859 = vadd.f32 %v2746, %v2858
    %2860 = vmatmul.f32.gmra.mxu0 %v1933
    %v2861 = vpop.f32.mrf.mxu0
    %v2862 = vadd.f32 %v2749, %v2861
    %2863 = vmatmul.f32.gmra.mxu0 %v1941
    %v2864 = vpop.f32.mrf.mxu0
    %v2865 = vadd.f32 %v2752, %v2864
    %2866 = vmatmul.f32.gmra.mxu0 %v1949
    %v2867 = vpop.f32.mrf.mxu0
    %v2868 = vadd.f32 %v2755, %v2867
    %2869 = vmatmul.f32.gmra.mxu0 %v1957
    %v2870 = vpop.f32.mrf.mxu0
    %v2871 = vadd.f32 %v2758, %v2870
    %2872 = vmatmul.f32.gmra.mxu0 %v1965
    %v2873 = vpop.f32.mrf.mxu0
    %v2874 = vadd.f32 %v2761, %v2873
    %2875 = vmatmul.f32.gmra.mxu0 %v1973
    %v2876 = vpop.f32.mrf.mxu0
    %v2877 = vadd.f32 %v2764, %v2876
    %2878 = vdwg.mxu0
    %2879 = vmatpush.msra.mxu0 %v2087
    %2880 = vmatpush.msra.mxu0 %v2086
    %2881 = vmatpush.msra.mxu0 %v2085
    %2882 = vmatpush.msra.mxu0 %v2084
    %2883 = vmatpush.msra.mxu0 %v2083
    %2884 = vmatpush.msra.mxu0 %v2082
    %2885 = vmatpush.msra.mxu0 %v2081
    %2886 = vmatpush.msra.mxu0 %v2080
    %2887 = vmatpush.msra.mxu0 %v2079
    %2888 = vmatpush.msra.mxu0 %v2078
    %2889 = vmatpush.msra.mxu0 %v2077
    %2890 = vmatpush.msra.mxu0 %v2076
    %2891 = vmatpush.msra.mxu0 %v2075
    %2892 = vmatpush.msra.mxu0 %v2074
    %2893 = vmatpush.msra.mxu0 %v2073
    %2894 = vmatpush.msra.mxu0 %v2072
    %2895 = vmatmul.f32.gmra.mxu0 %v1726
    %v2896 = vpop.f32.mrf.mxu0
    %v2897 = vadd.f32 %v2784, %v2896
    %2898 = vmatmul.f32.gmra.mxu0 %v1734
    %v2899 = vpop.f32.mrf.mxu0
    %v2900 = vadd.f32 %v2787, %v2899
    %2901 = vmatmul.f32.gmra.mxu0 %v1742
    %v2902 = vpop.f32.mrf.mxu0
    %v2903 = vadd.f32 %v2790, %v2902
    %2904 = vmatmul.f32.gmra.mxu0 %v1750
    %v2905 = vpop.f32.mrf.mxu0
    %v2906 = vadd.f32 %v2793, %v2905
    %2907 = vmatmul.f32.gmra.mxu0 %v1758
    %v2908 = vpop.f32.mrf.mxu0
    %v2909 = vadd.f32 %v2796, %v2908
    %2910 = vmatmul.f32.gmra.mxu0 %v1766
    %v2911 = vpop.f32.mrf.mxu0
    %v2912 = vadd.f32 %v2799, %v2911
    %2913 = vmatmul.f32.gmra.mxu0 %v1774
    %v2914 = vpop.f32.mrf.mxu0
    %v2915 = vadd.f32 %v2802, %v2914
    %2916 = vmatmul.f32.gmra.mxu0 %v1782
    %v2917 = vpop.f32.mrf.mxu0
    %v2918 = vadd.f32 %v2805, %v2917
    %2919 = vmatmul.f32.gmra.mxu0 %v1790
    %v2920 = vpop.f32.mrf.mxu0
    %v2921 = vadd.f32 %v2808, %v2920
    %2922 = vmatmul.f32.gmra.mxu0 %v1798
    %v2923 = vpop.f32.mrf.mxu0
    %v2924 = vadd.f32 %v2811, %v2923
    %2925 = vmatmul.f32.gmra.mxu0 %v1806
    %v2926 = vpop.f32.mrf.mxu0
    %v2927 = vadd.f32 %v2814, %v2926
    %2928 = vmatmul.f32.gmra.mxu0 %v1814
    %v2929 = vpop.f32.mrf.mxu0
    %v2930 = vadd.f32 %v2817, %v2929
    %2931 = vmatmul.f32.gmra.mxu0 %v1822
    %v2932 = vpop.f32.mrf.mxu0
    %v2933 = vadd.f32 %v2820, %v2932
    %2934 = vmatmul.f32.gmra.mxu0 %v1830
    %v2935 = vpop.f32.mrf.mxu0
    %v2936 = vadd.f32 %v2823, %v2935
    %2937 = vmatmul.f32.gmra.mxu0 %v1838
    %v2938 = vpop.f32.mrf.mxu0
    %v2939 = vadd.f32 %v2826, %v2938
    %2940 = vmatmul.f32.gmra.mxu0 %v1846
    %v2941 = vpop.f32.mrf.mxu0
    %v2942 = vadd.f32 %v2829, %v2941
    %2943 = vmatmul.f32.gmra.mxu0 %v1854
    %v2944 = vpop.f32.mrf.mxu0
    %v2945 = vadd.f32 %v2832, %v2944
    %2946 = vmatmul.f32.gmra.mxu0 %v1862
    %v2947 = vpop.f32.mrf.mxu0
    %v2948 = vadd.f32 %v2835, %v2947
    %2949 = vmatmul.f32.gmra.mxu0 %v1870
    %v2950 = vpop.f32.mrf.mxu0
    %v2951 = vadd.f32 %v2838, %v2950
    %2952 = vmatmul.f32.gmra.mxu0 %v1878
    %v2953 = vpop.f32.mrf.mxu0
    %v2954 = vadd.f32 %v2841, %v2953
    %2955 = vmatmul.f32.gmra.mxu0 %v1886
    %v2956 = vpop.f32.mrf.mxu0
    %v2957 = vadd.f32 %v2844, %v2956
    %2958 = vmatmul.f32.gmra.mxu0 %v1894
    %v2959 = vpop.f32.mrf.mxu0
    %v2960 = vadd.f32 %v2847, %v2959
    %2961 = vmatmul.f32.gmra.mxu0 %v1902
    %v2962 = vpop.f32.mrf.mxu0
    %v2963 = vadd.f32 %v2850, %v2962
    %2964 = vmatmul.f32.gmra.mxu0 %v1910
    %v2965 = vpop.f32.mrf.mxu0
    %v2966 = vadd.f32 %v2853, %v2965
    %2967 = vmatmul.f32.gmra.mxu0 %v1918
    %v2968 = vpop.f32.mrf.mxu0
    %v2969 = vadd.f32 %v2856, %v2968
    %2970 = vmatmul.f32.gmra.mxu0 %v1926
    %v2971 = vpop.f32.mrf.mxu0
    %v2972 = vadd.f32 %v2859, %v2971
    %2973 = vmatmul.f32.gmra.mxu0 %v1934
    %v2974 = vpop.f32.mrf.mxu0
    %v2975 = vadd.f32 %v2862, %v2974
    %2976 = vmatmul.f32.gmra.mxu0 %v1942
    %v2977 = vpop.f32.mrf.mxu0
    %v2978 = vadd.f32 %v2865, %v2977
    %2979 = vmatmul.f32.gmra.mxu0 %v1950
    %v2980 = vpop.f32.mrf.mxu0
    %v2981 = vadd.f32 %v2868, %v2980
    %2982 = vmatmul.f32.gmra.mxu0 %v1958
    %v2983 = vpop.f32.mrf.mxu0
    %v2984 = vadd.f32 %v2871, %v2983
    %2985 = vmatmul.f32.gmra.mxu0 %v1966
    %v2986 = vpop.f32.mrf.mxu0
    %v2987 = vadd.f32 %v2874, %v2986
    %2988 = vmatmul.f32.gmra.mxu0 %v1974
    %v2989 = vpop.f32.mrf.mxu0
    %v2990 = vadd.f32 %v2877, %v2989
    %2991 = vdwg.mxu0
    %2992 = vmatpush.msra.mxu0 0.0
    %2993 = vmatpush.msra.mxu0 0.0
    %2994 = vmatpush.msra.mxu0 0.0
    %2995 = vmatpush.msra.mxu0 %v2100
    %2996 = vmatpush.msra.mxu0 %v2099
    %2997 = vmatpush.msra.mxu0 %v2098
    %2998 = vmatpush.msra.mxu0 %v2097
    %2999 = vmatpush.msra.mxu0 %v2096
    %3000 = vmatpush.msra.mxu0 %v2095
    %3001 = vmatpush.msra.mxu0 %v2094
    %3002 = vmatpush.msra.mxu0 %v2093
    %3003 = vmatpush.msra.mxu0 %v2092
    %3004 = vmatpush.msra.mxu0 %v2091
    %3005 = vmatpush.msra.mxu0 %v2090
    %3006 = vmatpush.msra.mxu0 %v2089
    %3007 = vmatpush.msra.mxu0 %v2088
    %3008 = vmatmul.f32.gmra.mxu0 %v2106
    %v3009 = vpop.f32.mrf.mxu0
    %v3010 = vadd.f32 %v2897, %v3009
    %3011 = vmatmul.f32.gmra.mxu0 %v2109
    %v3012 = vpop.f32.mrf.mxu0
    %v3013 = vadd.f32 %v2900, %v3012
    %3014 = vmatmul.f32.gmra.mxu0 %v2112
    %v3015 = vpop.f32.mrf.mxu0
    %v3016 = vadd.f32 %v2903, %v3015
    %3017 = vmatmul.f32.gmra.mxu0 %v2115
    %v3018 = vpop.f32.mrf.mxu0
    %v3019 = vadd.f32 %v2906, %v3018
    %3020 = vmatmul.f32.gmra.mxu0 %v2118
    %v3021 = vpop.f32.mrf.mxu0
    %v3022 = vadd.f32 %v2909, %v3021
    %3023 = vmatmul.f32.gmra.mxu0 %v2121
    %v3024 = vpop.f32.mrf.mxu0
    %v3025 = vadd.f32 %v2912, %v3024
    %3026 = vmatmul.f32.gmra.mxu0 %v2124
    %v3027 = vpop.f32.mrf.mxu0
    %v3028 = vadd.f32 %v2915, %v3027
    %3029 = vmatmul.f32.gmra.mxu0 %v2127
    %v3030 = vpop.f32.mrf.mxu0
    %v3031 = vadd.f32 %v2918, %v3030
    %3032 = vmatmul.f32.gmra.mxu0 %v2130
    %v3033 = vpop.f32.mrf.mxu0
    %v3034 = vadd.f32 %v2921, %v3033
    %3035 = vmatmul.f32.gmra.mxu0 %v2133
    %v3036 = vpop.f32.mrf.mxu0
    %v3037 = vadd.f32 %v2924, %v3036
    %3038 = vmatmul.f32.gmra.mxu0 %v2136
    %v3039 = vpop.f32.mrf.mxu0
    %v3040 = vadd.f32 %v2927, %v3039
    %3041 = vmatmul.f32.gmra.mxu0 %v2139
    %v3042 = vpop.f32.mrf.mxu0
    %v3043 = vadd.f32 %v2930, %v3042
    %3044 = vmatmul.f32.gmra.mxu0 %v2142
    %v3045 = vpop.f32.mrf.mxu0
    %v3046 = vadd.f32 %v2933, %v3045
    %3047 = vmatmul.f32.gmra.mxu0 %v2145
    %v3048 = vpop.f32.mrf.mxu0
    %v3049 = vadd.f32 %v2936, %v3048
    %3050 = vmatmul.f32.gmra.mxu0 %v2148
    %v3051 = vpop.f32.mrf.mxu0
    %v3052 = vadd.f32 %v2939, %v3051
    %3053 = vmatmul.f32.gmra.mxu0 %v2151
    %v3054 = vpop.f32.mrf.mxu0
    %v3055 = vadd.f32 %v2942, %v3054
    %3056 = vmatmul.f32.gmra.mxu0 %v2154
    %v3057 = vpop.f32.mrf.mxu0
    %v3058 = vadd.f32 %v2945, %v3057
    %3059 = vmatmul.f32.gmra.mxu0 %v2157
    %v3060 = vpop.f32.mrf.mxu0
    %v3061 = vadd.f32 %v2948, %v3060
    %3062 = vmatmul.f32.gmra.mxu0 %v2160
    %v3063 = vpop.f32.mrf.mxu0
    %v3064 = vadd.f32 %v2951, %v3063
    %3065 = vmatmul.f32.gmra.mxu0 %v2163
    %v3066 = vpop.f32.mrf.mxu0
    %v3067 = vadd.f32 %v2954, %v3066
    %3068 = vmatmul.f32.gmra.mxu0 %v2166
    %v3069 = vpop.f32.mrf.mxu0
    %v3070 = vadd.f32 %v2957, %v3069
    %3071 = vmatmul.f32.gmra.mxu0 %v2169
    %v3072 = vpop.f32.mrf.mxu0
    %v3073 = vadd.f32 %v2960, %v3072
    %3074 = vmatmul.f32.gmra.mxu0 %v2172
    %v3075 = vpop.f32.mrf.mxu0
    %v3076 = vadd.f32 %v2963, %v3075
    %3077 = vmatmul.f32.gmra.mxu0 %v2175
    %v3078 = vpop.f32.mrf.mxu0
    %v3079 = vadd.f32 %v2966, %v3078
    %3080 = vmatmul.f32.gmra.mxu0 %v2178
    %v3081 = vpop.f32.mrf.mxu0
    %v3082 = vadd.f32 %v2969, %v3081
    %3083 = vmatmul.f32.gmra.mxu0 %v2181
    %v3084 = vpop.f32.mrf.mxu0
    %v3085 = vadd.f32 %v2972, %v3084
    %3086 = vmatmul.f32.gmra.mxu0 %v2184
    %v3087 = vpop.f32.mrf.mxu0
    %v3088 = vadd.f32 %v2975, %v3087
    %3089 = vmatmul.f32.gmra.mxu0 %v2187
    %v3090 = vpop.f32.mrf.mxu0
    %v3091 = vadd.f32 %v2978, %v3090
    %3092 = vmatmul.f32.gmra.mxu0 %v2190
    %v3093 = vpop.f32.mrf.mxu0
    %v3094 = vadd.f32 %v2981, %v3093
    %3095 = vmatmul.f32.gmra.mxu0 %v2193
    %v3096 = vpop.f32.mrf.mxu0
    %v3097 = vadd.f32 %v2984, %v3096
    %3098 = vmatmul.f32.gmra.mxu0 %v2196
    %v3099 = vpop.f32.mrf.mxu0
    %v3100 = vadd.f32 %v2987, %v3099
    %3101 = vmatmul.f32.gmra.mxu0 %v2199
    %v3102 = vpop.f32.mrf.mxu0
    %v3103 = vadd.f32 %v2990, %v3102
    %3104 = vdwg.mxu0
    %v3105 = vld [vmem:[%s4] sm:$0xff]
    %v3106 = vld [vmem:[%s4 + $0x8] sm:$0xff]
    %v3107 = vld [vmem:[%s4 + $0x10] sm:$0xff]
    %v3108 = vld [vmem:[%s4 + $0x18] sm:$0xff]
    %v3109 = vld [vmem:[%s4 + $0x20] sm:$0xff]
    %v3110 = vld [vmem:[%s4 + $0x28] sm:$0xff]
    %v3111 = vld [vmem:[%s4 + $0x30] sm:$0xff]
    %v3112 = vld [vmem:[%s4 + $0x38] sm:$0xff]
    %v3113 = vld [vmem:[%s4 + $0x40] sm:$0xff]
    %v3114 = vld [vmem:[%s4 + $0x48] sm:$0xff]
    %v3115 = vld [vmem:[%s4 + $0x50] sm:$0xff]
    %v3116 = vld [vmem:[%s4 + $0x58] sm:$0xff]
    %v3117 = vld [vmem:[%s4 + $0x60] sm:$0xff]
    %v3118 = vld [vmem:[%s4 + $0x68] sm:$0xff]
    %v3119 = vld [vmem:[%s4 + $0x70] sm:$0xff]
    %v3120 = vld [vmem:[%s4 + $0x78] sm:$0xff]
    %v3121 = vld [vmem:[%s4 + $0x80] sm:$0xff]
    %v3122 = vld [vmem:[%s4 + $0x88] sm:$0xff]
    %v3123 = vld [vmem:[%s4 + $0x90] sm:$0xff]
    %v3124 = vld [vmem:[%s4 + $0x98] sm:$0xff]
    %v3125 = vld [vmem:[%s4 + $0xa0] sm:$0xff]
    %v3126 = vld [vmem:[%s4 + $0xa8] sm:$0xff]
    %v3127 = vld [vmem:[%s4 + $0xb0] sm:$0xff]
    %v3128 = vld [vmem:[%s4 + $0xb8] sm:$0xff]
    %v3129 = vld [vmem:[%s4 + $0xc0] sm:$0xff]
    %v3130 = vld [vmem:[%s4 + $0xc8] sm:$0xff]
    %v3131 = vld [vmem:[%s4 + $0xd0] sm:$0xff]
    %v3132 = vld [vmem:[%s4 + $0xd8] sm:$0xff]
    %v3133 = vld [vmem:[%s4 + $0xe0] sm:$0xff]
    %v3134 = vld [vmem:[%s4 + $0xe8] sm:$0xff]
    %v3135 = vld [vmem:[%s4 + $0xf0] sm:$0xff]
    %v3136 = vld [vmem:[%s4 + $0xf8] sm:$0xff]
    %v3137 = vld [vmem:[%s4 + $0x100] sm:$0xff]
    %v3138 = vld [vmem:[%s4 + $0x108] sm:$0xff]
    %v3139 = vld [vmem:[%s4 + $0x110] sm:$0xff]
    %v3140 = vld [vmem:[%s4 + $0x118] sm:$0xff]
    %v3141 = vld [vmem:[%s4 + $0x120] sm:$0xff]
    %v3142 = vld [vmem:[%s4 + $0x128] sm:$0xff]
    %v3143 = vld [vmem:[%s4 + $0x130] sm:$0xff]
    %v3144 = vld [vmem:[%s4 + $0x138] sm:$0xff]
    %v3145 = vld [vmem:[%s4 + $0x140] sm:$0xff]
    %v3146 = vld [vmem:[%s4 + $0x148] sm:$0xff]
    %v3147 = vld [vmem:[%s4 + $0x150] sm:$0xff]
    %v3148 = vld [vmem:[%s4 + $0x158] sm:$0xff]
    %v3149 = vld [vmem:[%s4 + $0x160] sm:$0xff]
    %v3150 = vld [vmem:[%s4 + $0x168] sm:$0xff]
    %v3151 = vld [vmem:[%s4 + $0x170] sm:$0xff]
    %v3152 = vld [vmem:[%s4 + $0x178] sm:$0xff]
    %v3153 = vld [vmem:[%s4 + $0x180] sm:$0xff]
    %v3154 = vld [vmem:[%s4 + $0x188] sm:$0xff]
    %v3155 = vld [vmem:[%s4 + $0x190] sm:$0xff]
    %v3156 = vld [vmem:[%s4 + $0x198] sm:$0xff]
    %v3157 = vld [vmem:[%s4 + $0x1a0] sm:$0xff]
    %v3158 = vld [vmem:[%s4 + $0x1a8] sm:$0xff]
    %v3159 = vld [vmem:[%s4 + $0x1b0] sm:$0xff]
    %v3160 = vld [vmem:[%s4 + $0x1b8] sm:$0xff]
    %v3161 = vld [vmem:[%s4 + $0x1c0] sm:$0xff]
    %v3162 = vld [vmem:[%s4 + $0x1c8] sm:$0xff]
    %v3163 = vld [vmem:[%s4 + $0x1d0] sm:$0xff]
    %v3164 = vld [vmem:[%s4 + $0x1d8] sm:$0xff]
    %v3165 = vld [vmem:[%s4 + $0x1e0] sm:$0xff]
    %v3166 = vld [vmem:[%s4 + $0x1e8] sm:$0xff]
    %v3167 = vld [vmem:[%s4 + $0x1f0] sm:$0xff]
    %v3168 = vld [vmem:[%s4 + $0x1f8] sm:$0xff]
    %v3169 = vld [vmem:[%s4 + $0x200] sm:$0xff]
    %v3170 = vld [vmem:[%s4 + $0x208] sm:$0xff]
    %v3171 = vld [vmem:[%s4 + $0x210] sm:$0xff]
    %v3172 = vld [vmem:[%s4 + $0x218] sm:$0xff]
    %v3173 = vld [vmem:[%s4 + $0x220] sm:$0xff]
    %v3174 = vld [vmem:[%s4 + $0x228] sm:$0xff]
    %v3175 = vld [vmem:[%s4 + $0x230] sm:$0xff]
    %v3176 = vld [vmem:[%s4 + $0x238] sm:$0xff]
    %v3177 = vld [vmem:[%s4 + $0x240] sm:$0xff]
    %v3178 = vld [vmem:[%s4 + $0x248] sm:$0xff]
    %v3179 = vld [vmem:[%s4 + $0x250] sm:$0xff]
    %v3180 = vld [vmem:[%s4 + $0x258] sm:$0xff]
    %v3181 = vld [vmem:[%s4 + $0x260] sm:$0xff]
    %v3182 = vld [vmem:[%s4 + $0x268] sm:$0xff]
    %v3183 = vld [vmem:[%s4 + $0x270] sm:$0xff]
    %v3184 = vld [vmem:[%s4 + $0x278] sm:$0xff]
    %v3185 = vld [vmem:[%s4 + $0x280] sm:$0xff]
    %v3186 = vld [vmem:[%s4 + $0x288] sm:$0xff]
    %v3187 = vld [vmem:[%s4 + $0x290] sm:$0xff]
    %v3188 = vld [vmem:[%s4 + $0x298] sm:$0xff]
    %v3189 = vld [vmem:[%s4 + $0x2a0] sm:$0xff]
    %v3190 = vld [vmem:[%s4 + $0x2a8] sm:$0xff]
    %v3191 = vld [vmem:[%s4 + $0x2b0] sm:$0xff]
    %v3192 = vld [vmem:[%s4 + $0x2b8] sm:$0xff]
    %v3193 = vld [vmem:[%s4 + $0x2c0] sm:$0xff]
    %v3194 = vld [vmem:[%s4 + $0x2c8] sm:$0xff]
    %v3195 = vld [vmem:[%s4 + $0x2d0] sm:$0xff]
    %v3196 = vld [vmem:[%s4 + $0x2d8] sm:$0xff]
    %v3197 = vld [vmem:[%s4 + $0x2e0] sm:$0xff]
    %v3198 = vld [vmem:[%s4 + $0x2e8] sm:$0xff]
    %v3199 = vld [vmem:[%s4 + $0x2f0] sm:$0xff]
    %v3200 = vld [vmem:[%s4 + $0x2f8] sm:$0xff]
    %v3201 = vld [vmem:[%s14] sm:$0xff]
    %v3202 = vld [vmem:[%s14 + $0x8] sm:$0xff]
    %v3203 = vld [vmem:[%s14 + $0x10] sm:$0xff]
    %v3204 = vld [vmem:[%s14 + $0x18] sm:$0xff]
    %v3205 = vld [vmem:[%s14 + $0x20] sm:$0xff]
    %v3206 = vld [vmem:[%s14 + $0x28] sm:$0xff]
    %v3207 = vld [vmem:[%s14 + $0x30] sm:$0xff]
    %v3208 = vld [vmem:[%s14 + $0x38] sm:$0xff]
    %v3209 = vld [vmem:[%s14 + $0x40] sm:$0xff]
    %v3210 = vld [vmem:[%s14 + $0x48] sm:$0xff]
    %v3211 = vld [vmem:[%s14 + $0x50] sm:$0xff]
    %v3212 = vld [vmem:[%s14 + $0x58] sm:$0xff]
    %v3213 = vld [vmem:[%s14 + $0x60] sm:$0xff]
    %v3214 = vld [vmem:[%s14 + $0x68] sm:$0xff]
    %v3215 = vld [vmem:[%s14 + $0x70] sm:$0xff]
    %v3216 = vld [vmem:[%s14 + $0x78] sm:$0xff]
    %v3217 = vld [vmem:[%s14 + $0x80] sm:$0xff]
    %v3218 = vld [vmem:[%s14 + $0x88] sm:$0xff]
    %v3219 = vld [vmem:[%s14 + $0x90] sm:$0xff]
    %v3220 = vld [vmem:[%s14 + $0x98] sm:$0xff]
    %v3221 = vld [vmem:[%s14 + $0xa0] sm:$0xff]
    %v3222 = vld [vmem:[%s14 + $0xa8] sm:$0xff]
    %v3223 = vld [vmem:[%s14 + $0xb0] sm:$0xff]
    %v3224 = vld [vmem:[%s14 + $0xb8] sm:$0xff]
    %v3225 = vld [vmem:[%s14 + $0xc0] sm:$0xff]
    %v3226 = vld [vmem:[%s14 + $0xc8] sm:$0xff]
    %v3227 = vld [vmem:[%s14 + $0xd0] sm:$0xff]
    %v3228 = vld [vmem:[%s14 + $0xd8] sm:$0xff]
    %v3229 = vld [vmem:[%s14 + $0xe0] sm:$0xff]
    %v3230 = vld [vmem:[%s14 + $0xe8] sm:$0xff]
    %v3231 = vld [vmem:[%s14 + $0xf0] sm:$0xff]
    %v3232 = vld [vmem:[%s14 + $0xf8] sm:$0xff]
    %v3233 = vld [vmem:[%s14 + $0x100] sm:$0xff]
    %v3234 = vld [vmem:[%s14 + $0x108] sm:$0xff]
    %v3235 = vld [vmem:[%s14 + $0x110] sm:$0xff]
    %v3236 = vld [vmem:[%s14 + $0x118] sm:$0xff]
    %v3237 = vld [vmem:[%s14 + $0x120] sm:$0xff]
    %v3238 = vld [vmem:[%s14 + $0x128] sm:$0xf]
    %v3239 = vld [vmem:[%s15] sm:$0x1]
    %v3241 = vperm.slane %v3239, 0
    %vm3243 = vcmask 359424
    %v3245 = vsel %vm3243, %v3107, 0
    %v3248 = vsel %vm3243, %v3110, 0
    %v3251 = vsel %vm3243, %v3113, 0
    %v3254 = vsel %vm3243, %v3116, 0
    %v3257 = vsel %vm3243, %v3119, 0
    %v3260 = vsel %vm3243, %v3122, 0
    %v3263 = vsel %vm3243, %v3125, 0
    %v3266 = vsel %vm3243, %v3128, 0
    %v3269 = vsel %vm3243, %v3131, 0
    %v3272 = vsel %vm3243, %v3134, 0
    %v3275 = vsel %vm3243, %v3137, 0
    %v3278 = vsel %vm3243, %v3140, 0
    %v3281 = vsel %vm3243, %v3143, 0
    %v3284 = vsel %vm3243, %v3146, 0
    %v3287 = vsel %vm3243, %v3149, 0
    %v3290 = vsel %vm3243, %v3152, 0
    %v3293 = vsel %vm3243, %v3155, 0
    %v3296 = vsel %vm3243, %v3158, 0
    %v3299 = vsel %vm3243, %v3161, 0
    %v3302 = vsel %vm3243, %v3164, 0
    %v3305 = vsel %vm3243, %v3167, 0
    %v3308 = vsel %vm3243, %v3170, 0
    %v3311 = vsel %vm3243, %v3173, 0
    %v3314 = vsel %vm3243, %v3176, 0
    %v3317 = vsel %vm3243, %v3179, 0
    %v3320 = vsel %vm3243, %v3182, 0
    %v3323 = vsel %vm3243, %v3185, 0
    %v3326 = vsel %vm3243, %v3188, 0
    %v3329 = vsel %vm3243, %v3191, 0
    %v3332 = vsel %vm3243, %v3194, 0
    %v3335 = vsel %vm3243, %v3197, 0
    %v3338 = vsel %vm3243, %v3200, 0
    %vm3340 = vcmask 1043456
    %v3342 = vsel %vm3340, %v3238, 0
    %3344 = vmatpush.msra.mxu0 %v3216
    %3345 = vmatpush.msra.mxu0 %v3215
    %3346 = vmatpush.msra.mxu0 %v3214
    %3347 = vmatpush.msra.mxu0 %v3213
    %3348 = vmatpush.msra.mxu0 %v3212
    %3349 = vmatpush.msra.mxu0 %v3211
    %3350 = vmatpush.msra.mxu0 %v3210
    %3351 = vmatpush.msra.mxu0 %v3209
    %3352 = vmatpush.msra.mxu0 %v3208
    %3353 = vmatpush.msra.mxu0 %v3207
    %3354 = vmatpush.msra.mxu0 %v3206
    %3355 = vmatpush.msra.mxu0 %v3205
    %3356 = vmatpush.msra.mxu0 %v3204
    %3357 = vmatpush.msra.mxu0 %v3203
    %3358 = vmatpush.msra.mxu0 %v3202
    %3359 = vmatpush.msra.mxu0 %v3201
    %3360 = vmatmul.f32.gmra.mxu0 %v3105
    %v3361 = vpop.f32.mrf.mxu0
    %v3362 = vadd.f32 %v3241, %v3361
    %3363 = vmatmul.f32.gmra.mxu0 %v3108
    %v3364 = vpop.f32.mrf.mxu0
    %v3365 = vadd.f32 %v3241, %v3364
    %3366 = vmatmul.f32.gmra.mxu0 %v3111
    %v3367 = vpop.f32.mrf.mxu0
    %v3368 = vadd.f32 %v3241, %v3367
    %3369 = vmatmul.f32.gmra.mxu0 %v3114
    %v3370 = vpop.f32.mrf.mxu0
    %v3371 = vadd.f32 %v3241, %v3370
    %3372 = vmatmul.f32.gmra.mxu0 %v3117
    %v3373 = vpop.f32.mrf.mxu0
    %v3374 = vadd.f32 %v3241, %v3373
    %3375 = vmatmul.f32.gmra.mxu0 %v3120
    %v3376 = vpop.f32.mrf.mxu0
    %v3377 = vadd.f32 %v3241, %v3376
    %3378 = vmatmul.f32.gmra.mxu0 %v3123
    %v3379 = vpop.f32.mrf.mxu0
    %v3380 = vadd.f32 %v3241, %v3379
    %3381 = vmatmul.f32.gmra.mxu0 %v3126
    %v3382 = vpop.f32.mrf.mxu0
    %v3383 = vadd.f32 %v3241, %v3382
    %3384 = vmatmul.f32.gmra.mxu0 %v3129
    %v3385 = vpop.f32.mrf.mxu0
    %v3386 = vadd.f32 %v3241, %v3385
    %3387 = vmatmul.f32.gmra.mxu0 %v3132
    %v3388 = vpop.f32.mrf.mxu0
    %v3389 = vadd.f32 %v3241, %v3388
    %3390 = vmatmul.f32.gmra.mxu0 %v3135
    %v3391 = vpop.f32.mrf.mxu0
    %v3392 = vadd.f32 %v3241, %v3391
    %3393 = vmatmul.f32.gmra.mxu0 %v3138
    %v3394 = vpop.f32.mrf.mxu0
    %v3395 = vadd.f32 %v3241, %v3394
    %3396 = vmatmul.f32.gmra.mxu0 %v3141
    %v3397 = vpop.f32.mrf.mxu0
    %v3398 = vadd.f32 %v3241, %v3397
    %3399 = vmatmul.f32.gmra.mxu0 %v3144
    %v3400 = vpop.f32.mrf.mxu0
    %v3401 = vadd.f32 %v3241, %v3400
    %3402 = vmatmul.f32.gmra.mxu0 %v3147
    %v3403 = vpop.f32.mrf.mxu0
    %v3404 = vadd.f32 %v3241, %v3403
    %3405 = vmatmul.f32.gmra.mxu0 %v3150
    %v3406 = vpop.f32.mrf.mxu0
    %v3407 = vadd.f32 %v3241, %v3406
    %3408 = vmatmul.f32.gmra.mxu0 %v3153
    %v3409 = vpop.f32.mrf.mxu0
    %v3410 = vadd.f32 %v3241, %v3409
    %3411 = vmatmul.f32.gmra.mxu0 %v3156
    %v3412 = vpop.f32.mrf.mxu0
    %v3413 = vadd.f32 %v3241, %v3412
    %3414 = vmatmul.f32.gmra.mxu0 %v3159
    %v3415 = vpop.f32.mrf.mxu0
    %v3416 = vadd.f32 %v3241, %v3415
    %3417 = vmatmul.f32.gmra.mxu0 %v3162
    %v3418 = vpop.f32.mrf.mxu0
    %v3419 = vadd.f32 %v3241, %v3418
    %3420 = vmatmul.f32.gmra.mxu0 %v3165
    %v3421 = vpop.f32.mrf.mxu0
    %v3422 = vadd.f32 %v3241, %v3421
    %3423 = vmatmul.f32.gmra.mxu0 %v3168
    %v3424 = vpop.f32.mrf.mxu0
    %v3425 = vadd.f32 %v3241, %v3424
    %3426 = vmatmul.f32.gmra.mxu0 %v3171
    %v3427 = vpop.f32.mrf.mxu0
    %v3428 = vadd.f32 %v3241, %v3427
    %3429 = vmatmul.f32.gmra.mxu0 %v3174
    %v3430 = vpop.f32.mrf.mxu0
    %v3431 = vadd.f32 %v3241, %v3430
    %3432 = vmatmul.f32.gmra.mxu0 %v3177
    %v3433 = vpop.f32.mrf.mxu0
    %v3434 = vadd.f32 %v3241, %v3433
    %3435 = vmatmul.f32.gmra.mxu0 %v3180
    %v3436 = vpop.f32.mrf.mxu0
    %v3437 = vadd.f32 %v3241, %v3436
    %3438 = vmatmul.f32.gmra.mxu0 %v3183
    %v3439 = vpop.f32.mrf.mxu0
    %v3440 = vadd.f32 %v3241, %v3439
    %3441 = vmatmul.f32.gmra.mxu0 %v3186
    %v3442 = vpop.f32.mrf.mxu0
    %v3443 = vadd.f32 %v3241, %v3442
    %3444 = vmatmul.f32.gmra.mxu0 %v3189
    %v3445 = vpop.f32.mrf.mxu0
    %v3446 = vadd.f32 %v3241, %v3445
    %3447 = vmatmul.f32.gmra.mxu0 %v3192
    %v3448 = vpop.f32.mrf.mxu0
    %v3449 = vadd.f32 %v3241, %v3448
    %3450 = vmatmul.f32.gmra.mxu0 %v3195
    %v3451 = vpop.f32.mrf.mxu0
    %v3452 = vadd.f32 %v3241, %v3451
    %3453 = vmatmul.f32.gmra.mxu0 %v3198
    %v3454 = vpop.f32.mrf.mxu0
    %v3455 = vadd.f32 %v3241, %v3454
    %3456 = vdwg.mxu0
    %3457 = vmatpush.msra.mxu0 %v3232
    %3458 = vmatpush.msra.mxu0 %v3231
    %3459 = vmatpush.msra.mxu0 %v3230
    %3460 = vmatpush.msra.mxu0 %v3229
    %3461 = vmatpush.msra.mxu0 %v3228
    %3462 = vmatpush.msra.mxu0 %v3227
    %3463 = vmatpush.msra.mxu0 %v3226
    %3464 = vmatpush.msra.mxu0 %v3225
    %3465 = vmatpush.msra.mxu0 %v3224
    %3466 = vmatpush.msra.mxu0 %v3223
    %3467 = vmatpush.msra.mxu0 %v3222
    %3468 = vmatpush.msra.mxu0 %v3221
    %3469 = vmatpush.msra.mxu0 %v3220
    %3470 = vmatpush.msra.mxu0 %v3219
    %3471 = vmatpush.msra.mxu0 %v3218
    %3472 = vmatpush.msra.mxu0 %v3217
    %3473 = vmatmul.f32.gmra.mxu0 %v3106
    %v3474 = vpop.f32.mrf.mxu0
    %v3475 = vadd.f32 %v3362, %v3474
    %3476 = vmatmul.f32.gmra.mxu0 %v3109
    %v3477 = vpop.f32.mrf.mxu0
    %v3478 = vadd.f32 %v3365, %v3477
    %3479 = vmatmul.f32.gmra.mxu0 %v3112
    %v3480 = vpop.f32.mrf.mxu0
    %v3481 = vadd.f32 %v3368, %v3480
    %3482 = vmatmul.f32.gmra.mxu0 %v3115
    %v3483 = vpop.f32.mrf.mxu0
    %v3484 = vadd.f32 %v3371, %v3483
    %3485 = vmatmul.f32.gmra.mxu0 %v3118
    %v3486 = vpop.f32.mrf.mxu0
    %v3487 = vadd.f32 %v3374, %v3486
    %3488 = vmatmul.f32.gmra.mxu0 %v3121
    %v3489 = vpop.f32.mrf.mxu0
    %v3490 = vadd.f32 %v3377, %v3489
    %3491 = vmatmul.f32.gmra.mxu0 %v3124
    %v3492 = vpop.f32.mrf.mxu0
    %v3493 = vadd.f32 %v3380, %v3492
    %3494 = vmatmul.f32.gmra.mxu0 %v3127
    %v3495 = vpop.f32.mrf.mxu0
    %v3496 = vadd.f32 %v3383, %v3495
    %3497 = vmatmul.f32.gmra.mxu0 %v3130
    %v3498 = vpop.f32.mrf.mxu0
    %v3499 = vadd.f32 %v3386, %v3498
    %3500 = vmatmul.f32.gmra.mxu0 %v3133
    %v3501 = vpop.f32.mrf.mxu0
    %v3502 = vadd.f32 %v3389, %v3501
    %3503 = vmatmul.f32.gmra.mxu0 %v3136
    %v3504 = vpop.f32.mrf.mxu0
    %v3505 = vadd.f32 %v3392, %v3504
    %3506 = vmatmul.f32.gmra.mxu0 %v3139
    %v3507 = vpop.f32.mrf.mxu0
    %v3508 = vadd.f32 %v3395, %v3507
    %3509 = vmatmul.f32.gmra.mxu0 %v3142
    %v3510 = vpop.f32.mrf.mxu0
    %v3511 = vadd.f32 %v3398, %v3510
    %3512 = vmatmul.f32.gmra.mxu0 %v3145
    %v3513 = vpop.f32.mrf.mxu0
    %v3514 = vadd.f32 %v3401, %v3513
    %3515 = vmatmul.f32.gmra.mxu0 %v3148
    %v3516 = vpop.f32.mrf.mxu0
    %v3517 = vadd.f32 %v3404, %v3516
    %3518 = vmatmul.f32.gmra.mxu0 %v3151
    %v3519 = vpop.f32.mrf.mxu0
    %v3520 = vadd.f32 %v3407, %v3519
    %3521 = vmatmul.f32.gmra.mxu0 %v3154
    %v3522 = vpop.f32.mrf.mxu0
    %v3523 = vadd.f32 %v3410, %v3522
    %3524 = vmatmul.f32.gmra.mxu0 %v3157
    %v3525 = vpop.f32.mrf.mxu0
    %v3526 = vadd.f32 %v3413, %v3525
    %3527 = vmatmul.f32.gmra.mxu0 %v3160
    %v3528 = vpop.f32.mrf.mxu0
    %v3529 = vadd.f32 %v3416, %v3528
    %3530 = vmatmul.f32.gmra.mxu0 %v3163
    %v3531 = vpop.f32.mrf.mxu0
    %v3532 = vadd.f32 %v3419, %v3531
    %3533 = vmatmul.f32.gmra.mxu0 %v3166
    %v3534 = vpop.f32.mrf.mxu0
    %v3535 = vadd.f32 %v3422, %v3534
    %3536 = vmatmul.f32.gmra.mxu0 %v3169
    %v3537 = vpop.f32.mrf.mxu0
    %v3538 = vadd.f32 %v3425, %v3537
    %3539 = vmatmul.f32.gmra.mxu0 %v3172
    %v3540 = vpop.f32.mrf.mxu0
    %v3541 = vadd.f32 %v3428, %v3540
    %3542 = vmatmul.f32.gmra.mxu0 %v3175
    %v3543 = vpop.f32.mrf.mxu0
    %v3544 = vadd.f32 %v3431, %v3543
    %3545 = vmatmul.f32.gmra.mxu0 %v3178
    %v3546 = vpop.f32.mrf.mxu0
    %v3547 = vadd.f32 %v3434, %v3546
    %3548 = vmatmul.f32.gmra.mxu0 %v3181
    %v3549 = vpop.f32.mrf.mxu0
    %v3550 = vadd.f32 %v3437, %v3549
    %3551 = vmatmul.f32.gmra.mxu0 %v3184
    %v3552 = vpop.f32.mrf.mxu0
    %v3553 = vadd.f32 %v3440, %v3552
    %3554 = vmatmul.f32.gmra.mxu0 %v3187
    %v3555 = vpop.f32.mrf.mxu0
    %v3556 = vadd.f32 %v3443, %v3555
    %3557 = vmatmul.f32.gmra.mxu0 %v3190
    %v3558 = vpop.f32.mrf.mxu0
    %v3559 = vadd.f32 %v3446, %v3558
    %3560 = vmatmul.f32.gmra.mxu0 %v3193
    %v3561 = vpop.f32.mrf.mxu0
    %v3562 = vadd.f32 %v3449, %v3561
    %3563 = vmatmul.f32.gmra.mxu0 %v3196
    %v3564 = vpop.f32.mrf.mxu0
    %v3565 = vadd.f32 %v3452, %v3564
    %3566 = vmatmul.f32.gmra.mxu0 %v3199
    %v3567 = vpop.f32.mrf.mxu0
    %v3568 = vadd.f32 %v3455, %v3567
    %3569 = vdwg.mxu0
    %3570 = vmatpush.msra.mxu0 0.0
    %3571 = vmatpush.msra.mxu0 0.0
    %3572 = vmatpush.msra.mxu0 0.0
    %3573 = vmatpush.msra.mxu0 0.0
    %3574 = vmatpush.msra.mxu0 0.0
    %3575 = vmatpush.msra.mxu0 0.0
    %3576 = vmatpush.msra.mxu0 0.0
    %3577 = vmatpush.msra.mxu0 0.0
    %3578 = vmatpush.msra.mxu0 0.0
    %3579 = vmatpush.msra.mxu0 0.0
    %3580 = vmatpush.msra.mxu0 %v3342
    %3581 = vmatpush.msra.mxu0 %v3237
    %3582 = vmatpush.msra.mxu0 %v3236
    %3583 = vmatpush.msra.mxu0 %v3235
    %3584 = vmatpush.msra.mxu0 %v3234
    %3585 = vmatpush.msra.mxu0 %v3233
    %3586 = vmatmul.f32.gmra.mxu0 %v3245
    %v3587 = vpop.f32.mrf.mxu0
    %v3588 = vadd.f32 %v3475, %v3587
    %3589 = vmatmul.f32.gmra.mxu0 %v3248
    %v3590 = vpop.f32.mrf.mxu0
    %v3591 = vadd.f32 %v3478, %v3590
    %3592 = vmatmul.f32.gmra.mxu0 %v3251
    %v3593 = vpop.f32.mrf.mxu0
    %v3594 = vadd.f32 %v3481, %v3593
    %3595 = vmatmul.f32.gmra.mxu0 %v3254
    %v3596 = vpop.f32.mrf.mxu0
    %v3597 = vadd.f32 %v3484, %v3596
    %3598 = vmatmul.f32.gmra.mxu0 %v3257
    %v3599 = vpop.f32.mrf.mxu0
    %v3600 = vadd.f32 %v3487, %v3599
    %3601 = vmatmul.f32.gmra.mxu0 %v3260
    %v3602 = vpop.f32.mrf.mxu0
    %v3603 = vadd.f32 %v3490, %v3602
    %3604 = vmatmul.f32.gmra.mxu0 %v3263
    %v3605 = vpop.f32.mrf.mxu0
    %v3606 = vadd.f32 %v3493, %v3605
    %3607 = vmatmul.f32.gmra.mxu0 %v3266
    %v3608 = vpop.f32.mrf.mxu0
    %v3609 = vadd.f32 %v3496, %v3608
    %3610 = vmatmul.f32.gmra.mxu0 %v3269
    %v3611 = vpop.f32.mrf.mxu0
    %v3612 = vadd.f32 %v3499, %v3611
    %3613 = vmatmul.f32.gmra.mxu0 %v3272
    %v3614 = vpop.f32.mrf.mxu0
    %v3615 = vadd.f32 %v3502, %v3614
    %3616 = vmatmul.f32.gmra.mxu0 %v3275
    %v3617 = vpop.f32.mrf.mxu0
    %v3618 = vadd.f32 %v3505, %v3617
    %3619 = vmatmul.f32.gmra.mxu0 %v3278
    %v3620 = vpop.f32.mrf.mxu0
    %v3621 = vadd.f32 %v3508, %v3620
    %3622 = vmatmul.f32.gmra.mxu0 %v3281
    %v3623 = vpop.f32.mrf.mxu0
    %v3624 = vadd.f32 %v3511, %v3623
    %3625 = vmatmul.f32.gmra.mxu0 %v3284
    %v3626 = vpop.f32.mrf.mxu0
    %v3627 = vadd.f32 %v3514, %v3626
    %3628 = vmatmul.f32.gmra.mxu0 %v3287
    %v3629 = vpop.f32.mrf.mxu0
    %v3630 = vadd.f32 %v3517, %v3629
    %3631 = vmatmul.f32.gmra.mxu0 %v3290
    %v3632 = vpop.f32.mrf.mxu0
    %v3633 = vadd.f32 %v3520, %v3632
    %3634 = vmatmul.f32.gmra.mxu0 %v3293
    %v3635 = vpop.f32.mrf.mxu0
    %v3636 = vadd.f32 %v3523, %v3635
    %3637 = vmatmul.f32.gmra.mxu0 %v3296
    %v3638 = vpop.f32.mrf.mxu0
    %v3639 = vadd.f32 %v3526, %v3638
    %3640 = vmatmul.f32.gmra.mxu0 %v3299
    %v3641 = vpop.f32.mrf.mxu0
    %v3642 = vadd.f32 %v3529, %v3641
    %3643 = vmatmul.f32.gmra.mxu0 %v3302
    %v3644 = vpop.f32.mrf.mxu0
    %v3645 = vadd.f32 %v3532, %v3644
    %3646 = vmatmul.f32.gmra.mxu0 %v3305
    %v3647 = vpop.f32.mrf.mxu0
    %v3648 = vadd.f32 %v3535, %v3647
    %3649 = vmatmul.f32.gmra.mxu0 %v3308
    %v3650 = vpop.f32.mrf.mxu0
    %v3651 = vadd.f32 %v3538, %v3650
    %3652 = vmatmul.f32.gmra.mxu0 %v3311
    %v3653 = vpop.f32.mrf.mxu0
    %v3654 = vadd.f32 %v3541, %v3653
    %3655 = vmatmul.f32.gmra.mxu0 %v3314
    %v3656 = vpop.f32.mrf.mxu0
    %v3657 = vadd.f32 %v3544, %v3656
    %3658 = vmatmul.f32.gmra.mxu0 %v3317
    %v3659 = vpop.f32.mrf.mxu0
    %v3660 = vadd.f32 %v3547, %v3659
    %3661 = vmatmul.f32.gmra.mxu0 %v3320
    %v3662 = vpop.f32.mrf.mxu0
    %v3663 = vadd.f32 %v3550, %v3662
    %3664 = vmatmul.f32.gmra.mxu0 %v3323
    %v3665 = vpop.f32.mrf.mxu0
    %v3666 = vadd.f32 %v3553, %v3665
    %3667 = vmatmul.f32.gmra.mxu0 %v3326
    %v3668 = vpop.f32.mrf.mxu0
    %v3669 = vadd.f32 %v3556, %v3668
    %3670 = vmatmul.f32.gmra.mxu0 %v3329
    %v3671 = vpop.f32.mrf.mxu0
    %v3672 = vadd.f32 %v3559, %v3671
    %3673 = vmatmul.f32.gmra.mxu0 %v3332
    %v3674 = vpop.f32.mrf.mxu0
    %v3675 = vadd.f32 %v3562, %v3674
    %3676 = vmatmul.f32.gmra.mxu0 %v3335
    %v3677 = vpop.f32.mrf.mxu0
    %v3678 = vadd.f32 %v3565, %v3677
    %3679 = vmatmul.f32.gmra.mxu0 %v3338
    %v3680 = vpop.f32.mrf.mxu0
    %v3681 = vadd.f32 %v3568, %v3680
    %3682 = vdwg.mxu0
    %v3683 = vld [vmem:[%s5] sm:$0xff]
    %v3684 = vld [vmem:[%s5 + $0x8] sm:$0xff]
    %v3685 = vld [vmem:[%s5 + $0x10] sm:$0xff]
    %v3686 = vld [vmem:[%s5 + $0x18] sm:$0xff]
    %v3687 = vld [vmem:[%s5 + $0x20] sm:$0xff]
    %v3688 = vld [vmem:[%s5 + $0x28] sm:$0xff]
    %v3689 = vld [vmem:[%s5 + $0x30] sm:$0xff]
    %v3690 = vld [vmem:[%s5 + $0x38] sm:$0xff]
    %v3691 = vld [vmem:[%s5 + $0x40] sm:$0xff]
    %v3692 = vld [vmem:[%s5 + $0x48] sm:$0xff]
    %v3693 = vld [vmem:[%s5 + $0x50] sm:$0xff]
    %v3694 = vld [vmem:[%s5 + $0x58] sm:$0xff]
    %v3695 = vld [vmem:[%s5 + $0x60] sm:$0xff]
    %v3696 = vld [vmem:[%s5 + $0x68] sm:$0xff]
    %v3697 = vld [vmem:[%s5 + $0x70] sm:$0xff]
    %v3698 = vld [vmem:[%s5 + $0x78] sm:$0xff]
    %v3699 = vld [vmem:[%s5 + $0x80] sm:$0xff]
    %v3700 = vld [vmem:[%s5 + $0x88] sm:$0xff]
    %v3701 = vld [vmem:[%s5 + $0x90] sm:$0xff]
    %v3702 = vld [vmem:[%s5 + $0x98] sm:$0xff]
    %v3703 = vld [vmem:[%s5 + $0xa0] sm:$0xff]
    %v3704 = vld [vmem:[%s5 + $0xa8] sm:$0xff]
    %v3705 = vld [vmem:[%s5 + $0xb0] sm:$0xff]
    %v3706 = vld [vmem:[%s5 + $0xb8] sm:$0xff]
    %v3707 = vld [vmem:[%s5 + $0xc0] sm:$0xff]
    %v3708 = vld [vmem:[%s5 + $0xc8] sm:$0xff]
    %v3709 = vld [vmem:[%s5 + $0xd0] sm:$0xff]
    %v3710 = vld [vmem:[%s5 + $0xd8] sm:$0xff]
    %v3711 = vld [vmem:[%s5 + $0xe0] sm:$0xff]
    %v3712 = vld [vmem:[%s5 + $0xe8] sm:$0xff]
    %v3713 = vld [vmem:[%s5 + $0xf0] sm:$0xff]
    %v3714 = vld [vmem:[%s5 + $0xf8] sm:$0xff]
    %v3715 = vld [vmem:[%s16] sm:$0xff]
    %v3716 = vld [vmem:[%s16 + $0x8] sm:$0xff]
    %v3717 = vld [vmem:[%s16 + $0x10] sm:$0xff]
    %v3718 = vld [vmem:[%s16 + $0x18] sm:$0xff]
    %v3719 = vld [vmem:[%s16 + $0x20] sm:$0xff]
    %v3720 = vld [vmem:[%s16 + $0x28] sm:$0xff]
    %v3721 = vld [vmem:[%s16 + $0x30] sm:$0xff]
    %v3722 = vld [vmem:[%s16 + $0x38] sm:$0xff]
    %v3723 = vld [vmem:[%s17] sm:$0x1]
    %v3725 = vperm.slane %v3723, 0
    %v3728 = vsel %vm124, %v3683, 0
    %v3731 = vsel %vm124, %v3684, 0
    %v3734 = vsel %vm124, %v3685, 0
    %v3737 = vsel %vm124, %v3686, 0
    %v3740 = vsel %vm124, %v3687, 0
    %v3743 = vsel %vm124, %v3688, 0
    %v3746 = vsel %vm124, %v3689, 0
    %v3749 = vsel %vm124, %v3690, 0
    %v3752 = vsel %vm124, %v3691, 0
    %v3755 = vsel %vm124, %v3692, 0
    %v3758 = vsel %vm124, %v3693, 0
    %v3761 = vsel %vm124, %v3694, 0
    %v3764 = vsel %vm124, %v3695, 0
    %v3767 = vsel %vm124, %v3696, 0
    %v3770 = vsel %vm124, %v3697, 0
    %v3773 = vsel %vm124, %v3698, 0
    %v3776 = vsel %vm124, %v3699, 0
    %v3779 = vsel %vm124, %v3700, 0
    %v3782 = vsel %vm124, %v3701, 0
    %v3785 = vsel %vm124, %v3702, 0
    %v3788 = vsel %vm124, %v3703, 0
    %v3791 = vsel %vm124, %v3704, 0
    %v3794 = vsel %vm124, %v3705, 0
    %v3797 = vsel %vm124, %v3706, 0
    %v3800 = vsel %vm124, %v3707, 0
    %v3803 = vsel %vm124, %v3708, 0
    %v3806 = vsel %vm124, %v3709, 0
    %v3809 = vsel %vm124, %v3710, 0
    %v3812 = vsel %vm124, %v3711, 0
    %v3815 = vsel %vm124, %v3712, 0
    %v3818 = vsel %vm124, %v3713, 0
    %v3821 = vsel %vm124, %v3714, 0
    %3823 = vmatpush.msra.mxu0 0.0
    %3824 = vmatpush.msra.mxu0 0.0
    %3825 = vmatpush.msra.mxu0 0.0
    %3826 = vmatpush.msra.mxu0 0.0
    %3827 = vmatpush.msra.mxu0 0.0
    %3828 = vmatpush.msra.mxu0 0.0
    %3829 = vmatpush.msra.mxu0 0.0
    %3830 = vmatpush.msra.mxu0 0.0
    %3831 = vmatpush.msra.mxu0 %v3722
    %3832 = vmatpush.msra.mxu0 %v3721
    %3833 = vmatpush.msra.mxu0 %v3720
    %3834 = vmatpush.msra.mxu0 %v3719
    %3835 = vmatpush.msra.mxu0 %v3718
    %3836 = vmatpush.msra.mxu0 %v3717
    %3837 = vmatpush.msra.mxu0 %v3716
    %3838 = vmatpush.msra.mxu0 %v3715
    %3839 = vmatmul.f32.gmra.mxu0 %v3728
    %v3840 = vpop.f32.mrf.mxu0
    %v3841 = vadd.f32 %v3725, %v3840
    %3842 = vmatmul.f32.gmra.mxu0 %v3731
    %v3843 = vpop.f32.mrf.mxu0
    %v3844 = vadd.f32 %v3725, %v3843
    %3845 = vmatmul.f32.gmra.mxu0 %v3734
    %v3846 = vpop.f32.mrf.mxu0
    %v3847 = vadd.f32 %v3725, %v3846
    %3848 = vmatmul.f32.gmra.mxu0 %v3737
    %v3849 = vpop.f32.mrf.mxu0
    %v3850 = vadd.f32 %v3725, %v3849
    %3851 = vmatmul.f32.gmra.mxu0 %v3740
    %v3852 = vpop.f32.mrf.mxu0
    %v3853 = vadd.f32 %v3725, %v3852
    %3854 = vmatmul.f32.gmra.mxu0 %v3743
    %v3855 = vpop.f32.mrf.mxu0
    %v3856 = vadd.f32 %v3725, %v3855
    %3857 = vmatmul.f32.gmra.mxu0 %v3746
    %v3858 = vpop.f32.mrf.mxu0
    %v3859 = vadd.f32 %v3725, %v3858
    %3860 = vmatmul.f32.gmra.mxu0 %v3749
    %v3861 = vpop.f32.mrf.mxu0
    %v3862 = vadd.f32 %v3725, %v3861
    %3863 = vmatmul.f32.gmra.mxu0 %v3752
    %v3864 = vpop.f32.mrf.mxu0
    %v3865 = vadd.f32 %v3725, %v3864
    %3866 = vmatmul.f32.gmra.mxu0 %v3755
    %v3867 = vpop.f32.mrf.mxu0
    %v3868 = vadd.f32 %v3725, %v3867
    %3869 = vmatmul.f32.gmra.mxu0 %v3758
    %v3870 = vpop.f32.mrf.mxu0
    %v3871 = vadd.f32 %v3725, %v3870
    %3872 = vmatmul.f32.gmra.mxu0 %v3761
    %v3873 = vpop.f32.mrf.mxu0
    %v3874 = vadd.f32 %v3725, %v3873
    %3875 = vmatmul.f32.gmra.mxu0 %v3764
    %v3876 = vpop.f32.mrf.mxu0
    %v3877 = vadd.f32 %v3725, %v3876
    %3878 = vmatmul.f32.gmra.mxu0 %v3767
    %v3879 = vpop.f32.mrf.mxu0
    %v3880 = vadd.f32 %v3725, %v3879
    %3881 = vmatmul.f32.gmra.mxu0 %v3770
    %v3882 = vpop.f32.mrf.mxu0
    %v3883 = vadd.f32 %v3725, %v3882
    %3884 = vmatmul.f32.gmra.mxu0 %v3773
    %v3885 = vpop.f32.mrf.mxu0
    %v3886 = vadd.f32 %v3725, %v3885
    %3887 = vmatmul.f32.gmra.mxu0 %v3776
    %v3888 = vpop.f32.mrf.mxu0
    %v3889 = vadd.f32 %v3725, %v3888
    %3890 = vmatmul.f32.gmra.mxu0 %v3779
    %v3891 = vpop.f32.mrf.mxu0
    %v3892 = vadd.f32 %v3725, %v3891
    %3893 = vmatmul.f32.gmra.mxu0 %v3782
    %v3894 = vpop.f32.mrf.mxu0
    %v3895 = vadd.f32 %v3725, %v3894
    %3896 = vmatmul.f32.gmra.mxu0 %v3785
    %v3897 = vpop.f32.mrf.mxu0
    %v3898 = vadd.f32 %v3725, %v3897
    %3899 = vmatmul.f32.gmra.mxu0 %v3788
    %v3900 = vpop.f32.mrf.mxu0
    %v3901 = vadd.f32 %v3725, %v3900
    %3902 = vmatmul.f32.gmra.mxu0 %v3791
    %v3903 = vpop.f32.mrf.mxu0
    %v3904 = vadd.f32 %v3725, %v3903
    %3905 = vmatmul.f32.gmra.mxu0 %v3794
    %v3906 = vpop.f32.mrf.mxu0
    %v3907 = vadd.f32 %v3725, %v3906
    %3908 = vmatmul.f32.gmra.mxu0 %v3797
    %v3909 = vpop.f32.mrf.mxu0
    %v3910 = vadd.f32 %v3725, %v3909
    %3911 = vmatmul.f32.gmra.mxu0 %v3800
    %v3912 = vpop.f32.mrf.mxu0
    %v3913 = vadd.f32 %v3725, %v3912
    %3914 = vmatmul.f32.gmra.mxu0 %v3803
    %v3915 = vpop.f32.mrf.mxu0
    %v3916 = vadd.f32 %v3725, %v3915
    %3917 = vmatmul.f32.gmra.mxu0 %v3806
    %v3918 = vpop.f32.mrf.mxu0
    %v3919 = vadd.f32 %v3725, %v3918
    %3920 = vmatmul.f32.gmra.mxu0 %v3809
    %v3921 = vpop.f32.mrf.mxu0
    %v3922 = vadd.f32 %v3725, %v3921
    %3923 = vmatmul.f32.gmra.mxu0 %v3812
    %v3924 = vpop.f32.mrf.mxu0
    %v3925 = vadd.f32 %v3725, %v3924
    %3926 = vmatmul.f32.gmra.mxu0 %v3815
    %v3927 = vpop.f32.mrf.mxu0
    %v3928 = vadd.f32 %v3725, %v3927
    %3929 = vmatmul.f32.gmra.mxu0 %v3818
    %v3930 = vpop.f32.mrf.mxu0
    %v3931 = vadd.f32 %v3725, %v3930
    %3932 = vmatmul.f32.gmra.mxu0 %v3821
    %v3933 = vpop.f32.mrf.mxu0
    %v3934 = vadd.f32 %v3725, %v3933
    %3935 = vdwg.mxu0
    %v3936 = vld [vmem:[%s6] sm:$0xff]
    %v3937 = vld [vmem:[%s6 + $0x8] sm:$0xff]
    %v3938 = vld [vmem:[%s6 + $0x10] sm:$0xff]
    %v3939 = vld [vmem:[%s6 + $0x18] sm:$0xff]
    %v3940 = vld [vmem:[%s6 + $0x20] sm:$0xff]
    %v3941 = vld [vmem:[%s6 + $0x28] sm:$0xff]
    %v3942 = vld [vmem:[%s6 + $0x30] sm:$0xff]
    %v3943 = vld [vmem:[%s6 + $0x38] sm:$0xff]
    %v3944 = vld [vmem:[%s6 + $0x40] sm:$0xff]
    %v3945 = vld [vmem:[%s6 + $0x48] sm:$0xff]
    %v3946 = vld [vmem:[%s6 + $0x50] sm:$0xff]
    %v3947 = vld [vmem:[%s6 + $0x58] sm:$0xff]
    %v3948 = vld [vmem:[%s6 + $0x60] sm:$0xff]
    %v3949 = vld [vmem:[%s6 + $0x68] sm:$0xff]
    %v3950 = vld [vmem:[%s6 + $0x70] sm:$0xff]
    %v3951 = vld [vmem:[%s6 + $0x78] sm:$0xff]
    %v3952 = vld [vmem:[%s6 + $0x80] sm:$0xff]
    %v3953 = vld [vmem:[%s6 + $0x88] sm:$0xff]
    %v3954 = vld [vmem:[%s6 + $0x90] sm:$0xff]
    %v3955 = vld [vmem:[%s6 + $0x98] sm:$0xff]
    %v3956 = vld [vmem:[%s6 + $0xa0] sm:$0xff]
    %v3957 = vld [vmem:[%s6 + $0xa8] sm:$0xff]
    %v3958 = vld [vmem:[%s6 + $0xb0] sm:$0xff]
    %v3959 = vld [vmem:[%s6 + $0xb8] sm:$0xff]
    %v3960 = vld [vmem:[%s6 + $0xc0] sm:$0xff]
    %v3961 = vld [vmem:[%s6 + $0xc8] sm:$0xff]
    %v3962 = vld [vmem:[%s6 + $0xd0] sm:$0xff]
    %v3963 = vld [vmem:[%s6 + $0xd8] sm:$0xff]
    %v3964 = vld [vmem:[%s6 + $0xe0] sm:$0xff]
    %v3965 = vld [vmem:[%s6 + $0xe8] sm:$0xff]
    %v3966 = vld [vmem:[%s6 + $0xf0] sm:$0xff]
    %v3967 = vld [vmem:[%s6 + $0xf8] sm:$0xff]
    %v3968 = vld [vmem:[%s18] sm:$0xff]
    %v3969 = vld [vmem:[%s18 + $0x8] sm:$0xff]
    %v3970 = vld [vmem:[%s18 + $0x10] sm:$0xff]
    %v3971 = vld [vmem:[%s18 + $0x18] sm:$0xff]
    %v3972 = vld [vmem:[%s18 + $0x20] sm:$0xff]
    %v3973 = vld [vmem:[%s18 + $0x28] sm:$0xff]
    %v3974 = vld [vmem:[%s18 + $0x30] sm:$0xff]
    %v3975 = vld [vmem:[%s18 + $0x38] sm:$0xff]
    %v3976 = vld [vmem:[%s19] sm:$0x1]
    %v3978 = vperm.slane %v3976, 0
    %v3981 = vsel %vm124, %v3936, 0
    %v3984 = vsel %vm124, %v3937, 0
    %v3987 = vsel %vm124, %v3938, 0
    %v3990 = vsel %vm124, %v3939, 0
    %v3993 = vsel %vm124, %v3940, 0
    %v3996 = vsel %vm124, %v3941, 0
    %v3999 = vsel %vm124, %v3942, 0
    %v4002 = vsel %vm124, %v3943, 0
    %v4005 = vsel %vm124, %v3944, 0
    %v4008 = vsel %vm124, %v3945, 0
    %v4011 = vsel %vm124, %v3946, 0
    %v4014 = vsel %vm124, %v3947, 0
    %v4017 = vsel %vm124, %v3948, 0
    %v4020 = vsel %vm124, %v3949, 0
    %v4023 = vsel %vm124, %v3950, 0
    %v4026 = vsel %vm124, %v3951, 0
    %v4029 = vsel %vm124, %v3952, 0
    %v4032 = vsel %vm124, %v3953, 0
    %v4035 = vsel %vm124, %v3954, 0
    %v4038 = vsel %vm124, %v3955, 0
    %v4041 = vsel %vm124, %v3956, 0
    %v4044 = vsel %vm124, %v3957, 0
    %v4047 = vsel %vm124, %v3958, 0
    %v4050 = vsel %vm124, %v3959, 0
    %v4053 = vsel %vm124, %v3960, 0
    %v4056 = vsel %vm124, %v3961, 0
    %v4059 = vsel %vm124, %v3962, 0
    %v4062 = vsel %vm124, %v3963, 0
    %v4065 = vsel %vm124, %v3964, 0
    %v4068 = vsel %vm124, %v3965, 0
    %v4071 = vsel %vm124, %v3966, 0
    %v4074 = vsel %vm124, %v3967, 0
    %4076 = vmatpush.msra.mxu0 0.0
    %4077 = vmatpush.msra.mxu0 0.0
    %4078 = vmatpush.msra.mxu0 0.0
    %4079 = vmatpush.msra.mxu0 0.0
    %4080 = vmatpush.msra.mxu0 0.0
    %4081 = vmatpush.msra.mxu0 0.0
    %4082 = vmatpush.msra.mxu0 0.0
    %4083 = vmatpush.msra.mxu0 0.0
    %4084 = vmatpush.msra.mxu0 %v3975
    %4085 = vmatpush.msra.mxu0 %v3974
    %4086 = vmatpush.msra.mxu0 %v3973
    %4087 = vmatpush.msra.mxu0 %v3972
    %4088 = vmatpush.msra.mxu0 %v3971
    %4089 = vmatpush.msra.mxu0 %v3970
    %4090 = vmatpush.msra.mxu0 %v3969
    %4091 = vmatpush.msra.mxu0 %v3968
    %4092 = vmatmul.f32.gmra.mxu0 %v3981
    %v4093 = vpop.f32.mrf.mxu0
    %v4094 = vadd.f32 %v3978, %v4093
    %4095 = vmatmul.f32.gmra.mxu0 %v3984
    %v4096 = vpop.f32.mrf.mxu0
    %v4097 = vadd.f32 %v3978, %v4096
    %4098 = vmatmul.f32.gmra.mxu0 %v3987
    %v4099 = vpop.f32.mrf.mxu0
    %v4100 = vadd.f32 %v3978, %v4099
    %4101 = vmatmul.f32.gmra.mxu0 %v3990
    %v4102 = vpop.f32.mrf.mxu0
    %v4103 = vadd.f32 %v3978, %v4102
    %4104 = vmatmul.f32.gmra.mxu0 %v3993
    %v4105 = vpop.f32.mrf.mxu0
    %v4106 = vadd.f32 %v3978, %v4105
    %4107 = vmatmul.f32.gmra.mxu0 %v3996
    %v4108 = vpop.f32.mrf.mxu0
    %v4109 = vadd.f32 %v3978, %v4108
    %4110 = vmatmul.f32.gmra.mxu0 %v3999
    %v4111 = vpop.f32.mrf.mxu0
    %v4112 = vadd.f32 %v3978, %v4111
    %4113 = vmatmul.f32.gmra.mxu0 %v4002
    %v4114 = vpop.f32.mrf.mxu0
    %v4115 = vadd.f32 %v3978, %v4114
    %4116 = vmatmul.f32.gmra.mxu0 %v4005
    %v4117 = vpop.f32.mrf.mxu0
    %v4118 = vadd.f32 %v3978, %v4117
    %4119 = vmatmul.f32.gmra.mxu0 %v4008
    %v4120 = vpop.f32.mrf.mxu0
    %v4121 = vadd.f32 %v3978, %v4120
    %4122 = vmatmul.f32.gmra.mxu0 %v4011
    %v4123 = vpop.f32.mrf.mxu0
    %v4124 = vadd.f32 %v3978, %v4123
    %4125 = vmatmul.f32.gmra.mxu0 %v4014
    %v4126 = vpop.f32.mrf.mxu0
    %v4127 = vadd.f32 %v3978, %v4126
    %4128 = vmatmul.f32.gmra.mxu0 %v4017
    %v4129 = vpop.f32.mrf.mxu0
    %v4130 = vadd.f32 %v3978, %v4129
    %4131 = vmatmul.f32.gmra.mxu0 %v4020
    %v4132 = vpop.f32.mrf.mxu0
    %v4133 = vadd.f32 %v3978, %v4132
    %4134 = vmatmul.f32.gmra.mxu0 %v4023
    %v4135 = vpop.f32.mrf.mxu0
    %v4136 = vadd.f32 %v3978, %v4135
    %4137 = vmatmul.f32.gmra.mxu0 %v4026
    %v4138 = vpop.f32.mrf.mxu0
    %v4139 = vadd.f32 %v3978, %v4138
    %4140 = vmatmul.f32.gmra.mxu0 %v4029
    %v4141 = vpop.f32.mrf.mxu0
    %v4142 = vadd.f32 %v3978, %v4141
    %4143 = vmatmul.f32.gmra.mxu0 %v4032
    %v4144 = vpop.f32.mrf.mxu0
    %v4145 = vadd.f32 %v3978, %v4144
    %4146 = vmatmul.f32.gmra.mxu0 %v4035
    %v4147 = vpop.f32.mrf.mxu0
    %v4148 = vadd.f32 %v3978, %v4147
    %4149 = vmatmul.f32.gmra.mxu0 %v4038
    %v4150 = vpop.f32.mrf.mxu0
    %v4151 = vadd.f32 %v3978, %v4150
    %4152 = vmatmul.f32.gmra.mxu0 %v4041
    %v4153 = vpop.f32.mrf.mxu0
    %v4154 = vadd.f32 %v3978, %v4153
    %4155 = vmatmul.f32.gmra.mxu0 %v4044
    %v4156 = vpop.f32.mrf.mxu0
    %v4157 = vadd.f32 %v3978, %v4156
    %4158 = vmatmul.f32.gmra.mxu0 %v4047
    %v4159 = vpop.f32.mrf.mxu0
    %v4160 = vadd.f32 %v3978, %v4159
    %4161 = vmatmul.f32.gmra.mxu0 %v4050
    %v4162 = vpop.f32.mrf.mxu0
    %v4163 = vadd.f32 %v3978, %v4162
    %4164 = vmatmul.f32.gmra.mxu0 %v4053
    %v4165 = vpop.f32.mrf.mxu0
    %v4166 = vadd.f32 %v3978, %v4165
    %4167 = vmatmul.f32.gmra.mxu0 %v4056
    %v4168 = vpop.f32.mrf.mxu0
    %v4169 = vadd.f32 %v3978, %v4168
    %4170 = vmatmul.f32.gmra.mxu0 %v4059
    %v4171 = vpop.f32.mrf.mxu0
    %v4172 = vadd.f32 %v3978, %v4171
    %4173 = vmatmul.f32.gmra.mxu0 %v4062
    %v4174 = vpop.f32.mrf.mxu0
    %v4175 = vadd.f32 %v3978, %v4174
    %4176 = vmatmul.f32.gmra.mxu0 %v4065
    %v4177 = vpop.f32.mrf.mxu0
    %v4178 = vadd.f32 %v3978, %v4177
    %4179 = vmatmul.f32.gmra.mxu0 %v4068
    %v4180 = vpop.f32.mrf.mxu0
    %v4181 = vadd.f32 %v3978, %v4180
    %4182 = vmatmul.f32.gmra.mxu0 %v4071
    %v4183 = vpop.f32.mrf.mxu0
    %v4184 = vadd.f32 %v3978, %v4183
    %4185 = vmatmul.f32.gmra.mxu0 %v4074
    %v4186 = vpop.f32.mrf.mxu0
    %v4187 = vadd.f32 %v3978, %v4186
    %4188 = vdwg.mxu0
    %v4189 = vld [vmem:[%s7] sm:$0xff]
    %v4190 = vld [vmem:[%s7 + $0x8] sm:$0xff]
    %v4191 = vld [vmem:[%s7 + $0x10] sm:$0xff]
    %v4192 = vld [vmem:[%s7 + $0x18] sm:$0xff]
    %v4193 = vld [vmem:[%s7 + $0x20] sm:$0xff]
    %v4194 = vld [vmem:[%s7 + $0x28] sm:$0xff]
    %v4195 = vld [vmem:[%s7 + $0x30] sm:$0xff]
    %v4196 = vld [vmem:[%s7 + $0x38] sm:$0xff]
    %v4197 = vld [vmem:[%s7 + $0x40] sm:$0xff]
    %v4198 = vld [vmem:[%s7 + $0x48] sm:$0xff]
    %v4199 = vld [vmem:[%s7 + $0x50] sm:$0xff]
    %v4200 = vld [vmem:[%s7 + $0x58] sm:$0xff]
    %v4201 = vld [vmem:[%s7 + $0x60] sm:$0xff]
    %v4202 = vld [vmem:[%s7 + $0x68] sm:$0xff]
    %v4203 = vld [vmem:[%s7 + $0x70] sm:$0xff]
    %v4204 = vld [vmem:[%s7 + $0x78] sm:$0xff]
    %v4205 = vld [vmem:[%s7 + $0x80] sm:$0xff]
    %v4206 = vld [vmem:[%s7 + $0x88] sm:$0xff]
    %v4207 = vld [vmem:[%s7 + $0x90] sm:$0xff]
    %v4208 = vld [vmem:[%s7 + $0x98] sm:$0xff]
    %v4209 = vld [vmem:[%s7 + $0xa0] sm:$0xff]
    %v4210 = vld [vmem:[%s7 + $0xa8] sm:$0xff]
    %v4211 = vld [vmem:[%s7 + $0xb0] sm:$0xff]
    %v4212 = vld [vmem:[%s7 + $0xb8] sm:$0xff]
    %v4213 = vld [vmem:[%s7 + $0xc0] sm:$0xff]
    %v4214 = vld [vmem:[%s7 + $0xc8] sm:$0xff]
    %v4215 = vld [vmem:[%s7 + $0xd0] sm:$0xff]
    %v4216 = vld [vmem:[%s7 + $0xd8] sm:$0xff]
    %v4217 = vld [vmem:[%s7 + $0xe0] sm:$0xff]
    %v4218 = vld [vmem:[%s7 + $0xe8] sm:$0xff]
    %v4219 = vld [vmem:[%s7 + $0xf0] sm:$0xff]
    %v4220 = vld [vmem:[%s7 + $0xf8] sm:$0xff]
    %vm4221 = vcmask 261120
    %4222 = vst.msk [vmem:[%s20] sm:$0xff] %vm4221, %v239
    %4223 = vst.msk [vmem:[%s20 + $0x18] sm:$0xff] %vm4221, %v242
    %4224 = vst.msk [vmem:[%s20 + $0x30] sm:$0xff] %vm4221, %v245
    %4225 = vst.msk [vmem:[%s20 + $0x48] sm:$0xff] %vm4221, %v248
    %4226 = vst.msk [vmem:[%s20 + $0x60] sm:$0xff] %vm4221, %v251
    %4227 = vst.msk [vmem:[%s20 + $0x78] sm:$0xff] %vm4221, %v254
    %4228 = vst.msk [vmem:[%s20 + $0x90] sm:$0xff] %vm4221, %v257
    %4229 = vst.msk [vmem:[%s20 + $0xa8] sm:$0xff] %vm4221, %v260
    %4230 = vst.msk [vmem:[%s20 + $0xc0] sm:$0xff] %vm4221, %v263
    %4231 = vst.msk [vmem:[%s20 + $0xd8] sm:$0xff] %vm4221, %v266
    %4232 = vst.msk [vmem:[%s20 + $0xf0] sm:$0xff] %vm4221, %v269
    %4233 = vst.msk [vmem:[%s20 + $0x108] sm:$0xff] %vm4221, %v272
    %4234 = vst.msk [vmem:[%s20 + $0x120] sm:$0xff] %vm4221, %v275
    %4235 = vst.msk [vmem:[%s20 + $0x138] sm:$0xff] %vm4221, %v278
    %4236 = vst.msk [vmem:[%s20 + $0x150] sm:$0xff] %vm4221, %v281
    %4237 = vst.msk [vmem:[%s20 + $0x168] sm:$0xff] %vm4221, %v284
    %4238 = vst.msk [vmem:[%s20 + $0x180] sm:$0xff] %vm4221, %v287
    %4239 = vst.msk [vmem:[%s20 + $0x198] sm:$0xff] %vm4221, %v290
    %4240 = vst.msk [vmem:[%s20 + $0x1b0] sm:$0xff] %vm4221, %v293
    %4241 = vst.msk [vmem:[%s20 + $0x1c8] sm:$0xff] %vm4221, %v296
    %4242 = vst.msk [vmem:[%s20 + $0x1e0] sm:$0xff] %vm4221, %v299
    %4243 = vst.msk [vmem:[%s20 + $0x1f8] sm:$0xff] %vm4221, %v302
    %4244 = vst.msk [vmem:[%s20 + $0x210] sm:$0xff] %vm4221, %v305
    %4245 = vst.msk [vmem:[%s20 + $0x228] sm:$0xff] %vm4221, %v308
    %4246 = vst.msk [vmem:[%s20 + $0x240] sm:$0xff] %vm4221, %v311
    %4247 = vst.msk [vmem:[%s20 + $0x258] sm:$0xff] %vm4221, %v314
    %4248 = vst.msk [vmem:[%s20 + $0x270] sm:$0xff] %vm4221, %v317
    %4249 = vst.msk [vmem:[%s20 + $0x288] sm:$0xff] %vm4221, %v320
    %4250 = vst.msk [vmem:[%s20 + $0x2a0] sm:$0xff] %vm4221, %v323
    %4251 = vst.msk [vmem:[%s20 + $0x2b8] sm:$0xff] %vm4221, %v326
    %4252 = vst.msk [vmem:[%s20 + $0x2d0] sm:$0xff] %vm4221, %v329
    %4253 = vst.msk [vmem:[%s20 + $0x2e8] sm:$0xff] %vm4221, %v332
    %4286 = vrot.lane.b32.xlu0 %v1625, 32
    %v4287 = vpop.permute.xlu0 %4286
    %4288 = vrot.lane.b32.xlu0 %v1628, 32
    %v4289 = vpop.permute.xlu0 %4288
    %4290 = vrot.lane.b32.xlu0 %v1631, 32
    %v4291 = vpop.permute.xlu0 %4290
    %4292 = vrot.lane.b32.xlu0 %v1634, 32
    %v4293 = vpop.permute.xlu0 %4292
    %4294 = vrot.lane.b32.xlu0 %v1637, 32
    %v4295 = vpop.permute.xlu0 %4294
    %4296 = vrot.lane.b32.xlu0 %v1640, 32
    %v4297 = vpop.permute.xlu0 %4296
    %4298 = vrot.lane.b32.xlu0 %v1643, 32
    %v4299 = vpop.permute.xlu0 %4298
    %4300 = vrot.lane.b32.xlu0 %v1646, 32
    %v4301 = vpop.permute.xlu0 %4300
    %4302 = vrot.lane.b32.xlu0 %v1649, 32
    %v4303 = vpop.permute.xlu0 %4302
    %4304 = vrot.lane.b32.xlu0 %v1652, 32
    %v4305 = vpop.permute.xlu0 %4304
    %4306 = vrot.lane.b32.xlu0 %v1655, 32
    %v4307 = vpop.permute.xlu0 %4306
    %4308 = vrot.lane.b32.xlu0 %v1658, 32
    %v4309 = vpop.permute.xlu0 %4308
    %4310 = vrot.lane.b32.xlu0 %v1661, 32
    %v4311 = vpop.permute.xlu0 %4310
    %4312 = vrot.lane.b32.xlu0 %v1664, 32
    %v4313 = vpop.permute.xlu0 %4312
    %4314 = vrot.lane.b32.xlu0 %v1667, 32
    %v4315 = vpop.permute.xlu0 %4314
    %4316 = vrot.lane.b32.xlu0 %v1670, 32
    %v4317 = vpop.permute.xlu0 %4316
    %4318 = vrot.lane.b32.xlu0 %v1673, 32
    %v4319 = vpop.permute.xlu0 %4318
    %4320 = vrot.lane.b32.xlu0 %v1676, 32
    %v4321 = vpop.permute.xlu0 %4320
    %4322 = vrot.lane.b32.xlu0 %v1679, 32
    %v4323 = vpop.permute.xlu0 %4322
    %4324 = vrot.lane.b32.xlu0 %v1682, 32
    %v4325 = vpop.permute.xlu0 %4324
    %4326 = vrot.lane.b32.xlu0 %v1685, 32
    %v4327 = vpop.permute.xlu0 %4326
    %4328 = vrot.lane.b32.xlu0 %v1688, 32
    %v4329 = vpop.permute.xlu0 %4328
    %4330 = vrot.lane.b32.xlu0 %v1691, 32
    %v4331 = vpop.permute.xlu0 %4330
    %4332 = vrot.lane.b32.xlu0 %v1694, 32
    %v4333 = vpop.permute.xlu0 %4332
    %4334 = vrot.lane.b32.xlu0 %v1697, 32
    %v4335 = vpop.permute.xlu0 %4334
    %4336 = vrot.lane.b32.xlu0 %v1700, 32
    %v4337 = vpop.permute.xlu0 %4336
    %4338 = vrot.lane.b32.xlu0 %v1703, 32
    %v4339 = vpop.permute.xlu0 %4338
    %4340 = vrot.lane.b32.xlu0 %v1706, 32
    %v4341 = vpop.permute.xlu0 %4340
    %4342 = vrot.lane.b32.xlu0 %v1709, 32
    %v4343 = vpop.permute.xlu0 %4342
    %4344 = vrot.lane.b32.xlu0 %v1712, 32
    %v4345 = vpop.permute.xlu0 %4344
    %4346 = vrot.lane.b32.xlu0 %v1715, 32
    %v4347 = vpop.permute.xlu0 %4346
    %4348 = vrot.lane.b32.xlu0 %v1718, 32
    %v4349 = vpop.permute.xlu0 %4348
    %vm4382 = vcmask 523520
    %4383 = vst.msk [vmem:[%s20] sm:$0xff] %vm4382, %v4287
    %4384 = vst.msk [vmem:[%s20 + $0x18] sm:$0xff] %vm4382, %v4289
    %4385 = vst.msk [vmem:[%s20 + $0x30] sm:$0xff] %vm4382, %v4291
    %4386 = vst.msk [vmem:[%s20 + $0x48] sm:$0xff] %vm4382, %v4293
    %4387 = vst.msk [vmem:[%s20 + $0x60] sm:$0xff] %vm4382, %v4295
    %4388 = vst.msk [vmem:[%s20 + $0x78] sm:$0xff] %vm4382, %v4297
    %4389 = vst.msk [vmem:[%s20 + $0x90] sm:$0xff] %vm4382, %v4299
    %4390 = vst.msk [vmem:[%s20 + $0xa8] sm:$0xff] %vm4382, %v4301
    %4391 = vst.msk [vmem:[%s20 + $0xc0] sm:$0xff] %vm4382, %v4303
    %4392 = vst.msk [vmem:[%s20 + $0xd8] sm:$0xff] %vm4382, %v4305
    %4393 = vst.msk [vmem:[%s20 + $0xf0] sm:$0xff] %vm4382, %v4307
    %4394 = vst.msk [vmem:[%s20 + $0x108] sm:$0xff] %vm4382, %v4309
    %4395 = vst.msk [vmem:[%s20 + $0x120] sm:$0xff] %vm4382, %v4311
    %4396 = vst.msk [vmem:[%s20 + $0x138] sm:$0xff] %vm4382, %v4313
    %4397 = vst.msk [vmem:[%s20 + $0x150] sm:$0xff] %vm4382, %v4315
    %4398 = vst.msk [vmem:[%s20 + $0x168] sm:$0xff] %vm4382, %v4317
    %4399 = vst.msk [vmem:[%s20 + $0x180] sm:$0xff] %vm4382, %v4319
    %4400 = vst.msk [vmem:[%s20 + $0x198] sm:$0xff] %vm4382, %v4321
    %4401 = vst.msk [vmem:[%s20 + $0x1b0] sm:$0xff] %vm4382, %v4323
    %4402 = vst.msk [vmem:[%s20 + $0x1c8] sm:$0xff] %vm4382, %v4325
    %4403 = vst.msk [vmem:[%s20 + $0x1e0] sm:$0xff] %vm4382, %v4327
    %4404 = vst.msk [vmem:[%s20 + $0x1f8] sm:$0xff] %vm4382, %v4329
    %4405 = vst.msk [vmem:[%s20 + $0x210] sm:$0xff] %vm4382, %v4331
    %4406 = vst.msk [vmem:[%s20 + $0x228] sm:$0xff] %vm4382, %v4333
    %4407 = vst.msk [vmem:[%s20 + $0x240] sm:$0xff] %vm4382, %v4335
    %4408 = vst.msk [vmem:[%s20 + $0x258] sm:$0xff] %vm4382, %v4337
    %4409 = vst.msk [vmem:[%s20 + $0x270] sm:$0xff] %vm4382, %v4339
    %4410 = vst.msk [vmem:[%s20 + $0x288] sm:$0xff] %vm4382, %v4341
    %4411 = vst.msk [vmem:[%s20 + $0x2a0] sm:$0xff] %vm4382, %v4343
    %4412 = vst.msk [vmem:[%s20 + $0x2b8] sm:$0xff] %vm4382, %v4345
    %4413 = vst.msk [vmem:[%s20 + $0x2d0] sm:$0xff] %vm4382, %v4347
    %4414 = vst.msk [vmem:[%s20 + $0x2e8] sm:$0xff] %vm4382, %v4349
    %4447 = vrot.lane.b32.xlu0 %v3010, 64
    %v4448 = vpop.permute.xlu0 %4447
    %4449 = vrot.lane.b32.xlu0 %v3013, 64
    %v4450 = vpop.permute.xlu0 %4449
    %4451 = vrot.lane.b32.xlu0 %v3016, 64
    %v4452 = vpop.permute.xlu0 %4451
    %4453 = vrot.lane.b32.xlu0 %v3019, 64
    %v4454 = vpop.permute.xlu0 %4453
    %4455 = vrot.lane.b32.xlu0 %v3022, 64
    %v4456 = vpop.permute.xlu0 %4455
    %4457 = vrot.lane.b32.xlu0 %v3025, 64
    %v4458 = vpop.permute.xlu0 %4457
    %4459 = vrot.lane.b32.xlu0 %v3028, 64
    %v4460 = vpop.permute.xlu0 %4459
    %4461 = vrot.lane.b32.xlu0 %v3031, 64
    %v4462 = vpop.permute.xlu0 %4461
    %4463 = vrot.lane.b32.xlu0 %v3034, 64
    %v4464 = vpop.permute.xlu0 %4463
    %4465 = vrot.lane.b32.xlu0 %v3037, 64
    %v4466 = vpop.permute.xlu0 %4465
    %4467 = vrot.lane.b32.xlu0 %v3040, 64
    %v4468 = vpop.permute.xlu0 %4467
    %4469 = vrot.lane.b32.xlu0 %v3043, 64
    %v4470 = vpop.permute.xlu0 %4469
    %4471 = vrot.lane.b32.xlu0 %v3046, 64
    %v4472 = vpop.permute.xlu0 %4471
    %4473 = vrot.lane.b32.xlu0 %v3049, 64
    %v4474 = vpop.permute.xlu0 %4473
    %4475 = vrot.lane.b32.xlu0 %v3052, 64
    %v4476 = vpop.permute.xlu0 %4475
    %4477 = vrot.lane.b32.xlu0 %v3055, 64
    %v4478 = vpop.permute.xlu0 %4477
    %4479 = vrot.lane.b32.xlu0 %v3058, 64
    %v4480 = vpop.permute.xlu0 %4479
    %4481 = vrot.lane.b32.xlu0 %v3061, 64
    %v4482 = vpop.permute.xlu0 %4481
    %4483 = vrot.lane.b32.xlu0 %v3064, 64
    %v4484 = vpop.permute.xlu0 %4483
    %4485 = vrot.lane.b32.xlu0 %v3067, 64
    %v4486 = vpop.permute.xlu0 %4485
    %4487 = vrot.lane.b32.xlu0 %v3070, 64
    %v4488 = vpop.permute.xlu0 %4487
    %4489 = vrot.lane.b32.xlu0 %v3073, 64
    %v4490 = vpop.permute.xlu0 %4489
    %4491 = vrot.lane.b32.xlu0 %v3076, 64
    %v4492 = vpop.permute.xlu0 %4491
    %4493 = vrot.lane.b32.xlu0 %v3079, 64
    %v4494 = vpop.permute.xlu0 %4493
    %4495 = vrot.lane.b32.xlu0 %v3082, 64
    %v4496 = vpop.permute.xlu0 %4495
    %4497 = vrot.lane.b32.xlu0 %v3085, 64
    %v4498 = vpop.permute.xlu0 %4497
    %4499 = vrot.lane.b32.xlu0 %v3088, 64
    %v4500 = vpop.permute.xlu0 %4499
    %4501 = vrot.lane.b32.xlu0 %v3091, 64
    %v4502 = vpop.permute.xlu0 %4501
    %4503 = vrot.lane.b32.xlu0 %v3094, 64
    %v4504 = vpop.permute.xlu0 %4503
    %4505 = vrot.lane.b32.xlu0 %v3097, 64
    %v4506 = vpop.permute.xlu0 %4505
    %4507 = vrot.lane.b32.xlu0 %v3100, 64
    %v4508 = vpop.permute.xlu0 %4507
    %4509 = vrot.lane.b32.xlu0 %v3103, 64
    %v4510 = vpop.permute.xlu0 %4509
    %vm4543 = vcmask 785920
    %4544 = vst.msk [vmem:[%s20] sm:$0xff] %vm4543, %v4448
    %4545 = vst.msk [vmem:[%s20 + $0x18] sm:$0xff] %vm4543, %v4450
    %4546 = vst.msk [vmem:[%s20 + $0x30] sm:$0xff] %vm4543, %v4452
    %4547 = vst.msk [vmem:[%s20 + $0x48] sm:$0xff] %vm4543, %v4454
    %4548 = vst.msk [vmem:[%s20 + $0x60] sm:$0xff] %vm4543, %v4456
    %4549 = vst.msk [vmem:[%s20 + $0x78] sm:$0xff] %vm4543, %v4458
    %4550 = vst.msk [vmem:[%s20 + $0x90] sm:$0xff] %vm4543, %v4460
    %4551 = vst.msk [vmem:[%s20 + $0xa8] sm:$0xff] %vm4543, %v4462
    %4552 = vst.msk [vmem:[%s20 + $0xc0] sm:$0xff] %vm4543, %v4464
    %4553 = vst.msk [vmem:[%s20 + $0xd8] sm:$0xff] %vm4543, %v4466
    %4554 = vst.msk [vmem:[%s20 + $0xf0] sm:$0xff] %vm4543, %v4468
    %4555 = vst.msk [vmem:[%s20 + $0x108] sm:$0xff] %vm4543, %v4470
    %4556 = vst.msk [vmem:[%s20 + $0x120] sm:$0xff] %vm4543, %v4472
    %4557 = vst.msk [vmem:[%s20 + $0x138] sm:$0xff] %vm4543, %v4474
    %4558 = vst.msk [vmem:[%s20 + $0x150] sm:$0xff] %vm4543, %v4476
    %4559 = vst.msk [vmem:[%s20 + $0x168] sm:$0xff] %vm4543, %v4478
    %4560 = vst.msk [vmem:[%s20 + $0x180] sm:$0xff] %vm4543, %v4480
    %4561 = vst.msk [vmem:[%s20 + $0x198] sm:$0xff] %vm4543, %v4482
    %4562 = vst.msk [vmem:[%s20 + $0x1b0] sm:$0xff] %vm4543, %v4484
    %4563 = vst.msk [vmem:[%s20 + $0x1c8] sm:$0xff] %vm4543, %v4486
    %4564 = vst.msk [vmem:[%s20 + $0x1e0] sm:$0xff] %vm4543, %v4488
    %4565 = vst.msk [vmem:[%s20 + $0x1f8] sm:$0xff] %vm4543, %v4490
    %4566 = vst.msk [vmem:[%s20 + $0x210] sm:$0xff] %vm4543, %v4492
    %4567 = vst.msk [vmem:[%s20 + $0x228] sm:$0xff] %vm4543, %v4494
    %4568 = vst.msk [vmem:[%s20 + $0x240] sm:$0xff] %vm4543, %v4496
    %4569 = vst.msk [vmem:[%s20 + $0x258] sm:$0xff] %vm4543, %v4498
    %4570 = vst.msk [vmem:[%s20 + $0x270] sm:$0xff] %vm4543, %v4500
    %4571 = vst.msk [vmem:[%s20 + $0x288] sm:$0xff] %vm4543, %v4502
    %4572 = vst.msk [vmem:[%s20 + $0x2a0] sm:$0xff] %vm4543, %v4504
    %4573 = vst.msk [vmem:[%s20 + $0x2b8] sm:$0xff] %vm4543, %v4506
    %4574 = vst.msk [vmem:[%s20 + $0x2d0] sm:$0xff] %vm4543, %v4508
    %4575 = vst.msk [vmem:[%s20 + $0x2e8] sm:$0xff] %vm4543, %v4510
    %4608 = vrot.lane.b32.xlu0 %v3588, 96
    %v4609 = vpop.permute.xlu0 %4608
    %4610 = vrot.lane.b32.xlu0 %v3591, 96
    %v4611 = vpop.permute.xlu0 %4610
    %4612 = vrot.lane.b32.xlu0 %v3594, 96
    %v4613 = vpop.permute.xlu0 %4612
    %4614 = vrot.lane.b32.xlu0 %v3597, 96
    %v4615 = vpop.permute.xlu0 %4614
    %4616 = vrot.lane.b32.xlu0 %v3600, 96
    %v4617 = vpop.permute.xlu0 %4616
    %4618 = vrot.lane.b32.xlu0 %v3603, 96
    %v4619 = vpop.permute.xlu0 %4618
    %4620 = vrot.lane.b32.xlu0 %v3606, 96
    %v4621 = vpop.permute.xlu0 %4620
    %4622 = vrot.lane.b32.xlu0 %v3609, 96
    %v4623 = vpop.permute.xlu0 %4622
    %4624 = vrot.lane.b32.xlu0 %v3612, 96
    %v4625 = vpop.permute.xlu0 %4624
    %4626 = vrot.lane.b32.xlu0 %v3615, 96
    %v4627 = vpop.permute.xlu0 %4626
    %4628 = vrot.lane.b32.xlu0 %v3618, 96
    %v4629 = vpop.permute.xlu0 %4628
    %4630 = vrot.lane.b32.xlu0 %v3621, 96
    %v4631 = vpop.permute.xlu0 %4630
    %4632 = vrot.lane.b32.xlu0 %v3624, 96
    %v4633 = vpop.permute.xlu0 %4632
    %4634 = vrot.lane.b32.xlu0 %v3627, 96
    %v4635 = vpop.permute.xlu0 %4634
    %4636 = vrot.lane.b32.xlu0 %v3630, 96
    %v4637 = vpop.permute.xlu0 %4636
    %4638 = vrot.lane.b32.xlu0 %v3633, 96
    %v4639 = vpop.permute.xlu0 %4638
    %4640 = vrot.lane.b32.xlu0 %v3636, 96
    %v4641 = vpop.permute.xlu0 %4640
    %4642 = vrot.lane.b32.xlu0 %v3639, 96
    %v4643 = vpop.permute.xlu0 %4642
    %4644 = vrot.lane.b32.xlu0 %v3642, 96
    %v4645 = vpop.permute.xlu0 %4644
    %4646 = vrot.lane.b32.xlu0 %v3645, 96
    %v4647 = vpop.permute.xlu0 %4646
    %4648 = vrot.lane.b32.xlu0 %v3648, 96
    %v4649 = vpop.permute.xlu0 %4648
    %4650 = vrot.lane.b32.xlu0 %v3651, 96
    %v4651 = vpop.permute.xlu0 %4650
    %4652 = vrot.lane.b32.xlu0 %v3654, 96
    %v4653 = vpop.permute.xlu0 %4652
    %4654 = vrot.lane.b32.xlu0 %v3657, 96
    %v4655 = vpop.permute.xlu0 %4654
    %4656 = vrot.lane.b32.xlu0 %v3660, 96
    %v4657 = vpop.permute.xlu0 %4656
    %4658 = vrot.lane.b32.xlu0 %v3663, 96
    %v4659 = vpop.permute.xlu0 %4658
    %4660 = vrot.lane.b32.xlu0 %v3666, 96
    %v4661 = vpop.permute.xlu0 %4660
    %4662 = vrot.lane.b32.xlu0 %v3669, 96
    %v4663 = vpop.permute.xlu0 %4662
    %4664 = vrot.lane.b32.xlu0 %v3672, 96
    %v4665 = vpop.permute.xlu0 %4664
    %4666 = vrot.lane.b32.xlu0 %v3675, 96
    %v4667 = vpop.permute.xlu0 %4666
    %4668 = vrot.lane.b32.xlu0 %v3678, 96
    %v4669 = vpop.permute.xlu0 %4668
    %4670 = vrot.lane.b32.xlu0 %v3681, 96
    %v4671 = vpop.permute.xlu0 %4670
    %vm4704 = vcmask 1048320
    %4705 = vst.msk [vmem:[%s20] sm:$0xff] %vm4704, %v4609
    %4706 = vst.msk [vmem:[%s20 + $0x18] sm:$0xff] %vm4704, %v4611
    %4707 = vst.msk [vmem:[%s20 + $0x30] sm:$0xff] %vm4704, %v4613
    %4708 = vst.msk [vmem:[%s20 + $0x48] sm:$0xff] %vm4704, %v4615
    %4709 = vst.msk [vmem:[%s20 + $0x60] sm:$0xff] %vm4704, %v4617
    %4710 = vst.msk [vmem:[%s20 + $0x78] sm:$0xff] %vm4704, %v4619
    %4711 = vst.msk [vmem:[%s20 + $0x90] sm:$0xff] %vm4704, %v4621
    %4712 = vst.msk [vmem:[%s20 + $0xa8] sm:$0xff] %vm4704, %v4623
    %4713 = vst.msk [vmem:[%s20 + $0xc0] sm:$0xff] %vm4704, %v4625
    %4714 = vst.msk [vmem:[%s20 + $0xd8] sm:$0xff] %vm4704, %v4627
    %4715 = vst.msk [vmem:[%s20 + $0xf0] sm:$0xff] %vm4704, %v4629
    %4716 = vst.msk [vmem:[%s20 + $0x108] sm:$0xff] %vm4704, %v4631
    %4717 = vst.msk [vmem:[%s20 + $0x120] sm:$0xff] %vm4704, %v4633
    %4718 = vst.msk [vmem:[%s20 + $0x138] sm:$0xff] %vm4704, %v4635
    %4719 = vst.msk [vmem:[%s20 + $0x150] sm:$0xff] %vm4704, %v4637
    %4720 = vst.msk [vmem:[%s20 + $0x168] sm:$0xff] %vm4704, %v4639
    %4721 = vst.msk [vmem:[%s20 + $0x180] sm:$0xff] %vm4704, %v4641
    %4722 = vst.msk [vmem:[%s20 + $0x198] sm:$0xff] %vm4704, %v4643
    %4723 = vst.msk [vmem:[%s20 + $0x1b0] sm:$0xff] %vm4704, %v4645
    %4724 = vst.msk [vmem:[%s20 + $0x1c8] sm:$0xff] %vm4704, %v4647
    %4725 = vst.msk [vmem:[%s20 + $0x1e0] sm:$0xff] %vm4704, %v4649
    %4726 = vst.msk [vmem:[%s20 + $0x1f8] sm:$0xff] %vm4704, %v4651
    %4727 = vst.msk [vmem:[%s20 + $0x210] sm:$0xff] %vm4704, %v4653
    %4728 = vst.msk [vmem:[%s20 + $0x228] sm:$0xff] %vm4704, %v4655
    %4729 = vst.msk [vmem:[%s20 + $0x240] sm:$0xff] %vm4704, %v4657
    %4730 = vst.msk [vmem:[%s20 + $0x258] sm:$0xff] %vm4704, %v4659
    %4731 = vst.msk [vmem:[%s20 + $0x270] sm:$0xff] %vm4704, %v4661
    %4732 = vst.msk [vmem:[%s20 + $0x288] sm:$0xff] %vm4704, %v4663
    %4733 = vst.msk [vmem:[%s20 + $0x2a0] sm:$0xff] %vm4704, %v4665
    %4734 = vst.msk [vmem:[%s20 + $0x2b8] sm:$0xff] %vm4704, %v4667
    %4735 = vst.msk [vmem:[%s20 + $0x2d0] sm:$0xff] %vm4704, %v4669
    %4736 = vst.msk [vmem:[%s20 + $0x2e8] sm:$0xff] %vm4704, %v4671
    %4737 = vst.msk [vmem:[%s20 + $0x8] sm:$0xff] %vm4221, %v3841
    %4738 = vst.msk [vmem:[%s20 + $0x20] sm:$0xff] %vm4221, %v3844
    %4739 = vst.msk [vmem:[%s20 + $0x38] sm:$0xff] %vm4221, %v3847
    %4740 = vst.msk [vmem:[%s20 + $0x50] sm:$0xff] %vm4221, %v3850
    %4741 = vst.msk [vmem:[%s20 + $0x68] sm:$0xff] %vm4221, %v3853
    %4742 = vst.msk [vmem:[%s20 + $0x80] sm:$0xff] %vm4221, %v3856
    %4743 = vst.msk [vmem:[%s20 + $0x98] sm:$0xff] %vm4221, %v3859
    %4744 = vst.msk [vmem:[%s20 + $0xb0] sm:$0xff] %vm4221, %v3862
    %4745 = vst.msk [vmem:[%s20 + $0xc8] sm:$0xff] %vm4221, %v3865
    %4746 = vst.msk [vmem:[%s20 + $0xe0] sm:$0xff] %vm4221, %v3868
    %4747 = vst.msk [vmem:[%s20 + $0xf8] sm:$0xff] %vm4221, %v3871
    %4748 = vst.msk [vmem:[%s20 + $0x110] sm:$0xff] %vm4221, %v3874
    %4749 = vst.msk [vmem:[%s20 + $0x128] sm:$0xff] %vm4221, %v3877
    %4750 = vst.msk [vmem:[%s20 + $0x140] sm:$0xff] %vm4221, %v3880
    %4751 = vst.msk [vmem:[%s20 + $0x158] sm:$0xff] %vm4221, %v3883
    %4752 = vst.msk [vmem:[%s20 + $0x170] sm:$0xff] %vm4221, %v3886
    %4753 = vst.msk [vmem:[%s20 + $0x188] sm:$0xff] %vm4221, %v3889
    %4754 = vst.msk [vmem:[%s20 + $0x1a0] sm:$0xff] %vm4221, %v3892
    %4755 = vst.msk [vmem:[%s20 + $0x1b8] sm:$0xff] %vm4221, %v3895
    %4756 = vst.msk [vmem:[%s20 + $0x1d0] sm:$0xff] %vm4221, %v3898
    %4757 = vst.msk [vmem:[%s20 + $0x1e8] sm:$0xff] %vm4221, %v3901
    %4758 = vst.msk [vmem:[%s20 + $0x200] sm:$0xff] %vm4221, %v3904
    %4759 = vst.msk [vmem:[%s20 + $0x218] sm:$0xff] %vm4221, %v3907
    %4760 = vst.msk [vmem:[%s20 + $0x230] sm:$0xff] %vm4221, %v3910
    %4761 = vst.msk [vmem:[%s20 + $0x248] sm:$0xff] %vm4221, %v3913
    %4762 = vst.msk [vmem:[%s20 + $0x260] sm:$0xff] %vm4221, %v3916
    %4763 = vst.msk [vmem:[%s20 + $0x278] sm:$0xff] %vm4221, %v3919
    %4764 = vst.msk [vmem:[%s20 + $0x290] sm:$0xff] %vm4221, %v3922
    %4765 = vst.msk [vmem:[%s20 + $0x2a8] sm:$0xff] %vm4221, %v3925
    %4766 = vst.msk [vmem:[%s20 + $0x2c0] sm:$0xff] %vm4221, %v3928
    %4767 = vst.msk [vmem:[%s20 + $0x2d8] sm:$0xff] %vm4221, %v3931
    %4768 = vst.msk [vmem:[%s20 + $0x2f0] sm:$0xff] %vm4221, %v3934
    %4801 = vrot.lane.b32.xlu0 %v4094, 32
    %v4802 = vpop.permute.xlu0 %4801
    %4803 = vrot.lane.b32.xlu0 %v4097, 32
    %v4804 = vpop.permute.xlu0 %4803
    %4805 = vrot.lane.b32.xlu0 %v4100, 32
    %v4806 = vpop.permute.xlu0 %4805
    %4807 = vrot.lane.b32.xlu0 %v4103, 32
    %v4808 = vpop.permute.xlu0 %4807
    %4809 = vrot.lane.b32.xlu0 %v4106, 32
    %v4810 = vpop.permute.xlu0 %4809
    %4811 = vrot.lane.b32.xlu0 %v4109, 32
    %v4812 = vpop.permute.xlu0 %4811
    %4813 = vrot.lane.b32.xlu0 %v4112, 32
    %v4814 = vpop.permute.xlu0 %4813
    %4815 = vrot.lane.b32.xlu0 %v4115, 32
    %v4816 = vpop.permute.xlu0 %4815
    %4817 = vrot.lane.b32.xlu0 %v4118, 32
    %v4818 = vpop.permute.xlu0 %4817
    %4819 = vrot.lane.b32.xlu0 %v4121, 32
    %v4820 = vpop.permute.xlu0 %4819
    %4821 = vrot.lane.b32.xlu0 %v4124, 32
    %v4822 = vpop.permute.xlu0 %4821
    %4823 = vrot.lane.b32.xlu0 %v4127, 32
    %v4824 = vpop.permute.xlu0 %4823
    %4825 = vrot.lane.b32.xlu0 %v4130, 32
    %v4826 = vpop.permute.xlu0 %4825
    %4827 = vrot.lane.b32.xlu0 %v4133, 32
    %v4828 = vpop.permute.xlu0 %4827
    %4829 = vrot.lane.b32.xlu0 %v4136, 32
    %v4830 = vpop.permute.xlu0 %4829
    %4831 = vrot.lane.b32.xlu0 %v4139, 32
    %v4832 = vpop.permute.xlu0 %4831
    %4833 = vrot.lane.b32.xlu0 %v4142, 32
    %v4834 = vpop.permute.xlu0 %4833
    %4835 = vrot.lane.b32.xlu0 %v4145, 32
    %v4836 = vpop.permute.xlu0 %4835
    %4837 = vrot.lane.b32.xlu0 %v4148, 32
    %v4838 = vpop.permute.xlu0 %4837
    %4839 = vrot.lane.b32.xlu0 %v4151, 32
    %v4840 = vpop.permute.xlu0 %4839
    %4841 = vrot.lane.b32.xlu0 %v4154, 32
    %v4842 = vpop.permute.xlu0 %4841
    %4843 = vrot.lane.b32.xlu0 %v4157, 32
    %v4844 = vpop.permute.xlu0 %4843
    %4845 = vrot.lane.b32.xlu0 %v4160, 32
    %v4846 = vpop.permute.xlu0 %4845
    %4847 = vrot.lane.b32.xlu0 %v4163, 32
    %v4848 = vpop.permute.xlu0 %4847
    %4849 = vrot.lane.b32.xlu0 %v4166, 32
    %v4850 = vpop.permute.xlu0 %4849
    %4851 = vrot.lane.b32.xlu0 %v4169, 32
    %v4852 = vpop.permute.xlu0 %4851
    %4853 = vrot.lane.b32.xlu0 %v4172, 32
    %v4854 = vpop.permute.xlu0 %4853
    %4855 = vrot.lane.b32.xlu0 %v4175, 32
    %v4856 = vpop.permute.xlu0 %4855
    %4857 = vrot.lane.b32.xlu0 %v4178, 32
    %v4858 = vpop.permute.xlu0 %4857
    %4859 = vrot.lane.b32.xlu0 %v4181, 32
    %v4860 = vpop.permute.xlu0 %4859
    %4861 = vrot.lane.b32.xlu0 %v4184, 32
    %v4862 = vpop.permute.xlu0 %4861
    %4863 = vrot.lane.b32.xlu0 %v4187, 32
    %v4864 = vpop.permute.xlu0 %4863
    %vm4897 = vcmask 1047808
    %4898 = vst.msk [vmem:[%s20 + $0x8] sm:$0xff] %vm4897, %v4802
    %vm4899 = vcmask 31744
    %4900 = vst.msk [vmem:[%s20 + $0x10] sm:$0xff] %vm4899, %v4802
    %4901 = vst.msk [vmem:[%s20 + $0x20] sm:$0xff] %vm4897, %v4804
    %4902 = vst.msk [vmem:[%s20 + $0x28] sm:$0xff] %vm4899, %v4804
    %4903 = vst.msk [vmem:[%s20 + $0x38] sm:$0xff] %vm4897, %v4806
    %4904 = vst.msk [vmem:[%s20 + $0x40] sm:$0xff] %vm4899, %v4806
    %4905 = vst.msk [vmem:[%s20 + $0x50] sm:$0xff] %vm4897, %v4808
    %4906 = vst.msk [vmem:[%s20 + $0x58] sm:$0xff] %vm4899, %v4808
    %4907 = vst.msk [vmem:[%s20 + $0x68] sm:$0xff] %vm4897, %v4810
    %4908 = vst.msk [vmem:[%s20 + $0x70] sm:$0xff] %vm4899, %v4810
    %4909 = vst.msk [vmem:[%s20 + $0x80] sm:$0xff] %vm4897, %v4812
    %4910 = vst.msk [vmem:[%s20 + $0x88] sm:$0xff] %vm4899, %v4812
    %4911 = vst.msk [vmem:[%s20 + $0x98] sm:$0xff] %vm4897, %v4814
    %4912 = vst.msk [vmem:[%s20 + $0xa0] sm:$0xff] %vm4899, %v4814
    %4913 = vst.msk [vmem:[%s20 + $0xb0] sm:$0xff] %vm4897, %v4816
    %4914 = vst.msk [vmem:[%s20 + $0xb8] sm:$0xff] %vm4899, %v4816
    %4915 = vst.msk [vmem:[%s20 + $0xc8] sm:$0xff] %vm4897, %v4818
    %4916 = vst.msk [vmem:[%s20 + $0xd0] sm:$0xff] %vm4899, %v4818
    %4917 = vst.msk [vmem:[%s20 + $0xe0] sm:$0xff] %vm4897, %v4820
    %4918 = vst.msk [vmem:[%s20 + $0xe8] sm:$0xff] %vm4899, %v4820
    %4919 = vst.msk [vmem:[%s20 + $0xf8] sm:$0xff] %vm4897, %v4822
    %4920 = vst.msk [vmem:[%s20 + $0x100] sm:$0xff] %vm4899, %v4822
    %4921 = vst.msk [vmem:[%s20 + $0x110] sm:$0xff] %vm4897, %v4824
    %4922 = vst.msk [vmem:[%s20 + $0x118] sm:$0xff] %vm4899, %v4824
    %4923 = vst.msk [vmem:[%s20 + $0x128] sm:$0xff] %vm4897, %v4826
    %4924 = vst.msk [vmem:[%s20 + $0x130] sm:$0xff] %vm4899, %v4826
    %4925 = vst.msk [vmem:[%s20 + $0x140] sm:$0xff] %vm4897, %v4828
    %4926 = vst.msk [vmem:[%s20 + $0x148] sm:$0xff] %vm4899, %v4828
    %4927 = vst.msk [vmem:[%s20 + $0x158] sm:$0xff] %vm4897, %v4830
    %4928 = vst.msk [vmem:[%s20 + $0x160] sm:$0xff] %vm4899, %v4830
    %4929 = vst.msk [vmem:[%s20 + $0x170] sm:$0xff] %vm4897, %v4832
    %4930 = vst.msk [vmem:[%s20 + $0x178] sm:$0xff] %vm4899, %v4832
    %4931 = vst.msk [vmem:[%s20 + $0x188] sm:$0xff] %vm4897, %v4834
    %4932 = vst.msk [vmem:[%s20 + $0x190] sm:$0xff] %vm4899, %v4834
    %4933 = vst.msk [vmem:[%s20 + $0x1a0] sm:$0xff] %vm4897, %v4836
    %4934 = vst.msk [vmem:[%s20 + $0x1a8] sm:$0xff] %vm4899, %v4836
    %4935 = vst.msk [vmem:[%s20 + $0x1b8] sm:$0xff] %vm4897, %v4838
    %4936 = vst.msk [vmem:[%s20 + $0x1c0] sm:$0xff] %vm4899, %v4838
    %4937 = vst.msk [vmem:[%s20 + $0x1d0] sm:$0xff] %vm4897, %v4840
    %4938 = vst.msk [vmem:[%s20 + $0x1d8] sm:$0xff] %vm4899, %v4840
    %4939 = vst.msk [vmem:[%s20 + $0x1e8] sm:$0xff] %vm4897, %v4842
    %4940 = vst.msk [vmem:[%s20 + $0x1f0] sm:$0xff] %vm4899, %v4842
    %4941 = vst.msk [vmem:[%s20 + $0x200] sm:$0xff] %vm4897, %v4844
    %4942 = vst.msk [vmem:[%s20 + $0x208] sm:$0xff] %vm4899, %v4844
    %4943 = vst.msk [vmem:[%s20 + $0x218] sm:$0xff] %vm4897, %v4846
    %4944 = vst.msk [vmem:[%s20 + $0x220] sm:$0xff] %vm4899, %v4846
    %4945 = vst.msk [vmem:[%s20 + $0x230] sm:$0xff] %vm4897, %v4848
    %4946 = vst.msk [vmem:[%s20 + $0x238] sm:$0xff] %vm4899, %v4848
    %4947 = vst.msk [vmem:[%s20 + $0x248] sm:$0xff] %vm4897, %v4850
    %4948 = vst.msk [vmem:[%s20 + $0x250] sm:$0xff] %vm4899, %v4850
    %4949 = vst.msk [vmem:[%s20 + $0x260] sm:$0xff] %vm4897, %v4852
    %4950 = vst.msk [vmem:[%s20 + $0x268] sm:$0xff] %vm4899, %v4852
    %4951 = vst.msk [vmem:[%s20 + $0x278] sm:$0xff] %vm4897, %v4854
    %4952 = vst.msk [vmem:[%s20 + $0x280] sm:$0xff] %vm4899, %v4854
    %4953 = vst.msk [vmem:[%s20 + $0x290] sm:$0xff] %vm4897, %v4856
    %4954 = vst.msk [vmem:[%s20 + $0x298] sm:$0xff] %vm4899, %v4856
    %4955 = vst.msk [vmem:[%s20 + $0x2a8] sm:$0xff] %vm4897, %v4858
    %4956 = vst.msk [vmem:[%s20 + $0x2b0] sm:$0xff] %vm4899, %v4858
    %4957 = vst.msk [vmem:[%s20 + $0x2c0] sm:$0xff] %vm4897, %v4860
    %4958 = vst.msk [vmem:[%s20 + $0x2c8] sm:$0xff] %vm4899, %v4860
    %4959 = vst.msk [vmem:[%s20 + $0x2d8] sm:$0xff] %vm4897, %v4862
    %4960 = vst.msk [vmem:[%s20 + $0x2e0] sm:$0xff] %vm4899, %v4862
    %4961 = vst.msk [vmem:[%s20 + $0x2f0] sm:$0xff] %vm4897, %v4864
    %4962 = vst.msk [vmem:[%s20 + $0x2f8] sm:$0xff] %vm4899, %v4864
    %vm4963 = vcmask 1047584
    %4964 = vst.msk [vmem:[%s20 + $0x10] sm:$0xff] %vm4963, 0.0
    %4965 = vst.msk [vmem:[%s20 + $0x28] sm:$0xff] %vm4963, 0.0
    %4966 = vst.msk [vmem:[%s20 + $0x40] sm:$0xff] %vm4963, 0.0
    %4967 = vst.msk [vmem:[%s20 + $0x58] sm:$0xff] %vm4963, 0.0
    %4968 = vst.msk [vmem:[%s20 + $0x70] sm:$0xff] %vm4963, 0.0
    %4969 = vst.msk [vmem:[%s20 + $0x88] sm:$0xff] %vm4963, 0.0
    %4970 = vst.msk [vmem:[%s20 + $0xa0] sm:$0xff] %vm4963, 0.0
    %4971 = vst.msk [vmem:[%s20 + $0xb8] sm:$0xff] %vm4963, 0.0
    %4972 = vst.msk [vmem:[%s20 + $0xd0] sm:$0xff] %vm4963, 0.0
    %4973 = vst.msk [vmem:[%s20 + $0xe8] sm:$0xff] %vm4963, 0.0
    %4974 = vst.msk [vmem:[%s20 + $0x100] sm:$0xff] %vm4963, 0.0
    %4975 = vst.msk [vmem:[%s20 + $0x118] sm:$0xff] %vm4963, 0.0
    %4976 = vst.msk [vmem:[%s20 + $0x130] sm:$0xff] %vm4963, 0.0
    %4977 = vst.msk [vmem:[%s20 + $0x148] sm:$0xff] %vm4963, 0.0
    %4978 = vst.msk [vmem:[%s20 + $0x160] sm:$0xff] %vm4963, 0.0
    %4979 = vst.msk [vmem:[%s20 + $0x178] sm:$0xff] %vm4963, 0.0
    %4980 = vst.msk [vmem:[%s20 + $0x190] sm:$0xff] %vm4963, 0.0
    %4981 = vst.msk [vmem:[%s20 + $0x1a8] sm:$0xff] %vm4963, 0.0
    %4982 = vst.msk [vmem:[%s20 + $0x1c0] sm:$0xff] %vm4963, 0.0
    %4983 = vst.msk [vmem:[%s20 + $0x1d8] sm:$0xff] %vm4963, 0.0
    %4984 = vst.msk [vmem:[%s20 + $0x1f0] sm:$0xff] %vm4963, 0.0
    %4985 = vst.msk [vmem:[%s20 + $0x208] sm:$0xff] %vm4963, 0.0
    %4986 = vst.msk [vmem:[%s20 + $0x220] sm:$0xff] %vm4963, 0.0
    %4987 = vst.msk [vmem:[%s20 + $0x238] sm:$0xff] %vm4963, 0.0
    %4988 = vst.msk [vmem:[%s20 + $0x250] sm:$0xff] %vm4963, 0.0
    %4989 = vst.msk [vmem:[%s20 + $0x268] sm:$0xff] %vm4963, 0.0
    %4990 = vst.msk [vmem:[%s20 + $0x280] sm:$0xff] %vm4963, 0.0
    %4991 = vst.msk [vmem:[%s20 + $0x298] sm:$0xff] %vm4963, 0.0
    %4992 = vst.msk [vmem:[%s20 + $0x2b0] sm:$0xff] %vm4963, 0.0
    %4993 = vst.msk [vmem:[%s20 + $0x2c8] sm:$0xff] %vm4963, 0.0
    %4994 = vst.msk [vmem:[%s20 + $0x2e0] sm:$0xff] %vm4963, 0.0
    %4995 = vst.msk [vmem:[%s20 + $0x2f8] sm:$0xff] %vm4963, 0.0
    %v4996 = vmul.f32 %v239, %v239
    %v4997 = vmul.f32 %v242, %v242
    %v4998 = vmul.f32 %v245, %v245
    %v4999 = vmul.f32 %v248, %v248
    %v5000 = vmul.f32 %v251, %v251
    %v5001 = vmul.f32 %v254, %v254
    %v5002 = vmul.f32 %v257, %v257
    %v5003 = vmul.f32 %v260, %v260
    %v5004 = vmul.f32 %v263, %v263
    %v5005 = vmul.f32 %v266, %v266
    %v5006 = vmul.f32 %v269, %v269
    %v5007 = vmul.f32 %v272, %v272
    %v5008 = vmul.f32 %v275, %v275
    %v5009 = vmul.f32 %v278, %v278
    %v5010 = vmul.f32 %v281, %v281
    %v5011 = vmul.f32 %v284, %v284
    %v5012 = vmul.f32 %v287, %v287
    %v5013 = vmul.f32 %v290, %v290
    %v5014 = vmul.f32 %v293, %v293
    %v5015 = vmul.f32 %v296, %v296
    %v5016 = vmul.f32 %v299, %v299
    %v5017 = vmul.f32 %v302, %v302
    %v5018 = vmul.f32 %v305, %v305
    %v5019 = vmul.f32 %v308, %v308
    %v5020 = vmul.f32 %v311, %v311
    %v5021 = vmul.f32 %v314, %v314
    %v5022 = vmul.f32 %v317, %v317
    %v5023 = vmul.f32 %v320, %v320
    %v5024 = vmul.f32 %v323, %v323
    %v5025 = vmul.f32 %v326, %v326
    %v5026 = vmul.f32 %v329, %v329
    %v5027 = vmul.f32 %v332, %v332
    %v5028 = vsel %vm4221, %v4996, 0.0
    %5029 = vadd.xlane.f32.xlu0 %v5028
    %v5030 = vpop.xlane.xlu0 %5029
    %v5031 = vsel %vm4221, %v4997, 0.0
    %5032 = vadd.xlane.f32.xlu0 %v5031
    %v5033 = vpop.xlane.xlu0 %5032
    %v5034 = vsel %vm4221, %v4998, 0.0
    %5035 = vadd.xlane.f32.xlu0 %v5034
    %v5036 = vpop.xlane.xlu0 %5035
    %v5037 = vsel %vm4221, %v4999, 0.0
    %5038 = vadd.xlane.f32.xlu0 %v5037
    %v5039 = vpop.xlane.xlu0 %5038
    %v5040 = vsel %vm4221, %v5000, 0.0
    %5041 = vadd.xlane.f32.xlu0 %v5040
    %v5042 = vpop.xlane.xlu0 %5041
    %v5043 = vsel %vm4221, %v5001, 0.0
    %5044 = vadd.xlane.f32.xlu0 %v5043
    %v5045 = vpop.xlane.xlu0 %5044
    %v5046 = vsel %vm4221, %v5002, 0.0
    %5047 = vadd.xlane.f32.xlu0 %v5046
    %v5048 = vpop.xlane.xlu0 %5047
    %v5049 = vsel %vm4221, %v5003, 0.0
    %5050 = vadd.xlane.f32.xlu0 %v5049
    %v5051 = vpop.xlane.xlu0 %5050
    %v5052 = vsel %vm4221, %v5004, 0.0
    %5053 = vadd.xlane.f32.xlu0 %v5052
    %v5054 = vpop.xlane.xlu0 %5053
    %v5055 = vsel %vm4221, %v5005, 0.0
    %5056 = vadd.xlane.f32.xlu0 %v5055
    %v5057 = vpop.xlane.xlu0 %5056
    %v5058 = vsel %vm4221, %v5006, 0.0
    %5059 = vadd.xlane.f32.xlu0 %v5058
    %v5060 = vpop.xlane.xlu0 %5059
    %v5061 = vsel %vm4221, %v5007, 0.0
    %5062 = vadd.xlane.f32.xlu0 %v5061
    %v5063 = vpop.xlane.xlu0 %5062
    %v5064 = vsel %vm4221, %v5008, 0.0
    %5065 = vadd.xlane.f32.xlu0 %v5064
    %v5066 = vpop.xlane.xlu0 %5065
    %v5067 = vsel %vm4221, %v5009, 0.0
    %5068 = vadd.xlane.f32.xlu0 %v5067
    %v5069 = vpop.xlane.xlu0 %5068
    %v5070 = vsel %vm4221, %v5010, 0.0
    %5071 = vadd.xlane.f32.xlu0 %v5070
    %v5072 = vpop.xlane.xlu0 %5071
    %v5073 = vsel %vm4221, %v5011, 0.0
    %5074 = vadd.xlane.f32.xlu0 %v5073
    %v5075 = vpop.xlane.xlu0 %5074
    %v5076 = vsel %vm4221, %v5012, 0.0
    %5077 = vadd.xlane.f32.xlu0 %v5076
    %v5078 = vpop.xlane.xlu0 %5077
    %v5079 = vsel %vm4221, %v5013, 0.0
    %5080 = vadd.xlane.f32.xlu0 %v5079
    %v5081 = vpop.xlane.xlu0 %5080
    %v5082 = vsel %vm4221, %v5014, 0.0
    %5083 = vadd.xlane.f32.xlu0 %v5082
    %v5084 = vpop.xlane.xlu0 %5083
    %v5085 = vsel %vm4221, %v5015, 0.0
    %5086 = vadd.xlane.f32.xlu0 %v5085
    %v5087 = vpop.xlane.xlu0 %5086
    %v5088 = vsel %vm4221, %v5016, 0.0
    %5089 = vadd.xlane.f32.xlu0 %v5088
    %v5090 = vpop.xlane.xlu0 %5089
    %v5091 = vsel %vm4221, %v5017, 0.0
    %5092 = vadd.xlane.f32.xlu0 %v5091
    %v5093 = vpop.xlane.xlu0 %5092
    %v5094 = vsel %vm4221, %v5018, 0.0
    %5095 = vadd.xlane.f32.xlu0 %v5094
    %v5096 = vpop.xlane.xlu0 %5095
    %v5097 = vsel %vm4221, %v5019, 0.0
    %5098 = vadd.xlane.f32.xlu0 %v5097
    %v5099 = vpop.xlane.xlu0 %5098
    %v5100 = vsel %vm4221, %v5020, 0.0
    %5101 = vadd.xlane.f32.xlu0 %v5100
    %v5102 = vpop.xlane.xlu0 %5101
    %v5103 = vsel %vm4221, %v5021, 0.0
    %5104 = vadd.xlane.f32.xlu0 %v5103
    %v5105 = vpop.xlane.xlu0 %5104
    %v5106 = vsel %vm4221, %v5022, 0.0
    %5107 = vadd.xlane.f32.xlu0 %v5106
    %v5108 = vpop.xlane.xlu0 %5107
    %v5109 = vsel %vm4221, %v5023, 0.0
    %5110 = vadd.xlane.f32.xlu0 %v5109
    %v5111 = vpop.xlane.xlu0 %5110
    %v5112 = vsel %vm4221, %v5024, 0.0
    %5113 = vadd.xlane.f32.xlu0 %v5112
    %v5114 = vpop.xlane.xlu0 %5113
    %v5115 = vsel %vm4221, %v5025, 0.0
    %5116 = vadd.xlane.f32.xlu0 %v5115
    %v5117 = vpop.xlane.xlu0 %5116
    %v5118 = vsel %vm4221, %v5026, 0.0
    %5119 = vadd.xlane.f32.xlu0 %v5118
    %v5120 = vpop.xlane.xlu0 %5119
    %v5121 = vsel %vm4221, %v5027, 0.0
    %5122 = vadd.xlane.f32.xlu0 %v5121
    %v5123 = vpop.xlane.xlu0 %5122
    %v5124 = vmax.f32 %v5030, 1e-24
    %v5125 = vmax.f32 %v5033, 1e-24
    %v5126 = vmax.f32 %v5036, 1e-24
    %v5127 = vmax.f32 %v5039, 1e-24
    %v5128 = vmax.f32 %v5042, 1e-24
    %v5129 = vmax.f32 %v5045, 1e-24
    %v5130 = vmax.f32 %v5048, 1e-24
    %v5131 = vmax.f32 %v5051, 1e-24
    %v5132 = vmax.f32 %v5054, 1e-24
    %v5133 = vmax.f32 %v5057, 1e-24
    %v5134 = vmax.f32 %v5060, 1e-24
    %v5135 = vmax.f32 %v5063, 1e-24
    %v5136 = vmax.f32 %v5066, 1e-24
    %v5137 = vmax.f32 %v5069, 1e-24
    %v5138 = vmax.f32 %v5072, 1e-24
    %v5139 = vmax.f32 %v5075, 1e-24
    %v5140 = vmax.f32 %v5078, 1e-24
    %v5141 = vmax.f32 %v5081, 1e-24
    %v5142 = vmax.f32 %v5084, 1e-24
    %v5143 = vmax.f32 %v5087, 1e-24
    %v5144 = vmax.f32 %v5090, 1e-24
    %v5145 = vmax.f32 %v5093, 1e-24
    %v5146 = vmax.f32 %v5096, 1e-24
    %v5147 = vmax.f32 %v5099, 1e-24
    %v5148 = vmax.f32 %v5102, 1e-24
    %v5149 = vmax.f32 %v5105, 1e-24
    %v5150 = vmax.f32 %v5108, 1e-24
    %v5151 = vmax.f32 %v5111, 1e-24
    %v5152 = vmax.f32 %v5114, 1e-24
    %v5153 = vmax.f32 %v5117, 1e-24
    %v5154 = vmax.f32 %v5120, 1e-24
    %v5155 = vmax.f32 %v5123, 1e-24
    %v5156 = vrsqrt.pop %v5124
    %v5157 = vmul.f32 %v5156, %v5124
    %v5158 = vmul.f32 %v5157, %v5156
    %v5159 = vmul.f32 0.5, %v5158
    %v5160 = vsub.f32 1.5, %v5159
    %v5161 = vmul.f32 %v5156, %v5160
    %vm5162 = vweird.f32 %v5124
    %vm5163 = vweird.f32 %v5156
    %vm5164 = vmor %vm5162, %vm5163
    %v5165 = vsel %vm5164, %v5156, %v5161
    %v5166 = vrsqrt.pop %v5125
    %v5167 = vmul.f32 %v5166, %v5125
    %v5168 = vmul.f32 %v5167, %v5166
    %v5169 = vmul.f32 0.5, %v5168
    %v5170 = vsub.f32 1.5, %v5169
    %v5171 = vmul.f32 %v5166, %v5170
    %vm5172 = vweird.f32 %v5125
    %vm5173 = vweird.f32 %v5166
    %vm5174 = vmor %vm5172, %vm5173
    %v5175 = vsel %vm5174, %v5166, %v5171
    %v5176 = vrsqrt.pop %v5126
    %v5177 = vmul.f32 %v5176, %v5126
    %v5178 = vmul.f32 %v5177, %v5176
    %v5179 = vmul.f32 0.5, %v5178
    %v5180 = vsub.f32 1.5, %v5179
    %v5181 = vmul.f32 %v5176, %v5180
    %vm5182 = vweird.f32 %v5126
    %vm5183 = vweird.f32 %v5176
    %vm5184 = vmor %vm5182, %vm5183
    %v5185 = vsel %vm5184, %v5176, %v5181
    %v5186 = vrsqrt.pop %v5127
    %v5187 = vmul.f32 %v5186, %v5127
    %v5188 = vmul.f32 %v5187, %v5186
    %v5189 = vmul.f32 0.5, %v5188
    %v5190 = vsub.f32 1.5, %v5189
    %v5191 = vmul.f32 %v5186, %v5190
    %vm5192 = vweird.f32 %v5127
    %vm5193 = vweird.f32 %v5186
    %vm5194 = vmor %vm5192, %vm5193
    %v5195 = vsel %vm5194, %v5186, %v5191
    %v5196 = vrsqrt.pop %v5128
    %v5197 = vmul.f32 %v5196, %v5128
    %v5198 = vmul.f32 %v5197, %v5196
    %v5199 = vmul.f32 0.5, %v5198
    %v5200 = vsub.f32 1.5, %v5199
    %v5201 = vmul.f32 %v5196, %v5200
    %vm5202 = vweird.f32 %v5128
    %vm5203 = vweird.f32 %v5196
    %vm5204 = vmor %vm5202, %vm5203
    %v5205 = vsel %vm5204, %v5196, %v5201
    %v5206 = vrsqrt.pop %v5129
    %v5207 = vmul.f32 %v5206, %v5129
    %v5208 = vmul.f32 %v5207, %v5206
    %v5209 = vmul.f32 0.5, %v5208
    %v5210 = vsub.f32 1.5, %v5209
    %v5211 = vmul.f32 %v5206, %v5210
    %vm5212 = vweird.f32 %v5129
    %vm5213 = vweird.f32 %v5206
    %vm5214 = vmor %vm5212, %vm5213
    %v5215 = vsel %vm5214, %v5206, %v5211
    %v5216 = vrsqrt.pop %v5130
    %v5217 = vmul.f32 %v5216, %v5130
    %v5218 = vmul.f32 %v5217, %v5216
    %v5219 = vmul.f32 0.5, %v5218
    %v5220 = vsub.f32 1.5, %v5219
    %v5221 = vmul.f32 %v5216, %v5220
    %vm5222 = vweird.f32 %v5130
    %vm5223 = vweird.f32 %v5216
    %vm5224 = vmor %vm5222, %vm5223
    %v5225 = vsel %vm5224, %v5216, %v5221
    %v5226 = vrsqrt.pop %v5131
    %v5227 = vmul.f32 %v5226, %v5131
    %v5228 = vmul.f32 %v5227, %v5226
    %v5229 = vmul.f32 0.5, %v5228
    %v5230 = vsub.f32 1.5, %v5229
    %v5231 = vmul.f32 %v5226, %v5230
    %vm5232 = vweird.f32 %v5131
    %vm5233 = vweird.f32 %v5226
    %vm5234 = vmor %vm5232, %vm5233
    %v5235 = vsel %vm5234, %v5226, %v5231
    %v5236 = vrsqrt.pop %v5132
    %v5237 = vmul.f32 %v5236, %v5132
    %v5238 = vmul.f32 %v5237, %v5236
    %v5239 = vmul.f32 0.5, %v5238
    %v5240 = vsub.f32 1.5, %v5239
    %v5241 = vmul.f32 %v5236, %v5240
    %vm5242 = vweird.f32 %v5132
    %vm5243 = vweird.f32 %v5236
    %vm5244 = vmor %vm5242, %vm5243
    %v5245 = vsel %vm5244, %v5236, %v5241
    %v5246 = vrsqrt.pop %v5133
    %v5247 = vmul.f32 %v5246, %v5133
    %v5248 = vmul.f32 %v5247, %v5246
    %v5249 = vmul.f32 0.5, %v5248
    %v5250 = vsub.f32 1.5, %v5249
    %v5251 = vmul.f32 %v5246, %v5250
    %vm5252 = vweird.f32 %v5133
    %vm5253 = vweird.f32 %v5246
    %vm5254 = vmor %vm5252, %vm5253
    %v5255 = vsel %vm5254, %v5246, %v5251
    %v5256 = vrsqrt.pop %v5134
    %v5257 = vmul.f32 %v5256, %v5134
    %v5258 = vmul.f32 %v5257, %v5256
    %v5259 = vmul.f32 0.5, %v5258
    %v5260 = vsub.f32 1.5, %v5259
    %v5261 = vmul.f32 %v5256, %v5260
    %vm5262 = vweird.f32 %v5134
    %vm5263 = vweird.f32 %v5256
    %vm5264 = vmor %vm5262, %vm5263
    %v5265 = vsel %vm5264, %v5256, %v5261
    %v5266 = vrsqrt.pop %v5135
    %v5267 = vmul.f32 %v5266, %v5135
    %v5268 = vmul.f32 %v5267, %v5266
    %v5269 = vmul.f32 0.5, %v5268
    %v5270 = vsub.f32 1.5, %v5269
    %v5271 = vmul.f32 %v5266, %v5270
    %vm5272 = vweird.f32 %v5135
    %vm5273 = vweird.f32 %v5266
    %vm5274 = vmor %vm5272, %vm5273
    %v5275 = vsel %vm5274, %v5266, %v5271
    %v5276 = vrsqrt.pop %v5136
    %v5277 = vmul.f32 %v5276, %v5136
    %v5278 = vmul.f32 %v5277, %v5276
    %v5279 = vmul.f32 0.5, %v5278
    %v5280 = vsub.f32 1.5, %v5279
    %v5281 = vmul.f32 %v5276, %v5280
    %vm5282 = vweird.f32 %v5136
    %vm5283 = vweird.f32 %v5276
    %vm5284 = vmor %vm5282, %vm5283
    %v5285 = vsel %vm5284, %v5276, %v5281
    %v5286 = vrsqrt.pop %v5137
    %v5287 = vmul.f32 %v5286, %v5137
    %v5288 = vmul.f32 %v5287, %v5286
    %v5289 = vmul.f32 0.5, %v5288
    %v5290 = vsub.f32 1.5, %v5289
    %v5291 = vmul.f32 %v5286, %v5290
    %vm5292 = vweird.f32 %v5137
    %vm5293 = vweird.f32 %v5286
    %vm5294 = vmor %vm5292, %vm5293
    %v5295 = vsel %vm5294, %v5286, %v5291
    %v5296 = vrsqrt.pop %v5138
    %v5297 = vmul.f32 %v5296, %v5138
    %v5298 = vmul.f32 %v5297, %v5296
    %v5299 = vmul.f32 0.5, %v5298
    %v5300 = vsub.f32 1.5, %v5299
    %v5301 = vmul.f32 %v5296, %v5300
    %vm5302 = vweird.f32 %v5138
    %vm5303 = vweird.f32 %v5296
    %vm5304 = vmor %vm5302, %vm5303
    %v5305 = vsel %vm5304, %v5296, %v5301
    %v5306 = vrsqrt.pop %v5139
    %v5307 = vmul.f32 %v5306, %v5139
    %v5308 = vmul.f32 %v5307, %v5306
    %v5309 = vmul.f32 0.5, %v5308
    %v5310 = vsub.f32 1.5, %v5309
    %v5311 = vmul.f32 %v5306, %v5310
    %vm5312 = vweird.f32 %v5139
    %vm5313 = vweird.f32 %v5306
    %vm5314 = vmor %vm5312, %vm5313
    %v5315 = vsel %vm5314, %v5306, %v5311
    %v5316 = vrsqrt.pop %v5140
    %v5317 = vmul.f32 %v5316, %v5140
    %v5318 = vmul.f32 %v5317, %v5316
    %v5319 = vmul.f32 0.5, %v5318
    %v5320 = vsub.f32 1.5, %v5319
    %v5321 = vmul.f32 %v5316, %v5320
    %vm5322 = vweird.f32 %v5140
    %vm5323 = vweird.f32 %v5316
    %vm5324 = vmor %vm5322, %vm5323
    %v5325 = vsel %vm5324, %v5316, %v5321
    %v5326 = vrsqrt.pop %v5141
    %v5327 = vmul.f32 %v5326, %v5141
    %v5328 = vmul.f32 %v5327, %v5326
    %v5329 = vmul.f32 0.5, %v5328
    %v5330 = vsub.f32 1.5, %v5329
    %v5331 = vmul.f32 %v5326, %v5330
    %vm5332 = vweird.f32 %v5141
    %vm5333 = vweird.f32 %v5326
    %vm5334 = vmor %vm5332, %vm5333
    %v5335 = vsel %vm5334, %v5326, %v5331
    %v5336 = vrsqrt.pop %v5142
    %v5337 = vmul.f32 %v5336, %v5142
    %v5338 = vmul.f32 %v5337, %v5336
    %v5339 = vmul.f32 0.5, %v5338
    %v5340 = vsub.f32 1.5, %v5339
    %v5341 = vmul.f32 %v5336, %v5340
    %vm5342 = vweird.f32 %v5142
    %vm5343 = vweird.f32 %v5336
    %vm5344 = vmor %vm5342, %vm5343
    %v5345 = vsel %vm5344, %v5336, %v5341
    %v5346 = vrsqrt.pop %v5143
    %v5347 = vmul.f32 %v5346, %v5143
    %v5348 = vmul.f32 %v5347, %v5346
    %v5349 = vmul.f32 0.5, %v5348
    %v5350 = vsub.f32 1.5, %v5349
    %v5351 = vmul.f32 %v5346, %v5350
    %vm5352 = vweird.f32 %v5143
    %vm5353 = vweird.f32 %v5346
    %vm5354 = vmor %vm5352, %vm5353
    %v5355 = vsel %vm5354, %v5346, %v5351
    %v5356 = vrsqrt.pop %v5144
    %v5357 = vmul.f32 %v5356, %v5144
    %v5358 = vmul.f32 %v5357, %v5356
    %v5359 = vmul.f32 0.5, %v5358
    %v5360 = vsub.f32 1.5, %v5359
    %v5361 = vmul.f32 %v5356, %v5360
    %vm5362 = vweird.f32 %v5144
    %vm5363 = vweird.f32 %v5356
    %vm5364 = vmor %vm5362, %vm5363
    %v5365 = vsel %vm5364, %v5356, %v5361
    %v5366 = vrsqrt.pop %v5145
    %v5367 = vmul.f32 %v5366, %v5145
    %v5368 = vmul.f32 %v5367, %v5366
    %v5369 = vmul.f32 0.5, %v5368
    %v5370 = vsub.f32 1.5, %v5369
    %v5371 = vmul.f32 %v5366, %v5370
    %vm5372 = vweird.f32 %v5145
    %vm5373 = vweird.f32 %v5366
    %vm5374 = vmor %vm5372, %vm5373
    %v5375 = vsel %vm5374, %v5366, %v5371
    %v5376 = vrsqrt.pop %v5146
    %v5377 = vmul.f32 %v5376, %v5146
    %v5378 = vmul.f32 %v5377, %v5376
    %v5379 = vmul.f32 0.5, %v5378
    %v5380 = vsub.f32 1.5, %v5379
    %v5381 = vmul.f32 %v5376, %v5380
    %vm5382 = vweird.f32 %v5146
    %vm5383 = vweird.f32 %v5376
    %vm5384 = vmor %vm5382, %vm5383
    %v5385 = vsel %vm5384, %v5376, %v5381
    %v5386 = vrsqrt.pop %v5147
    %v5387 = vmul.f32 %v5386, %v5147
    %v5388 = vmul.f32 %v5387, %v5386
    %v5389 = vmul.f32 0.5, %v5388
    %v5390 = vsub.f32 1.5, %v5389
    %v5391 = vmul.f32 %v5386, %v5390
    %vm5392 = vweird.f32 %v5147
    %vm5393 = vweird.f32 %v5386
    %vm5394 = vmor %vm5392, %vm5393
    %v5395 = vsel %vm5394, %v5386, %v5391
    %v5396 = vrsqrt.pop %v5148
    %v5397 = vmul.f32 %v5396, %v5148
    %v5398 = vmul.f32 %v5397, %v5396
    %v5399 = vmul.f32 0.5, %v5398
    %v5400 = vsub.f32 1.5, %v5399
    %v5401 = vmul.f32 %v5396, %v5400
    %vm5402 = vweird.f32 %v5148
    %vm5403 = vweird.f32 %v5396
    %vm5404 = vmor %vm5402, %vm5403
    %v5405 = vsel %vm5404, %v5396, %v5401
    %v5406 = vrsqrt.pop %v5149
    %v5407 = vmul.f32 %v5406, %v5149
    %v5408 = vmul.f32 %v5407, %v5406
    %v5409 = vmul.f32 0.5, %v5408
    %v5410 = vsub.f32 1.5, %v5409
    %v5411 = vmul.f32 %v5406, %v5410
    %vm5412 = vweird.f32 %v5149
    %vm5413 = vweird.f32 %v5406
    %vm5414 = vmor %vm5412, %vm5413
    %v5415 = vsel %vm5414, %v5406, %v5411
    %v5416 = vrsqrt.pop %v5150
    %v5417 = vmul.f32 %v5416, %v5150
    %v5418 = vmul.f32 %v5417, %v5416
    %v5419 = vmul.f32 0.5, %v5418
    %v5420 = vsub.f32 1.5, %v5419
    %v5421 = vmul.f32 %v5416, %v5420
    %vm5422 = vweird.f32 %v5150
    %vm5423 = vweird.f32 %v5416
    %vm5424 = vmor %vm5422, %vm5423
    %v5425 = vsel %vm5424, %v5416, %v5421
    %v5426 = vrsqrt.pop %v5151
    %v5427 = vmul.f32 %v5426, %v5151
    %v5428 = vmul.f32 %v5427, %v5426
    %v5429 = vmul.f32 0.5, %v5428
    %v5430 = vsub.f32 1.5, %v5429
    %v5431 = vmul.f32 %v5426, %v5430
    %vm5432 = vweird.f32 %v5151
    %vm5433 = vweird.f32 %v5426
    %vm5434 = vmor %vm5432, %vm5433
    %v5435 = vsel %vm5434, %v5426, %v5431
    %v5436 = vrsqrt.pop %v5152
    %v5437 = vmul.f32 %v5436, %v5152
    %v5438 = vmul.f32 %v5437, %v5436
    %v5439 = vmul.f32 0.5, %v5438
    %v5440 = vsub.f32 1.5, %v5439
    %v5441 = vmul.f32 %v5436, %v5440
    %vm5442 = vweird.f32 %v5152
    %vm5443 = vweird.f32 %v5436
    %vm5444 = vmor %vm5442, %vm5443
    %v5445 = vsel %vm5444, %v5436, %v5441
    %v5446 = vrsqrt.pop %v5153
    %v5447 = vmul.f32 %v5446, %v5153
    %v5448 = vmul.f32 %v5447, %v5446
    %v5449 = vmul.f32 0.5, %v5448
    %v5450 = vsub.f32 1.5, %v5449
    %v5451 = vmul.f32 %v5446, %v5450
    %vm5452 = vweird.f32 %v5153
    %vm5453 = vweird.f32 %v5446
    %vm5454 = vmor %vm5452, %vm5453
    %v5455 = vsel %vm5454, %v5446, %v5451
    %v5456 = vrsqrt.pop %v5154
    %v5457 = vmul.f32 %v5456, %v5154
    %v5458 = vmul.f32 %v5457, %v5456
    %v5459 = vmul.f32 0.5, %v5458
    %v5460 = vsub.f32 1.5, %v5459
    %v5461 = vmul.f32 %v5456, %v5460
    %vm5462 = vweird.f32 %v5154
    %vm5463 = vweird.f32 %v5456
    %vm5464 = vmor %vm5462, %vm5463
    %v5465 = vsel %vm5464, %v5456, %v5461
    %v5466 = vrsqrt.pop %v5155
    %v5467 = vmul.f32 %v5466, %v5155
    %v5468 = vmul.f32 %v5467, %v5466
    %v5469 = vmul.f32 0.5, %v5468
    %v5470 = vsub.f32 1.5, %v5469
    %v5471 = vmul.f32 %v5466, %v5470
    %vm5472 = vweird.f32 %v5155
    %vm5473 = vweird.f32 %v5466
    %vm5474 = vmor %vm5472, %vm5473
    %v5475 = vsel %vm5474, %v5466, %v5471
    %v5476 = vmul.f32 %v239, %v5165
    %v5477 = vmul.f32 %v242, %v5175
    %v5478 = vmul.f32 %v245, %v5185
    %v5479 = vmul.f32 %v248, %v5195
    %v5480 = vmul.f32 %v251, %v5205
    %v5481 = vmul.f32 %v254, %v5215
    %v5482 = vmul.f32 %v257, %v5225
    %v5483 = vmul.f32 %v260, %v5235
    %v5484 = vmul.f32 %v263, %v5245
    %v5485 = vmul.f32 %v266, %v5255
    %v5486 = vmul.f32 %v269, %v5265
    %v5487 = vmul.f32 %v272, %v5275
    %v5488 = vmul.f32 %v275, %v5285
    %v5489 = vmul.f32 %v278, %v5295
    %v5490 = vmul.f32 %v281, %v5305
    %v5491 = vmul.f32 %v284, %v5315
    %v5492 = vmul.f32 %v287, %v5325
    %v5493 = vmul.f32 %v290, %v5335
    %v5494 = vmul.f32 %v293, %v5345
    %v5495 = vmul.f32 %v296, %v5355
    %v5496 = vmul.f32 %v299, %v5365
    %v5497 = vmul.f32 %v302, %v5375
    %v5498 = vmul.f32 %v305, %v5385
    %v5499 = vmul.f32 %v308, %v5395
    %v5500 = vmul.f32 %v311, %v5405
    %v5501 = vmul.f32 %v314, %v5415
    %v5502 = vmul.f32 %v317, %v5425
    %v5503 = vmul.f32 %v320, %v5435
    %v5504 = vmul.f32 %v323, %v5445
    %v5505 = vmul.f32 %v326, %v5455
    %v5506 = vmul.f32 %v329, %v5465
    %v5507 = vmul.f32 %v332, %v5475
    %s5508 = sld [smem:[#allocation2]]
    %v5509 = vstv %s5508
    %v5510 = vmul.f32 %v5476, %v5509
    %v5511 = vmul.f32 %v5477, %v5509
    %v5512 = vmul.f32 %v5478, %v5509
    %v5513 = vmul.f32 %v5479, %v5509
    %v5514 = vmul.f32 %v5480, %v5509
    %v5515 = vmul.f32 %v5481, %v5509
    %v5516 = vmul.f32 %v5482, %v5509
    %v5517 = vmul.f32 %v5483, %v5509
    %v5518 = vmul.f32 %v5484, %v5509
    %v5519 = vmul.f32 %v5485, %v5509
    %v5520 = vmul.f32 %v5486, %v5509
    %v5521 = vmul.f32 %v5487, %v5509
    %v5522 = vmul.f32 %v5488, %v5509
    %v5523 = vmul.f32 %v5489, %v5509
    %v5524 = vmul.f32 %v5490, %v5509
    %v5525 = vmul.f32 %v5491, %v5509
    %v5526 = vmul.f32 %v5492, %v5509
    %v5527 = vmul.f32 %v5493, %v5509
    %v5528 = vmul.f32 %v5494, %v5509
    %v5529 = vmul.f32 %v5495, %v5509
    %v5530 = vmul.f32 %v5496, %v5509
    %v5531 = vmul.f32 %v5497, %v5509
    %v5532 = vmul.f32 %v5498, %v5509
    %v5533 = vmul.f32 %v5499, %v5509
    %v5534 = vmul.f32 %v5500, %v5509
    %v5535 = vmul.f32 %v5501, %v5509
    %v5536 = vmul.f32 %v5502, %v5509
    %v5537 = vmul.f32 %v5503, %v5509
    %v5538 = vmul.f32 %v5504, %v5509
    %v5539 = vmul.f32 %v5505, %v5509
    %v5540 = vmul.f32 %v5506, %v5509
    %v5541 = vmul.f32 %v5507, %v5509
    %5542 = vst.msk [vmem:[%s21] sm:$0xff] %vm4221, %v5510
    %5543 = vst.msk [vmem:[%s21 + $0x18] sm:$0xff] %vm4221, %v5511
    %5544 = vst.msk [vmem:[%s21 + $0x30] sm:$0xff] %vm4221, %v5512
    %5545 = vst.msk [vmem:[%s21 + $0x48] sm:$0xff] %vm4221, %v5513
    %5546 = vst.msk [vmem:[%s21 + $0x60] sm:$0xff] %vm4221, %v5514
    %5547 = vst.msk [vmem:[%s21 + $0x78] sm:$0xff] %vm4221, %v5515
    %5548 = vst.msk [vmem:[%s21 + $0x90] sm:$0xff] %vm4221, %v5516
    %5549 = vst.msk [vmem:[%s21 + $0xa8] sm:$0xff] %vm4221, %v5517
    %5550 = vst.msk [vmem:[%s21 + $0xc0] sm:$0xff] %vm4221, %v5518
    %5551 = vst.msk [vmem:[%s21 + $0xd8] sm:$0xff] %vm4221, %v5519
    %5552 = vst.msk [vmem:[%s21 + $0xf0] sm:$0xff] %vm4221, %v5520
    %5553 = vst.msk [vmem:[%s21 + $0x108] sm:$0xff] %vm4221, %v5521
    %5554 = vst.msk [vmem:[%s21 + $0x120] sm:$0xff] %vm4221, %v5522
    %5555 = vst.msk [vmem:[%s21 + $0x138] sm:$0xff] %vm4221, %v5523
    %5556 = vst.msk [vmem:[%s21 + $0x150] sm:$0xff] %vm4221, %v5524
    %5557 = vst.msk [vmem:[%s21 + $0x168] sm:$0xff] %vm4221, %v5525
    %5558 = vst.msk [vmem:[%s21 + $0x180] sm:$0xff] %vm4221, %v5526
    %5559 = vst.msk [vmem:[%s21 + $0x198] sm:$0xff] %vm4221, %v5527
    %5560 = vst.msk [vmem:[%s21 + $0x1b0] sm:$0xff] %vm4221, %v5528
    %5561 = vst.msk [vmem:[%s21 + $0x1c8] sm:$0xff] %vm4221, %v5529
    %5562 = vst.msk [vmem:[%s21 + $0x1e0] sm:$0xff] %vm4221, %v5530
    %5563 = vst.msk [vmem:[%s21 + $0x1f8] sm:$0xff] %vm4221, %v5531
    %5564 = vst.msk [vmem:[%s21 + $0x210] sm:$0xff] %vm4221, %v5532
    %5565 = vst.msk [vmem:[%s21 + $0x228] sm:$0xff] %vm4221, %v5533
    %5566 = vst.msk [vmem:[%s21 + $0x240] sm:$0xff] %vm4221, %v5534
    %5567 = vst.msk [vmem:[%s21 + $0x258] sm:$0xff] %vm4221, %v5535
    %5568 = vst.msk [vmem:[%s21 + $0x270] sm:$0xff] %vm4221, %v5536
    %5569 = vst.msk [vmem:[%s21 + $0x288] sm:$0xff] %vm4221, %v5537
    %5570 = vst.msk [vmem:[%s21 + $0x2a0] sm:$0xff] %vm4221, %v5538
    %5571 = vst.msk [vmem:[%s21 + $0x2b8] sm:$0xff] %vm4221, %v5539
    %5572 = vst.msk [vmem:[%s21 + $0x2d0] sm:$0xff] %vm4221, %v5540
    %5573 = vst.msk [vmem:[%s21 + $0x2e8] sm:$0xff] %vm4221, %v5541
    %v5574 = vmul.f32 %v3010, %v3010
    %v5575 = vmul.f32 %v3013, %v3013
    %v5576 = vmul.f32 %v3016, %v3016
    %v5577 = vmul.f32 %v3019, %v3019
    %v5578 = vmul.f32 %v3022, %v3022
    %v5579 = vmul.f32 %v3025, %v3025
    %v5580 = vmul.f32 %v3028, %v3028
    %v5581 = vmul.f32 %v3031, %v3031
    %v5582 = vmul.f32 %v3034, %v3034
    %v5583 = vmul.f32 %v3037, %v3037
    %v5584 = vmul.f32 %v3040, %v3040
    %v5585 = vmul.f32 %v3043, %v3043
    %v5586 = vmul.f32 %v3046, %v3046
    %v5587 = vmul.f32 %v3049, %v3049
    %v5588 = vmul.f32 %v3052, %v3052
    %v5589 = vmul.f32 %v3055, %v3055
    %v5590 = vmul.f32 %v3058, %v3058
    %v5591 = vmul.f32 %v3061, %v3061
    %v5592 = vmul.f32 %v3064, %v3064
    %v5593 = vmul.f32 %v3067, %v3067
    %v5594 = vmul.f32 %v3070, %v3070
    %v5595 = vmul.f32 %v3073, %v3073
    %v5596 = vmul.f32 %v3076, %v3076
    %v5597 = vmul.f32 %v3079, %v3079
    %v5598 = vmul.f32 %v3082, %v3082
    %v5599 = vmul.f32 %v3085, %v3085
    %v5600 = vmul.f32 %v3088, %v3088
    %v5601 = vmul.f32 %v3091, %v3091
    %v5602 = vmul.f32 %v3094, %v3094
    %v5603 = vmul.f32 %v3097, %v3097
    %v5604 = vmul.f32 %v3100, %v3100
    %v5605 = vmul.f32 %v3103, %v3103
    %v5606 = vsel %vm4221, %v5574, 0.0
    %5607 = vadd.xlane.f32.xlu0 %v5606
    %v5608 = vpop.xlane.xlu0 %5607
    %v5609 = vsel %vm4221, %v5575, 0.0
    %5610 = vadd.xlane.f32.xlu0 %v5609
    %v5611 = vpop.xlane.xlu0 %5610
    %v5612 = vsel %vm4221, %v5576, 0.0
    %5613 = vadd.xlane.f32.xlu0 %v5612
    %v5614 = vpop.xlane.xlu0 %5613
    %v5615 = vsel %vm4221, %v5577, 0.0
    %5616 = vadd.xlane.f32.xlu0 %v5615
    %v5617 = vpop.xlane.xlu0 %5616
    %v5618 = vsel %vm4221, %v5578, 0.0
    %5619 = vadd.xlane.f32.xlu0 %v5618
    %v5620 = vpop.xlane.xlu0 %5619
    %v5621 = vsel %vm4221, %v5579, 0.0
    %5622 = vadd.xlane.f32.xlu0 %v5621
    %v5623 = vpop.xlane.xlu0 %5622
    %v5624 = vsel %vm4221, %v5580, 0.0
    %5625 = vadd.xlane.f32.xlu0 %v5624
    %v5626 = vpop.xlane.xlu0 %5625
    %v5627 = vsel %vm4221, %v5581, 0.0
    %5628 = vadd.xlane.f32.xlu0 %v5627
    %v5629 = vpop.xlane.xlu0 %5628
    %v5630 = vsel %vm4221, %v5582, 0.0
    %5631 = vadd.xlane.f32.xlu0 %v5630
    %v5632 = vpop.xlane.xlu0 %5631
    %v5633 = vsel %vm4221, %v5583, 0.0
    %5634 = vadd.xlane.f32.xlu0 %v5633
    %v5635 = vpop.xlane.xlu0 %5634
    %v5636 = vsel %vm4221, %v5584, 0.0
    %5637 = vadd.xlane.f32.xlu0 %v5636
    %v5638 = vpop.xlane.xlu0 %5637
    %v5639 = vsel %vm4221, %v5585, 0.0
    %5640 = vadd.xlane.f32.xlu0 %v5639
    %v5641 = vpop.xlane.xlu0 %5640
    %v5642 = vsel %vm4221, %v5586, 0.0
    %5643 = vadd.xlane.f32.xlu0 %v5642
    %v5644 = vpop.xlane.xlu0 %5643
    %v5645 = vsel %vm4221, %v5587, 0.0
    %5646 = vadd.xlane.f32.xlu0 %v5645
    %v5647 = vpop.xlane.xlu0 %5646
    %v5648 = vsel %vm4221, %v5588, 0.0
    %5649 = vadd.xlane.f32.xlu0 %v5648
    %v5650 = vpop.xlane.xlu0 %5649
    %v5651 = vsel %vm4221, %v5589, 0.0
    %5652 = vadd.xlane.f32.xlu0 %v5651
    %v5653 = vpop.xlane.xlu0 %5652
    %v5654 = vsel %vm4221, %v5590, 0.0
    %5655 = vadd.xlane.f32.xlu0 %v5654
    %v5656 = vpop.xlane.xlu0 %5655
    %v5657 = vsel %vm4221, %v5591, 0.0
    %5658 = vadd.xlane.f32.xlu0 %v5657
    %v5659 = vpop.xlane.xlu0 %5658
    %v5660 = vsel %vm4221, %v5592, 0.0
    %5661 = vadd.xlane.f32.xlu0 %v5660
    %v5662 = vpop.xlane.xlu0 %5661
    %v5663 = vsel %vm4221, %v5593, 0.0
    %5664 = vadd.xlane.f32.xlu0 %v5663
    %v5665 = vpop.xlane.xlu0 %5664
    %v5666 = vsel %vm4221, %v5594, 0.0
    %5667 = vadd.xlane.f32.xlu0 %v5666
    %v5668 = vpop.xlane.xlu0 %5667
    %v5669 = vsel %vm4221, %v5595, 0.0
    %5670 = vadd.xlane.f32.xlu0 %v5669
    %v5671 = vpop.xlane.xlu0 %5670
    %v5672 = vsel %vm4221, %v5596, 0.0
    %5673 = vadd.xlane.f32.xlu0 %v5672
    %v5674 = vpop.xlane.xlu0 %5673
    %v5675 = vsel %vm4221, %v5597, 0.0
    %5676 = vadd.xlane.f32.xlu0 %v5675
    %v5677 = vpop.xlane.xlu0 %5676
    %v5678 = vsel %vm4221, %v5598, 0.0
    %5679 = vadd.xlane.f32.xlu0 %v5678
    %v5680 = vpop.xlane.xlu0 %5679
    %v5681 = vsel %vm4221, %v5599, 0.0
    %5682 = vadd.xlane.f32.xlu0 %v5681
    %v5683 = vpop.xlane.xlu0 %5682
    %v5684 = vsel %vm4221, %v5600, 0.0
    %5685 = vadd.xlane.f32.xlu0 %v5684
    %v5686 = vpop.xlane.xlu0 %5685
    %v5687 = vsel %vm4221, %v5601, 0.0
    %5688 = vadd.xlane.f32.xlu0 %v5687
    %v5689 = vpop.xlane.xlu0 %5688
    %v5690 = vsel %vm4221, %v5602, 0.0
    %5691 = vadd.xlane.f32.xlu0 %v5690
    %v5692 = vpop.xlane.xlu0 %5691
    %v5693 = vsel %vm4221, %v5603, 0.0
    %5694 = vadd.xlane.f32.xlu0 %v5693
    %v5695 = vpop.xlane.xlu0 %5694
    %v5696 = vsel %vm4221, %v5604, 0.0
    %5697 = vadd.xlane.f32.xlu0 %v5696
    %v5698 = vpop.xlane.xlu0 %5697
    %v5699 = vsel %vm4221, %v5605, 0.0
    %5700 = vadd.xlane.f32.xlu0 %v5699
    %v5701 = vpop.xlane.xlu0 %5700
    %v5702 = vmax.f32 %v5608, 1e-24
    %v5703 = vmax.f32 %v5611, 1e-24
    %v5704 = vmax.f32 %v5614, 1e-24
    %v5705 = vmax.f32 %v5617, 1e-24
    %v5706 = vmax.f32 %v5620, 1e-24
    %v5707 = vmax.f32 %v5623, 1e-24
    %v5708 = vmax.f32 %v5626, 1e-24
    %v5709 = vmax.f32 %v5629, 1e-24
    %v5710 = vmax.f32 %v5632, 1e-24
    %v5711 = vmax.f32 %v5635, 1e-24
    %v5712 = vmax.f32 %v5638, 1e-24
    %v5713 = vmax.f32 %v5641, 1e-24
    %v5714 = vmax.f32 %v5644, 1e-24
    %v5715 = vmax.f32 %v5647, 1e-24
    %v5716 = vmax.f32 %v5650, 1e-24
    %v5717 = vmax.f32 %v5653, 1e-24
    %v5718 = vmax.f32 %v5656, 1e-24
    %v5719 = vmax.f32 %v5659, 1e-24
    %v5720 = vmax.f32 %v5662, 1e-24
    %v5721 = vmax.f32 %v5665, 1e-24
    %v5722 = vmax.f32 %v5668, 1e-24
    %v5723 = vmax.f32 %v5671, 1e-24
    %v5724 = vmax.f32 %v5674, 1e-24
    %v5725 = vmax.f32 %v5677, 1e-24
    %v5726 = vmax.f32 %v5680, 1e-24
    %v5727 = vmax.f32 %v5683, 1e-24
    %v5728 = vmax.f32 %v5686, 1e-24
    %v5729 = vmax.f32 %v5689, 1e-24
    %v5730 = vmax.f32 %v5692, 1e-24
    %v5731 = vmax.f32 %v5695, 1e-24
    %v5732 = vmax.f32 %v5698, 1e-24
    %v5733 = vmax.f32 %v5701, 1e-24
    %v5734 = vrsqrt.pop %v5702
    %v5735 = vmul.f32 %v5734, %v5702
    %v5736 = vmul.f32 %v5735, %v5734
    %v5737 = vmul.f32 0.5, %v5736
    %v5738 = vsub.f32 1.5, %v5737
    %v5739 = vmul.f32 %v5734, %v5738
    %vm5740 = vweird.f32 %v5702
    %vm5741 = vweird.f32 %v5734
    %vm5742 = vmor %vm5740, %vm5741
    %v5743 = vsel %vm5742, %v5734, %v5739
    %v5744 = vrsqrt.pop %v5703
    %v5745 = vmul.f32 %v5744, %v5703
    %v5746 = vmul.f32 %v5745, %v5744
    %v5747 = vmul.f32 0.5, %v5746
    %v5748 = vsub.f32 1.5, %v5747
    %v5749 = vmul.f32 %v5744, %v5748
    %vm5750 = vweird.f32 %v5703
    %vm5751 = vweird.f32 %v5744
    %vm5752 = vmor %vm5750, %vm5751
    %v5753 = vsel %vm5752, %v5744, %v5749
    %v5754 = vrsqrt.pop %v5704
    %v5755 = vmul.f32 %v5754, %v5704
    %v5756 = vmul.f32 %v5755, %v5754
    %v5757 = vmul.f32 0.5, %v5756
    %v5758 = vsub.f32 1.5, %v5757
    %v5759 = vmul.f32 %v5754, %v5758
    %vm5760 = vweird.f32 %v5704
    %vm5761 = vweird.f32 %v5754
    %vm5762 = vmor %vm5760, %vm5761
    %v5763 = vsel %vm5762, %v5754, %v5759
    %v5764 = vrsqrt.pop %v5705
    %v5765 = vmul.f32 %v5764, %v5705
    %v5766 = vmul.f32 %v5765, %v5764
    %v5767 = vmul.f32 0.5, %v5766
    %v5768 = vsub.f32 1.5, %v5767
    %v5769 = vmul.f32 %v5764, %v5768
    %vm5770 = vweird.f32 %v5705
    %vm5771 = vweird.f32 %v5764
    %vm5772 = vmor %vm5770, %vm5771
    %v5773 = vsel %vm5772, %v5764, %v5769
    %v5774 = vrsqrt.pop %v5706
    %v5775 = vmul.f32 %v5774, %v5706
    %v5776 = vmul.f32 %v5775, %v5774
    %v5777 = vmul.f32 0.5, %v5776
    %v5778 = vsub.f32 1.5, %v5777
    %v5779 = vmul.f32 %v5774, %v5778
    %vm5780 = vweird.f32 %v5706
    %vm5781 = vweird.f32 %v5774
    %vm5782 = vmor %vm5780, %vm5781
    %v5783 = vsel %vm5782, %v5774, %v5779
    %v5784 = vrsqrt.pop %v5707
    %v5785 = vmul.f32 %v5784, %v5707
    %v5786 = vmul.f32 %v5785, %v5784
    %v5787 = vmul.f32 0.5, %v5786
    %v5788 = vsub.f32 1.5, %v5787
    %v5789 = vmul.f32 %v5784, %v5788
    %vm5790 = vweird.f32 %v5707
    %vm5791 = vweird.f32 %v5784
    %vm5792 = vmor %vm5790, %vm5791
    %v5793 = vsel %vm5792, %v5784, %v5789
    %v5794 = vrsqrt.pop %v5708
    %v5795 = vmul.f32 %v5794, %v5708
    %v5796 = vmul.f32 %v5795, %v5794
    %v5797 = vmul.f32 0.5, %v5796
    %v5798 = vsub.f32 1.5, %v5797
    %v5799 = vmul.f32 %v5794, %v5798
    %vm5800 = vweird.f32 %v5708
    %vm5801 = vweird.f32 %v5794
    %vm5802 = vmor %vm5800, %vm5801
    %v5803 = vsel %vm5802, %v5794, %v5799
    %v5804 = vrsqrt.pop %v5709
    %v5805 = vmul.f32 %v5804, %v5709
    %v5806 = vmul.f32 %v5805, %v5804
    %v5807 = vmul.f32 0.5, %v5806
    %v5808 = vsub.f32 1.5, %v5807
    %v5809 = vmul.f32 %v5804, %v5808
    %vm5810 = vweird.f32 %v5709
    %vm5811 = vweird.f32 %v5804
    %vm5812 = vmor %vm5810, %vm5811
    %v5813 = vsel %vm5812, %v5804, %v5809
    %v5814 = vrsqrt.pop %v5710
    %v5815 = vmul.f32 %v5814, %v5710
    %v5816 = vmul.f32 %v5815, %v5814
    %v5817 = vmul.f32 0.5, %v5816
    %v5818 = vsub.f32 1.5, %v5817
    %v5819 = vmul.f32 %v5814, %v5818
    %vm5820 = vweird.f32 %v5710
    %vm5821 = vweird.f32 %v5814
    %vm5822 = vmor %vm5820, %vm5821
    %v5823 = vsel %vm5822, %v5814, %v5819
    %v5824 = vrsqrt.pop %v5711
    %v5825 = vmul.f32 %v5824, %v5711
    %v5826 = vmul.f32 %v5825, %v5824
    %v5827 = vmul.f32 0.5, %v5826
    %v5828 = vsub.f32 1.5, %v5827
    %v5829 = vmul.f32 %v5824, %v5828
    %vm5830 = vweird.f32 %v5711
    %vm5831 = vweird.f32 %v5824
    %vm5832 = vmor %vm5830, %vm5831
    %v5833 = vsel %vm5832, %v5824, %v5829
    %v5834 = vrsqrt.pop %v5712
    %v5835 = vmul.f32 %v5834, %v5712
    %v5836 = vmul.f32 %v5835, %v5834
    %v5837 = vmul.f32 0.5, %v5836
    %v5838 = vsub.f32 1.5, %v5837
    %v5839 = vmul.f32 %v5834, %v5838
    %vm5840 = vweird.f32 %v5712
    %vm5841 = vweird.f32 %v5834
    %vm5842 = vmor %vm5840, %vm5841
    %v5843 = vsel %vm5842, %v5834, %v5839
    %v5844 = vrsqrt.pop %v5713
    %v5845 = vmul.f32 %v5844, %v5713
    %v5846 = vmul.f32 %v5845, %v5844
    %v5847 = vmul.f32 0.5, %v5846
    %v5848 = vsub.f32 1.5, %v5847
    %v5849 = vmul.f32 %v5844, %v5848
    %vm5850 = vweird.f32 %v5713
    %vm5851 = vweird.f32 %v5844
    %vm5852 = vmor %vm5850, %vm5851
    %v5853 = vsel %vm5852, %v5844, %v5849
    %v5854 = vrsqrt.pop %v5714
    %v5855 = vmul.f32 %v5854, %v5714
    %v5856 = vmul.f32 %v5855, %v5854
    %v5857 = vmul.f32 0.5, %v5856
    %v5858 = vsub.f32 1.5, %v5857
    %v5859 = vmul.f32 %v5854, %v5858
    %vm5860 = vweird.f32 %v5714
    %vm5861 = vweird.f32 %v5854
    %vm5862 = vmor %vm5860, %vm5861
    %v5863 = vsel %vm5862, %v5854, %v5859
    %v5864 = vrsqrt.pop %v5715
    %v5865 = vmul.f32 %v5864, %v5715
    %v5866 = vmul.f32 %v5865, %v5864
    %v5867 = vmul.f32 0.5, %v5866
    %v5868 = vsub.f32 1.5, %v5867
    %v5869 = vmul.f32 %v5864, %v5868
    %vm5870 = vweird.f32 %v5715
    %vm5871 = vweird.f32 %v5864
    %vm5872 = vmor %vm5870, %vm5871
    %v5873 = vsel %vm5872, %v5864, %v5869
    %v5874 = vrsqrt.pop %v5716
    %v5875 = vmul.f32 %v5874, %v5716
    %v5876 = vmul.f32 %v5875, %v5874
    %v5877 = vmul.f32 0.5, %v5876
    %v5878 = vsub.f32 1.5, %v5877
    %v5879 = vmul.f32 %v5874, %v5878
    %vm5880 = vweird.f32 %v5716
    %vm5881 = vweird.f32 %v5874
    %vm5882 = vmor %vm5880, %vm5881
    %v5883 = vsel %vm5882, %v5874, %v5879
    %v5884 = vrsqrt.pop %v5717
    %v5885 = vmul.f32 %v5884, %v5717
    %v5886 = vmul.f32 %v5885, %v5884
    %v5887 = vmul.f32 0.5, %v5886
    %v5888 = vsub.f32 1.5, %v5887
    %v5889 = vmul.f32 %v5884, %v5888
    %vm5890 = vweird.f32 %v5717
    %vm5891 = vweird.f32 %v5884
    %vm5892 = vmor %vm5890, %vm5891
    %v5893 = vsel %vm5892, %v5884, %v5889
    %v5894 = vrsqrt.pop %v5718
    %v5895 = vmul.f32 %v5894, %v5718
    %v5896 = vmul.f32 %v5895, %v5894
    %v5897 = vmul.f32 0.5, %v5896
    %v5898 = vsub.f32 1.5, %v5897
    %v5899 = vmul.f32 %v5894, %v5898
    %vm5900 = vweird.f32 %v5718
    %vm5901 = vweird.f32 %v5894
    %vm5902 = vmor %vm5900, %vm5901
    %v5903 = vsel %vm5902, %v5894, %v5899
    %v5904 = vrsqrt.pop %v5719
    %v5905 = vmul.f32 %v5904, %v5719
    %v5906 = vmul.f32 %v5905, %v5904
    %v5907 = vmul.f32 0.5, %v5906
    %v5908 = vsub.f32 1.5, %v5907
    %v5909 = vmul.f32 %v5904, %v5908
    %vm5910 = vweird.f32 %v5719
    %vm5911 = vweird.f32 %v5904
    %vm5912 = vmor %vm5910, %vm5911
    %v5913 = vsel %vm5912, %v5904, %v5909
    %v5914 = vrsqrt.pop %v5720
    %v5915 = vmul.f32 %v5914, %v5720
    %v5916 = vmul.f32 %v5915, %v5914
    %v5917 = vmul.f32 0.5, %v5916
    %v5918 = vsub.f32 1.5, %v5917
    %v5919 = vmul.f32 %v5914, %v5918
    %vm5920 = vweird.f32 %v5720
    %vm5921 = vweird.f32 %v5914
    %vm5922 = vmor %vm5920, %vm5921
    %v5923 = vsel %vm5922, %v5914, %v5919
    %v5924 = vrsqrt.pop %v5721
    %v5925 = vmul.f32 %v5924, %v5721
    %v5926 = vmul.f32 %v5925, %v5924
    %v5927 = vmul.f32 0.5, %v5926
    %v5928 = vsub.f32 1.5, %v5927
    %v5929 = vmul.f32 %v5924, %v5928
    %vm5930 = vweird.f32 %v5721
    %vm5931 = vweird.f32 %v5924
    %vm5932 = vmor %vm5930, %vm5931
    %v5933 = vsel %vm5932, %v5924, %v5929
    %v5934 = vrsqrt.pop %v5722
    %v5935 = vmul.f32 %v5934, %v5722
    %v5936 = vmul.f32 %v5935, %v5934
    %v5937 = vmul.f32 0.5, %v5936
    %v5938 = vsub.f32 1.5, %v5937
    %v5939 = vmul.f32 %v5934, %v5938
    %vm5940 = vweird.f32 %v5722
    %vm5941 = vweird.f32 %v5934
    %vm5942 = vmor %vm5940, %vm5941
    %v5943 = vsel %vm5942, %v5934, %v5939
    %v5944 = vrsqrt.pop %v5723
    %v5945 = vmul.f32 %v5944, %v5723
    %v5946 = vmul.f32 %v5945, %v5944
    %v5947 = vmul.f32 0.5, %v5946
    %v5948 = vsub.f32 1.5, %v5947
    %v5949 = vmul.f32 %v5944, %v5948
    %vm5950 = vweird.f32 %v5723
    %vm5951 = vweird.f32 %v5944
    %vm5952 = vmor %vm5950, %vm5951
    %v5953 = vsel %vm5952, %v5944, %v5949
    %v5954 = vrsqrt.pop %v5724
    %v5955 = vmul.f32 %v5954, %v5724
    %v5956 = vmul.f32 %v5955, %v5954
    %v5957 = vmul.f32 0.5, %v5956
    %v5958 = vsub.f32 1.5, %v5957
    %v5959 = vmul.f32 %v5954, %v5958
    %vm5960 = vweird.f32 %v5724
    %vm5961 = vweird.f32 %v5954
    %vm5962 = vmor %vm5960, %vm5961
    %v5963 = vsel %vm5962, %v5954, %v5959
    %v5964 = vrsqrt.pop %v5725
    %v5965 = vmul.f32 %v5964, %v5725
    %v5966 = vmul.f32 %v5965, %v5964
    %v5967 = vmul.f32 0.5, %v5966
    %v5968 = vsub.f32 1.5, %v5967
    %v5969 = vmul.f32 %v5964, %v5968
    %vm5970 = vweird.f32 %v5725
    %vm5971 = vweird.f32 %v5964
    %vm5972 = vmor %vm5970, %vm5971
    %v5973 = vsel %vm5972, %v5964, %v5969
    %v5974 = vrsqrt.pop %v5726
    %v5975 = vmul.f32 %v5974, %v5726
    %v5976 = vmul.f32 %v5975, %v5974
    %v5977 = vmul.f32 0.5, %v5976
    %v5978 = vsub.f32 1.5, %v5977
    %v5979 = vmul.f32 %v5974, %v5978
    %vm5980 = vweird.f32 %v5726
    %vm5981 = vweird.f32 %v5974
    %vm5982 = vmor %vm5980, %vm5981
    %v5983 = vsel %vm5982, %v5974, %v5979
    %v5984 = vrsqrt.pop %v5727
    %v5985 = vmul.f32 %v5984, %v5727
    %v5986 = vmul.f32 %v5985, %v5984
    %v5987 = vmul.f32 0.5, %v5986
    %v5988 = vsub.f32 1.5, %v5987
    %v5989 = vmul.f32 %v5984, %v5988
    %vm5990 = vweird.f32 %v5727
    %vm5991 = vweird.f32 %v5984
    %vm5992 = vmor %vm5990, %vm5991
    %v5993 = vsel %vm5992, %v5984, %v5989
    %v5994 = vrsqrt.pop %v5728
    %v5995 = vmul.f32 %v5994, %v5728
    %v5996 = vmul.f32 %v5995, %v5994
    %v5997 = vmul.f32 0.5, %v5996
    %v5998 = vsub.f32 1.5, %v5997
    %v5999 = vmul.f32 %v5994, %v5998
    %vm6000 = vweird.f32 %v5728
    %vm6001 = vweird.f32 %v5994
    %vm6002 = vmor %vm6000, %vm6001
    %v6003 = vsel %vm6002, %v5994, %v5999
    %v6004 = vrsqrt.pop %v5729
    %v6005 = vmul.f32 %v6004, %v5729
    %v6006 = vmul.f32 %v6005, %v6004
    %v6007 = vmul.f32 0.5, %v6006
    %v6008 = vsub.f32 1.5, %v6007
    %v6009 = vmul.f32 %v6004, %v6008
    %vm6010 = vweird.f32 %v5729
    %vm6011 = vweird.f32 %v6004
    %vm6012 = vmor %vm6010, %vm6011
    %v6013 = vsel %vm6012, %v6004, %v6009
    %v6014 = vrsqrt.pop %v5730
    %v6015 = vmul.f32 %v6014, %v5730
    %v6016 = vmul.f32 %v6015, %v6014
    %v6017 = vmul.f32 0.5, %v6016
    %v6018 = vsub.f32 1.5, %v6017
    %v6019 = vmul.f32 %v6014, %v6018
    %vm6020 = vweird.f32 %v5730
    %vm6021 = vweird.f32 %v6014
    %vm6022 = vmor %vm6020, %vm6021
    %v6023 = vsel %vm6022, %v6014, %v6019
    %v6024 = vrsqrt.pop %v5731
    %v6025 = vmul.f32 %v6024, %v5731
    %v6026 = vmul.f32 %v6025, %v6024
    %v6027 = vmul.f32 0.5, %v6026
    %v6028 = vsub.f32 1.5, %v6027
    %v6029 = vmul.f32 %v6024, %v6028
    %vm6030 = vweird.f32 %v5731
    %vm6031 = vweird.f32 %v6024
    %vm6032 = vmor %vm6030, %vm6031
    %v6033 = vsel %vm6032, %v6024, %v6029
    %v6034 = vrsqrt.pop %v5732
    %v6035 = vmul.f32 %v6034, %v5732
    %v6036 = vmul.f32 %v6035, %v6034
    %v6037 = vmul.f32 0.5, %v6036
    %v6038 = vsub.f32 1.5, %v6037
    %v6039 = vmul.f32 %v6034, %v6038
    %vm6040 = vweird.f32 %v5732
    %vm6041 = vweird.f32 %v6034
    %vm6042 = vmor %vm6040, %vm6041
    %v6043 = vsel %vm6042, %v6034, %v6039
    %v6044 = vrsqrt.pop %v5733
    %v6045 = vmul.f32 %v6044, %v5733
    %v6046 = vmul.f32 %v6045, %v6044
    %v6047 = vmul.f32 0.5, %v6046
    %v6048 = vsub.f32 1.5, %v6047
    %v6049 = vmul.f32 %v6044, %v6048
    %vm6050 = vweird.f32 %v5733
    %vm6051 = vweird.f32 %v6044
    %vm6052 = vmor %vm6050, %vm6051
    %v6053 = vsel %vm6052, %v6044, %v6049
    %v6054 = vmul.f32 %v3010, %v5743
    %v6055 = vmul.f32 %v3013, %v5753
    %v6056 = vmul.f32 %v3016, %v5763
    %v6057 = vmul.f32 %v3019, %v5773
    %v6058 = vmul.f32 %v3022, %v5783
    %v6059 = vmul.f32 %v3025, %v5793
    %v6060 = vmul.f32 %v3028, %v5803
    %v6061 = vmul.f32 %v3031, %v5813
    %v6062 = vmul.f32 %v3034, %v5823
    %v6063 = vmul.f32 %v3037, %v5833
    %v6064 = vmul.f32 %v3040, %v5843
    %v6065 = vmul.f32 %v3043, %v5853
    %v6066 = vmul.f32 %v3046, %v5863
    %v6067 = vmul.f32 %v3049, %v5873
    %v6068 = vmul.f32 %v3052, %v5883
    %v6069 = vmul.f32 %v3055, %v5893
    %v6070 = vmul.f32 %v3058, %v5903
    %v6071 = vmul.f32 %v3061, %v5913
    %v6072 = vmul.f32 %v3064, %v5923
    %v6073 = vmul.f32 %v3067, %v5933
    %v6074 = vmul.f32 %v3070, %v5943
    %v6075 = vmul.f32 %v3073, %v5953
    %v6076 = vmul.f32 %v3076, %v5963
    %v6077 = vmul.f32 %v3079, %v5973
    %v6078 = vmul.f32 %v3082, %v5983
    %v6079 = vmul.f32 %v3085, %v5993
    %v6080 = vmul.f32 %v3088, %v6003
    %v6081 = vmul.f32 %v3091, %v6013
    %v6082 = vmul.f32 %v3094, %v6023
    %v6083 = vmul.f32 %v3097, %v6033
    %v6084 = vmul.f32 %v3100, %v6043
    %v6085 = vmul.f32 %v3103, %v6053
    %s6086 = sld [smem:[#allocation2 + $0x1]]
    %v6087 = vstv %s6086
    %v6088 = vmul.f32 %v6054, %v6087
    %v6089 = vmul.f32 %v6055, %v6087
    %v6090 = vmul.f32 %v6056, %v6087
    %v6091 = vmul.f32 %v6057, %v6087
    %v6092 = vmul.f32 %v6058, %v6087
    %v6093 = vmul.f32 %v6059, %v6087
    %v6094 = vmul.f32 %v6060, %v6087
    %v6095 = vmul.f32 %v6061, %v6087
    %v6096 = vmul.f32 %v6062, %v6087
    %v6097 = vmul.f32 %v6063, %v6087
    %v6098 = vmul.f32 %v6064, %v6087
    %v6099 = vmul.f32 %v6065, %v6087
    %v6100 = vmul.f32 %v6066, %v6087
    %v6101 = vmul.f32 %v6067, %v6087
    %v6102 = vmul.f32 %v6068, %v6087
    %v6103 = vmul.f32 %v6069, %v6087
    %v6104 = vmul.f32 %v6070, %v6087
    %v6105 = vmul.f32 %v6071, %v6087
    %v6106 = vmul.f32 %v6072, %v6087
    %v6107 = vmul.f32 %v6073, %v6087
    %v6108 = vmul.f32 %v6074, %v6087
    %v6109 = vmul.f32 %v6075, %v6087
    %v6110 = vmul.f32 %v6076, %v6087
    %v6111 = vmul.f32 %v6077, %v6087
    %v6112 = vmul.f32 %v6078, %v6087
    %v6113 = vmul.f32 %v6079, %v6087
    %v6114 = vmul.f32 %v6080, %v6087
    %v6115 = vmul.f32 %v6081, %v6087
    %v6116 = vmul.f32 %v6082, %v6087
    %v6117 = vmul.f32 %v6083, %v6087
    %v6118 = vmul.f32 %v6084, %v6087
    %v6119 = vmul.f32 %v6085, %v6087
    %6152 = vrot.lane.b32.xlu0 %v6088, 32
    %v6153 = vpop.permute.xlu0 %6152
    %6154 = vrot.lane.b32.xlu0 %v6089, 32
    %v6155 = vpop.permute.xlu0 %6154
    %6156 = vrot.lane.b32.xlu0 %v6090, 32
    %v6157 = vpop.permute.xlu0 %6156
    %6158 = vrot.lane.b32.xlu0 %v6091, 32
    %v6159 = vpop.permute.xlu0 %6158
    %6160 = vrot.lane.b32.xlu0 %v6092, 32
    %v6161 = vpop.permute.xlu0 %6160
    %6162 = vrot.lane.b32.xlu0 %v6093, 32
    %v6163 = vpop.permute.xlu0 %6162
    %6164 = vrot.lane.b32.xlu0 %v6094, 32
    %v6165 = vpop.permute.xlu0 %6164
    %6166 = vrot.lane.b32.xlu0 %v6095, 32
    %v6167 = vpop.permute.xlu0 %6166
    %6168 = vrot.lane.b32.xlu0 %v6096, 32
    %v6169 = vpop.permute.xlu0 %6168
    %6170 = vrot.lane.b32.xlu0 %v6097, 32
    %v6171 = vpop.permute.xlu0 %6170
    %6172 = vrot.lane.b32.xlu0 %v6098, 32
    %v6173 = vpop.permute.xlu0 %6172
    %6174 = vrot.lane.b32.xlu0 %v6099, 32
    %v6175 = vpop.permute.xlu0 %6174
    %6176 = vrot.lane.b32.xlu0 %v6100, 32
    %v6177 = vpop.permute.xlu0 %6176
    %6178 = vrot.lane.b32.xlu0 %v6101, 32
    %v6179 = vpop.permute.xlu0 %6178
    %6180 = vrot.lane.b32.xlu0 %v6102, 32
    %v6181 = vpop.permute.xlu0 %6180
    %6182 = vrot.lane.b32.xlu0 %v6103, 32
    %v6183 = vpop.permute.xlu0 %6182
    %6184 = vrot.lane.b32.xlu0 %v6104, 32
    %v6185 = vpop.permute.xlu0 %6184
    %6186 = vrot.lane.b32.xlu0 %v6105, 32
    %v6187 = vpop.permute.xlu0 %6186
    %6188 = vrot.lane.b32.xlu0 %v6106, 32
    %v6189 = vpop.permute.xlu0 %6188
    %6190 = vrot.lane.b32.xlu0 %v6107, 32
    %v6191 = vpop.permute.xlu0 %6190
    %6192 = vrot.lane.b32.xlu0 %v6108, 32
    %v6193 = vpop.permute.xlu0 %6192
    %6194 = vrot.lane.b32.xlu0 %v6109, 32
    %v6195 = vpop.permute.xlu0 %6194
    %6196 = vrot.lane.b32.xlu0 %v6110, 32
    %v6197 = vpop.permute.xlu0 %6196
    %6198 = vrot.lane.b32.xlu0 %v6111, 32
    %v6199 = vpop.permute.xlu0 %6198
    %6200 = vrot.lane.b32.xlu0 %v6112, 32
    %v6201 = vpop.permute.xlu0 %6200
    %6202 = vrot.lane.b32.xlu0 %v6113, 32
    %v6203 = vpop.permute.xlu0 %6202
    %6204 = vrot.lane.b32.xlu0 %v6114, 32
    %v6205 = vpop.permute.xlu0 %6204
    %6206 = vrot.lane.b32.xlu0 %v6115, 32
    %v6207 = vpop.permute.xlu0 %6206
    %6208 = vrot.lane.b32.xlu0 %v6116, 32
    %v6209 = vpop.permute.xlu0 %6208
    %6210 = vrot.lane.b32.xlu0 %v6117, 32
    %v6211 = vpop.permute.xlu0 %6210
    %6212 = vrot.lane.b32.xlu0 %v6118, 32
    %v6213 = vpop.permute.xlu0 %6212
    %6214 = vrot.lane.b32.xlu0 %v6119, 32
    %v6215 = vpop.permute.xlu0 %6214
    %6248 = vst.msk [vmem:[%s21] sm:$0xff] %vm4382, %v6153
    %6249 = vst.msk [vmem:[%s21 + $0x18] sm:$0xff] %vm4382, %v6155
    %6250 = vst.msk [vmem:[%s21 + $0x30] sm:$0xff] %vm4382, %v6157
    %6251 = vst.msk [vmem:[%s21 + $0x48] sm:$0xff] %vm4382, %v6159
    %6252 = vst.msk [vmem:[%s21 + $0x60] sm:$0xff] %vm4382, %v6161
    %6253 = vst.msk [vmem:[%s21 + $0x78] sm:$0xff] %vm4382, %v6163
    %6254 = vst.msk [vmem:[%s21 + $0x90] sm:$0xff] %vm4382, %v6165
    %6255 = vst.msk [vmem:[%s21 + $0xa8] sm:$0xff] %vm4382, %v6167
    %6256 = vst.msk [vmem:[%s21 + $0xc0] sm:$0xff] %vm4382, %v6169
    %6257 = vst.msk [vmem:[%s21 + $0xd8] sm:$0xff] %vm4382, %v6171
    %6258 = vst.msk [vmem:[%s21 + $0xf0] sm:$0xff] %vm4382, %v6173
    %6259 = vst.msk [vmem:[%s21 + $0x108] sm:$0xff] %vm4382, %v6175
    %6260 = vst.msk [vmem:[%s21 + $0x120] sm:$0xff] %vm4382, %v6177
    %6261 = vst.msk [vmem:[%s21 + $0x138] sm:$0xff] %vm4382, %v6179
    %6262 = vst.msk [vmem:[%s21 + $0x150] sm:$0xff] %vm4382, %v6181
    %6263 = vst.msk [vmem:[%s21 + $0x168] sm:$0xff] %vm4382, %v6183
    %6264 = vst.msk [vmem:[%s21 + $0x180] sm:$0xff] %vm4382, %v6185
    %6265 = vst.msk [vmem:[%s21 + $0x198] sm:$0xff] %vm4382, %v6187
    %6266 = vst.msk [vmem:[%s21 + $0x1b0] sm:$0xff] %vm4382, %v6189
    %6267 = vst.msk [vmem:[%s21 + $0x1c8] sm:$0xff] %vm4382, %v6191
    %6268 = vst.msk [vmem:[%s21 + $0x1e0] sm:$0xff] %vm4382, %v6193
    %6269 = vst.msk [vmem:[%s21 + $0x1f8] sm:$0xff] %vm4382, %v6195
    %6270 = vst.msk [vmem:[%s21 + $0x210] sm:$0xff] %vm4382, %v6197
    %6271 = vst.msk [vmem:[%s21 + $0x228] sm:$0xff] %vm4382, %v6199
    %6272 = vst.msk [vmem:[%s21 + $0x240] sm:$0xff] %vm4382, %v6201
    %6273 = vst.msk [vmem:[%s21 + $0x258] sm:$0xff] %vm4382, %v6203
    %6274 = vst.msk [vmem:[%s21 + $0x270] sm:$0xff] %vm4382, %v6205
    %6275 = vst.msk [vmem:[%s21 + $0x288] sm:$0xff] %vm4382, %v6207
    %6276 = vst.msk [vmem:[%s21 + $0x2a0] sm:$0xff] %vm4382, %v6209
    %6277 = vst.msk [vmem:[%s21 + $0x2b8] sm:$0xff] %vm4382, %v6211
    %6278 = vst.msk [vmem:[%s21 + $0x2d0] sm:$0xff] %vm4382, %v6213
    %6279 = vst.msk [vmem:[%s21 + $0x2e8] sm:$0xff] %vm4382, %v6215
    %v6280 = vmul.f32 %v1625, %v1625
    %v6281 = vmul.f32 %v1628, %v1628
    %v6282 = vmul.f32 %v1631, %v1631
    %v6283 = vmul.f32 %v1634, %v1634
    %v6284 = vmul.f32 %v1637, %v1637
    %v6285 = vmul.f32 %v1640, %v1640
    %v6286 = vmul.f32 %v1643, %v1643
    %v6287 = vmul.f32 %v1646, %v1646
    %v6288 = vmul.f32 %v1649, %v1649
    %v6289 = vmul.f32 %v1652, %v1652
    %v6290 = vmul.f32 %v1655, %v1655
    %v6291 = vmul.f32 %v1658, %v1658
    %v6292 = vmul.f32 %v1661, %v1661
    %v6293 = vmul.f32 %v1664, %v1664
    %v6294 = vmul.f32 %v1667, %v1667
    %v6295 = vmul.f32 %v1670, %v1670
    %v6296 = vmul.f32 %v1673, %v1673
    %v6297 = vmul.f32 %v1676, %v1676
    %v6298 = vmul.f32 %v1679, %v1679
    %v6299 = vmul.f32 %v1682, %v1682
    %v6300 = vmul.f32 %v1685, %v1685
    %v6301 = vmul.f32 %v1688, %v1688
    %v6302 = vmul.f32 %v1691, %v1691
    %v6303 = vmul.f32 %v1694, %v1694
    %v6304 = vmul.f32 %v1697, %v1697
    %v6305 = vmul.f32 %v1700, %v1700
    %v6306 = vmul.f32 %v1703, %v1703
    %v6307 = vmul.f32 %v1706, %v1706
    %v6308 = vmul.f32 %v1709, %v1709
    %v6309 = vmul.f32 %v1712, %v1712
    %v6310 = vmul.f32 %v1715, %v1715
    %v6311 = vmul.f32 %v1718, %v1718
    %v6312 = vsel %vm4221, %v6280, 0.0
    %6313 = vadd.xlane.f32.xlu0 %v6312
    %v6314 = vpop.xlane.xlu0 %6313
    %v6315 = vsel %vm4221, %v6281, 0.0
    %6316 = vadd.xlane.f32.xlu0 %v6315
    %v6317 = vpop.xlane.xlu0 %6316
    %v6318 = vsel %vm4221, %v6282, 0.0
    %6319 = vadd.xlane.f32.xlu0 %v6318
    %v6320 = vpop.xlane.xlu0 %6319
    %v6321 = vsel %vm4221, %v6283, 0.0
    %6322 = vadd.xlane.f32.xlu0 %v6321
    %v6323 = vpop.xlane.xlu0 %6322
    %v6324 = vsel %vm4221, %v6284, 0.0
    %6325 = vadd.xlane.f32.xlu0 %v6324
    %v6326 = vpop.xlane.xlu0 %6325
    %v6327 = vsel %vm4221, %v6285, 0.0
    %6328 = vadd.xlane.f32.xlu0 %v6327
    %v6329 = vpop.xlane.xlu0 %6328
    %v6330 = vsel %vm4221, %v6286, 0.0
    %6331 = vadd.xlane.f32.xlu0 %v6330
    %v6332 = vpop.xlane.xlu0 %6331
    %v6333 = vsel %vm4221, %v6287, 0.0
    %6334 = vadd.xlane.f32.xlu0 %v6333
    %v6335 = vpop.xlane.xlu0 %6334
    %v6336 = vsel %vm4221, %v6288, 0.0
    %6337 = vadd.xlane.f32.xlu0 %v6336
    %v6338 = vpop.xlane.xlu0 %6337
    %v6339 = vsel %vm4221, %v6289, 0.0
    %6340 = vadd.xlane.f32.xlu0 %v6339
    %v6341 = vpop.xlane.xlu0 %6340
    %v6342 = vsel %vm4221, %v6290, 0.0
    %6343 = vadd.xlane.f32.xlu0 %v6342
    %v6344 = vpop.xlane.xlu0 %6343
    %v6345 = vsel %vm4221, %v6291, 0.0
    %6346 = vadd.xlane.f32.xlu0 %v6345
    %v6347 = vpop.xlane.xlu0 %6346
    %v6348 = vsel %vm4221, %v6292, 0.0
    %6349 = vadd.xlane.f32.xlu0 %v6348
    %v6350 = vpop.xlane.xlu0 %6349
    %v6351 = vsel %vm4221, %v6293, 0.0
    %6352 = vadd.xlane.f32.xlu0 %v6351
    %v6353 = vpop.xlane.xlu0 %6352
    %v6354 = vsel %vm4221, %v6294, 0.0
    %6355 = vadd.xlane.f32.xlu0 %v6354
    %v6356 = vpop.xlane.xlu0 %6355
    %v6357 = vsel %vm4221, %v6295, 0.0
    %6358 = vadd.xlane.f32.xlu0 %v6357
    %v6359 = vpop.xlane.xlu0 %6358
    %v6360 = vsel %vm4221, %v6296, 0.0
    %6361 = vadd.xlane.f32.xlu0 %v6360
    %v6362 = vpop.xlane.xlu0 %6361
    %v6363 = vsel %vm4221, %v6297, 0.0
    %6364 = vadd.xlane.f32.xlu0 %v6363
    %v6365 = vpop.xlane.xlu0 %6364
    %v6366 = vsel %vm4221, %v6298, 0.0
    %6367 = vadd.xlane.f32.xlu0 %v6366
    %v6368 = vpop.xlane.xlu0 %6367
    %v6369 = vsel %vm4221, %v6299, 0.0
    %6370 = vadd.xlane.f32.xlu0 %v6369
    %v6371 = vpop.xlane.xlu0 %6370
    %v6372 = vsel %vm4221, %v6300, 0.0
    %6373 = vadd.xlane.f32.xlu0 %v6372
    %v6374 = vpop.xlane.xlu0 %6373
    %v6375 = vsel %vm4221, %v6301, 0.0
    %6376 = vadd.xlane.f32.xlu0 %v6375
    %v6377 = vpop.xlane.xlu0 %6376
    %v6378 = vsel %vm4221, %v6302, 0.0
    %6379 = vadd.xlane.f32.xlu0 %v6378
    %v6380 = vpop.xlane.xlu0 %6379
    %v6381 = vsel %vm4221, %v6303, 0.0
    %6382 = vadd.xlane.f32.xlu0 %v6381
    %v6383 = vpop.xlane.xlu0 %6382
    %v6384 = vsel %vm4221, %v6304, 0.0
    %6385 = vadd.xlane.f32.xlu0 %v6384
    %v6386 = vpop.xlane.xlu0 %6385
    %v6387 = vsel %vm4221, %v6305, 0.0
    %6388 = vadd.xlane.f32.xlu0 %v6387
    %v6389 = vpop.xlane.xlu0 %6388
    %v6390 = vsel %vm4221, %v6306, 0.0
    %6391 = vadd.xlane.f32.xlu0 %v6390
    %v6392 = vpop.xlane.xlu0 %6391
    %v6393 = vsel %vm4221, %v6307, 0.0
    %6394 = vadd.xlane.f32.xlu0 %v6393
    %v6395 = vpop.xlane.xlu0 %6394
    %v6396 = vsel %vm4221, %v6308, 0.0
    %6397 = vadd.xlane.f32.xlu0 %v6396
    %v6398 = vpop.xlane.xlu0 %6397
    %v6399 = vsel %vm4221, %v6309, 0.0
    %6400 = vadd.xlane.f32.xlu0 %v6399
    %v6401 = vpop.xlane.xlu0 %6400
    %v6402 = vsel %vm4221, %v6310, 0.0
    %6403 = vadd.xlane.f32.xlu0 %v6402
    %v6404 = vpop.xlane.xlu0 %6403
    %v6405 = vsel %vm4221, %v6311, 0.0
    %6406 = vadd.xlane.f32.xlu0 %v6405
    %v6407 = vpop.xlane.xlu0 %6406
    %v6408 = vmax.f32 %v6314, 1e-24
    %v6409 = vmax.f32 %v6317, 1e-24
    %v6410 = vmax.f32 %v6320, 1e-24
    %v6411 = vmax.f32 %v6323, 1e-24
    %v6412 = vmax.f32 %v6326, 1e-24
    %v6413 = vmax.f32 %v6329, 1e-24
    %v6414 = vmax.f32 %v6332, 1e-24
    %v6415 = vmax.f32 %v6335, 1e-24
    %v6416 = vmax.f32 %v6338, 1e-24
    %v6417 = vmax.f32 %v6341, 1e-24
    %v6418 = vmax.f32 %v6344, 1e-24
    %v6419 = vmax.f32 %v6347, 1e-24
    %v6420 = vmax.f32 %v6350, 1e-24
    %v6421 = vmax.f32 %v6353, 1e-24
    %v6422 = vmax.f32 %v6356, 1e-24
    %v6423 = vmax.f32 %v6359, 1e-24
    %v6424 = vmax.f32 %v6362, 1e-24
    %v6425 = vmax.f32 %v6365, 1e-24
    %v6426 = vmax.f32 %v6368, 1e-24
    %v6427 = vmax.f32 %v6371, 1e-24
    %v6428 = vmax.f32 %v6374, 1e-24
    %v6429 = vmax.f32 %v6377, 1e-24
    %v6430 = vmax.f32 %v6380, 1e-24
    %v6431 = vmax.f32 %v6383, 1e-24
    %v6432 = vmax.f32 %v6386, 1e-24
    %v6433 = vmax.f32 %v6389, 1e-24
    %v6434 = vmax.f32 %v6392, 1e-24
    %v6435 = vmax.f32 %v6395, 1e-24
    %v6436 = vmax.f32 %v6398, 1e-24
    %v6437 = vmax.f32 %v6401, 1e-24
    %v6438 = vmax.f32 %v6404, 1e-24
    %v6439 = vmax.f32 %v6407, 1e-24
    %v6440 = vrsqrt.pop %v6408
    %v6441 = vmul.f32 %v6440, %v6408
    %v6442 = vmul.f32 %v6441, %v6440
    %v6443 = vmul.f32 0.5, %v6442
    %v6444 = vsub.f32 1.5, %v6443
    %v6445 = vmul.f32 %v6440, %v6444
    %vm6446 = vweird.f32 %v6408
    %vm6447 = vweird.f32 %v6440
    %vm6448 = vmor %vm6446, %vm6447
    %v6449 = vsel %vm6448, %v6440, %v6445
    %v6450 = vrsqrt.pop %v6409
    %v6451 = vmul.f32 %v6450, %v6409
    %v6452 = vmul.f32 %v6451, %v6450
    %v6453 = vmul.f32 0.5, %v6452
    %v6454 = vsub.f32 1.5, %v6453
    %v6455 = vmul.f32 %v6450, %v6454
    %vm6456 = vweird.f32 %v6409
    %vm6457 = vweird.f32 %v6450
    %vm6458 = vmor %vm6456, %vm6457
    %v6459 = vsel %vm6458, %v6450, %v6455
    %v6460 = vrsqrt.pop %v6410
    %v6461 = vmul.f32 %v6460, %v6410
    %v6462 = vmul.f32 %v6461, %v6460
    %v6463 = vmul.f32 0.5, %v6462
    %v6464 = vsub.f32 1.5, %v6463
    %v6465 = vmul.f32 %v6460, %v6464
    %vm6466 = vweird.f32 %v6410
    %vm6467 = vweird.f32 %v6460
    %vm6468 = vmor %vm6466, %vm6467
    %v6469 = vsel %vm6468, %v6460, %v6465
    %v6470 = vrsqrt.pop %v6411
    %v6471 = vmul.f32 %v6470, %v6411
    %v6472 = vmul.f32 %v6471, %v6470
    %v6473 = vmul.f32 0.5, %v6472
    %v6474 = vsub.f32 1.5, %v6473
    %v6475 = vmul.f32 %v6470, %v6474
    %vm6476 = vweird.f32 %v6411
    %vm6477 = vweird.f32 %v6470
    %vm6478 = vmor %vm6476, %vm6477
    %v6479 = vsel %vm6478, %v6470, %v6475
    %v6480 = vrsqrt.pop %v6412
    %v6481 = vmul.f32 %v6480, %v6412
    %v6482 = vmul.f32 %v6481, %v6480
    %v6483 = vmul.f32 0.5, %v6482
    %v6484 = vsub.f32 1.5, %v6483
    %v6485 = vmul.f32 %v6480, %v6484
    %vm6486 = vweird.f32 %v6412
    %vm6487 = vweird.f32 %v6480
    %vm6488 = vmor %vm6486, %vm6487
    %v6489 = vsel %vm6488, %v6480, %v6485
    %v6490 = vrsqrt.pop %v6413
    %v6491 = vmul.f32 %v6490, %v6413
    %v6492 = vmul.f32 %v6491, %v6490
    %v6493 = vmul.f32 0.5, %v6492
    %v6494 = vsub.f32 1.5, %v6493
    %v6495 = vmul.f32 %v6490, %v6494
    %vm6496 = vweird.f32 %v6413
    %vm6497 = vweird.f32 %v6490
    %vm6498 = vmor %vm6496, %vm6497
    %v6499 = vsel %vm6498, %v6490, %v6495
    %v6500 = vrsqrt.pop %v6414
    %v6501 = vmul.f32 %v6500, %v6414
    %v6502 = vmul.f32 %v6501, %v6500
    %v6503 = vmul.f32 0.5, %v6502
    %v6504 = vsub.f32 1.5, %v6503
    %v6505 = vmul.f32 %v6500, %v6504
    %vm6506 = vweird.f32 %v6414
    %vm6507 = vweird.f32 %v6500
    %vm6508 = vmor %vm6506, %vm6507
    %v6509 = vsel %vm6508, %v6500, %v6505
    %v6510 = vrsqrt.pop %v6415
    %v6511 = vmul.f32 %v6510, %v6415
    %v6512 = vmul.f32 %v6511, %v6510
    %v6513 = vmul.f32 0.5, %v6512
    %v6514 = vsub.f32 1.5, %v6513
    %v6515 = vmul.f32 %v6510, %v6514
    %vm6516 = vweird.f32 %v6415
    %vm6517 = vweird.f32 %v6510
    %vm6518 = vmor %vm6516, %vm6517
    %v6519 = vsel %vm6518, %v6510, %v6515
    %v6520 = vrsqrt.pop %v6416
    %v6521 = vmul.f32 %v6520, %v6416
    %v6522 = vmul.f32 %v6521, %v6520
    %v6523 = vmul.f32 0.5, %v6522
    %v6524 = vsub.f32 1.5, %v6523
    %v6525 = vmul.f32 %v6520, %v6524
    %vm6526 = vweird.f32 %v6416
    %vm6527 = vweird.f32 %v6520
    %vm6528 = vmor %vm6526, %vm6527
    %v6529 = vsel %vm6528, %v6520, %v6525
    %v6530 = vrsqrt.pop %v6417
    %v6531 = vmul.f32 %v6530, %v6417
    %v6532 = vmul.f32 %v6531, %v6530
    %v6533 = vmul.f32 0.5, %v6532
    %v6534 = vsub.f32 1.5, %v6533
    %v6535 = vmul.f32 %v6530, %v6534
    %vm6536 = vweird.f32 %v6417
    %vm6537 = vweird.f32 %v6530
    %vm6538 = vmor %vm6536, %vm6537
    %v6539 = vsel %vm6538, %v6530, %v6535
    %v6540 = vrsqrt.pop %v6418
    %v6541 = vmul.f32 %v6540, %v6418
    %v6542 = vmul.f32 %v6541, %v6540
    %v6543 = vmul.f32 0.5, %v6542
    %v6544 = vsub.f32 1.5, %v6543
    %v6545 = vmul.f32 %v6540, %v6544
    %vm6546 = vweird.f32 %v6418
    %vm6547 = vweird.f32 %v6540
    %vm6548 = vmor %vm6546, %vm6547
    %v6549 = vsel %vm6548, %v6540, %v6545
    %v6550 = vrsqrt.pop %v6419
    %v6551 = vmul.f32 %v6550, %v6419
    %v6552 = vmul.f32 %v6551, %v6550
    %v6553 = vmul.f32 0.5, %v6552
    %v6554 = vsub.f32 1.5, %v6553
    %v6555 = vmul.f32 %v6550, %v6554
    %vm6556 = vweird.f32 %v6419
    %vm6557 = vweird.f32 %v6550
    %vm6558 = vmor %vm6556, %vm6557
    %v6559 = vsel %vm6558, %v6550, %v6555
    %v6560 = vrsqrt.pop %v6420
    %v6561 = vmul.f32 %v6560, %v6420
    %v6562 = vmul.f32 %v6561, %v6560
    %v6563 = vmul.f32 0.5, %v6562
    %v6564 = vsub.f32 1.5, %v6563
    %v6565 = vmul.f32 %v6560, %v6564
    %vm6566 = vweird.f32 %v6420
    %vm6567 = vweird.f32 %v6560
    %vm6568 = vmor %vm6566, %vm6567
    %v6569 = vsel %vm6568, %v6560, %v6565
    %v6570 = vrsqrt.pop %v6421
    %v6571 = vmul.f32 %v6570, %v6421
    %v6572 = vmul.f32 %v6571, %v6570
    %v6573 = vmul.f32 0.5, %v6572
    %v6574 = vsub.f32 1.5, %v6573
    %v6575 = vmul.f32 %v6570, %v6574
    %vm6576 = vweird.f32 %v6421
    %vm6577 = vweird.f32 %v6570
    %vm6578 = vmor %vm6576, %vm6577
    %v6579 = vsel %vm6578, %v6570, %v6575
    %v6580 = vrsqrt.pop %v6422
    %v6581 = vmul.f32 %v6580, %v6422
    %v6582 = vmul.f32 %v6581, %v6580
    %v6583 = vmul.f32 0.5, %v6582
    %v6584 = vsub.f32 1.5, %v6583
    %v6585 = vmul.f32 %v6580, %v6584
    %vm6586 = vweird.f32 %v6422
    %vm6587 = vweird.f32 %v6580
    %vm6588 = vmor %vm6586, %vm6587
    %v6589 = vsel %vm6588, %v6580, %v6585
    %v6590 = vrsqrt.pop %v6423
    %v6591 = vmul.f32 %v6590, %v6423
    %v6592 = vmul.f32 %v6591, %v6590
    %v6593 = vmul.f32 0.5, %v6592
    %v6594 = vsub.f32 1.5, %v6593
    %v6595 = vmul.f32 %v6590, %v6594
    %vm6596 = vweird.f32 %v6423
    %vm6597 = vweird.f32 %v6590
    %vm6598 = vmor %vm6596, %vm6597
    %v6599 = vsel %vm6598, %v6590, %v6595
    %v6600 = vrsqrt.pop %v6424
    %v6601 = vmul.f32 %v6600, %v6424
    %v6602 = vmul.f32 %v6601, %v6600
    %v6603 = vmul.f32 0.5, %v6602
    %v6604 = vsub.f32 1.5, %v6603
    %v6605 = vmul.f32 %v6600, %v6604
    %vm6606 = vweird.f32 %v6424
    %vm6607 = vweird.f32 %v6600
    %vm6608 = vmor %vm6606, %vm6607
    %v6609 = vsel %vm6608, %v6600, %v6605
    %v6610 = vrsqrt.pop %v6425
    %v6611 = vmul.f32 %v6610, %v6425
    %v6612 = vmul.f32 %v6611, %v6610
    %v6613 = vmul.f32 0.5, %v6612
    %v6614 = vsub.f32 1.5, %v6613
    %v6615 = vmul.f32 %v6610, %v6614
    %vm6616 = vweird.f32 %v6425
    %vm6617 = vweird.f32 %v6610
    %vm6618 = vmor %vm6616, %vm6617
    %v6619 = vsel %vm6618, %v6610, %v6615
    %v6620 = vrsqrt.pop %v6426
    %v6621 = vmul.f32 %v6620, %v6426
    %v6622 = vmul.f32 %v6621, %v6620
    %v6623 = vmul.f32 0.5, %v6622
    %v6624 = vsub.f32 1.5, %v6623
    %v6625 = vmul.f32 %v6620, %v6624
    %vm6626 = vweird.f32 %v6426
    %vm6627 = vweird.f32 %v6620
    %vm6628 = vmor %vm6626, %vm6627
    %v6629 = vsel %vm6628, %v6620, %v6625
    %v6630 = vrsqrt.pop %v6427
    %v6631 = vmul.f32 %v6630, %v6427
    %v6632 = vmul.f32 %v6631, %v6630
    %v6633 = vmul.f32 0.5, %v6632
    %v6634 = vsub.f32 1.5, %v6633
    %v6635 = vmul.f32 %v6630, %v6634
    %vm6636 = vweird.f32 %v6427
    %vm6637 = vweird.f32 %v6630
    %vm6638 = vmor %vm6636, %vm6637
    %v6639 = vsel %vm6638, %v6630, %v6635
    %v6640 = vrsqrt.pop %v6428
    %v6641 = vmul.f32 %v6640, %v6428
    %v6642 = vmul.f32 %v6641, %v6640
    %v6643 = vmul.f32 0.5, %v6642
    %v6644 = vsub.f32 1.5, %v6643
    %v6645 = vmul.f32 %v6640, %v6644
    %vm6646 = vweird.f32 %v6428
    %vm6647 = vweird.f32 %v6640
    %vm6648 = vmor %vm6646, %vm6647
    %v6649 = vsel %vm6648, %v6640, %v6645
    %v6650 = vrsqrt.pop %v6429
    %v6651 = vmul.f32 %v6650, %v6429
    %v6652 = vmul.f32 %v6651, %v6650
    %v6653 = vmul.f32 0.5, %v6652
    %v6654 = vsub.f32 1.5, %v6653
    %v6655 = vmul.f32 %v6650, %v6654
    %vm6656 = vweird.f32 %v6429
    %vm6657 = vweird.f32 %v6650
    %vm6658 = vmor %vm6656, %vm6657
    %v6659 = vsel %vm6658, %v6650, %v6655
    %v6660 = vrsqrt.pop %v6430
    %v6661 = vmul.f32 %v6660, %v6430
    %v6662 = vmul.f32 %v6661, %v6660
    %v6663 = vmul.f32 0.5, %v6662
    %v6664 = vsub.f32 1.5, %v6663
    %v6665 = vmul.f32 %v6660, %v6664
    %vm6666 = vweird.f32 %v6430
    %vm6667 = vweird.f32 %v6660
    %vm6668 = vmor %vm6666, %vm6667
    %v6669 = vsel %vm6668, %v6660, %v6665
    %v6670 = vrsqrt.pop %v6431
    %v6671 = vmul.f32 %v6670, %v6431
    %v6672 = vmul.f32 %v6671, %v6670
    %v6673 = vmul.f32 0.5, %v6672
    %v6674 = vsub.f32 1.5, %v6673
    %v6675 = vmul.f32 %v6670, %v6674
    %vm6676 = vweird.f32 %v6431
    %vm6677 = vweird.f32 %v6670
    %vm6678 = vmor %vm6676, %vm6677
    %v6679 = vsel %vm6678, %v6670, %v6675
    %v6680 = vrsqrt.pop %v6432
    %v6681 = vmul.f32 %v6680, %v6432
    %v6682 = vmul.f32 %v6681, %v6680
    %v6683 = vmul.f32 0.5, %v6682
    %v6684 = vsub.f32 1.5, %v6683
    %v6685 = vmul.f32 %v6680, %v6684
    %vm6686 = vweird.f32 %v6432
    %vm6687 = vweird.f32 %v6680
    %vm6688 = vmor %vm6686, %vm6687
    %v6689 = vsel %vm6688, %v6680, %v6685
    %v6690 = vrsqrt.pop %v6433
    %v6691 = vmul.f32 %v6690, %v6433
    %v6692 = vmul.f32 %v6691, %v6690
    %v6693 = vmul.f32 0.5, %v6692
    %v6694 = vsub.f32 1.5, %v6693
    %v6695 = vmul.f32 %v6690, %v6694
    %vm6696 = vweird.f32 %v6433
    %vm6697 = vweird.f32 %v6690
    %vm6698 = vmor %vm6696, %vm6697
    %v6699 = vsel %vm6698, %v6690, %v6695
    %v6700 = vrsqrt.pop %v6434
    %v6701 = vmul.f32 %v6700, %v6434
    %v6702 = vmul.f32 %v6701, %v6700
    %v6703 = vmul.f32 0.5, %v6702
    %v6704 = vsub.f32 1.5, %v6703
    %v6705 = vmul.f32 %v6700, %v6704
    %vm6706 = vweird.f32 %v6434
    %vm6707 = vweird.f32 %v6700
    %vm6708 = vmor %vm6706, %vm6707
    %v6709 = vsel %vm6708, %v6700, %v6705
    %v6710 = vrsqrt.pop %v6435
    %v6711 = vmul.f32 %v6710, %v6435
    %v6712 = vmul.f32 %v6711, %v6710
    %v6713 = vmul.f32 0.5, %v6712
    %v6714 = vsub.f32 1.5, %v6713
    %v6715 = vmul.f32 %v6710, %v6714
    %vm6716 = vweird.f32 %v6435
    %vm6717 = vweird.f32 %v6710
    %vm6718 = vmor %vm6716, %vm6717
    %v6719 = vsel %vm6718, %v6710, %v6715
    %v6720 = vrsqrt.pop %v6436
    %v6721 = vmul.f32 %v6720, %v6436
    %v6722 = vmul.f32 %v6721, %v6720
    %v6723 = vmul.f32 0.5, %v6722
    %v6724 = vsub.f32 1.5, %v6723
    %v6725 = vmul.f32 %v6720, %v6724
    %vm6726 = vweird.f32 %v6436
    %vm6727 = vweird.f32 %v6720
    %vm6728 = vmor %vm6726, %vm6727
    %v6729 = vsel %vm6728, %v6720, %v6725
    %v6730 = vrsqrt.pop %v6437
    %v6731 = vmul.f32 %v6730, %v6437
    %v6732 = vmul.f32 %v6731, %v6730
    %v6733 = vmul.f32 0.5, %v6732
    %v6734 = vsub.f32 1.5, %v6733
    %v6735 = vmul.f32 %v6730, %v6734
    %vm6736 = vweird.f32 %v6437
    %vm6737 = vweird.f32 %v6730
    %vm6738 = vmor %vm6736, %vm6737
    %v6739 = vsel %vm6738, %v6730, %v6735
    %v6740 = vrsqrt.pop %v6438
    %v6741 = vmul.f32 %v6740, %v6438
    %v6742 = vmul.f32 %v6741, %v6740
    %v6743 = vmul.f32 0.5, %v6742
    %v6744 = vsub.f32 1.5, %v6743
    %v6745 = vmul.f32 %v6740, %v6744
    %vm6746 = vweird.f32 %v6438
    %vm6747 = vweird.f32 %v6740
    %vm6748 = vmor %vm6746, %vm6747
    %v6749 = vsel %vm6748, %v6740, %v6745
    %v6750 = vrsqrt.pop %v6439
    %v6751 = vmul.f32 %v6750, %v6439
    %v6752 = vmul.f32 %v6751, %v6750
    %v6753 = vmul.f32 0.5, %v6752
    %v6754 = vsub.f32 1.5, %v6753
    %v6755 = vmul.f32 %v6750, %v6754
    %vm6756 = vweird.f32 %v6439
    %vm6757 = vweird.f32 %v6750
    %vm6758 = vmor %vm6756, %vm6757
    %v6759 = vsel %vm6758, %v6750, %v6755
    %v6760 = vmul.f32 %v1625, %v6449
    %v6761 = vmul.f32 %v1628, %v6459
    %v6762 = vmul.f32 %v1631, %v6469
    %v6763 = vmul.f32 %v1634, %v6479
    %v6764 = vmul.f32 %v1637, %v6489
    %v6765 = vmul.f32 %v1640, %v6499
    %v6766 = vmul.f32 %v1643, %v6509
    %v6767 = vmul.f32 %v1646, %v6519
    %v6768 = vmul.f32 %v1649, %v6529
    %v6769 = vmul.f32 %v1652, %v6539
    %v6770 = vmul.f32 %v1655, %v6549
    %v6771 = vmul.f32 %v1658, %v6559
    %v6772 = vmul.f32 %v1661, %v6569
    %v6773 = vmul.f32 %v1664, %v6579
    %v6774 = vmul.f32 %v1667, %v6589
    %v6775 = vmul.f32 %v1670, %v6599
    %v6776 = vmul.f32 %v1673, %v6609
    %v6777 = vmul.f32 %v1676, %v6619
    %v6778 = vmul.f32 %v1679, %v6629
    %v6779 = vmul.f32 %v1682, %v6639
    %v6780 = vmul.f32 %v1685, %v6649
    %v6781 = vmul.f32 %v1688, %v6659
    %v6782 = vmul.f32 %v1691, %v6669
    %v6783 = vmul.f32 %v1694, %v6679
    %v6784 = vmul.f32 %v1697, %v6689
    %v6785 = vmul.f32 %v1700, %v6699
    %v6786 = vmul.f32 %v1703, %v6709
    %v6787 = vmul.f32 %v1706, %v6719
    %v6788 = vmul.f32 %v1709, %v6729
    %v6789 = vmul.f32 %v1712, %v6739
    %v6790 = vmul.f32 %v1715, %v6749
    %v6791 = vmul.f32 %v1718, %v6759
    %s6792 = sld [smem:[#allocation2 + $0x2]]
    %v6793 = vstv %s6792
    %v6794 = vmul.f32 %v6760, %v6793
    %v6795 = vmul.f32 %v6761, %v6793
    %v6796 = vmul.f32 %v6762, %v6793
    %v6797 = vmul.f32 %v6763, %v6793
    %v6798 = vmul.f32 %v6764, %v6793
    %v6799 = vmul.f32 %v6765, %v6793
    %v6800 = vmul.f32 %v6766, %v6793
    %v6801 = vmul.f32 %v6767, %v6793
    %v6802 = vmul.f32 %v6768, %v6793
    %v6803 = vmul.f32 %v6769, %v6793
    %v6804 = vmul.f32 %v6770, %v6793
    %v6805 = vmul.f32 %v6771, %v6793
    %v6806 = vmul.f32 %v6772, %v6793
    %v6807 = vmul.f32 %v6773, %v6793
    %v6808 = vmul.f32 %v6774, %v6793
    %v6809 = vmul.f32 %v6775, %v6793
    %v6810 = vmul.f32 %v6776, %v6793
    %v6811 = vmul.f32 %v6777, %v6793
    %v6812 = vmul.f32 %v6778, %v6793
    %v6813 = vmul.f32 %v6779, %v6793
    %v6814 = vmul.f32 %v6780, %v6793
    %v6815 = vmul.f32 %v6781, %v6793
    %v6816 = vmul.f32 %v6782, %v6793
    %v6817 = vmul.f32 %v6783, %v6793
    %v6818 = vmul.f32 %v6784, %v6793
    %v6819 = vmul.f32 %v6785, %v6793
    %v6820 = vmul.f32 %v6786, %v6793
    %v6821 = vmul.f32 %v6787, %v6793
    %v6822 = vmul.f32 %v6788, %v6793
    %v6823 = vmul.f32 %v6789, %v6793
    %v6824 = vmul.f32 %v6790, %v6793
    %v6825 = vmul.f32 %v6791, %v6793
    %6858 = vrot.lane.b32.xlu0 %v6794, 64
    %v6859 = vpop.permute.xlu0 %6858
    %6860 = vrot.lane.b32.xlu0 %v6795, 64
    %v6861 = vpop.permute.xlu0 %6860
    %6862 = vrot.lane.b32.xlu0 %v6796, 64
    %v6863 = vpop.permute.xlu0 %6862
    %6864 = vrot.lane.b32.xlu0 %v6797, 64
    %v6865 = vpop.permute.xlu0 %6864
    %6866 = vrot.lane.b32.xlu0 %v6798, 64
    %v6867 = vpop.permute.xlu0 %6866
    %6868 = vrot.lane.b32.xlu0 %v6799, 64
    %v6869 = vpop.permute.xlu0 %6868
    %6870 = vrot.lane.b32.xlu0 %v6800, 64
    %v6871 = vpop.permute.xlu0 %6870
    %6872 = vrot.lane.b32.xlu0 %v6801, 64
    %v6873 = vpop.permute.xlu0 %6872
    %6874 = vrot.lane.b32.xlu0 %v6802, 64
    %v6875 = vpop.permute.xlu0 %6874
    %6876 = vrot.lane.b32.xlu0 %v6803, 64
    %v6877 = vpop.permute.xlu0 %6876
    %6878 = vrot.lane.b32.xlu0 %v6804, 64
    %v6879 = vpop.permute.xlu0 %6878
    %6880 = vrot.lane.b32.xlu0 %v6805, 64
    %v6881 = vpop.permute.xlu0 %6880
    %6882 = vrot.lane.b32.xlu0 %v6806, 64
    %v6883 = vpop.permute.xlu0 %6882
    %6884 = vrot.lane.b32.xlu0 %v6807, 64
    %v6885 = vpop.permute.xlu0 %6884
    %6886 = vrot.lane.b32.xlu0 %v6808, 64
    %v6887 = vpop.permute.xlu0 %6886
    %6888 = vrot.lane.b32.xlu0 %v6809, 64
    %v6889 = vpop.permute.xlu0 %6888
    %6890 = vrot.lane.b32.xlu0 %v6810, 64
    %v6891 = vpop.permute.xlu0 %6890
    %6892 = vrot.lane.b32.xlu0 %v6811, 64
    %v6893 = vpop.permute.xlu0 %6892
    %6894 = vrot.lane.b32.xlu0 %v6812, 64
    %v6895 = vpop.permute.xlu0 %6894
    %6896 = vrot.lane.b32.xlu0 %v6813, 64
    %v6897 = vpop.permute.xlu0 %6896
    %6898 = vrot.lane.b32.xlu0 %v6814, 64
    %v6899 = vpop.permute.xlu0 %6898
    %6900 = vrot.lane.b32.xlu0 %v6815, 64
    %v6901 = vpop.permute.xlu0 %6900
    %6902 = vrot.lane.b32.xlu0 %v6816, 64
    %v6903 = vpop.permute.xlu0 %6902
    %6904 = vrot.lane.b32.xlu0 %v6817, 64
    %v6905 = vpop.permute.xlu0 %6904
    %6906 = vrot.lane.b32.xlu0 %v6818, 64
    %v6907 = vpop.permute.xlu0 %6906
    %6908 = vrot.lane.b32.xlu0 %v6819, 64
    %v6909 = vpop.permute.xlu0 %6908
    %6910 = vrot.lane.b32.xlu0 %v6820, 64
    %v6911 = vpop.permute.xlu0 %6910
    %6912 = vrot.lane.b32.xlu0 %v6821, 64
    %v6913 = vpop.permute.xlu0 %6912
    %6914 = vrot.lane.b32.xlu0 %v6822, 64
    %v6915 = vpop.permute.xlu0 %6914
    %6916 = vrot.lane.b32.xlu0 %v6823, 64
    %v6917 = vpop.permute.xlu0 %6916
    %6918 = vrot.lane.b32.xlu0 %v6824, 64
    %v6919 = vpop.permute.xlu0 %6918
    %6920 = vrot.lane.b32.xlu0 %v6825, 64
    %v6921 = vpop.permute.xlu0 %6920
    %6954 = vst.msk [vmem:[%s21] sm:$0xff] %vm4543, %v6859
    %6955 = vst.msk [vmem:[%s21 + $0x18] sm:$0xff] %vm4543, %v6861
    %6956 = vst.msk [vmem:[%s21 + $0x30] sm:$0xff] %vm4543, %v6863
    %6957 = vst.msk [vmem:[%s21 + $0x48] sm:$0xff] %vm4543, %v6865
    %6958 = vst.msk [vmem:[%s21 + $0x60] sm:$0xff] %vm4543, %v6867
    %6959 = vst.msk [vmem:[%s21 + $0x78] sm:$0xff] %vm4543, %v6869
    %6960 = vst.msk [vmem:[%s21 + $0x90] sm:$0xff] %vm4543, %v6871
    %6961 = vst.msk [vmem:[%s21 + $0xa8] sm:$0xff] %vm4543, %v6873
    %6962 = vst.msk [vmem:[%s21 + $0xc0] sm:$0xff] %vm4543, %v6875
    %6963 = vst.msk [vmem:[%s21 + $0xd8] sm:$0xff] %vm4543, %v6877
    %6964 = vst.msk [vmem:[%s21 + $0xf0] sm:$0xff] %vm4543, %v6879
    %6965 = vst.msk [vmem:[%s21 + $0x108] sm:$0xff] %vm4543, %v6881
    %6966 = vst.msk [vmem:[%s21 + $0x120] sm:$0xff] %vm4543, %v6883
    %6967 = vst.msk [vmem:[%s21 + $0x138] sm:$0xff] %vm4543, %v6885
    %6968 = vst.msk [vmem:[%s21 + $0x150] sm:$0xff] %vm4543, %v6887
    %6969 = vst.msk [vmem:[%s21 + $0x168] sm:$0xff] %vm4543, %v6889
    %6970 = vst.msk [vmem:[%s21 + $0x180] sm:$0xff] %vm4543, %v6891
    %6971 = vst.msk [vmem:[%s21 + $0x198] sm:$0xff] %vm4543, %v6893
    %6972 = vst.msk [vmem:[%s21 + $0x1b0] sm:$0xff] %vm4543, %v6895
    %6973 = vst.msk [vmem:[%s21 + $0x1c8] sm:$0xff] %vm4543, %v6897
    %6974 = vst.msk [vmem:[%s21 + $0x1e0] sm:$0xff] %vm4543, %v6899
    %6975 = vst.msk [vmem:[%s21 + $0x1f8] sm:$0xff] %vm4543, %v6901
    %6976 = vst.msk [vmem:[%s21 + $0x210] sm:$0xff] %vm4543, %v6903
    %6977 = vst.msk [vmem:[%s21 + $0x228] sm:$0xff] %vm4543, %v6905
    %6978 = vst.msk [vmem:[%s21 + $0x240] sm:$0xff] %vm4543, %v6907
    %6979 = vst.msk [vmem:[%s21 + $0x258] sm:$0xff] %vm4543, %v6909
    %6980 = vst.msk [vmem:[%s21 + $0x270] sm:$0xff] %vm4543, %v6911
    %6981 = vst.msk [vmem:[%s21 + $0x288] sm:$0xff] %vm4543, %v6913
    %6982 = vst.msk [vmem:[%s21 + $0x2a0] sm:$0xff] %vm4543, %v6915
    %6983 = vst.msk [vmem:[%s21 + $0x2b8] sm:$0xff] %vm4543, %v6917
    %6984 = vst.msk [vmem:[%s21 + $0x2d0] sm:$0xff] %vm4543, %v6919
    %6985 = vst.msk [vmem:[%s21 + $0x2e8] sm:$0xff] %vm4543, %v6921
    %v6986 = vmul.f32 %v4189, %v4189
    %v6987 = vmul.f32 %v4190, %v4190
    %v6988 = vmul.f32 %v4191, %v4191
    %v6989 = vmul.f32 %v4192, %v4192
    %v6990 = vmul.f32 %v4193, %v4193
    %v6991 = vmul.f32 %v4194, %v4194
    %v6992 = vmul.f32 %v4195, %v4195
    %v6993 = vmul.f32 %v4196, %v4196
    %v6994 = vmul.f32 %v4197, %v4197
    %v6995 = vmul.f32 %v4198, %v4198
    %v6996 = vmul.f32 %v4199, %v4199
    %v6997 = vmul.f32 %v4200, %v4200
    %v6998 = vmul.f32 %v4201, %v4201
    %v6999 = vmul.f32 %v4202, %v4202
    %v7000 = vmul.f32 %v4203, %v4203
    %v7001 = vmul.f32 %v4204, %v4204
    %v7002 = vmul.f32 %v4205, %v4205
    %v7003 = vmul.f32 %v4206, %v4206
    %v7004 = vmul.f32 %v4207, %v4207
    %v7005 = vmul.f32 %v4208, %v4208
    %v7006 = vmul.f32 %v4209, %v4209
    %v7007 = vmul.f32 %v4210, %v4210
    %v7008 = vmul.f32 %v4211, %v4211
    %v7009 = vmul.f32 %v4212, %v4212
    %v7010 = vmul.f32 %v4213, %v4213
    %v7011 = vmul.f32 %v4214, %v4214
    %v7012 = vmul.f32 %v4215, %v4215
    %v7013 = vmul.f32 %v4216, %v4216
    %v7014 = vmul.f32 %v4217, %v4217
    %v7015 = vmul.f32 %v4218, %v4218
    %v7016 = vmul.f32 %v4219, %v4219
    %v7017 = vmul.f32 %v4220, %v4220
    %v7018 = vsel %vm4221, %v6986, 0.0
    %7019 = vadd.xlane.f32.xlu0 %v7018
    %v7020 = vpop.xlane.xlu0 %7019
    %v7021 = vsel %vm4221, %v6987, 0.0
    %7022 = vadd.xlane.f32.xlu0 %v7021
    %v7023 = vpop.xlane.xlu0 %7022
    %v7024 = vsel %vm4221, %v6988, 0.0
    %7025 = vadd.xlane.f32.xlu0 %v7024
    %v7026 = vpop.xlane.xlu0 %7025
    %v7027 = vsel %vm4221, %v6989, 0.0
    %7028 = vadd.xlane.f32.xlu0 %v7027
    %v7029 = vpop.xlane.xlu0 %7028
    %v7030 = vsel %vm4221, %v6990, 0.0
    %7031 = vadd.xlane.f32.xlu0 %v7030
    %v7032 = vpop.xlane.xlu0 %7031
    %v7033 = vsel %vm4221, %v6991, 0.0
    %7034 = vadd.xlane.f32.xlu0 %v7033
    %v7035 = vpop.xlane.xlu0 %7034
    %v7036 = vsel %vm4221, %v6992, 0.0
    %7037 = vadd.xlane.f32.xlu0 %v7036
    %v7038 = vpop.xlane.xlu0 %7037
    %v7039 = vsel %vm4221, %v6993, 0.0
    %7040 = vadd.xlane.f32.xlu0 %v7039
    %v7041 = vpop.xlane.xlu0 %7040
    %v7042 = vsel %vm4221, %v6994, 0.0
    %7043 = vadd.xlane.f32.xlu0 %v7042
    %v7044 = vpop.xlane.xlu0 %7043
    %v7045 = vsel %vm4221, %v6995, 0.0
    %7046 = vadd.xlane.f32.xlu0 %v7045
    %v7047 = vpop.xlane.xlu0 %7046
    %v7048 = vsel %vm4221, %v6996, 0.0
    %7049 = vadd.xlane.f32.xlu0 %v7048
    %v7050 = vpop.xlane.xlu0 %7049
    %v7051 = vsel %vm4221, %v6997, 0.0
    %7052 = vadd.xlane.f32.xlu0 %v7051
    %v7053 = vpop.xlane.xlu0 %7052
    %v7054 = vsel %vm4221, %v6998, 0.0
    %7055 = vadd.xlane.f32.xlu0 %v7054
    %v7056 = vpop.xlane.xlu0 %7055
    %v7057 = vsel %vm4221, %v6999, 0.0
    %7058 = vadd.xlane.f32.xlu0 %v7057
    %v7059 = vpop.xlane.xlu0 %7058
    %v7060 = vsel %vm4221, %v7000, 0.0
    %7061 = vadd.xlane.f32.xlu0 %v7060
    %v7062 = vpop.xlane.xlu0 %7061
    %v7063 = vsel %vm4221, %v7001, 0.0
    %7064 = vadd.xlane.f32.xlu0 %v7063
    %v7065 = vpop.xlane.xlu0 %7064
    %v7066 = vsel %vm4221, %v7002, 0.0
    %7067 = vadd.xlane.f32.xlu0 %v7066
    %v7068 = vpop.xlane.xlu0 %7067
    %v7069 = vsel %vm4221, %v7003, 0.0
    %7070 = vadd.xlane.f32.xlu0 %v7069
    %v7071 = vpop.xlane.xlu0 %7070
    %v7072 = vsel %vm4221, %v7004, 0.0
    %7073 = vadd.xlane.f32.xlu0 %v7072
    %v7074 = vpop.xlane.xlu0 %7073
    %v7075 = vsel %vm4221, %v7005, 0.0
    %7076 = vadd.xlane.f32.xlu0 %v7075
    %v7077 = vpop.xlane.xlu0 %7076
    %v7078 = vsel %vm4221, %v7006, 0.0
    %7079 = vadd.xlane.f32.xlu0 %v7078
    %v7080 = vpop.xlane.xlu0 %7079
    %v7081 = vsel %vm4221, %v7007, 0.0
    %7082 = vadd.xlane.f32.xlu0 %v7081
    %v7083 = vpop.xlane.xlu0 %7082
    %v7084 = vsel %vm4221, %v7008, 0.0
    %7085 = vadd.xlane.f32.xlu0 %v7084
    %v7086 = vpop.xlane.xlu0 %7085
    %v7087 = vsel %vm4221, %v7009, 0.0
    %7088 = vadd.xlane.f32.xlu0 %v7087
    %v7089 = vpop.xlane.xlu0 %7088
    %v7090 = vsel %vm4221, %v7010, 0.0
    %7091 = vadd.xlane.f32.xlu0 %v7090
    %v7092 = vpop.xlane.xlu0 %7091
    %v7093 = vsel %vm4221, %v7011, 0.0
    %7094 = vadd.xlane.f32.xlu0 %v7093
    %v7095 = vpop.xlane.xlu0 %7094
    %v7096 = vsel %vm4221, %v7012, 0.0
    %7097 = vadd.xlane.f32.xlu0 %v7096
    %v7098 = vpop.xlane.xlu0 %7097
    %v7099 = vsel %vm4221, %v7013, 0.0
    %7100 = vadd.xlane.f32.xlu0 %v7099
    %v7101 = vpop.xlane.xlu0 %7100
    %v7102 = vsel %vm4221, %v7014, 0.0
    %7103 = vadd.xlane.f32.xlu0 %v7102
    %v7104 = vpop.xlane.xlu0 %7103
    %v7105 = vsel %vm4221, %v7015, 0.0
    %7106 = vadd.xlane.f32.xlu0 %v7105
    %v7107 = vpop.xlane.xlu0 %7106
    %v7108 = vsel %vm4221, %v7016, 0.0
    %7109 = vadd.xlane.f32.xlu0 %v7108
    %v7110 = vpop.xlane.xlu0 %7109
    %v7111 = vsel %vm4221, %v7017, 0.0
    %7112 = vadd.xlane.f32.xlu0 %v7111
    %v7113 = vpop.xlane.xlu0 %7112
    %v7114 = vmax.f32 %v7020, 1e-24
    %v7115 = vmax.f32 %v7023, 1e-24
    %v7116 = vmax.f32 %v7026, 1e-24
    %v7117 = vmax.f32 %v7029, 1e-24
    %v7118 = vmax.f32 %v7032, 1e-24
    %v7119 = vmax.f32 %v7035, 1e-24
    %v7120 = vmax.f32 %v7038, 1e-24
    %v7121 = vmax.f32 %v7041, 1e-24
    %v7122 = vmax.f32 %v7044, 1e-24
    %v7123 = vmax.f32 %v7047, 1e-24
    %v7124 = vmax.f32 %v7050, 1e-24
    %v7125 = vmax.f32 %v7053, 1e-24
    %v7126 = vmax.f32 %v7056, 1e-24
    %v7127 = vmax.f32 %v7059, 1e-24
    %v7128 = vmax.f32 %v7062, 1e-24
    %v7129 = vmax.f32 %v7065, 1e-24
    %v7130 = vmax.f32 %v7068, 1e-24
    %v7131 = vmax.f32 %v7071, 1e-24
    %v7132 = vmax.f32 %v7074, 1e-24
    %v7133 = vmax.f32 %v7077, 1e-24
    %v7134 = vmax.f32 %v7080, 1e-24
    %v7135 = vmax.f32 %v7083, 1e-24
    %v7136 = vmax.f32 %v7086, 1e-24
    %v7137 = vmax.f32 %v7089, 1e-24
    %v7138 = vmax.f32 %v7092, 1e-24
    %v7139 = vmax.f32 %v7095, 1e-24
    %v7140 = vmax.f32 %v7098, 1e-24
    %v7141 = vmax.f32 %v7101, 1e-24
    %v7142 = vmax.f32 %v7104, 1e-24
    %v7143 = vmax.f32 %v7107, 1e-24
    %v7144 = vmax.f32 %v7110, 1e-24
    %v7145 = vmax.f32 %v7113, 1e-24
    %v7146 = vrsqrt.pop %v7114
    %v7147 = vmul.f32 %v7146, %v7114
    %v7148 = vmul.f32 %v7147, %v7146
    %v7149 = vmul.f32 0.5, %v7148
    %v7150 = vsub.f32 1.5, %v7149
    %v7151 = vmul.f32 %v7146, %v7150
    %vm7152 = vweird.f32 %v7114
    %vm7153 = vweird.f32 %v7146
    %vm7154 = vmor %vm7152, %vm7153
    %v7155 = vsel %vm7154, %v7146, %v7151
    %v7156 = vrsqrt.pop %v7115
    %v7157 = vmul.f32 %v7156, %v7115
    %v7158 = vmul.f32 %v7157, %v7156
    %v7159 = vmul.f32 0.5, %v7158
    %v7160 = vsub.f32 1.5, %v7159
    %v7161 = vmul.f32 %v7156, %v7160
    %vm7162 = vweird.f32 %v7115
    %vm7163 = vweird.f32 %v7156
    %vm7164 = vmor %vm7162, %vm7163
    %v7165 = vsel %vm7164, %v7156, %v7161
    %v7166 = vrsqrt.pop %v7116
    %v7167 = vmul.f32 %v7166, %v7116
    %v7168 = vmul.f32 %v7167, %v7166
    %v7169 = vmul.f32 0.5, %v7168
    %v7170 = vsub.f32 1.5, %v7169
    %v7171 = vmul.f32 %v7166, %v7170
    %vm7172 = vweird.f32 %v7116
    %vm7173 = vweird.f32 %v7166
    %vm7174 = vmor %vm7172, %vm7173
    %v7175 = vsel %vm7174, %v7166, %v7171
    %v7176 = vrsqrt.pop %v7117
    %v7177 = vmul.f32 %v7176, %v7117
    %v7178 = vmul.f32 %v7177, %v7176
    %v7179 = vmul.f32 0.5, %v7178
    %v7180 = vsub.f32 1.5, %v7179
    %v7181 = vmul.f32 %v7176, %v7180
    %vm7182 = vweird.f32 %v7117
    %vm7183 = vweird.f32 %v7176
    %vm7184 = vmor %vm7182, %vm7183
    %v7185 = vsel %vm7184, %v7176, %v7181
    %v7186 = vrsqrt.pop %v7118
    %v7187 = vmul.f32 %v7186, %v7118
    %v7188 = vmul.f32 %v7187, %v7186
    %v7189 = vmul.f32 0.5, %v7188
    %v7190 = vsub.f32 1.5, %v7189
    %v7191 = vmul.f32 %v7186, %v7190
    %vm7192 = vweird.f32 %v7118
    %vm7193 = vweird.f32 %v7186
    %vm7194 = vmor %vm7192, %vm7193
    %v7195 = vsel %vm7194, %v7186, %v7191
    %v7196 = vrsqrt.pop %v7119
    %v7197 = vmul.f32 %v7196, %v7119
    %v7198 = vmul.f32 %v7197, %v7196
    %v7199 = vmul.f32 0.5, %v7198
    %v7200 = vsub.f32 1.5, %v7199
    %v7201 = vmul.f32 %v7196, %v7200
    %vm7202 = vweird.f32 %v7119
    %vm7203 = vweird.f32 %v7196
    %vm7204 = vmor %vm7202, %vm7203
    %v7205 = vsel %vm7204, %v7196, %v7201
    %v7206 = vrsqrt.pop %v7120
    %v7207 = vmul.f32 %v7206, %v7120
    %v7208 = vmul.f32 %v7207, %v7206
    %v7209 = vmul.f32 0.5, %v7208
    %v7210 = vsub.f32 1.5, %v7209
    %v7211 = vmul.f32 %v7206, %v7210
    %vm7212 = vweird.f32 %v7120
    %vm7213 = vweird.f32 %v7206
    %vm7214 = vmor %vm7212, %vm7213
    %v7215 = vsel %vm7214, %v7206, %v7211
    %v7216 = vrsqrt.pop %v7121
    %v7217 = vmul.f32 %v7216, %v7121
    %v7218 = vmul.f32 %v7217, %v7216
    %v7219 = vmul.f32 0.5, %v7218
    %v7220 = vsub.f32 1.5, %v7219
    %v7221 = vmul.f32 %v7216, %v7220
    %vm7222 = vweird.f32 %v7121
    %vm7223 = vweird.f32 %v7216
    %vm7224 = vmor %vm7222, %vm7223
    %v7225 = vsel %vm7224, %v7216, %v7221
    %v7226 = vrsqrt.pop %v7122
    %v7227 = vmul.f32 %v7226, %v7122
    %v7228 = vmul.f32 %v7227, %v7226
    %v7229 = vmul.f32 0.5, %v7228
    %v7230 = vsub.f32 1.5, %v7229
    %v7231 = vmul.f32 %v7226, %v7230
    %vm7232 = vweird.f32 %v7122
    %vm7233 = vweird.f32 %v7226
    %vm7234 = vmor %vm7232, %vm7233
    %v7235 = vsel %vm7234, %v7226, %v7231
    %v7236 = vrsqrt.pop %v7123
    %v7237 = vmul.f32 %v7236, %v7123
    %v7238 = vmul.f32 %v7237, %v7236
    %v7239 = vmul.f32 0.5, %v7238
    %v7240 = vsub.f32 1.5, %v7239
    %v7241 = vmul.f32 %v7236, %v7240
    %vm7242 = vweird.f32 %v7123
    %vm7243 = vweird.f32 %v7236
    %vm7244 = vmor %vm7242, %vm7243
    %v7245 = vsel %vm7244, %v7236, %v7241
    %v7246 = vrsqrt.pop %v7124
    %v7247 = vmul.f32 %v7246, %v7124
    %v7248 = vmul.f32 %v7247, %v7246
    %v7249 = vmul.f32 0.5, %v7248
    %v7250 = vsub.f32 1.5, %v7249
    %v7251 = vmul.f32 %v7246, %v7250
    %vm7252 = vweird.f32 %v7124
    %vm7253 = vweird.f32 %v7246
    %vm7254 = vmor %vm7252, %vm7253
    %v7255 = vsel %vm7254, %v7246, %v7251
    %v7256 = vrsqrt.pop %v7125
    %v7257 = vmul.f32 %v7256, %v7125
    %v7258 = vmul.f32 %v7257, %v7256
    %v7259 = vmul.f32 0.5, %v7258
    %v7260 = vsub.f32 1.5, %v7259
    %v7261 = vmul.f32 %v7256, %v7260
    %vm7262 = vweird.f32 %v7125
    %vm7263 = vweird.f32 %v7256
    %vm7264 = vmor %vm7262, %vm7263
    %v7265 = vsel %vm7264, %v7256, %v7261
    %v7266 = vrsqrt.pop %v7126
    %v7267 = vmul.f32 %v7266, %v7126
    %v7268 = vmul.f32 %v7267, %v7266
    %v7269 = vmul.f32 0.5, %v7268
    %v7270 = vsub.f32 1.5, %v7269
    %v7271 = vmul.f32 %v7266, %v7270
    %vm7272 = vweird.f32 %v7126
    %vm7273 = vweird.f32 %v7266
    %vm7274 = vmor %vm7272, %vm7273
    %v7275 = vsel %vm7274, %v7266, %v7271
    %v7276 = vrsqrt.pop %v7127
    %v7277 = vmul.f32 %v7276, %v7127
    %v7278 = vmul.f32 %v7277, %v7276
    %v7279 = vmul.f32 0.5, %v7278
    %v7280 = vsub.f32 1.5, %v7279
    %v7281 = vmul.f32 %v7276, %v7280
    %vm7282 = vweird.f32 %v7127
    %vm7283 = vweird.f32 %v7276
    %vm7284 = vmor %vm7282, %vm7283
    %v7285 = vsel %vm7284, %v7276, %v7281
    %v7286 = vrsqrt.pop %v7128
    %v7287 = vmul.f32 %v7286, %v7128
    %v7288 = vmul.f32 %v7287, %v7286
    %v7289 = vmul.f32 0.5, %v7288
    %v7290 = vsub.f32 1.5, %v7289
    %v7291 = vmul.f32 %v7286, %v7290
    %vm7292 = vweird.f32 %v7128
    %vm7293 = vweird.f32 %v7286
    %vm7294 = vmor %vm7292, %vm7293
    %v7295 = vsel %vm7294, %v7286, %v7291
    %v7296 = vrsqrt.pop %v7129
    %v7297 = vmul.f32 %v7296, %v7129
    %v7298 = vmul.f32 %v7297, %v7296
    %v7299 = vmul.f32 0.5, %v7298
    %v7300 = vsub.f32 1.5, %v7299
    %v7301 = vmul.f32 %v7296, %v7300
    %vm7302 = vweird.f32 %v7129
    %vm7303 = vweird.f32 %v7296
    %vm7304 = vmor %vm7302, %vm7303
    %v7305 = vsel %vm7304, %v7296, %v7301
    %v7306 = vrsqrt.pop %v7130
    %v7307 = vmul.f32 %v7306, %v7130
    %v7308 = vmul.f32 %v7307, %v7306
    %v7309 = vmul.f32 0.5, %v7308
    %v7310 = vsub.f32 1.5, %v7309
    %v7311 = vmul.f32 %v7306, %v7310
    %vm7312 = vweird.f32 %v7130
    %vm7313 = vweird.f32 %v7306
    %vm7314 = vmor %vm7312, %vm7313
    %v7315 = vsel %vm7314, %v7306, %v7311
    %v7316 = vrsqrt.pop %v7131
    %v7317 = vmul.f32 %v7316, %v7131
    %v7318 = vmul.f32 %v7317, %v7316
    %v7319 = vmul.f32 0.5, %v7318
    %v7320 = vsub.f32 1.5, %v7319
    %v7321 = vmul.f32 %v7316, %v7320
    %vm7322 = vweird.f32 %v7131
    %vm7323 = vweird.f32 %v7316
    %vm7324 = vmor %vm7322, %vm7323
    %v7325 = vsel %vm7324, %v7316, %v7321
    %v7326 = vrsqrt.pop %v7132
    %v7327 = vmul.f32 %v7326, %v7132
    %v7328 = vmul.f32 %v7327, %v7326
    %v7329 = vmul.f32 0.5, %v7328
    %v7330 = vsub.f32 1.5, %v7329
    %v7331 = vmul.f32 %v7326, %v7330
    %vm7332 = vweird.f32 %v7132
    %vm7333 = vweird.f32 %v7326
    %vm7334 = vmor %vm7332, %vm7333
    %v7335 = vsel %vm7334, %v7326, %v7331
    %v7336 = vrsqrt.pop %v7133
    %v7337 = vmul.f32 %v7336, %v7133
    %v7338 = vmul.f32 %v7337, %v7336
    %v7339 = vmul.f32 0.5, %v7338
    %v7340 = vsub.f32 1.5, %v7339
    %v7341 = vmul.f32 %v7336, %v7340
    %vm7342 = vweird.f32 %v7133
    %vm7343 = vweird.f32 %v7336
    %vm7344 = vmor %vm7342, %vm7343
    %v7345 = vsel %vm7344, %v7336, %v7341
    %v7346 = vrsqrt.pop %v7134
    %v7347 = vmul.f32 %v7346, %v7134
    %v7348 = vmul.f32 %v7347, %v7346
    %v7349 = vmul.f32 0.5, %v7348
    %v7350 = vsub.f32 1.5, %v7349
    %v7351 = vmul.f32 %v7346, %v7350
    %vm7352 = vweird.f32 %v7134
    %vm7353 = vweird.f32 %v7346
    %vm7354 = vmor %vm7352, %vm7353
    %v7355 = vsel %vm7354, %v7346, %v7351
    %v7356 = vrsqrt.pop %v7135
    %v7357 = vmul.f32 %v7356, %v7135
    %v7358 = vmul.f32 %v7357, %v7356
    %v7359 = vmul.f32 0.5, %v7358
    %v7360 = vsub.f32 1.5, %v7359
    %v7361 = vmul.f32 %v7356, %v7360
    %vm7362 = vweird.f32 %v7135
    %vm7363 = vweird.f32 %v7356
    %vm7364 = vmor %vm7362, %vm7363
    %v7365 = vsel %vm7364, %v7356, %v7361
    %v7366 = vrsqrt.pop %v7136
    %v7367 = vmul.f32 %v7366, %v7136
    %v7368 = vmul.f32 %v7367, %v7366
    %v7369 = vmul.f32 0.5, %v7368
    %v7370 = vsub.f32 1.5, %v7369
    %v7371 = vmul.f32 %v7366, %v7370
    %vm7372 = vweird.f32 %v7136
    %vm7373 = vweird.f32 %v7366
    %vm7374 = vmor %vm7372, %vm7373
    %v7375 = vsel %vm7374, %v7366, %v7371
    %v7376 = vrsqrt.pop %v7137
    %v7377 = vmul.f32 %v7376, %v7137
    %v7378 = vmul.f32 %v7377, %v7376
    %v7379 = vmul.f32 0.5, %v7378
    %v7380 = vsub.f32 1.5, %v7379
    %v7381 = vmul.f32 %v7376, %v7380
    %vm7382 = vweird.f32 %v7137
    %vm7383 = vweird.f32 %v7376
    %vm7384 = vmor %vm7382, %vm7383
    %v7385 = vsel %vm7384, %v7376, %v7381
    %v7386 = vrsqrt.pop %v7138
    %v7387 = vmul.f32 %v7386, %v7138
    %v7388 = vmul.f32 %v7387, %v7386
    %v7389 = vmul.f32 0.5, %v7388
    %v7390 = vsub.f32 1.5, %v7389
    %v7391 = vmul.f32 %v7386, %v7390
    %vm7392 = vweird.f32 %v7138
    %vm7393 = vweird.f32 %v7386
    %vm7394 = vmor %vm7392, %vm7393
    %v7395 = vsel %vm7394, %v7386, %v7391
    %v7396 = vrsqrt.pop %v7139
    %v7397 = vmul.f32 %v7396, %v7139
    %v7398 = vmul.f32 %v7397, %v7396
    %v7399 = vmul.f32 0.5, %v7398
    %v7400 = vsub.f32 1.5, %v7399
    %v7401 = vmul.f32 %v7396, %v7400
    %vm7402 = vweird.f32 %v7139
    %vm7403 = vweird.f32 %v7396
    %vm7404 = vmor %vm7402, %vm7403
    %v7405 = vsel %vm7404, %v7396, %v7401
    %v7406 = vrsqrt.pop %v7140
    %v7407 = vmul.f32 %v7406, %v7140
    %v7408 = vmul.f32 %v7407, %v7406
    %v7409 = vmul.f32 0.5, %v7408
    %v7410 = vsub.f32 1.5, %v7409
    %v7411 = vmul.f32 %v7406, %v7410
    %vm7412 = vweird.f32 %v7140
    %vm7413 = vweird.f32 %v7406
    %vm7414 = vmor %vm7412, %vm7413
    %v7415 = vsel %vm7414, %v7406, %v7411
    %v7416 = vrsqrt.pop %v7141
    %v7417 = vmul.f32 %v7416, %v7141
    %v7418 = vmul.f32 %v7417, %v7416
    %v7419 = vmul.f32 0.5, %v7418
    %v7420 = vsub.f32 1.5, %v7419
    %v7421 = vmul.f32 %v7416, %v7420
    %vm7422 = vweird.f32 %v7141
    %vm7423 = vweird.f32 %v7416
    %vm7424 = vmor %vm7422, %vm7423
    %v7425 = vsel %vm7424, %v7416, %v7421
    %v7426 = vrsqrt.pop %v7142
    %v7427 = vmul.f32 %v7426, %v7142
    %v7428 = vmul.f32 %v7427, %v7426
    %v7429 = vmul.f32 0.5, %v7428
    %v7430 = vsub.f32 1.5, %v7429
    %v7431 = vmul.f32 %v7426, %v7430
    %vm7432 = vweird.f32 %v7142
    %vm7433 = vweird.f32 %v7426
    %vm7434 = vmor %vm7432, %vm7433
    %v7435 = vsel %vm7434, %v7426, %v7431
    %v7436 = vrsqrt.pop %v7143
    %v7437 = vmul.f32 %v7436, %v7143
    %v7438 = vmul.f32 %v7437, %v7436
    %v7439 = vmul.f32 0.5, %v7438
    %v7440 = vsub.f32 1.5, %v7439
    %v7441 = vmul.f32 %v7436, %v7440
    %vm7442 = vweird.f32 %v7143
    %vm7443 = vweird.f32 %v7436
    %vm7444 = vmor %vm7442, %vm7443
    %v7445 = vsel %vm7444, %v7436, %v7441
    %v7446 = vrsqrt.pop %v7144
    %v7447 = vmul.f32 %v7446, %v7144
    %v7448 = vmul.f32 %v7447, %v7446
    %v7449 = vmul.f32 0.5, %v7448
    %v7450 = vsub.f32 1.5, %v7449
    %v7451 = vmul.f32 %v7446, %v7450
    %vm7452 = vweird.f32 %v7144
    %vm7453 = vweird.f32 %v7446
    %vm7454 = vmor %vm7452, %vm7453
    %v7455 = vsel %vm7454, %v7446, %v7451
    %v7456 = vrsqrt.pop %v7145
    %v7457 = vmul.f32 %v7456, %v7145
    %v7458 = vmul.f32 %v7457, %v7456
    %v7459 = vmul.f32 0.5, %v7458
    %v7460 = vsub.f32 1.5, %v7459
    %v7461 = vmul.f32 %v7456, %v7460
    %vm7462 = vweird.f32 %v7145
    %vm7463 = vweird.f32 %v7456
    %vm7464 = vmor %vm7462, %vm7463
    %v7465 = vsel %vm7464, %v7456, %v7461
    %v7466 = vmul.f32 %v4189, %v7155
    %v7467 = vmul.f32 %v4190, %v7165
    %v7468 = vmul.f32 %v4191, %v7175
    %v7469 = vmul.f32 %v4192, %v7185
    %v7470 = vmul.f32 %v4193, %v7195
    %v7471 = vmul.f32 %v4194, %v7205
    %v7472 = vmul.f32 %v4195, %v7215
    %v7473 = vmul.f32 %v4196, %v7225
    %v7474 = vmul.f32 %v4197, %v7235
    %v7475 = vmul.f32 %v4198, %v7245
    %v7476 = vmul.f32 %v4199, %v7255
    %v7477 = vmul.f32 %v4200, %v7265
    %v7478 = vmul.f32 %v4201, %v7275
    %v7479 = vmul.f32 %v4202, %v7285
    %v7480 = vmul.f32 %v4203, %v7295
    %v7481 = vmul.f32 %v4204, %v7305
    %v7482 = vmul.f32 %v4205, %v7315
    %v7483 = vmul.f32 %v4206, %v7325
    %v7484 = vmul.f32 %v4207, %v7335
    %v7485 = vmul.f32 %v4208, %v7345
    %v7486 = vmul.f32 %v4209, %v7355
    %v7487 = vmul.f32 %v4210, %v7365
    %v7488 = vmul.f32 %v4211, %v7375
    %v7489 = vmul.f32 %v4212, %v7385
    %v7490 = vmul.f32 %v4213, %v7395
    %v7491 = vmul.f32 %v4214, %v7405
    %v7492 = vmul.f32 %v4215, %v7415
    %v7493 = vmul.f32 %v4216, %v7425
    %v7494 = vmul.f32 %v4217, %v7435
    %v7495 = vmul.f32 %v4218, %v7445
    %v7496 = vmul.f32 %v4219, %v7455
    %v7497 = vmul.f32 %v4220, %v7465
    %s7498 = sld [smem:[#allocation2 + $0x3]]
    %v7499 = vstv %s7498
    %v7500 = vmul.f32 %v7466, %v7499
    %v7501 = vmul.f32 %v7467, %v7499
    %v7502 = vmul.f32 %v7468, %v7499
    %v7503 = vmul.f32 %v7469, %v7499
    %v7504 = vmul.f32 %v7470, %v7499
    %v7505 = vmul.f32 %v7471, %v7499
    %v7506 = vmul.f32 %v7472, %v7499
    %v7507 = vmul.f32 %v7473, %v7499
    %v7508 = vmul.f32 %v7474, %v7499
    %v7509 = vmul.f32 %v7475, %v7499
    %v7510 = vmul.f32 %v7476, %v7499
    %v7511 = vmul.f32 %v7477, %v7499
    %v7512 = vmul.f32 %v7478, %v7499
    %v7513 = vmul.f32 %v7479, %v7499
    %v7514 = vmul.f32 %v7480, %v7499
    %v7515 = vmul.f32 %v7481, %v7499
    %v7516 = vmul.f32 %v7482, %v7499
    %v7517 = vmul.f32 %v7483, %v7499
    %v7518 = vmul.f32 %v7484, %v7499
    %v7519 = vmul.f32 %v7485, %v7499
    %v7520 = vmul.f32 %v7486, %v7499
    %v7521 = vmul.f32 %v7487, %v7499
    %v7522 = vmul.f32 %v7488, %v7499
    %v7523 = vmul.f32 %v7489, %v7499
    %v7524 = vmul.f32 %v7490, %v7499
    %v7525 = vmul.f32 %v7491, %v7499
    %v7526 = vmul.f32 %v7492, %v7499
    %v7527 = vmul.f32 %v7493, %v7499
    %v7528 = vmul.f32 %v7494, %v7499
    %v7529 = vmul.f32 %v7495, %v7499
    %v7530 = vmul.f32 %v7496, %v7499
    %v7531 = vmul.f32 %v7497, %v7499
    %7564 = vrot.lane.b32.xlu0 %v7500, 96
    %v7565 = vpop.permute.xlu0 %7564
    %7566 = vrot.lane.b32.xlu0 %v7501, 96
    %v7567 = vpop.permute.xlu0 %7566
    %7568 = vrot.lane.b32.xlu0 %v7502, 96
    %v7569 = vpop.permute.xlu0 %7568
    %7570 = vrot.lane.b32.xlu0 %v7503, 96
    %v7571 = vpop.permute.xlu0 %7570
    %7572 = vrot.lane.b32.xlu0 %v7504, 96
    %v7573 = vpop.permute.xlu0 %7572
    %7574 = vrot.lane.b32.xlu0 %v7505, 96
    %v7575 = vpop.permute.xlu0 %7574
    %7576 = vrot.lane.b32.xlu0 %v7506, 96
    %v7577 = vpop.permute.xlu0 %7576
    %7578 = vrot.lane.b32.xlu0 %v7507, 96
    %v7579 = vpop.permute.xlu0 %7578
    %7580 = vrot.lane.b32.xlu0 %v7508, 96
    %v7581 = vpop.permute.xlu0 %7580
    %7582 = vrot.lane.b32.xlu0 %v7509, 96
    %v7583 = vpop.permute.xlu0 %7582
    %7584 = vrot.lane.b32.xlu0 %v7510, 96
    %v7585 = vpop.permute.xlu0 %7584
    %7586 = vrot.lane.b32.xlu0 %v7511, 96
    %v7587 = vpop.permute.xlu0 %7586
    %7588 = vrot.lane.b32.xlu0 %v7512, 96
    %v7589 = vpop.permute.xlu0 %7588
    %7590 = vrot.lane.b32.xlu0 %v7513, 96
    %v7591 = vpop.permute.xlu0 %7590
    %7592 = vrot.lane.b32.xlu0 %v7514, 96
    %v7593 = vpop.permute.xlu0 %7592
    %7594 = vrot.lane.b32.xlu0 %v7515, 96
    %v7595 = vpop.permute.xlu0 %7594
    %7596 = vrot.lane.b32.xlu0 %v7516, 96
    %v7597 = vpop.permute.xlu0 %7596
    %7598 = vrot.lane.b32.xlu0 %v7517, 96
    %v7599 = vpop.permute.xlu0 %7598
    %7600 = vrot.lane.b32.xlu0 %v7518, 96
    %v7601 = vpop.permute.xlu0 %7600
    %7602 = vrot.lane.b32.xlu0 %v7519, 96
    %v7603 = vpop.permute.xlu0 %7602
    %7604 = vrot.lane.b32.xlu0 %v7520, 96
    %v7605 = vpop.permute.xlu0 %7604
    %7606 = vrot.lane.b32.xlu0 %v7521, 96
    %v7607 = vpop.permute.xlu0 %7606
    %7608 = vrot.lane.b32.xlu0 %v7522, 96
    %v7609 = vpop.permute.xlu0 %7608
    %7610 = vrot.lane.b32.xlu0 %v7523, 96
    %v7611 = vpop.permute.xlu0 %7610
    %7612 = vrot.lane.b32.xlu0 %v7524, 96
    %v7613 = vpop.permute.xlu0 %7612
    %7614 = vrot.lane.b32.xlu0 %v7525, 96
    %v7615 = vpop.permute.xlu0 %7614
    %7616 = vrot.lane.b32.xlu0 %v7526, 96
    %v7617 = vpop.permute.xlu0 %7616
    %7618 = vrot.lane.b32.xlu0 %v7527, 96
    %v7619 = vpop.permute.xlu0 %7618
    %7620 = vrot.lane.b32.xlu0 %v7528, 96
    %v7621 = vpop.permute.xlu0 %7620
    %7622 = vrot.lane.b32.xlu0 %v7529, 96
    %v7623 = vpop.permute.xlu0 %7622
    %7624 = vrot.lane.b32.xlu0 %v7530, 96
    %v7625 = vpop.permute.xlu0 %7624
    %7626 = vrot.lane.b32.xlu0 %v7531, 96
    %v7627 = vpop.permute.xlu0 %7626
    %7660 = vst.msk [vmem:[%s21] sm:$0xff] %vm4704, %v7565
    %7661 = vst.msk [vmem:[%s21 + $0x18] sm:$0xff] %vm4704, %v7567
    %7662 = vst.msk [vmem:[%s21 + $0x30] sm:$0xff] %vm4704, %v7569
    %7663 = vst.msk [vmem:[%s21 + $0x48] sm:$0xff] %vm4704, %v7571
    %7664 = vst.msk [vmem:[%s21 + $0x60] sm:$0xff] %vm4704, %v7573
    %7665 = vst.msk [vmem:[%s21 + $0x78] sm:$0xff] %vm4704, %v7575
    %7666 = vst.msk [vmem:[%s21 + $0x90] sm:$0xff] %vm4704, %v7577
    %7667 = vst.msk [vmem:[%s21 + $0xa8] sm:$0xff] %vm4704, %v7579
    %7668 = vst.msk [vmem:[%s21 + $0xc0] sm:$0xff] %vm4704, %v7581
    %7669 = vst.msk [vmem:[%s21 + $0xd8] sm:$0xff] %vm4704, %v7583
    %7670 = vst.msk [vmem:[%s21 + $0xf0] sm:$0xff] %vm4704, %v7585
    %7671 = vst.msk [vmem:[%s21 + $0x108] sm:$0xff] %vm4704, %v7587
    %7672 = vst.msk [vmem:[%s21 + $0x120] sm:$0xff] %vm4704, %v7589
    %7673 = vst.msk [vmem:[%s21 + $0x138] sm:$0xff] %vm4704, %v7591
    %7674 = vst.msk [vmem:[%s21 + $0x150] sm:$0xff] %vm4704, %v7593
    %7675 = vst.msk [vmem:[%s21 + $0x168] sm:$0xff] %vm4704, %v7595
    %7676 = vst.msk [vmem:[%s21 + $0x180] sm:$0xff] %vm4704, %v7597
    %7677 = vst.msk [vmem:[%s21 + $0x198] sm:$0xff] %vm4704, %v7599
    %7678 = vst.msk [vmem:[%s21 + $0x1b0] sm:$0xff] %vm4704, %v7601
    %7679 = vst.msk [vmem:[%s21 + $0x1c8] sm:$0xff] %vm4704, %v7603
    %7680 = vst.msk [vmem:[%s21 + $0x1e0] sm:$0xff] %vm4704, %v7605
    %7681 = vst.msk [vmem:[%s21 + $0x1f8] sm:$0xff] %vm4704, %v7607
    %7682 = vst.msk [vmem:[%s21 + $0x210] sm:$0xff] %vm4704, %v7609
    %7683 = vst.msk [vmem:[%s21 + $0x228] sm:$0xff] %vm4704, %v7611
    %7684 = vst.msk [vmem:[%s21 + $0x240] sm:$0xff] %vm4704, %v7613
    %7685 = vst.msk [vmem:[%s21 + $0x258] sm:$0xff] %vm4704, %v7615
    %7686 = vst.msk [vmem:[%s21 + $0x270] sm:$0xff] %vm4704, %v7617
    %7687 = vst.msk [vmem:[%s21 + $0x288] sm:$0xff] %vm4704, %v7619
    %7688 = vst.msk [vmem:[%s21 + $0x2a0] sm:$0xff] %vm4704, %v7621
    %7689 = vst.msk [vmem:[%s21 + $0x2b8] sm:$0xff] %vm4704, %v7623
    %7690 = vst.msk [vmem:[%s21 + $0x2d0] sm:$0xff] %vm4704, %v7625
    %7691 = vst.msk [vmem:[%s21 + $0x2e8] sm:$0xff] %vm4704, %v7627
    %v7692 = vmul.f32 %v3588, %v3588
    %v7693 = vmul.f32 %v3591, %v3591
    %v7694 = vmul.f32 %v3594, %v3594
    %v7695 = vmul.f32 %v3597, %v3597
    %v7696 = vmul.f32 %v3600, %v3600
    %v7697 = vmul.f32 %v3603, %v3603
    %v7698 = vmul.f32 %v3606, %v3606
    %v7699 = vmul.f32 %v3609, %v3609
    %v7700 = vmul.f32 %v3612, %v3612
    %v7701 = vmul.f32 %v3615, %v3615
    %v7702 = vmul.f32 %v3618, %v3618
    %v7703 = vmul.f32 %v3621, %v3621
    %v7704 = vmul.f32 %v3624, %v3624
    %v7705 = vmul.f32 %v3627, %v3627
    %v7706 = vmul.f32 %v3630, %v3630
    %v7707 = vmul.f32 %v3633, %v3633
    %v7708 = vmul.f32 %v3636, %v3636
    %v7709 = vmul.f32 %v3639, %v3639
    %v7710 = vmul.f32 %v3642, %v3642
    %v7711 = vmul.f32 %v3645, %v3645
    %v7712 = vmul.f32 %v3648, %v3648
    %v7713 = vmul.f32 %v3651, %v3651
    %v7714 = vmul.f32 %v3654, %v3654
    %v7715 = vmul.f32 %v3657, %v3657
    %v7716 = vmul.f32 %v3660, %v3660
    %v7717 = vmul.f32 %v3663, %v3663
    %v7718 = vmul.f32 %v3666, %v3666
    %v7719 = vmul.f32 %v3669, %v3669
    %v7720 = vmul.f32 %v3672, %v3672
    %v7721 = vmul.f32 %v3675, %v3675
    %v7722 = vmul.f32 %v3678, %v3678
    %v7723 = vmul.f32 %v3681, %v3681
    %v7724 = vsel %vm4221, %v7692, 0.0
    %7725 = vadd.xlane.f32.xlu0 %v7724
    %v7726 = vpop.xlane.xlu0 %7725
    %v7727 = vsel %vm4221, %v7693, 0.0
    %7728 = vadd.xlane.f32.xlu0 %v7727
    %v7729 = vpop.xlane.xlu0 %7728
    %v7730 = vsel %vm4221, %v7694, 0.0
    %7731 = vadd.xlane.f32.xlu0 %v7730
    %v7732 = vpop.xlane.xlu0 %7731
    %v7733 = vsel %vm4221, %v7695, 0.0
    %7734 = vadd.xlane.f32.xlu0 %v7733
    %v7735 = vpop.xlane.xlu0 %7734
    %v7736 = vsel %vm4221, %v7696, 0.0
    %7737 = vadd.xlane.f32.xlu0 %v7736
    %v7738 = vpop.xlane.xlu0 %7737
    %v7739 = vsel %vm4221, %v7697, 0.0
    %7740 = vadd.xlane.f32.xlu0 %v7739
    %v7741 = vpop.xlane.xlu0 %7740
    %v7742 = vsel %vm4221, %v7698, 0.0
    %7743 = vadd.xlane.f32.xlu0 %v7742
    %v7744 = vpop.xlane.xlu0 %7743
    %v7745 = vsel %vm4221, %v7699, 0.0
    %7746 = vadd.xlane.f32.xlu0 %v7745
    %v7747 = vpop.xlane.xlu0 %7746
    %v7748 = vsel %vm4221, %v7700, 0.0
    %7749 = vadd.xlane.f32.xlu0 %v7748
    %v7750 = vpop.xlane.xlu0 %7749
    %v7751 = vsel %vm4221, %v7701, 0.0
    %7752 = vadd.xlane.f32.xlu0 %v7751
    %v7753 = vpop.xlane.xlu0 %7752
    %v7754 = vsel %vm4221, %v7702, 0.0
    %7755 = vadd.xlane.f32.xlu0 %v7754
    %v7756 = vpop.xlane.xlu0 %7755
    %v7757 = vsel %vm4221, %v7703, 0.0
    %7758 = vadd.xlane.f32.xlu0 %v7757
    %v7759 = vpop.xlane.xlu0 %7758
    %v7760 = vsel %vm4221, %v7704, 0.0
    %7761 = vadd.xlane.f32.xlu0 %v7760
    %v7762 = vpop.xlane.xlu0 %7761
    %v7763 = vsel %vm4221, %v7705, 0.0
    %7764 = vadd.xlane.f32.xlu0 %v7763
    %v7765 = vpop.xlane.xlu0 %7764
    %v7766 = vsel %vm4221, %v7706, 0.0
    %7767 = vadd.xlane.f32.xlu0 %v7766
    %v7768 = vpop.xlane.xlu0 %7767
    %v7769 = vsel %vm4221, %v7707, 0.0
    %7770 = vadd.xlane.f32.xlu0 %v7769
    %v7771 = vpop.xlane.xlu0 %7770
    %v7772 = vsel %vm4221, %v7708, 0.0
    %7773 = vadd.xlane.f32.xlu0 %v7772
    %v7774 = vpop.xlane.xlu0 %7773
    %v7775 = vsel %vm4221, %v7709, 0.0
    %7776 = vadd.xlane.f32.xlu0 %v7775
    %v7777 = vpop.xlane.xlu0 %7776
    %v7778 = vsel %vm4221, %v7710, 0.0
    %7779 = vadd.xlane.f32.xlu0 %v7778
    %v7780 = vpop.xlane.xlu0 %7779
    %v7781 = vsel %vm4221, %v7711, 0.0
    %7782 = vadd.xlane.f32.xlu0 %v7781
    %v7783 = vpop.xlane.xlu0 %7782
    %v7784 = vsel %vm4221, %v7712, 0.0
    %7785 = vadd.xlane.f32.xlu0 %v7784
    %v7786 = vpop.xlane.xlu0 %7785
    %v7787 = vsel %vm4221, %v7713, 0.0
    %7788 = vadd.xlane.f32.xlu0 %v7787
    %v7789 = vpop.xlane.xlu0 %7788
    %v7790 = vsel %vm4221, %v7714, 0.0
    %7791 = vadd.xlane.f32.xlu0 %v7790
    %v7792 = vpop.xlane.xlu0 %7791
    %v7793 = vsel %vm4221, %v7715, 0.0
    %7794 = vadd.xlane.f32.xlu0 %v7793
    %v7795 = vpop.xlane.xlu0 %7794
    %v7796 = vsel %vm4221, %v7716, 0.0
    %7797 = vadd.xlane.f32.xlu0 %v7796
    %v7798 = vpop.xlane.xlu0 %7797
    %v7799 = vsel %vm4221, %v7717, 0.0
    %7800 = vadd.xlane.f32.xlu0 %v7799
    %v7801 = vpop.xlane.xlu0 %7800
    %v7802 = vsel %vm4221, %v7718, 0.0
    %7803 = vadd.xlane.f32.xlu0 %v7802
    %v7804 = vpop.xlane.xlu0 %7803
    %v7805 = vsel %vm4221, %v7719, 0.0
    %7806 = vadd.xlane.f32.xlu0 %v7805
    %v7807 = vpop.xlane.xlu0 %7806
    %v7808 = vsel %vm4221, %v7720, 0.0
    %7809 = vadd.xlane.f32.xlu0 %v7808
    %v7810 = vpop.xlane.xlu0 %7809
    %v7811 = vsel %vm4221, %v7721, 0.0
    %7812 = vadd.xlane.f32.xlu0 %v7811
    %v7813 = vpop.xlane.xlu0 %7812
    %v7814 = vsel %vm4221, %v7722, 0.0
    %7815 = vadd.xlane.f32.xlu0 %v7814
    %v7816 = vpop.xlane.xlu0 %7815
    %v7817 = vsel %vm4221, %v7723, 0.0
    %7818 = vadd.xlane.f32.xlu0 %v7817
    %v7819 = vpop.xlane.xlu0 %7818
    %v7820 = vmax.f32 %v7726, 1e-24
    %v7821 = vmax.f32 %v7729, 1e-24
    %v7822 = vmax.f32 %v7732, 1e-24
    %v7823 = vmax.f32 %v7735, 1e-24
    %v7824 = vmax.f32 %v7738, 1e-24
    %v7825 = vmax.f32 %v7741, 1e-24
    %v7826 = vmax.f32 %v7744, 1e-24
    %v7827 = vmax.f32 %v7747, 1e-24
    %v7828 = vmax.f32 %v7750, 1e-24
    %v7829 = vmax.f32 %v7753, 1e-24
    %v7830 = vmax.f32 %v7756, 1e-24
    %v7831 = vmax.f32 %v7759, 1e-24
    %v7832 = vmax.f32 %v7762, 1e-24
    %v7833 = vmax.f32 %v7765, 1e-24
    %v7834 = vmax.f32 %v7768, 1e-24
    %v7835 = vmax.f32 %v7771, 1e-24
    %v7836 = vmax.f32 %v7774, 1e-24
    %v7837 = vmax.f32 %v7777, 1e-24
    %v7838 = vmax.f32 %v7780, 1e-24
    %v7839 = vmax.f32 %v7783, 1e-24
    %v7840 = vmax.f32 %v7786, 1e-24
    %v7841 = vmax.f32 %v7789, 1e-24
    %v7842 = vmax.f32 %v7792, 1e-24
    %v7843 = vmax.f32 %v7795, 1e-24
    %v7844 = vmax.f32 %v7798, 1e-24
    %v7845 = vmax.f32 %v7801, 1e-24
    %v7846 = vmax.f32 %v7804, 1e-24
    %v7847 = vmax.f32 %v7807, 1e-24
    %v7848 = vmax.f32 %v7810, 1e-24
    %v7849 = vmax.f32 %v7813, 1e-24
    %v7850 = vmax.f32 %v7816, 1e-24
    %v7851 = vmax.f32 %v7819, 1e-24
    %v7852 = vrsqrt.pop %v7820
    %v7853 = vmul.f32 %v7852, %v7820
    %v7854 = vmul.f32 %v7853, %v7852
    %v7855 = vmul.f32 0.5, %v7854
    %v7856 = vsub.f32 1.5, %v7855
    %v7857 = vmul.f32 %v7852, %v7856
    %vm7858 = vweird.f32 %v7820
    %vm7859 = vweird.f32 %v7852
    %vm7860 = vmor %vm7858, %vm7859
    %v7861 = vsel %vm7860, %v7852, %v7857
    %v7862 = vrsqrt.pop %v7821
    %v7863 = vmul.f32 %v7862, %v7821
    %v7864 = vmul.f32 %v7863, %v7862
    %v7865 = vmul.f32 0.5, %v7864
    %v7866 = vsub.f32 1.5, %v7865
    %v7867 = vmul.f32 %v7862, %v7866
    %vm7868 = vweird.f32 %v7821
    %vm7869 = vweird.f32 %v7862
    %vm7870 = vmor %vm7868, %vm7869
    %v7871 = vsel %vm7870, %v7862, %v7867
    %v7872 = vrsqrt.pop %v7822
    %v7873 = vmul.f32 %v7872, %v7822
    %v7874 = vmul.f32 %v7873, %v7872
    %v7875 = vmul.f32 0.5, %v7874
    %v7876 = vsub.f32 1.5, %v7875
    %v7877 = vmul.f32 %v7872, %v7876
    %vm7878 = vweird.f32 %v7822
    %vm7879 = vweird.f32 %v7872
    %vm7880 = vmor %vm7878, %vm7879
    %v7881 = vsel %vm7880, %v7872, %v7877
    %v7882 = vrsqrt.pop %v7823
    %v7883 = vmul.f32 %v7882, %v7823
    %v7884 = vmul.f32 %v7883, %v7882
    %v7885 = vmul.f32 0.5, %v7884
    %v7886 = vsub.f32 1.5, %v7885
    %v7887 = vmul.f32 %v7882, %v7886
    %vm7888 = vweird.f32 %v7823
    %vm7889 = vweird.f32 %v7882
    %vm7890 = vmor %vm7888, %vm7889
    %v7891 = vsel %vm7890, %v7882, %v7887
    %v7892 = vrsqrt.pop %v7824
    %v7893 = vmul.f32 %v7892, %v7824
    %v7894 = vmul.f32 %v7893, %v7892
    %v7895 = vmul.f32 0.5, %v7894
    %v7896 = vsub.f32 1.5, %v7895
    %v7897 = vmul.f32 %v7892, %v7896
    %vm7898 = vweird.f32 %v7824
    %vm7899 = vweird.f32 %v7892
    %vm7900 = vmor %vm7898, %vm7899
    %v7901 = vsel %vm7900, %v7892, %v7897
    %v7902 = vrsqrt.pop %v7825
    %v7903 = vmul.f32 %v7902, %v7825
    %v7904 = vmul.f32 %v7903, %v7902
    %v7905 = vmul.f32 0.5, %v7904
    %v7906 = vsub.f32 1.5, %v7905
    %v7907 = vmul.f32 %v7902, %v7906
    %vm7908 = vweird.f32 %v7825
    %vm7909 = vweird.f32 %v7902
    %vm7910 = vmor %vm7908, %vm7909
    %v7911 = vsel %vm7910, %v7902, %v7907
    %v7912 = vrsqrt.pop %v7826
    %v7913 = vmul.f32 %v7912, %v7826
    %v7914 = vmul.f32 %v7913, %v7912
    %v7915 = vmul.f32 0.5, %v7914
    %v7916 = vsub.f32 1.5, %v7915
    %v7917 = vmul.f32 %v7912, %v7916
    %vm7918 = vweird.f32 %v7826
    %vm7919 = vweird.f32 %v7912
    %vm7920 = vmor %vm7918, %vm7919
    %v7921 = vsel %vm7920, %v7912, %v7917
    %v7922 = vrsqrt.pop %v7827
    %v7923 = vmul.f32 %v7922, %v7827
    %v7924 = vmul.f32 %v7923, %v7922
    %v7925 = vmul.f32 0.5, %v7924
    %v7926 = vsub.f32 1.5, %v7925
    %v7927 = vmul.f32 %v7922, %v7926
    %vm7928 = vweird.f32 %v7827
    %vm7929 = vweird.f32 %v7922
    %vm7930 = vmor %vm7928, %vm7929
    %v7931 = vsel %vm7930, %v7922, %v7927
    %v7932 = vrsqrt.pop %v7828
    %v7933 = vmul.f32 %v7932, %v7828
    %v7934 = vmul.f32 %v7933, %v7932
    %v7935 = vmul.f32 0.5, %v7934
    %v7936 = vsub.f32 1.5, %v7935
    %v7937 = vmul.f32 %v7932, %v7936
    %vm7938 = vweird.f32 %v7828
    %vm7939 = vweird.f32 %v7932
    %vm7940 = vmor %vm7938, %vm7939
    %v7941 = vsel %vm7940, %v7932, %v7937
    %v7942 = vrsqrt.pop %v7829
    %v7943 = vmul.f32 %v7942, %v7829
    %v7944 = vmul.f32 %v7943, %v7942
    %v7945 = vmul.f32 0.5, %v7944
    %v7946 = vsub.f32 1.5, %v7945
    %v7947 = vmul.f32 %v7942, %v7946
    %vm7948 = vweird.f32 %v7829
    %vm7949 = vweird.f32 %v7942
    %vm7950 = vmor %vm7948, %vm7949
    %v7951 = vsel %vm7950, %v7942, %v7947
    %v7952 = vrsqrt.pop %v7830
    %v7953 = vmul.f32 %v7952, %v7830
    %v7954 = vmul.f32 %v7953, %v7952
    %v7955 = vmul.f32 0.5, %v7954
    %v7956 = vsub.f32 1.5, %v7955
    %v7957 = vmul.f32 %v7952, %v7956
    %vm7958 = vweird.f32 %v7830
    %vm7959 = vweird.f32 %v7952
    %vm7960 = vmor %vm7958, %vm7959
    %v7961 = vsel %vm7960, %v7952, %v7957
    %v7962 = vrsqrt.pop %v7831
    %v7963 = vmul.f32 %v7962, %v7831
    %v7964 = vmul.f32 %v7963, %v7962
    %v7965 = vmul.f32 0.5, %v7964
    %v7966 = vsub.f32 1.5, %v7965
    %v7967 = vmul.f32 %v7962, %v7966
    %vm7968 = vweird.f32 %v7831
    %vm7969 = vweird.f32 %v7962
    %vm7970 = vmor %vm7968, %vm7969
    %v7971 = vsel %vm7970, %v7962, %v7967
    %v7972 = vrsqrt.pop %v7832
    %v7973 = vmul.f32 %v7972, %v7832
    %v7974 = vmul.f32 %v7973, %v7972
    %v7975 = vmul.f32 0.5, %v7974
    %v7976 = vsub.f32 1.5, %v7975
    %v7977 = vmul.f32 %v7972, %v7976
    %vm7978 = vweird.f32 %v7832
    %vm7979 = vweird.f32 %v7972
    %vm7980 = vmor %vm7978, %vm7979
    %v7981 = vsel %vm7980, %v7972, %v7977
    %v7982 = vrsqrt.pop %v7833
    %v7983 = vmul.f32 %v7982, %v7833
    %v7984 = vmul.f32 %v7983, %v7982
    %v7985 = vmul.f32 0.5, %v7984
    %v7986 = vsub.f32 1.5, %v7985
    %v7987 = vmul.f32 %v7982, %v7986
    %vm7988 = vweird.f32 %v7833
    %vm7989 = vweird.f32 %v7982
    %vm7990 = vmor %vm7988, %vm7989
    %v7991 = vsel %vm7990, %v7982, %v7987
    %v7992 = vrsqrt.pop %v7834
    %v7993 = vmul.f32 %v7992, %v7834
    %v7994 = vmul.f32 %v7993, %v7992
    %v7995 = vmul.f32 0.5, %v7994
    %v7996 = vsub.f32 1.5, %v7995
    %v7997 = vmul.f32 %v7992, %v7996
    %vm7998 = vweird.f32 %v7834
    %vm7999 = vweird.f32 %v7992
    %vm8000 = vmor %vm7998, %vm7999
    %v8001 = vsel %vm8000, %v7992, %v7997
    %v8002 = vrsqrt.pop %v7835
    %v8003 = vmul.f32 %v8002, %v7835
    %v8004 = vmul.f32 %v8003, %v8002
    %v8005 = vmul.f32 0.5, %v8004
    %v8006 = vsub.f32 1.5, %v8005
    %v8007 = vmul.f32 %v8002, %v8006
    %vm8008 = vweird.f32 %v7835
    %vm8009 = vweird.f32 %v8002
    %vm8010 = vmor %vm8008, %vm8009
    %v8011 = vsel %vm8010, %v8002, %v8007
    %v8012 = vrsqrt.pop %v7836
    %v8013 = vmul.f32 %v8012, %v7836
    %v8014 = vmul.f32 %v8013, %v8012
    %v8015 = vmul.f32 0.5, %v8014
    %v8016 = vsub.f32 1.5, %v8015
    %v8017 = vmul.f32 %v8012, %v8016
    %vm8018 = vweird.f32 %v7836
    %vm8019 = vweird.f32 %v8012
    %vm8020 = vmor %vm8018, %vm8019
    %v8021 = vsel %vm8020, %v8012, %v8017
    %v8022 = vrsqrt.pop %v7837
    %v8023 = vmul.f32 %v8022, %v7837
    %v8024 = vmul.f32 %v8023, %v8022
    %v8025 = vmul.f32 0.5, %v8024
    %v8026 = vsub.f32 1.5, %v8025
    %v8027 = vmul.f32 %v8022, %v8026
    %vm8028 = vweird.f32 %v7837
    %vm8029 = vweird.f32 %v8022
    %vm8030 = vmor %vm8028, %vm8029
    %v8031 = vsel %vm8030, %v8022, %v8027
    %v8032 = vrsqrt.pop %v7838
    %v8033 = vmul.f32 %v8032, %v7838
    %v8034 = vmul.f32 %v8033, %v8032
    %v8035 = vmul.f32 0.5, %v8034
    %v8036 = vsub.f32 1.5, %v8035
    %v8037 = vmul.f32 %v8032, %v8036
    %vm8038 = vweird.f32 %v7838
    %vm8039 = vweird.f32 %v8032
    %vm8040 = vmor %vm8038, %vm8039
    %v8041 = vsel %vm8040, %v8032, %v8037
    %v8042 = vrsqrt.pop %v7839
    %v8043 = vmul.f32 %v8042, %v7839
    %v8044 = vmul.f32 %v8043, %v8042
    %v8045 = vmul.f32 0.5, %v8044
    %v8046 = vsub.f32 1.5, %v8045
    %v8047 = vmul.f32 %v8042, %v8046
    %vm8048 = vweird.f32 %v7839
    %vm8049 = vweird.f32 %v8042
    %vm8050 = vmor %vm8048, %vm8049
    %v8051 = vsel %vm8050, %v8042, %v8047
    %v8052 = vrsqrt.pop %v7840
    %v8053 = vmul.f32 %v8052, %v7840
    %v8054 = vmul.f32 %v8053, %v8052
    %v8055 = vmul.f32 0.5, %v8054
    %v8056 = vsub.f32 1.5, %v8055
    %v8057 = vmul.f32 %v8052, %v8056
    %vm8058 = vweird.f32 %v7840
    %vm8059 = vweird.f32 %v8052
    %vm8060 = vmor %vm8058, %vm8059
    %v8061 = vsel %vm8060, %v8052, %v8057
    %v8062 = vrsqrt.pop %v7841
    %v8063 = vmul.f32 %v8062, %v7841
    %v8064 = vmul.f32 %v8063, %v8062
    %v8065 = vmul.f32 0.5, %v8064
    %v8066 = vsub.f32 1.5, %v8065
    %v8067 = vmul.f32 %v8062, %v8066
    %vm8068 = vweird.f32 %v7841
    %vm8069 = vweird.f32 %v8062
    %vm8070 = vmor %vm8068, %vm8069
    %v8071 = vsel %vm8070, %v8062, %v8067
    %v8072 = vrsqrt.pop %v7842
    %v8073 = vmul.f32 %v8072, %v7842
    %v8074 = vmul.f32 %v8073, %v8072
    %v8075 = vmul.f32 0.5, %v8074
    %v8076 = vsub.f32 1.5, %v8075
    %v8077 = vmul.f32 %v8072, %v8076
    %vm8078 = vweird.f32 %v7842
    %vm8079 = vweird.f32 %v8072
    %vm8080 = vmor %vm8078, %vm8079
    %v8081 = vsel %vm8080, %v8072, %v8077
    %v8082 = vrsqrt.pop %v7843
    %v8083 = vmul.f32 %v8082, %v7843
    %v8084 = vmul.f32 %v8083, %v8082
    %v8085 = vmul.f32 0.5, %v8084
    %v8086 = vsub.f32 1.5, %v8085
    %v8087 = vmul.f32 %v8082, %v8086
    %vm8088 = vweird.f32 %v7843
    %vm8089 = vweird.f32 %v8082
    %vm8090 = vmor %vm8088, %vm8089
    %v8091 = vsel %vm8090, %v8082, %v8087
    %v8092 = vrsqrt.pop %v7844
    %v8093 = vmul.f32 %v8092, %v7844
    %v8094 = vmul.f32 %v8093, %v8092
    %v8095 = vmul.f32 0.5, %v8094
    %v8096 = vsub.f32 1.5, %v8095
    %v8097 = vmul.f32 %v8092, %v8096
    %vm8098 = vweird.f32 %v7844
    %vm8099 = vweird.f32 %v8092
    %vm8100 = vmor %vm8098, %vm8099
    %v8101 = vsel %vm8100, %v8092, %v8097
    %v8102 = vrsqrt.pop %v7845
    %v8103 = vmul.f32 %v8102, %v7845
    %v8104 = vmul.f32 %v8103, %v8102
    %v8105 = vmul.f32 0.5, %v8104
    %v8106 = vsub.f32 1.5, %v8105
    %v8107 = vmul.f32 %v8102, %v8106
    %vm8108 = vweird.f32 %v7845
    %vm8109 = vweird.f32 %v8102
    %vm8110 = vmor %vm8108, %vm8109
    %v8111 = vsel %vm8110, %v8102, %v8107
    %v8112 = vrsqrt.pop %v7846
    %v8113 = vmul.f32 %v8112, %v7846
    %v8114 = vmul.f32 %v8113, %v8112
    %v8115 = vmul.f32 0.5, %v8114
    %v8116 = vsub.f32 1.5, %v8115
    %v8117 = vmul.f32 %v8112, %v8116
    %vm8118 = vweird.f32 %v7846
    %vm8119 = vweird.f32 %v8112
    %vm8120 = vmor %vm8118, %vm8119
    %v8121 = vsel %vm8120, %v8112, %v8117
    %v8122 = vrsqrt.pop %v7847
    %v8123 = vmul.f32 %v8122, %v7847
    %v8124 = vmul.f32 %v8123, %v8122
    %v8125 = vmul.f32 0.5, %v8124
    %v8126 = vsub.f32 1.5, %v8125
    %v8127 = vmul.f32 %v8122, %v8126
    %vm8128 = vweird.f32 %v7847
    %vm8129 = vweird.f32 %v8122
    %vm8130 = vmor %vm8128, %vm8129
    %v8131 = vsel %vm8130, %v8122, %v8127
    %v8132 = vrsqrt.pop %v7848
    %v8133 = vmul.f32 %v8132, %v7848
    %v8134 = vmul.f32 %v8133, %v8132
    %v8135 = vmul.f32 0.5, %v8134
    %v8136 = vsub.f32 1.5, %v8135
    %v8137 = vmul.f32 %v8132, %v8136
    %vm8138 = vweird.f32 %v7848
    %vm8139 = vweird.f32 %v8132
    %vm8140 = vmor %vm8138, %vm8139
    %v8141 = vsel %vm8140, %v8132, %v8137
    %v8142 = vrsqrt.pop %v7849
    %v8143 = vmul.f32 %v8142, %v7849
    %v8144 = vmul.f32 %v8143, %v8142
    %v8145 = vmul.f32 0.5, %v8144
    %v8146 = vsub.f32 1.5, %v8145
    %v8147 = vmul.f32 %v8142, %v8146
    %vm8148 = vweird.f32 %v7849
    %vm8149 = vweird.f32 %v8142
    %vm8150 = vmor %vm8148, %vm8149
    %v8151 = vsel %vm8150, %v8142, %v8147
    %v8152 = vrsqrt.pop %v7850
    %v8153 = vmul.f32 %v8152, %v7850
    %v8154 = vmul.f32 %v8153, %v8152
    %v8155 = vmul.f32 0.5, %v8154
    %v8156 = vsub.f32 1.5, %v8155
    %v8157 = vmul.f32 %v8152, %v8156
    %vm8158 = vweird.f32 %v7850
    %vm8159 = vweird.f32 %v8152
    %vm8160 = vmor %vm8158, %vm8159
    %v8161 = vsel %vm8160, %v8152, %v8157
    %v8162 = vrsqrt.pop %v7851
    %v8163 = vmul.f32 %v8162, %v7851
    %v8164 = vmul.f32 %v8163, %v8162
    %v8165 = vmul.f32 0.5, %v8164
    %v8166 = vsub.f32 1.5, %v8165
    %v8167 = vmul.f32 %v8162, %v8166
    %vm8168 = vweird.f32 %v7851
    %vm8169 = vweird.f32 %v8162
    %vm8170 = vmor %vm8168, %vm8169
    %v8171 = vsel %vm8170, %v8162, %v8167
    %v8172 = vmul.f32 %v3588, %v7861
    %v8173 = vmul.f32 %v3591, %v7871
    %v8174 = vmul.f32 %v3594, %v7881
    %v8175 = vmul.f32 %v3597, %v7891
    %v8176 = vmul.f32 %v3600, %v7901
    %v8177 = vmul.f32 %v3603, %v7911
    %v8178 = vmul.f32 %v3606, %v7921
    %v8179 = vmul.f32 %v3609, %v7931
    %v8180 = vmul.f32 %v3612, %v7941
    %v8181 = vmul.f32 %v3615, %v7951
    %v8182 = vmul.f32 %v3618, %v7961
    %v8183 = vmul.f32 %v3621, %v7971
    %v8184 = vmul.f32 %v3624, %v7981
    %v8185 = vmul.f32 %v3627, %v7991
    %v8186 = vmul.f32 %v3630, %v8001
    %v8187 = vmul.f32 %v3633, %v8011
    %v8188 = vmul.f32 %v3636, %v8021
    %v8189 = vmul.f32 %v3639, %v8031
    %v8190 = vmul.f32 %v3642, %v8041
    %v8191 = vmul.f32 %v3645, %v8051
    %v8192 = vmul.f32 %v3648, %v8061
    %v8193 = vmul.f32 %v3651, %v8071
    %v8194 = vmul.f32 %v3654, %v8081
    %v8195 = vmul.f32 %v3657, %v8091
    %v8196 = vmul.f32 %v3660, %v8101
    %v8197 = vmul.f32 %v3663, %v8111
    %v8198 = vmul.f32 %v3666, %v8121
    %v8199 = vmul.f32 %v3669, %v8131
    %v8200 = vmul.f32 %v3672, %v8141
    %v8201 = vmul.f32 %v3675, %v8151
    %v8202 = vmul.f32 %v3678, %v8161
    %v8203 = vmul.f32 %v3681, %v8171
    %s8204 = sld [smem:[#allocation2 + $0x4]]
    %v8205 = vstv %s8204
    %v8206 = vmul.f32 %v8172, %v8205
    %v8207 = vmul.f32 %v8173, %v8205
    %v8208 = vmul.f32 %v8174, %v8205
    %v8209 = vmul.f32 %v8175, %v8205
    %v8210 = vmul.f32 %v8176, %v8205
    %v8211 = vmul.f32 %v8177, %v8205
    %v8212 = vmul.f32 %v8178, %v8205
    %v8213 = vmul.f32 %v8179, %v8205
    %v8214 = vmul.f32 %v8180, %v8205
    %v8215 = vmul.f32 %v8181, %v8205
    %v8216 = vmul.f32 %v8182, %v8205
    %v8217 = vmul.f32 %v8183, %v8205
    %v8218 = vmul.f32 %v8184, %v8205
    %v8219 = vmul.f32 %v8185, %v8205
    %v8220 = vmul.f32 %v8186, %v8205
    %v8221 = vmul.f32 %v8187, %v8205
    %v8222 = vmul.f32 %v8188, %v8205
    %v8223 = vmul.f32 %v8189, %v8205
    %v8224 = vmul.f32 %v8190, %v8205
    %v8225 = vmul.f32 %v8191, %v8205
    %v8226 = vmul.f32 %v8192, %v8205
    %v8227 = vmul.f32 %v8193, %v8205
    %v8228 = vmul.f32 %v8194, %v8205
    %v8229 = vmul.f32 %v8195, %v8205
    %v8230 = vmul.f32 %v8196, %v8205
    %v8231 = vmul.f32 %v8197, %v8205
    %v8232 = vmul.f32 %v8198, %v8205
    %v8233 = vmul.f32 %v8199, %v8205
    %v8234 = vmul.f32 %v8200, %v8205
    %v8235 = vmul.f32 %v8201, %v8205
    %v8236 = vmul.f32 %v8202, %v8205
    %v8237 = vmul.f32 %v8203, %v8205
    %8238 = vst.msk [vmem:[%s21 + $0x8] sm:$0xff] %vm4221, %v8206
    %8239 = vst.msk [vmem:[%s21 + $0x20] sm:$0xff] %vm4221, %v8207
    %8240 = vst.msk [vmem:[%s21 + $0x38] sm:$0xff] %vm4221, %v8208
    %8241 = vst.msk [vmem:[%s21 + $0x50] sm:$0xff] %vm4221, %v8209
    %8242 = vst.msk [vmem:[%s21 + $0x68] sm:$0xff] %vm4221, %v8210
    %8243 = vst.msk [vmem:[%s21 + $0x80] sm:$0xff] %vm4221, %v8211
    %8244 = vst.msk [vmem:[%s21 + $0x98] sm:$0xff] %vm4221, %v8212
    %8245 = vst.msk [vmem:[%s21 + $0xb0] sm:$0xff] %vm4221, %v8213
    %8246 = vst.msk [vmem:[%s21 + $0xc8] sm:$0xff] %vm4221, %v8214
    %8247 = vst.msk [vmem:[%s21 + $0xe0] sm:$0xff] %vm4221, %v8215
    %8248 = vst.msk [vmem:[%s21 + $0xf8] sm:$0xff] %vm4221, %v8216
    %8249 = vst.msk [vmem:[%s21 + $0x110] sm:$0xff] %vm4221, %v8217
    %8250 = vst.msk [vmem:[%s21 + $0x128] sm:$0xff] %vm4221, %v8218
    %8251 = vst.msk [vmem:[%s21 + $0x140] sm:$0xff] %vm4221, %v8219
    %8252 = vst.msk [vmem:[%s21 + $0x158] sm:$0xff] %vm4221, %v8220
    %8253 = vst.msk [vmem:[%s21 + $0x170] sm:$0xff] %vm4221, %v8221
    %8254 = vst.msk [vmem:[%s21 + $0x188] sm:$0xff] %vm4221, %v8222
    %8255 = vst.msk [vmem:[%s21 + $0x1a0] sm:$0xff] %vm4221, %v8223
    %8256 = vst.msk [vmem:[%s21 + $0x1b8] sm:$0xff] %vm4221, %v8224
    %8257 = vst.msk [vmem:[%s21 + $0x1d0] sm:$0xff] %vm4221, %v8225
    %8258 = vst.msk [vmem:[%s21 + $0x1e8] sm:$0xff] %vm4221, %v8226
    %8259 = vst.msk [vmem:[%s21 + $0x200] sm:$0xff] %vm4221, %v8227
    %8260 = vst.msk [vmem:[%s21 + $0x218] sm:$0xff] %vm4221, %v8228
    %8261 = vst.msk [vmem:[%s21 + $0x230] sm:$0xff] %vm4221, %v8229
    %8262 = vst.msk [vmem:[%s21 + $0x248] sm:$0xff] %vm4221, %v8230
    %8263 = vst.msk [vmem:[%s21 + $0x260] sm:$0xff] %vm4221, %v8231
    %8264 = vst.msk [vmem:[%s21 + $0x278] sm:$0xff] %vm4221, %v8232
    %8265 = vst.msk [vmem:[%s21 + $0x290] sm:$0xff] %vm4221, %v8233
    %8266 = vst.msk [vmem:[%s21 + $0x2a8] sm:$0xff] %vm4221, %v8234
    %8267 = vst.msk [vmem:[%s21 + $0x2c0] sm:$0xff] %vm4221, %v8235
    %8268 = vst.msk [vmem:[%s21 + $0x2d8] sm:$0xff] %vm4221, %v8236
    %8269 = vst.msk [vmem:[%s21 + $0x2f0] sm:$0xff] %vm4221, %v8237
    %v8270 = vmul.f32 %v3841, %v3841
    %v8271 = vmul.f32 %v3844, %v3844
    %v8272 = vmul.f32 %v3847, %v3847
    %v8273 = vmul.f32 %v3850, %v3850
    %v8274 = vmul.f32 %v3853, %v3853
    %v8275 = vmul.f32 %v3856, %v3856
    %v8276 = vmul.f32 %v3859, %v3859
    %v8277 = vmul.f32 %v3862, %v3862
    %v8278 = vmul.f32 %v3865, %v3865
    %v8279 = vmul.f32 %v3868, %v3868
    %v8280 = vmul.f32 %v3871, %v3871
    %v8281 = vmul.f32 %v3874, %v3874
    %v8282 = vmul.f32 %v3877, %v3877
    %v8283 = vmul.f32 %v3880, %v3880
    %v8284 = vmul.f32 %v3883, %v3883
    %v8285 = vmul.f32 %v3886, %v3886
    %v8286 = vmul.f32 %v3889, %v3889
    %v8287 = vmul.f32 %v3892, %v3892
    %v8288 = vmul.f32 %v3895, %v3895
    %v8289 = vmul.f32 %v3898, %v3898
    %v8290 = vmul.f32 %v3901, %v3901
    %v8291 = vmul.f32 %v3904, %v3904
    %v8292 = vmul.f32 %v3907, %v3907
    %v8293 = vmul.f32 %v3910, %v3910
    %v8294 = vmul.f32 %v3913, %v3913
    %v8295 = vmul.f32 %v3916, %v3916
    %v8296 = vmul.f32 %v3919, %v3919
    %v8297 = vmul.f32 %v3922, %v3922
    %v8298 = vmul.f32 %v3925, %v3925
    %v8299 = vmul.f32 %v3928, %v3928
    %v8300 = vmul.f32 %v3931, %v3931
    %v8301 = vmul.f32 %v3934, %v3934
    %v8302 = vsel %vm4221, %v8270, 0.0
    %8303 = vadd.xlane.f32.xlu0 %v8302
    %v8304 = vpop.xlane.xlu0 %8303
    %v8305 = vsel %vm4221, %v8271, 0.0
    %8306 = vadd.xlane.f32.xlu0 %v8305
    %v8307 = vpop.xlane.xlu0 %8306
    %v8308 = vsel %vm4221, %v8272, 0.0
    %8309 = vadd.xlane.f32.xlu0 %v8308
    %v8310 = vpop.xlane.xlu0 %8309
    %v8311 = vsel %vm4221, %v8273, 0.0
    %8312 = vadd.xlane.f32.xlu0 %v8311
    %v8313 = vpop.xlane.xlu0 %8312
    %v8314 = vsel %vm4221, %v8274, 0.0
    %8315 = vadd.xlane.f32.xlu0 %v8314
    %v8316 = vpop.xlane.xlu0 %8315
    %v8317 = vsel %vm4221, %v8275, 0.0
    %8318 = vadd.xlane.f32.xlu0 %v8317
    %v8319 = vpop.xlane.xlu0 %8318
    %v8320 = vsel %vm4221, %v8276, 0.0
    %8321 = vadd.xlane.f32.xlu0 %v8320
    %v8322 = vpop.xlane.xlu0 %8321
    %v8323 = vsel %vm4221, %v8277, 0.0
    %8324 = vadd.xlane.f32.xlu0 %v8323
    %v8325 = vpop.xlane.xlu0 %8324
    %v8326 = vsel %vm4221, %v8278, 0.0
    %8327 = vadd.xlane.f32.xlu0 %v8326
    %v8328 = vpop.xlane.xlu0 %8327
    %v8329 = vsel %vm4221, %v8279, 0.0
    %8330 = vadd.xlane.f32.xlu0 %v8329
    %v8331 = vpop.xlane.xlu0 %8330
    %v8332 = vsel %vm4221, %v8280, 0.0
    %8333 = vadd.xlane.f32.xlu0 %v8332
    %v8334 = vpop.xlane.xlu0 %8333
    %v8335 = vsel %vm4221, %v8281, 0.0
    %8336 = vadd.xlane.f32.xlu0 %v8335
    %v8337 = vpop.xlane.xlu0 %8336
    %v8338 = vsel %vm4221, %v8282, 0.0
    %8339 = vadd.xlane.f32.xlu0 %v8338
    %v8340 = vpop.xlane.xlu0 %8339
    %v8341 = vsel %vm4221, %v8283, 0.0
    %8342 = vadd.xlane.f32.xlu0 %v8341
    %v8343 = vpop.xlane.xlu0 %8342
    %v8344 = vsel %vm4221, %v8284, 0.0
    %8345 = vadd.xlane.f32.xlu0 %v8344
    %v8346 = vpop.xlane.xlu0 %8345
    %v8347 = vsel %vm4221, %v8285, 0.0
    %8348 = vadd.xlane.f32.xlu0 %v8347
    %v8349 = vpop.xlane.xlu0 %8348
    %v8350 = vsel %vm4221, %v8286, 0.0
    %8351 = vadd.xlane.f32.xlu0 %v8350
    %v8352 = vpop.xlane.xlu0 %8351
    %v8353 = vsel %vm4221, %v8287, 0.0
    %8354 = vadd.xlane.f32.xlu0 %v8353
    %v8355 = vpop.xlane.xlu0 %8354
    %v8356 = vsel %vm4221, %v8288, 0.0
    %8357 = vadd.xlane.f32.xlu0 %v8356
    %v8358 = vpop.xlane.xlu0 %8357
    %v8359 = vsel %vm4221, %v8289, 0.0
    %8360 = vadd.xlane.f32.xlu0 %v8359
    %v8361 = vpop.xlane.xlu0 %8360
    %v8362 = vsel %vm4221, %v8290, 0.0
    %8363 = vadd.xlane.f32.xlu0 %v8362
    %v8364 = vpop.xlane.xlu0 %8363
    %v8365 = vsel %vm4221, %v8291, 0.0
    %8366 = vadd.xlane.f32.xlu0 %v8365
    %v8367 = vpop.xlane.xlu0 %8366
    %v8368 = vsel %vm4221, %v8292, 0.0
    %8369 = vadd.xlane.f32.xlu0 %v8368
    %v8370 = vpop.xlane.xlu0 %8369
    %v8371 = vsel %vm4221, %v8293, 0.0
    %8372 = vadd.xlane.f32.xlu0 %v8371
    %v8373 = vpop.xlane.xlu0 %8372
    %v8374 = vsel %vm4221, %v8294, 0.0
    %8375 = vadd.xlane.f32.xlu0 %v8374
    %v8376 = vpop.xlane.xlu0 %8375
    %v8377 = vsel %vm4221, %v8295, 0.0
    %8378 = vadd.xlane.f32.xlu0 %v8377
    %v8379 = vpop.xlane.xlu0 %8378
    %v8380 = vsel %vm4221, %v8296, 0.0
    %8381 = vadd.xlane.f32.xlu0 %v8380
    %v8382 = vpop.xlane.xlu0 %8381
    %v8383 = vsel %vm4221, %v8297, 0.0
    %8384 = vadd.xlane.f32.xlu0 %v8383
    %v8385 = vpop.xlane.xlu0 %8384
    %v8386 = vsel %vm4221, %v8298, 0.0
    %8387 = vadd.xlane.f32.xlu0 %v8386
    %v8388 = vpop.xlane.xlu0 %8387
    %v8389 = vsel %vm4221, %v8299, 0.0
    %8390 = vadd.xlane.f32.xlu0 %v8389
    %v8391 = vpop.xlane.xlu0 %8390
    %v8392 = vsel %vm4221, %v8300, 0.0
    %8393 = vadd.xlane.f32.xlu0 %v8392
    %v8394 = vpop.xlane.xlu0 %8393
    %v8395 = vsel %vm4221, %v8301, 0.0
    %8396 = vadd.xlane.f32.xlu0 %v8395
    %v8397 = vpop.xlane.xlu0 %8396
    %v8398 = vmax.f32 %v8304, 1e-24
    %v8399 = vmax.f32 %v8307, 1e-24
    %v8400 = vmax.f32 %v8310, 1e-24
    %v8401 = vmax.f32 %v8313, 1e-24
    %v8402 = vmax.f32 %v8316, 1e-24
    %v8403 = vmax.f32 %v8319, 1e-24
    %v8404 = vmax.f32 %v8322, 1e-24
    %v8405 = vmax.f32 %v8325, 1e-24
    %v8406 = vmax.f32 %v8328, 1e-24
    %v8407 = vmax.f32 %v8331, 1e-24
    %v8408 = vmax.f32 %v8334, 1e-24
    %v8409 = vmax.f32 %v8337, 1e-24
    %v8410 = vmax.f32 %v8340, 1e-24
    %v8411 = vmax.f32 %v8343, 1e-24
    %v8412 = vmax.f32 %v8346, 1e-24
    %v8413 = vmax.f32 %v8349, 1e-24
    %v8414 = vmax.f32 %v8352, 1e-24
    %v8415 = vmax.f32 %v8355, 1e-24
    %v8416 = vmax.f32 %v8358, 1e-24
    %v8417 = vmax.f32 %v8361, 1e-24
    %v8418 = vmax.f32 %v8364, 1e-24
    %v8419 = vmax.f32 %v8367, 1e-24
    %v8420 = vmax.f32 %v8370, 1e-24
    %v8421 = vmax.f32 %v8373, 1e-24
    %v8422 = vmax.f32 %v8376, 1e-24
    %v8423 = vmax.f32 %v8379, 1e-24
    %v8424 = vmax.f32 %v8382, 1e-24
    %v8425 = vmax.f32 %v8385, 1e-24
    %v8426 = vmax.f32 %v8388, 1e-24
    %v8427 = vmax.f32 %v8391, 1e-24
    %v8428 = vmax.f32 %v8394, 1e-24
    %v8429 = vmax.f32 %v8397, 1e-24
    %v8430 = vrsqrt.pop %v8398
    %v8431 = vmul.f32 %v8430, %v8398
    %v8432 = vmul.f32 %v8431, %v8430
    %v8433 = vmul.f32 0.5, %v8432
    %v8434 = vsub.f32 1.5, %v8433
    %v8435 = vmul.f32 %v8430, %v8434
    %vm8436 = vweird.f32 %v8398
    %vm8437 = vweird.f32 %v8430
    %vm8438 = vmor %vm8436, %vm8437
    %v8439 = vsel %vm8438, %v8430, %v8435
    %v8440 = vrsqrt.pop %v8399
    %v8441 = vmul.f32 %v8440, %v8399
    %v8442 = vmul.f32 %v8441, %v8440
    %v8443 = vmul.f32 0.5, %v8442
    %v8444 = vsub.f32 1.5, %v8443
    %v8445 = vmul.f32 %v8440, %v8444
    %vm8446 = vweird.f32 %v8399
    %vm8447 = vweird.f32 %v8440
    %vm8448 = vmor %vm8446, %vm8447
    %v8449 = vsel %vm8448, %v8440, %v8445
    %v8450 = vrsqrt.pop %v8400
    %v8451 = vmul.f32 %v8450, %v8400
    %v8452 = vmul.f32 %v8451, %v8450
    %v8453 = vmul.f32 0.5, %v8452
    %v8454 = vsub.f32 1.5, %v8453
    %v8455 = vmul.f32 %v8450, %v8454
    %vm8456 = vweird.f32 %v8400
    %vm8457 = vweird.f32 %v8450
    %vm8458 = vmor %vm8456, %vm8457
    %v8459 = vsel %vm8458, %v8450, %v8455
    %v8460 = vrsqrt.pop %v8401
    %v8461 = vmul.f32 %v8460, %v8401
    %v8462 = vmul.f32 %v8461, %v8460
    %v8463 = vmul.f32 0.5, %v8462
    %v8464 = vsub.f32 1.5, %v8463
    %v8465 = vmul.f32 %v8460, %v8464
    %vm8466 = vweird.f32 %v8401
    %vm8467 = vweird.f32 %v8460
    %vm8468 = vmor %vm8466, %vm8467
    %v8469 = vsel %vm8468, %v8460, %v8465
    %v8470 = vrsqrt.pop %v8402
    %v8471 = vmul.f32 %v8470, %v8402
    %v8472 = vmul.f32 %v8471, %v8470
    %v8473 = vmul.f32 0.5, %v8472
    %v8474 = vsub.f32 1.5, %v8473
    %v8475 = vmul.f32 %v8470, %v8474
    %vm8476 = vweird.f32 %v8402
    %vm8477 = vweird.f32 %v8470
    %vm8478 = vmor %vm8476, %vm8477
    %v8479 = vsel %vm8478, %v8470, %v8475
    %v8480 = vrsqrt.pop %v8403
    %v8481 = vmul.f32 %v8480, %v8403
    %v8482 = vmul.f32 %v8481, %v8480
    %v8483 = vmul.f32 0.5, %v8482
    %v8484 = vsub.f32 1.5, %v8483
    %v8485 = vmul.f32 %v8480, %v8484
    %vm8486 = vweird.f32 %v8403
    %vm8487 = vweird.f32 %v8480
    %vm8488 = vmor %vm8486, %vm8487
    %v8489 = vsel %vm8488, %v8480, %v8485
    %v8490 = vrsqrt.pop %v8404
    %v8491 = vmul.f32 %v8490, %v8404
    %v8492 = vmul.f32 %v8491, %v8490
    %v8493 = vmul.f32 0.5, %v8492
    %v8494 = vsub.f32 1.5, %v8493
    %v8495 = vmul.f32 %v8490, %v8494
    %vm8496 = vweird.f32 %v8404
    %vm8497 = vweird.f32 %v8490
    %vm8498 = vmor %vm8496, %vm8497
    %v8499 = vsel %vm8498, %v8490, %v8495
    %v8500 = vrsqrt.pop %v8405
    %v8501 = vmul.f32 %v8500, %v8405
    %v8502 = vmul.f32 %v8501, %v8500
    %v8503 = vmul.f32 0.5, %v8502
    %v8504 = vsub.f32 1.5, %v8503
    %v8505 = vmul.f32 %v8500, %v8504
    %vm8506 = vweird.f32 %v8405
    %vm8507 = vweird.f32 %v8500
    %vm8508 = vmor %vm8506, %vm8507
    %v8509 = vsel %vm8508, %v8500, %v8505
    %v8510 = vrsqrt.pop %v8406
    %v8511 = vmul.f32 %v8510, %v8406
    %v8512 = vmul.f32 %v8511, %v8510
    %v8513 = vmul.f32 0.5, %v8512
    %v8514 = vsub.f32 1.5, %v8513
    %v8515 = vmul.f32 %v8510, %v8514
    %vm8516 = vweird.f32 %v8406
    %vm8517 = vweird.f32 %v8510
    %vm8518 = vmor %vm8516, %vm8517
    %v8519 = vsel %vm8518, %v8510, %v8515
    %v8520 = vrsqrt.pop %v8407
    %v8521 = vmul.f32 %v8520, %v8407
    %v8522 = vmul.f32 %v8521, %v8520
    %v8523 = vmul.f32 0.5, %v8522
    %v8524 = vsub.f32 1.5, %v8523
    %v8525 = vmul.f32 %v8520, %v8524
    %vm8526 = vweird.f32 %v8407
    %vm8527 = vweird.f32 %v8520
    %vm8528 = vmor %vm8526, %vm8527
    %v8529 = vsel %vm8528, %v8520, %v8525
    %v8530 = vrsqrt.pop %v8408
    %v8531 = vmul.f32 %v8530, %v8408
    %v8532 = vmul.f32 %v8531, %v8530
    %v8533 = vmul.f32 0.5, %v8532
    %v8534 = vsub.f32 1.5, %v8533
    %v8535 = vmul.f32 %v8530, %v8534
    %vm8536 = vweird.f32 %v8408
    %vm8537 = vweird.f32 %v8530
    %vm8538 = vmor %vm8536, %vm8537
    %v8539 = vsel %vm8538, %v8530, %v8535
    %v8540 = vrsqrt.pop %v8409
    %v8541 = vmul.f32 %v8540, %v8409
    %v8542 = vmul.f32 %v8541, %v8540
    %v8543 = vmul.f32 0.5, %v8542
    %v8544 = vsub.f32 1.5, %v8543
    %v8545 = vmul.f32 %v8540, %v8544
    %vm8546 = vweird.f32 %v8409
    %vm8547 = vweird.f32 %v8540
    %vm8548 = vmor %vm8546, %vm8547
    %v8549 = vsel %vm8548, %v8540, %v8545
    %v8550 = vrsqrt.pop %v8410
    %v8551 = vmul.f32 %v8550, %v8410
    %v8552 = vmul.f32 %v8551, %v8550
    %v8553 = vmul.f32 0.5, %v8552
    %v8554 = vsub.f32 1.5, %v8553
    %v8555 = vmul.f32 %v8550, %v8554
    %vm8556 = vweird.f32 %v8410
    %vm8557 = vweird.f32 %v8550
    %vm8558 = vmor %vm8556, %vm8557
    %v8559 = vsel %vm8558, %v8550, %v8555
    %v8560 = vrsqrt.pop %v8411
    %v8561 = vmul.f32 %v8560, %v8411
    %v8562 = vmul.f32 %v8561, %v8560
    %v8563 = vmul.f32 0.5, %v8562
    %v8564 = vsub.f32 1.5, %v8563
    %v8565 = vmul.f32 %v8560, %v8564
    %vm8566 = vweird.f32 %v8411
    %vm8567 = vweird.f32 %v8560
    %vm8568 = vmor %vm8566, %vm8567
    %v8569 = vsel %vm8568, %v8560, %v8565
    %v8570 = vrsqrt.pop %v8412
    %v8571 = vmul.f32 %v8570, %v8412
    %v8572 = vmul.f32 %v8571, %v8570
    %v8573 = vmul.f32 0.5, %v8572
    %v8574 = vsub.f32 1.5, %v8573
    %v8575 = vmul.f32 %v8570, %v8574
    %vm8576 = vweird.f32 %v8412
    %vm8577 = vweird.f32 %v8570
    %vm8578 = vmor %vm8576, %vm8577
    %v8579 = vsel %vm8578, %v8570, %v8575
    %v8580 = vrsqrt.pop %v8413
    %v8581 = vmul.f32 %v8580, %v8413
    %v8582 = vmul.f32 %v8581, %v8580
    %v8583 = vmul.f32 0.5, %v8582
    %v8584 = vsub.f32 1.5, %v8583
    %v8585 = vmul.f32 %v8580, %v8584
    %vm8586 = vweird.f32 %v8413
    %vm8587 = vweird.f32 %v8580
    %vm8588 = vmor %vm8586, %vm8587
    %v8589 = vsel %vm8588, %v8580, %v8585
    %v8590 = vrsqrt.pop %v8414
    %v8591 = vmul.f32 %v8590, %v8414
    %v8592 = vmul.f32 %v8591, %v8590
    %v8593 = vmul.f32 0.5, %v8592
    %v8594 = vsub.f32 1.5, %v8593
    %v8595 = vmul.f32 %v8590, %v8594
    %vm8596 = vweird.f32 %v8414
    %vm8597 = vweird.f32 %v8590
    %vm8598 = vmor %vm8596, %vm8597
    %v8599 = vsel %vm8598, %v8590, %v8595
    %v8600 = vrsqrt.pop %v8415
    %v8601 = vmul.f32 %v8600, %v8415
    %v8602 = vmul.f32 %v8601, %v8600
    %v8603 = vmul.f32 0.5, %v8602
    %v8604 = vsub.f32 1.5, %v8603
    %v8605 = vmul.f32 %v8600, %v8604
    %vm8606 = vweird.f32 %v8415
    %vm8607 = vweird.f32 %v8600
    %vm8608 = vmor %vm8606, %vm8607
    %v8609 = vsel %vm8608, %v8600, %v8605
    %v8610 = vrsqrt.pop %v8416
    %v8611 = vmul.f32 %v8610, %v8416
    %v8612 = vmul.f32 %v8611, %v8610
    %v8613 = vmul.f32 0.5, %v8612
    %v8614 = vsub.f32 1.5, %v8613
    %v8615 = vmul.f32 %v8610, %v8614
    %vm8616 = vweird.f32 %v8416
    %vm8617 = vweird.f32 %v8610
    %vm8618 = vmor %vm8616, %vm8617
    %v8619 = vsel %vm8618, %v8610, %v8615
    %v8620 = vrsqrt.pop %v8417
    %v8621 = vmul.f32 %v8620, %v8417
    %v8622 = vmul.f32 %v8621, %v8620
    %v8623 = vmul.f32 0.5, %v8622
    %v8624 = vsub.f32 1.5, %v8623
    %v8625 = vmul.f32 %v8620, %v8624
    %vm8626 = vweird.f32 %v8417
    %vm8627 = vweird.f32 %v8620
    %vm8628 = vmor %vm8626, %vm8627
    %v8629 = vsel %vm8628, %v8620, %v8625
    %v8630 = vrsqrt.pop %v8418
    %v8631 = vmul.f32 %v8630, %v8418
    %v8632 = vmul.f32 %v8631, %v8630
    %v8633 = vmul.f32 0.5, %v8632
    %v8634 = vsub.f32 1.5, %v8633
    %v8635 = vmul.f32 %v8630, %v8634
    %vm8636 = vweird.f32 %v8418
    %vm8637 = vweird.f32 %v8630
    %vm8638 = vmor %vm8636, %vm8637
    %v8639 = vsel %vm8638, %v8630, %v8635
    %v8640 = vrsqrt.pop %v8419
    %v8641 = vmul.f32 %v8640, %v8419
    %v8642 = vmul.f32 %v8641, %v8640
    %v8643 = vmul.f32 0.5, %v8642
    %v8644 = vsub.f32 1.5, %v8643
    %v8645 = vmul.f32 %v8640, %v8644
    %vm8646 = vweird.f32 %v8419
    %vm8647 = vweird.f32 %v8640
    %vm8648 = vmor %vm8646, %vm8647
    %v8649 = vsel %vm8648, %v8640, %v8645
    %v8650 = vrsqrt.pop %v8420
    %v8651 = vmul.f32 %v8650, %v8420
    %v8652 = vmul.f32 %v8651, %v8650
    %v8653 = vmul.f32 0.5, %v8652
    %v8654 = vsub.f32 1.5, %v8653
    %v8655 = vmul.f32 %v8650, %v8654
    %vm8656 = vweird.f32 %v8420
    %vm8657 = vweird.f32 %v8650
    %vm8658 = vmor %vm8656, %vm8657
    %v8659 = vsel %vm8658, %v8650, %v8655
    %v8660 = vrsqrt.pop %v8421
    %v8661 = vmul.f32 %v8660, %v8421
    %v8662 = vmul.f32 %v8661, %v8660
    %v8663 = vmul.f32 0.5, %v8662
    %v8664 = vsub.f32 1.5, %v8663
    %v8665 = vmul.f32 %v8660, %v8664
    %vm8666 = vweird.f32 %v8421
    %vm8667 = vweird.f32 %v8660
    %vm8668 = vmor %vm8666, %vm8667
    %v8669 = vsel %vm8668, %v8660, %v8665
    %v8670 = vrsqrt.pop %v8422
    %v8671 = vmul.f32 %v8670, %v8422
    %v8672 = vmul.f32 %v8671, %v8670
    %v8673 = vmul.f32 0.5, %v8672
    %v8674 = vsub.f32 1.5, %v8673
    %v8675 = vmul.f32 %v8670, %v8674
    %vm8676 = vweird.f32 %v8422
    %vm8677 = vweird.f32 %v8670
    %vm8678 = vmor %vm8676, %vm8677
    %v8679 = vsel %vm8678, %v8670, %v8675
    %v8680 = vrsqrt.pop %v8423
    %v8681 = vmul.f32 %v8680, %v8423
    %v8682 = vmul.f32 %v8681, %v8680
    %v8683 = vmul.f32 0.5, %v8682
    %v8684 = vsub.f32 1.5, %v8683
    %v8685 = vmul.f32 %v8680, %v8684
    %vm8686 = vweird.f32 %v8423
    %vm8687 = vweird.f32 %v8680
    %vm8688 = vmor %vm8686, %vm8687
    %v8689 = vsel %vm8688, %v8680, %v8685
    %v8690 = vrsqrt.pop %v8424
    %v8691 = vmul.f32 %v8690, %v8424
    %v8692 = vmul.f32 %v8691, %v8690
    %v8693 = vmul.f32 0.5, %v8692
    %v8694 = vsub.f32 1.5, %v8693
    %v8695 = vmul.f32 %v8690, %v8694
    %vm8696 = vweird.f32 %v8424
    %vm8697 = vweird.f32 %v8690
    %vm8698 = vmor %vm8696, %vm8697
    %v8699 = vsel %vm8698, %v8690, %v8695
    %v8700 = vrsqrt.pop %v8425
    %v8701 = vmul.f32 %v8700, %v8425
    %v8702 = vmul.f32 %v8701, %v8700
    %v8703 = vmul.f32 0.5, %v8702
    %v8704 = vsub.f32 1.5, %v8703
    %v8705 = vmul.f32 %v8700, %v8704
    %vm8706 = vweird.f32 %v8425
    %vm8707 = vweird.f32 %v8700
    %vm8708 = vmor %vm8706, %vm8707
    %v8709 = vsel %vm8708, %v8700, %v8705
    %v8710 = vrsqrt.pop %v8426
    %v8711 = vmul.f32 %v8710, %v8426
    %v8712 = vmul.f32 %v8711, %v8710
    %v8713 = vmul.f32 0.5, %v8712
    %v8714 = vsub.f32 1.5, %v8713
    %v8715 = vmul.f32 %v8710, %v8714
    %vm8716 = vweird.f32 %v8426
    %vm8717 = vweird.f32 %v8710
    %vm8718 = vmor %vm8716, %vm8717
    %v8719 = vsel %vm8718, %v8710, %v8715
    %v8720 = vrsqrt.pop %v8427
    %v8721 = vmul.f32 %v8720, %v8427
    %v8722 = vmul.f32 %v8721, %v8720
    %v8723 = vmul.f32 0.5, %v8722
    %v8724 = vsub.f32 1.5, %v8723
    %v8725 = vmul.f32 %v8720, %v8724
    %vm8726 = vweird.f32 %v8427
    %vm8727 = vweird.f32 %v8720
    %vm8728 = vmor %vm8726, %vm8727
    %v8729 = vsel %vm8728, %v8720, %v8725
    %v8730 = vrsqrt.pop %v8428
    %v8731 = vmul.f32 %v8730, %v8428
    %v8732 = vmul.f32 %v8731, %v8730
    %v8733 = vmul.f32 0.5, %v8732
    %v8734 = vsub.f32 1.5, %v8733
    %v8735 = vmul.f32 %v8730, %v8734
    %vm8736 = vweird.f32 %v8428
    %vm8737 = vweird.f32 %v8730
    %vm8738 = vmor %vm8736, %vm8737
    %v8739 = vsel %vm8738, %v8730, %v8735
    %v8740 = vrsqrt.pop %v8429
    %v8741 = vmul.f32 %v8740, %v8429
    %v8742 = vmul.f32 %v8741, %v8740
    %v8743 = vmul.f32 0.5, %v8742
    %v8744 = vsub.f32 1.5, %v8743
    %v8745 = vmul.f32 %v8740, %v8744
    %vm8746 = vweird.f32 %v8429
    %vm8747 = vweird.f32 %v8740
    %vm8748 = vmor %vm8746, %vm8747
    %v8749 = vsel %vm8748, %v8740, %v8745
    %v8750 = vmul.f32 %v3841, %v8439
    %v8751 = vmul.f32 %v3844, %v8449
    %v8752 = vmul.f32 %v3847, %v8459
    %v8753 = vmul.f32 %v3850, %v8469
    %v8754 = vmul.f32 %v3853, %v8479
    %v8755 = vmul.f32 %v3856, %v8489
    %v8756 = vmul.f32 %v3859, %v8499
    %v8757 = vmul.f32 %v3862, %v8509
    %v8758 = vmul.f32 %v3865, %v8519
    %v8759 = vmul.f32 %v3868, %v8529
    %v8760 = vmul.f32 %v3871, %v8539
    %v8761 = vmul.f32 %v3874, %v8549
    %v8762 = vmul.f32 %v3877, %v8559
    %v8763 = vmul.f32 %v3880, %v8569
    %v8764 = vmul.f32 %v3883, %v8579
    %v8765 = vmul.f32 %v3886, %v8589
    %v8766 = vmul.f32 %v3889, %v8599
    %v8767 = vmul.f32 %v3892, %v8609
    %v8768 = vmul.f32 %v3895, %v8619
    %v8769 = vmul.f32 %v3898, %v8629
    %v8770 = vmul.f32 %v3901, %v8639
    %v8771 = vmul.f32 %v3904, %v8649
    %v8772 = vmul.f32 %v3907, %v8659
    %v8773 = vmul.f32 %v3910, %v8669
    %v8774 = vmul.f32 %v3913, %v8679
    %v8775 = vmul.f32 %v3916, %v8689
    %v8776 = vmul.f32 %v3919, %v8699
    %v8777 = vmul.f32 %v3922, %v8709
    %v8778 = vmul.f32 %v3925, %v8719
    %v8779 = vmul.f32 %v3928, %v8729
    %v8780 = vmul.f32 %v3931, %v8739
    %v8781 = vmul.f32 %v3934, %v8749
    %s8782 = sld [smem:[#allocation2 + $0x5]]
    %v8783 = vstv %s8782
    %v8784 = vmul.f32 %v8750, %v8783
    %v8785 = vmul.f32 %v8751, %v8783
    %v8786 = vmul.f32 %v8752, %v8783
    %v8787 = vmul.f32 %v8753, %v8783
    %v8788 = vmul.f32 %v8754, %v8783
    %v8789 = vmul.f32 %v8755, %v8783
    %v8790 = vmul.f32 %v8756, %v8783
    %v8791 = vmul.f32 %v8757, %v8783
    %v8792 = vmul.f32 %v8758, %v8783
    %v8793 = vmul.f32 %v8759, %v8783
    %v8794 = vmul.f32 %v8760, %v8783
    %v8795 = vmul.f32 %v8761, %v8783
    %v8796 = vmul.f32 %v8762, %v8783
    %v8797 = vmul.f32 %v8763, %v8783
    %v8798 = vmul.f32 %v8764, %v8783
    %v8799 = vmul.f32 %v8765, %v8783
    %v8800 = vmul.f32 %v8766, %v8783
    %v8801 = vmul.f32 %v8767, %v8783
    %v8802 = vmul.f32 %v8768, %v8783
    %v8803 = vmul.f32 %v8769, %v8783
    %v8804 = vmul.f32 %v8770, %v8783
    %v8805 = vmul.f32 %v8771, %v8783
    %v8806 = vmul.f32 %v8772, %v8783
    %v8807 = vmul.f32 %v8773, %v8783
    %v8808 = vmul.f32 %v8774, %v8783
    %v8809 = vmul.f32 %v8775, %v8783
    %v8810 = vmul.f32 %v8776, %v8783
    %v8811 = vmul.f32 %v8777, %v8783
    %v8812 = vmul.f32 %v8778, %v8783
    %v8813 = vmul.f32 %v8779, %v8783
    %v8814 = vmul.f32 %v8780, %v8783
    %v8815 = vmul.f32 %v8781, %v8783
    %8848 = vrot.lane.b32.xlu0 %v8784, 32
    %v8849 = vpop.permute.xlu0 %8848
    %8850 = vrot.lane.b32.xlu0 %v8785, 32
    %v8851 = vpop.permute.xlu0 %8850
    %8852 = vrot.lane.b32.xlu0 %v8786, 32
    %v8853 = vpop.permute.xlu0 %8852
    %8854 = vrot.lane.b32.xlu0 %v8787, 32
    %v8855 = vpop.permute.xlu0 %8854
    %8856 = vrot.lane.b32.xlu0 %v8788, 32
    %v8857 = vpop.permute.xlu0 %8856
    %8858 = vrot.lane.b32.xlu0 %v8789, 32
    %v8859 = vpop.permute.xlu0 %8858
    %8860 = vrot.lane.b32.xlu0 %v8790, 32
    %v8861 = vpop.permute.xlu0 %8860
    %8862 = vrot.lane.b32.xlu0 %v8791, 32
    %v8863 = vpop.permute.xlu0 %8862
    %8864 = vrot.lane.b32.xlu0 %v8792, 32
    %v8865 = vpop.permute.xlu0 %8864
    %8866 = vrot.lane.b32.xlu0 %v8793, 32
    %v8867 = vpop.permute.xlu0 %8866
    %8868 = vrot.lane.b32.xlu0 %v8794, 32
    %v8869 = vpop.permute.xlu0 %8868
    %8870 = vrot.lane.b32.xlu0 %v8795, 32
    %v8871 = vpop.permute.xlu0 %8870
    %8872 = vrot.lane.b32.xlu0 %v8796, 32
    %v8873 = vpop.permute.xlu0 %8872
    %8874 = vrot.lane.b32.xlu0 %v8797, 32
    %v8875 = vpop.permute.xlu0 %8874
    %8876 = vrot.lane.b32.xlu0 %v8798, 32
    %v8877 = vpop.permute.xlu0 %8876
    %8878 = vrot.lane.b32.xlu0 %v8799, 32
    %v8879 = vpop.permute.xlu0 %8878
    %8880 = vrot.lane.b32.xlu0 %v8800, 32
    %v8881 = vpop.permute.xlu0 %8880
    %8882 = vrot.lane.b32.xlu0 %v8801, 32
    %v8883 = vpop.permute.xlu0 %8882
    %8884 = vrot.lane.b32.xlu0 %v8802, 32
    %v8885 = vpop.permute.xlu0 %8884
    %8886 = vrot.lane.b32.xlu0 %v8803, 32
    %v8887 = vpop.permute.xlu0 %8886
    %8888 = vrot.lane.b32.xlu0 %v8804, 32
    %v8889 = vpop.permute.xlu0 %8888
    %8890 = vrot.lane.b32.xlu0 %v8805, 32
    %v8891 = vpop.permute.xlu0 %8890
    %8892 = vrot.lane.b32.xlu0 %v8806, 32
    %v8893 = vpop.permute.xlu0 %8892
    %8894 = vrot.lane.b32.xlu0 %v8807, 32
    %v8895 = vpop.permute.xlu0 %8894
    %8896 = vrot.lane.b32.xlu0 %v8808, 32
    %v8897 = vpop.permute.xlu0 %8896
    %8898 = vrot.lane.b32.xlu0 %v8809, 32
    %v8899 = vpop.permute.xlu0 %8898
    %8900 = vrot.lane.b32.xlu0 %v8810, 32
    %v8901 = vpop.permute.xlu0 %8900
    %8902 = vrot.lane.b32.xlu0 %v8811, 32
    %v8903 = vpop.permute.xlu0 %8902
    %8904 = vrot.lane.b32.xlu0 %v8812, 32
    %v8905 = vpop.permute.xlu0 %8904
    %8906 = vrot.lane.b32.xlu0 %v8813, 32
    %v8907 = vpop.permute.xlu0 %8906
    %8908 = vrot.lane.b32.xlu0 %v8814, 32
    %v8909 = vpop.permute.xlu0 %8908
    %8910 = vrot.lane.b32.xlu0 %v8815, 32
    %v8911 = vpop.permute.xlu0 %8910
    %8944 = vst.msk [vmem:[%s21 + $0x8] sm:$0xff] %vm4382, %v8849
    %8945 = vst.msk [vmem:[%s21 + $0x20] sm:$0xff] %vm4382, %v8851
    %8946 = vst.msk [vmem:[%s21 + $0x38] sm:$0xff] %vm4382, %v8853
    %8947 = vst.msk [vmem:[%s21 + $0x50] sm:$0xff] %vm4382, %v8855
    %8948 = vst.msk [vmem:[%s21 + $0x68] sm:$0xff] %vm4382, %v8857
    %8949 = vst.msk [vmem:[%s21 + $0x80] sm:$0xff] %vm4382, %v8859
    %8950 = vst.msk [vmem:[%s21 + $0x98] sm:$0xff] %vm4382, %v8861
    %8951 = vst.msk [vmem:[%s21 + $0xb0] sm:$0xff] %vm4382, %v8863
    %8952 = vst.msk [vmem:[%s21 + $0xc8] sm:$0xff] %vm4382, %v8865
    %8953 = vst.msk [vmem:[%s21 + $0xe0] sm:$0xff] %vm4382, %v8867
    %8954 = vst.msk [vmem:[%s21 + $0xf8] sm:$0xff] %vm4382, %v8869
    %8955 = vst.msk [vmem:[%s21 + $0x110] sm:$0xff] %vm4382, %v8871
    %8956 = vst.msk [vmem:[%s21 + $0x128] sm:$0xff] %vm4382, %v8873
    %8957 = vst.msk [vmem:[%s21 + $0x140] sm:$0xff] %vm4382, %v8875
    %8958 = vst.msk [vmem:[%s21 + $0x158] sm:$0xff] %vm4382, %v8877
    %8959 = vst.msk [vmem:[%s21 + $0x170] sm:$0xff] %vm4382, %v8879
    %8960 = vst.msk [vmem:[%s21 + $0x188] sm:$0xff] %vm4382, %v8881
    %8961 = vst.msk [vmem:[%s21 + $0x1a0] sm:$0xff] %vm4382, %v8883
    %8962 = vst.msk [vmem:[%s21 + $0x1b8] sm:$0xff] %vm4382, %v8885
    %8963 = vst.msk [vmem:[%s21 + $0x1d0] sm:$0xff] %vm4382, %v8887
    %8964 = vst.msk [vmem:[%s21 + $0x1e8] sm:$0xff] %vm4382, %v8889
    %8965 = vst.msk [vmem:[%s21 + $0x200] sm:$0xff] %vm4382, %v8891
    %8966 = vst.msk [vmem:[%s21 + $0x218] sm:$0xff] %vm4382, %v8893
    %8967 = vst.msk [vmem:[%s21 + $0x230] sm:$0xff] %vm4382, %v8895
    %8968 = vst.msk [vmem:[%s21 + $0x248] sm:$0xff] %vm4382, %v8897
    %8969 = vst.msk [vmem:[%s21 + $0x260] sm:$0xff] %vm4382, %v8899
    %8970 = vst.msk [vmem:[%s21 + $0x278] sm:$0xff] %vm4382, %v8901
    %8971 = vst.msk [vmem:[%s21 + $0x290] sm:$0xff] %vm4382, %v8903
    %8972 = vst.msk [vmem:[%s21 + $0x2a8] sm:$0xff] %vm4382, %v8905
    %8973 = vst.msk [vmem:[%s21 + $0x2c0] sm:$0xff] %vm4382, %v8907
    %8974 = vst.msk [vmem:[%s21 + $0x2d8] sm:$0xff] %vm4382, %v8909
    %8975 = vst.msk [vmem:[%s21 + $0x2f0] sm:$0xff] %vm4382, %v8911
    %v8976 = vmul.f32 %v4094, %v4094
    %v8977 = vmul.f32 %v4097, %v4097
    %v8978 = vmul.f32 %v4100, %v4100
    %v8979 = vmul.f32 %v4103, %v4103
    %v8980 = vmul.f32 %v4106, %v4106
    %v8981 = vmul.f32 %v4109, %v4109
    %v8982 = vmul.f32 %v4112, %v4112
    %v8983 = vmul.f32 %v4115, %v4115
    %v8984 = vmul.f32 %v4118, %v4118
    %v8985 = vmul.f32 %v4121, %v4121
    %v8986 = vmul.f32 %v4124, %v4124
    %v8987 = vmul.f32 %v4127, %v4127
    %v8988 = vmul.f32 %v4130, %v4130
    %v8989 = vmul.f32 %v4133, %v4133
    %v8990 = vmul.f32 %v4136, %v4136
    %v8991 = vmul.f32 %v4139, %v4139
    %v8992 = vmul.f32 %v4142, %v4142
    %v8993 = vmul.f32 %v4145, %v4145
    %v8994 = vmul.f32 %v4148, %v4148
    %v8995 = vmul.f32 %v4151, %v4151
    %v8996 = vmul.f32 %v4154, %v4154
    %v8997 = vmul.f32 %v4157, %v4157
    %v8998 = vmul.f32 %v4160, %v4160
    %v8999 = vmul.f32 %v4163, %v4163
    %v9000 = vmul.f32 %v4166, %v4166
    %v9001 = vmul.f32 %v4169, %v4169
    %v9002 = vmul.f32 %v4172, %v4172
    %v9003 = vmul.f32 %v4175, %v4175
    %v9004 = vmul.f32 %v4178, %v4178
    %v9005 = vmul.f32 %v4181, %v4181
    %v9006 = vmul.f32 %v4184, %v4184
    %v9007 = vmul.f32 %v4187, %v4187
    %vm9008 = vcmask 818176
    %v9009 = vsel %vm9008, %v8976, 0.0
    %9010 = vadd.xlane.f32.xlu0 %v9009
    %v9011 = vpop.xlane.xlu0 %9010
    %v9012 = vsel %vm9008, %v8977, 0.0
    %9013 = vadd.xlane.f32.xlu0 %v9012
    %v9014 = vpop.xlane.xlu0 %9013
    %v9015 = vsel %vm9008, %v8978, 0.0
    %9016 = vadd.xlane.f32.xlu0 %v9015
    %v9017 = vpop.xlane.xlu0 %9016
    %v9018 = vsel %vm9008, %v8979, 0.0
    %9019 = vadd.xlane.f32.xlu0 %v9018
    %v9020 = vpop.xlane.xlu0 %9019
    %v9021 = vsel %vm9008, %v8980, 0.0
    %9022 = vadd.xlane.f32.xlu0 %v9021
    %v9023 = vpop.xlane.xlu0 %9022
    %v9024 = vsel %vm9008, %v8981, 0.0
    %9025 = vadd.xlane.f32.xlu0 %v9024
    %v9026 = vpop.xlane.xlu0 %9025
    %v9027 = vsel %vm9008, %v8982, 0.0
    %9028 = vadd.xlane.f32.xlu0 %v9027
    %v9029 = vpop.xlane.xlu0 %9028
    %v9030 = vsel %vm9008, %v8983, 0.0
    %9031 = vadd.xlane.f32.xlu0 %v9030
    %v9032 = vpop.xlane.xlu0 %9031
    %v9033 = vsel %vm9008, %v8984, 0.0
    %9034 = vadd.xlane.f32.xlu0 %v9033
    %v9035 = vpop.xlane.xlu0 %9034
    %v9036 = vsel %vm9008, %v8985, 0.0
    %9037 = vadd.xlane.f32.xlu0 %v9036
    %v9038 = vpop.xlane.xlu0 %9037
    %v9039 = vsel %vm9008, %v8986, 0.0
    %9040 = vadd.xlane.f32.xlu0 %v9039
    %v9041 = vpop.xlane.xlu0 %9040
    %v9042 = vsel %vm9008, %v8987, 0.0
    %9043 = vadd.xlane.f32.xlu0 %v9042
    %v9044 = vpop.xlane.xlu0 %9043
    %v9045 = vsel %vm9008, %v8988, 0.0
    %9046 = vadd.xlane.f32.xlu0 %v9045
    %v9047 = vpop.xlane.xlu0 %9046
    %v9048 = vsel %vm9008, %v8989, 0.0
    %9049 = vadd.xlane.f32.xlu0 %v9048
    %v9050 = vpop.xlane.xlu0 %9049
    %v9051 = vsel %vm9008, %v8990, 0.0
    %9052 = vadd.xlane.f32.xlu0 %v9051
    %v9053 = vpop.xlane.xlu0 %9052
    %v9054 = vsel %vm9008, %v8991, 0.0
    %9055 = vadd.xlane.f32.xlu0 %v9054
    %v9056 = vpop.xlane.xlu0 %9055
    %v9057 = vsel %vm9008, %v8992, 0.0
    %9058 = vadd.xlane.f32.xlu0 %v9057
    %v9059 = vpop.xlane.xlu0 %9058
    %v9060 = vsel %vm9008, %v8993, 0.0
    %9061 = vadd.xlane.f32.xlu0 %v9060
    %v9062 = vpop.xlane.xlu0 %9061
    %v9063 = vsel %vm9008, %v8994, 0.0
    %9064 = vadd.xlane.f32.xlu0 %v9063
    %v9065 = vpop.xlane.xlu0 %9064
    %v9066 = vsel %vm9008, %v8995, 0.0
    %9067 = vadd.xlane.f32.xlu0 %v9066
    %v9068 = vpop.xlane.xlu0 %9067
    %v9069 = vsel %vm9008, %v8996, 0.0
    %9070 = vadd.xlane.f32.xlu0 %v9069
    %v9071 = vpop.xlane.xlu0 %9070
    %v9072 = vsel %vm9008, %v8997, 0.0
    %9073 = vadd.xlane.f32.xlu0 %v9072
    %v9074 = vpop.xlane.xlu0 %9073
    %v9075 = vsel %vm9008, %v8998, 0.0
    %9076 = vadd.xlane.f32.xlu0 %v9075
    %v9077 = vpop.xlane.xlu0 %9076
    %v9078 = vsel %vm9008, %v8999, 0.0
    %9079 = vadd.xlane.f32.xlu0 %v9078
    %v9080 = vpop.xlane.xlu0 %9079
    %v9081 = vsel %vm9008, %v9000, 0.0
    %9082 = vadd.xlane.f32.xlu0 %v9081
    %v9083 = vpop.xlane.xlu0 %9082
    %v9084 = vsel %vm9008, %v9001, 0.0
    %9085 = vadd.xlane.f32.xlu0 %v9084
    %v9086 = vpop.xlane.xlu0 %9085
    %v9087 = vsel %vm9008, %v9002, 0.0
    %9088 = vadd.xlane.f32.xlu0 %v9087
    %v9089 = vpop.xlane.xlu0 %9088
    %v9090 = vsel %vm9008, %v9003, 0.0
    %9091 = vadd.xlane.f32.xlu0 %v9090
    %v9092 = vpop.xlane.xlu0 %9091
    %v9093 = vsel %vm9008, %v9004, 0.0
    %9094 = vadd.xlane.f32.xlu0 %v9093
    %v9095 = vpop.xlane.xlu0 %9094
    %v9096 = vsel %vm9008, %v9005, 0.0
    %9097 = vadd.xlane.f32.xlu0 %v9096
    %v9098 = vpop.xlane.xlu0 %9097
    %v9099 = vsel %vm9008, %v9006, 0.0
    %9100 = vadd.xlane.f32.xlu0 %v9099
    %v9101 = vpop.xlane.xlu0 %9100
    %v9102 = vsel %vm9008, %v9007, 0.0
    %9103 = vadd.xlane.f32.xlu0 %v9102
    %v9104 = vpop.xlane.xlu0 %9103
    %v9105 = vmax.f32 %v9011, 1e-24
    %v9106 = vmax.f32 %v9014, 1e-24
    %v9107 = vmax.f32 %v9017, 1e-24
    %v9108 = vmax.f32 %v9020, 1e-24
    %v9109 = vmax.f32 %v9023, 1e-24
    %v9110 = vmax.f32 %v9026, 1e-24
    %v9111 = vmax.f32 %v9029, 1e-24
    %v9112 = vmax.f32 %v9032, 1e-24
    %v9113 = vmax.f32 %v9035, 1e-24
    %v9114 = vmax.f32 %v9038, 1e-24
    %v9115 = vmax.f32 %v9041, 1e-24
    %v9116 = vmax.f32 %v9044, 1e-24
    %v9117 = vmax.f32 %v9047, 1e-24
    %v9118 = vmax.f32 %v9050, 1e-24
    %v9119 = vmax.f32 %v9053, 1e-24
    %v9120 = vmax.f32 %v9056, 1e-24
    %v9121 = vmax.f32 %v9059, 1e-24
    %v9122 = vmax.f32 %v9062, 1e-24
    %v9123 = vmax.f32 %v9065, 1e-24
    %v9124 = vmax.f32 %v9068, 1e-24
    %v9125 = vmax.f32 %v9071, 1e-24
    %v9126 = vmax.f32 %v9074, 1e-24
    %v9127 = vmax.f32 %v9077, 1e-24
    %v9128 = vmax.f32 %v9080, 1e-24
    %v9129 = vmax.f32 %v9083, 1e-24
    %v9130 = vmax.f32 %v9086, 1e-24
    %v9131 = vmax.f32 %v9089, 1e-24
    %v9132 = vmax.f32 %v9092, 1e-24
    %v9133 = vmax.f32 %v9095, 1e-24
    %v9134 = vmax.f32 %v9098, 1e-24
    %v9135 = vmax.f32 %v9101, 1e-24
    %v9136 = vmax.f32 %v9104, 1e-24
    %v9137 = vrsqrt.pop %v9105
    %v9138 = vmul.f32 %v9137, %v9105
    %v9139 = vmul.f32 %v9138, %v9137
    %v9140 = vmul.f32 0.5, %v9139
    %v9141 = vsub.f32 1.5, %v9140
    %v9142 = vmul.f32 %v9137, %v9141
    %vm9143 = vweird.f32 %v9105
    %vm9144 = vweird.f32 %v9137
    %vm9145 = vmor %vm9143, %vm9144
    %v9146 = vsel %vm9145, %v9137, %v9142
    %v9147 = vrsqrt.pop %v9106
    %v9148 = vmul.f32 %v9147, %v9106
    %v9149 = vmul.f32 %v9148, %v9147
    %v9150 = vmul.f32 0.5, %v9149
    %v9151 = vsub.f32 1.5, %v9150
    %v9152 = vmul.f32 %v9147, %v9151
    %vm9153 = vweird.f32 %v9106
    %vm9154 = vweird.f32 %v9147
    %vm9155 = vmor %vm9153, %vm9154
    %v9156 = vsel %vm9155, %v9147, %v9152
    %v9157 = vrsqrt.pop %v9107
    %v9158 = vmul.f32 %v9157, %v9107
    %v9159 = vmul.f32 %v9158, %v9157
    %v9160 = vmul.f32 0.5, %v9159
    %v9161 = vsub.f32 1.5, %v9160
    %v9162 = vmul.f32 %v9157, %v9161
    %vm9163 = vweird.f32 %v9107
    %vm9164 = vweird.f32 %v9157
    %vm9165 = vmor %vm9163, %vm9164
    %v9166 = vsel %vm9165, %v9157, %v9162
    %v9167 = vrsqrt.pop %v9108
    %v9168 = vmul.f32 %v9167, %v9108
    %v9169 = vmul.f32 %v9168, %v9167
    %v9170 = vmul.f32 0.5, %v9169
    %v9171 = vsub.f32 1.5, %v9170
    %v9172 = vmul.f32 %v9167, %v9171
    %vm9173 = vweird.f32 %v9108
    %vm9174 = vweird.f32 %v9167
    %vm9175 = vmor %vm9173, %vm9174
    %v9176 = vsel %vm9175, %v9167, %v9172
    %v9177 = vrsqrt.pop %v9109
    %v9178 = vmul.f32 %v9177, %v9109
    %v9179 = vmul.f32 %v9178, %v9177
    %v9180 = vmul.f32 0.5, %v9179
    %v9181 = vsub.f32 1.5, %v9180
    %v9182 = vmul.f32 %v9177, %v9181
    %vm9183 = vweird.f32 %v9109
    %vm9184 = vweird.f32 %v9177
    %vm9185 = vmor %vm9183, %vm9184
    %v9186 = vsel %vm9185, %v9177, %v9182
    %v9187 = vrsqrt.pop %v9110
    %v9188 = vmul.f32 %v9187, %v9110
    %v9189 = vmul.f32 %v9188, %v9187
    %v9190 = vmul.f32 0.5, %v9189
    %v9191 = vsub.f32 1.5, %v9190
    %v9192 = vmul.f32 %v9187, %v9191
    %vm9193 = vweird.f32 %v9110
    %vm9194 = vweird.f32 %v9187
    %vm9195 = vmor %vm9193, %vm9194
    %v9196 = vsel %vm9195, %v9187, %v9192
    %v9197 = vrsqrt.pop %v9111
    %v9198 = vmul.f32 %v9197, %v9111
    %v9199 = vmul.f32 %v9198, %v9197
    %v9200 = vmul.f32 0.5, %v9199
    %v9201 = vsub.f32 1.5, %v9200
    %v9202 = vmul.f32 %v9197, %v9201
    %vm9203 = vweird.f32 %v9111
    %vm9204 = vweird.f32 %v9197
    %vm9205 = vmor %vm9203, %vm9204
    %v9206 = vsel %vm9205, %v9197, %v9202
    %v9207 = vrsqrt.pop %v9112
    %v9208 = vmul.f32 %v9207, %v9112
    %v9209 = vmul.f32 %v9208, %v9207
    %v9210 = vmul.f32 0.5, %v9209
    %v9211 = vsub.f32 1.5, %v9210
    %v9212 = vmul.f32 %v9207, %v9211
    %vm9213 = vweird.f32 %v9112
    %vm9214 = vweird.f32 %v9207
    %vm9215 = vmor %vm9213, %vm9214
    %v9216 = vsel %vm9215, %v9207, %v9212
    %v9217 = vrsqrt.pop %v9113
    %v9218 = vmul.f32 %v9217, %v9113
    %v9219 = vmul.f32 %v9218, %v9217
    %v9220 = vmul.f32 0.5, %v9219
    %v9221 = vsub.f32 1.5, %v9220
    %v9222 = vmul.f32 %v9217, %v9221
    %vm9223 = vweird.f32 %v9113
    %vm9224 = vweird.f32 %v9217
    %vm9225 = vmor %vm9223, %vm9224
    %v9226 = vsel %vm9225, %v9217, %v9222
    %v9227 = vrsqrt.pop %v9114
    %v9228 = vmul.f32 %v9227, %v9114
    %v9229 = vmul.f32 %v9228, %v9227
    %v9230 = vmul.f32 0.5, %v9229
    %v9231 = vsub.f32 1.5, %v9230
    %v9232 = vmul.f32 %v9227, %v9231
    %vm9233 = vweird.f32 %v9114
    %vm9234 = vweird.f32 %v9227
    %vm9235 = vmor %vm9233, %vm9234
    %v9236 = vsel %vm9235, %v9227, %v9232
    %v9237 = vrsqrt.pop %v9115
    %v9238 = vmul.f32 %v9237, %v9115
    %v9239 = vmul.f32 %v9238, %v9237
    %v9240 = vmul.f32 0.5, %v9239
    %v9241 = vsub.f32 1.5, %v9240
    %v9242 = vmul.f32 %v9237, %v9241
    %vm9243 = vweird.f32 %v9115
    %vm9244 = vweird.f32 %v9237
    %vm9245 = vmor %vm9243, %vm9244
    %v9246 = vsel %vm9245, %v9237, %v9242
    %v9247 = vrsqrt.pop %v9116
    %v9248 = vmul.f32 %v9247, %v9116
    %v9249 = vmul.f32 %v9248, %v9247
    %v9250 = vmul.f32 0.5, %v9249
    %v9251 = vsub.f32 1.5, %v9250
    %v9252 = vmul.f32 %v9247, %v9251
    %vm9253 = vweird.f32 %v9116
    %vm9254 = vweird.f32 %v9247
    %vm9255 = vmor %vm9253, %vm9254
    %v9256 = vsel %vm9255, %v9247, %v9252
    %v9257 = vrsqrt.pop %v9117
    %v9258 = vmul.f32 %v9257, %v9117
    %v9259 = vmul.f32 %v9258, %v9257
    %v9260 = vmul.f32 0.5, %v9259
    %v9261 = vsub.f32 1.5, %v9260
    %v9262 = vmul.f32 %v9257, %v9261
    %vm9263 = vweird.f32 %v9117
    %vm9264 = vweird.f32 %v9257
    %vm9265 = vmor %vm9263, %vm9264
    %v9266 = vsel %vm9265, %v9257, %v9262
    %v9267 = vrsqrt.pop %v9118
    %v9268 = vmul.f32 %v9267, %v9118
    %v9269 = vmul.f32 %v9268, %v9267
    %v9270 = vmul.f32 0.5, %v9269
    %v9271 = vsub.f32 1.5, %v9270
    %v9272 = vmul.f32 %v9267, %v9271
    %vm9273 = vweird.f32 %v9118
    %vm9274 = vweird.f32 %v9267
    %vm9275 = vmor %vm9273, %vm9274
    %v9276 = vsel %vm9275, %v9267, %v9272
    %v9277 = vrsqrt.pop %v9119
    %v9278 = vmul.f32 %v9277, %v9119
    %v9279 = vmul.f32 %v9278, %v9277
    %v9280 = vmul.f32 0.5, %v9279
    %v9281 = vsub.f32 1.5, %v9280
    %v9282 = vmul.f32 %v9277, %v9281
    %vm9283 = vweird.f32 %v9119
    %vm9284 = vweird.f32 %v9277
    %vm9285 = vmor %vm9283, %vm9284
    %v9286 = vsel %vm9285, %v9277, %v9282
    %v9287 = vrsqrt.pop %v9120
    %v9288 = vmul.f32 %v9287, %v9120
    %v9289 = vmul.f32 %v9288, %v9287
    %v9290 = vmul.f32 0.5, %v9289
    %v9291 = vsub.f32 1.5, %v9290
    %v9292 = vmul.f32 %v9287, %v9291
    %vm9293 = vweird.f32 %v9120
    %vm9294 = vweird.f32 %v9287
    %vm9295 = vmor %vm9293, %vm9294
    %v9296 = vsel %vm9295, %v9287, %v9292
    %v9297 = vrsqrt.pop %v9121
    %v9298 = vmul.f32 %v9297, %v9121
    %v9299 = vmul.f32 %v9298, %v9297
    %v9300 = vmul.f32 0.5, %v9299
    %v9301 = vsub.f32 1.5, %v9300
    %v9302 = vmul.f32 %v9297, %v9301
    %vm9303 = vweird.f32 %v9121
    %vm9304 = vweird.f32 %v9297
    %vm9305 = vmor %vm9303, %vm9304
    %v9306 = vsel %vm9305, %v9297, %v9302
    %v9307 = vrsqrt.pop %v9122
    %v9308 = vmul.f32 %v9307, %v9122
    %v9309 = vmul.f32 %v9308, %v9307
    %v9310 = vmul.f32 0.5, %v9309
    %v9311 = vsub.f32 1.5, %v9310
    %v9312 = vmul.f32 %v9307, %v9311
    %vm9313 = vweird.f32 %v9122
    %vm9314 = vweird.f32 %v9307
    %vm9315 = vmor %vm9313, %vm9314
    %v9316 = vsel %vm9315, %v9307, %v9312
    %v9317 = vrsqrt.pop %v9123
    %v9318 = vmul.f32 %v9317, %v9123
    %v9319 = vmul.f32 %v9318, %v9317
    %v9320 = vmul.f32 0.5, %v9319
    %v9321 = vsub.f32 1.5, %v9320
    %v9322 = vmul.f32 %v9317, %v9321
    %vm9323 = vweird.f32 %v9123
    %vm9324 = vweird.f32 %v9317
    %vm9325 = vmor %vm9323, %vm9324
    %v9326 = vsel %vm9325, %v9317, %v9322
    %v9327 = vrsqrt.pop %v9124
    %v9328 = vmul.f32 %v9327, %v9124
    %v9329 = vmul.f32 %v9328, %v9327
    %v9330 = vmul.f32 0.5, %v9329
    %v9331 = vsub.f32 1.5, %v9330
    %v9332 = vmul.f32 %v9327, %v9331
    %vm9333 = vweird.f32 %v9124
    %vm9334 = vweird.f32 %v9327
    %vm9335 = vmor %vm9333, %vm9334
    %v9336 = vsel %vm9335, %v9327, %v9332
    %v9337 = vrsqrt.pop %v9125
    %v9338 = vmul.f32 %v9337, %v9125
    %v9339 = vmul.f32 %v9338, %v9337
    %v9340 = vmul.f32 0.5, %v9339
    %v9341 = vsub.f32 1.5, %v9340
    %v9342 = vmul.f32 %v9337, %v9341
    %vm9343 = vweird.f32 %v9125
    %vm9344 = vweird.f32 %v9337
    %vm9345 = vmor %vm9343, %vm9344
    %v9346 = vsel %vm9345, %v9337, %v9342
    %v9347 = vrsqrt.pop %v9126
    %v9348 = vmul.f32 %v9347, %v9126
    %v9349 = vmul.f32 %v9348, %v9347
    %v9350 = vmul.f32 0.5, %v9349
    %v9351 = vsub.f32 1.5, %v9350
    %v9352 = vmul.f32 %v9347, %v9351
    %vm9353 = vweird.f32 %v9126
    %vm9354 = vweird.f32 %v9347
    %vm9355 = vmor %vm9353, %vm9354
    %v9356 = vsel %vm9355, %v9347, %v9352
    %v9357 = vrsqrt.pop %v9127
    %v9358 = vmul.f32 %v9357, %v9127
    %v9359 = vmul.f32 %v9358, %v9357
    %v9360 = vmul.f32 0.5, %v9359
    %v9361 = vsub.f32 1.5, %v9360
    %v9362 = vmul.f32 %v9357, %v9361
    %vm9363 = vweird.f32 %v9127
    %vm9364 = vweird.f32 %v9357
    %vm9365 = vmor %vm9363, %vm9364
    %v9366 = vsel %vm9365, %v9357, %v9362
    %v9367 = vrsqrt.pop %v9128
    %v9368 = vmul.f32 %v9367, %v9128
    %v9369 = vmul.f32 %v9368, %v9367
    %v9370 = vmul.f32 0.5, %v9369
    %v9371 = vsub.f32 1.5, %v9370
    %v9372 = vmul.f32 %v9367, %v9371
    %vm9373 = vweird.f32 %v9128
    %vm9374 = vweird.f32 %v9367
    %vm9375 = vmor %vm9373, %vm9374
    %v9376 = vsel %vm9375, %v9367, %v9372
    %v9377 = vrsqrt.pop %v9129
    %v9378 = vmul.f32 %v9377, %v9129
    %v9379 = vmul.f32 %v9378, %v9377
    %v9380 = vmul.f32 0.5, %v9379
    %v9381 = vsub.f32 1.5, %v9380
    %v9382 = vmul.f32 %v9377, %v9381
    %vm9383 = vweird.f32 %v9129
    %vm9384 = vweird.f32 %v9377
    %vm9385 = vmor %vm9383, %vm9384
    %v9386 = vsel %vm9385, %v9377, %v9382
    %v9387 = vrsqrt.pop %v9130
    %v9388 = vmul.f32 %v9387, %v9130
    %v9389 = vmul.f32 %v9388, %v9387
    %v9390 = vmul.f32 0.5, %v9389
    %v9391 = vsub.f32 1.5, %v9390
    %v9392 = vmul.f32 %v9387, %v9391
    %vm9393 = vweird.f32 %v9130
    %vm9394 = vweird.f32 %v9387
    %vm9395 = vmor %vm9393, %vm9394
    %v9396 = vsel %vm9395, %v9387, %v9392
    %v9397 = vrsqrt.pop %v9131
    %v9398 = vmul.f32 %v9397, %v9131
    %v9399 = vmul.f32 %v9398, %v9397
    %v9400 = vmul.f32 0.5, %v9399
    %v9401 = vsub.f32 1.5, %v9400
    %v9402 = vmul.f32 %v9397, %v9401
    %vm9403 = vweird.f32 %v9131
    %vm9404 = vweird.f32 %v9397
    %vm9405 = vmor %vm9403, %vm9404
    %v9406 = vsel %vm9405, %v9397, %v9402
    %v9407 = vrsqrt.pop %v9132
    %v9408 = vmul.f32 %v9407, %v9132
    %v9409 = vmul.f32 %v9408, %v9407
    %v9410 = vmul.f32 0.5, %v9409
    %v9411 = vsub.f32 1.5, %v9410
    %v9412 = vmul.f32 %v9407, %v9411
    %vm9413 = vweird.f32 %v9132
    %vm9414 = vweird.f32 %v9407
    %vm9415 = vmor %vm9413, %vm9414
    %v9416 = vsel %vm9415, %v9407, %v9412
    %v9417 = vrsqrt.pop %v9133
    %v9418 = vmul.f32 %v9417, %v9133
    %v9419 = vmul.f32 %v9418, %v9417
    %v9420 = vmul.f32 0.5, %v9419
    %v9421 = vsub.f32 1.5, %v9420
    %v9422 = vmul.f32 %v9417, %v9421
    %vm9423 = vweird.f32 %v9133
    %vm9424 = vweird.f32 %v9417
    %vm9425 = vmor %vm9423, %vm9424
    %v9426 = vsel %vm9425, %v9417, %v9422
    %v9427 = vrsqrt.pop %v9134
    %v9428 = vmul.f32 %v9427, %v9134
    %v9429 = vmul.f32 %v9428, %v9427
    %v9430 = vmul.f32 0.5, %v9429
    %v9431 = vsub.f32 1.5, %v9430
    %v9432 = vmul.f32 %v9427, %v9431
    %vm9433 = vweird.f32 %v9134
    %vm9434 = vweird.f32 %v9427
    %vm9435 = vmor %vm9433, %vm9434
    %v9436 = vsel %vm9435, %v9427, %v9432
    %v9437 = vrsqrt.pop %v9135
    %v9438 = vmul.f32 %v9437, %v9135
    %v9439 = vmul.f32 %v9438, %v9437
    %v9440 = vmul.f32 0.5, %v9439
    %v9441 = vsub.f32 1.5, %v9440
    %v9442 = vmul.f32 %v9437, %v9441
    %vm9443 = vweird.f32 %v9135
    %vm9444 = vweird.f32 %v9437
    %vm9445 = vmor %vm9443, %vm9444
    %v9446 = vsel %vm9445, %v9437, %v9442
    %v9447 = vrsqrt.pop %v9136
    %v9448 = vmul.f32 %v9447, %v9136
    %v9449 = vmul.f32 %v9448, %v9447
    %v9450 = vmul.f32 0.5, %v9449
    %v9451 = vsub.f32 1.5, %v9450
    %v9452 = vmul.f32 %v9447, %v9451
    %vm9453 = vweird.f32 %v9136
    %vm9454 = vweird.f32 %v9447
    %vm9455 = vmor %vm9453, %vm9454
    %v9456 = vsel %vm9455, %v9447, %v9452
    %v9457 = vmul.f32 %v4094, %v9146
    %v9458 = vmul.f32 %v4097, %v9156
    %v9459 = vmul.f32 %v4100, %v9166
    %v9460 = vmul.f32 %v4103, %v9176
    %v9461 = vmul.f32 %v4106, %v9186
    %v9462 = vmul.f32 %v4109, %v9196
    %v9463 = vmul.f32 %v4112, %v9206
    %v9464 = vmul.f32 %v4115, %v9216
    %v9465 = vmul.f32 %v4118, %v9226
    %v9466 = vmul.f32 %v4121, %v9236
    %v9467 = vmul.f32 %v4124, %v9246
    %v9468 = vmul.f32 %v4127, %v9256
    %v9469 = vmul.f32 %v4130, %v9266
    %v9470 = vmul.f32 %v4133, %v9276
    %v9471 = vmul.f32 %v4136, %v9286
    %v9472 = vmul.f32 %v4139, %v9296
    %v9473 = vmul.f32 %v4142, %v9306
    %v9474 = vmul.f32 %v4145, %v9316
    %v9475 = vmul.f32 %v4148, %v9326
    %v9476 = vmul.f32 %v4151, %v9336
    %v9477 = vmul.f32 %v4154, %v9346
    %v9478 = vmul.f32 %v4157, %v9356
    %v9479 = vmul.f32 %v4160, %v9366
    %v9480 = vmul.f32 %v4163, %v9376
    %v9481 = vmul.f32 %v4166, %v9386
    %v9482 = vmul.f32 %v4169, %v9396
    %v9483 = vmul.f32 %v4172, %v9406
    %v9484 = vmul.f32 %v4175, %v9416
    %v9485 = vmul.f32 %v4178, %v9426
    %v9486 = vmul.f32 %v4181, %v9436
    %v9487 = vmul.f32 %v4184, %v9446
    %v9488 = vmul.f32 %v4187, %v9456
    %s9489 = sld [smem:[#allocation2 + $0x6]]
    %v9490 = vstv %s9489
    %v9491 = vmul.f32 %v9457, %v9490
    %v9492 = vmul.f32 %v9458, %v9490
    %v9493 = vmul.f32 %v9459, %v9490
    %v9494 = vmul.f32 %v9460, %v9490
    %v9495 = vmul.f32 %v9461, %v9490
    %v9496 = vmul.f32 %v9462, %v9490
    %v9497 = vmul.f32 %v9463, %v9490
    %v9498 = vmul.f32 %v9464, %v9490
    %v9499 = vmul.f32 %v9465, %v9490
    %v9500 = vmul.f32 %v9466, %v9490
    %v9501 = vmul.f32 %v9467, %v9490
    %v9502 = vmul.f32 %v9468, %v9490
    %v9503 = vmul.f32 %v9469, %v9490
    %v9504 = vmul.f32 %v9470, %v9490
    %v9505 = vmul.f32 %v9471, %v9490
    %v9506 = vmul.f32 %v9472, %v9490
    %v9507 = vmul.f32 %v9473, %v9490
    %v9508 = vmul.f32 %v9474, %v9490
    %v9509 = vmul.f32 %v9475, %v9490
    %v9510 = vmul.f32 %v9476, %v9490
    %v9511 = vmul.f32 %v9477, %v9490
    %v9512 = vmul.f32 %v9478, %v9490
    %v9513 = vmul.f32 %v9479, %v9490
    %v9514 = vmul.f32 %v9480, %v9490
    %v9515 = vmul.f32 %v9481, %v9490
    %v9516 = vmul.f32 %v9482, %v9490
    %v9517 = vmul.f32 %v9483, %v9490
    %v9518 = vmul.f32 %v9484, %v9490
    %v9519 = vmul.f32 %v9485, %v9490
    %v9520 = vmul.f32 %v9486, %v9490
    %v9521 = vmul.f32 %v9487, %v9490
    %v9522 = vmul.f32 %v9488, %v9490
    %9555 = vrot.lane.b32.xlu0 %v9491, 64
    %v9556 = vpop.permute.xlu0 %9555
    %9557 = vrot.lane.b32.xlu0 %v9492, 64
    %v9558 = vpop.permute.xlu0 %9557
    %9559 = vrot.lane.b32.xlu0 %v9493, 64
    %v9560 = vpop.permute.xlu0 %9559
    %9561 = vrot.lane.b32.xlu0 %v9494, 64
    %v9562 = vpop.permute.xlu0 %9561
    %9563 = vrot.lane.b32.xlu0 %v9495, 64
    %v9564 = vpop.permute.xlu0 %9563
    %9565 = vrot.lane.b32.xlu0 %v9496, 64
    %v9566 = vpop.permute.xlu0 %9565
    %9567 = vrot.lane.b32.xlu0 %v9497, 64
    %v9568 = vpop.permute.xlu0 %9567
    %9569 = vrot.lane.b32.xlu0 %v9498, 64
    %v9570 = vpop.permute.xlu0 %9569
    %9571 = vrot.lane.b32.xlu0 %v9499, 64
    %v9572 = vpop.permute.xlu0 %9571
    %9573 = vrot.lane.b32.xlu0 %v9500, 64
    %v9574 = vpop.permute.xlu0 %9573
    %9575 = vrot.lane.b32.xlu0 %v9501, 64
    %v9576 = vpop.permute.xlu0 %9575
    %9577 = vrot.lane.b32.xlu0 %v9502, 64
    %v9578 = vpop.permute.xlu0 %9577
    %9579 = vrot.lane.b32.xlu0 %v9503, 64
    %v9580 = vpop.permute.xlu0 %9579
    %9581 = vrot.lane.b32.xlu0 %v9504, 64
    %v9582 = vpop.permute.xlu0 %9581
    %9583 = vrot.lane.b32.xlu0 %v9505, 64
    %v9584 = vpop.permute.xlu0 %9583
    %9585 = vrot.lane.b32.xlu0 %v9506, 64
    %v9586 = vpop.permute.xlu0 %9585
    %9587 = vrot.lane.b32.xlu0 %v9507, 64
    %v9588 = vpop.permute.xlu0 %9587
    %9589 = vrot.lane.b32.xlu0 %v9508, 64
    %v9590 = vpop.permute.xlu0 %9589
    %9591 = vrot.lane.b32.xlu0 %v9509, 64
    %v9592 = vpop.permute.xlu0 %9591
    %9593 = vrot.lane.b32.xlu0 %v9510, 64
    %v9594 = vpop.permute.xlu0 %9593
    %9595 = vrot.lane.b32.xlu0 %v9511, 64
    %v9596 = vpop.permute.xlu0 %9595
    %9597 = vrot.lane.b32.xlu0 %v9512, 64
    %v9598 = vpop.permute.xlu0 %9597
    %9599 = vrot.lane.b32.xlu0 %v9513, 64
    %v9600 = vpop.permute.xlu0 %9599
    %9601 = vrot.lane.b32.xlu0 %v9514, 64
    %v9602 = vpop.permute.xlu0 %9601
    %9603 = vrot.lane.b32.xlu0 %v9515, 64
    %v9604 = vpop.permute.xlu0 %9603
    %9605 = vrot.lane.b32.xlu0 %v9516, 64
    %v9606 = vpop.permute.xlu0 %9605
    %9607 = vrot.lane.b32.xlu0 %v9517, 64
    %v9608 = vpop.permute.xlu0 %9607
    %9609 = vrot.lane.b32.xlu0 %v9518, 64
    %v9610 = vpop.permute.xlu0 %9609
    %9611 = vrot.lane.b32.xlu0 %v9519, 64
    %v9612 = vpop.permute.xlu0 %9611
    %9613 = vrot.lane.b32.xlu0 %v9520, 64
    %v9614 = vpop.permute.xlu0 %9613
    %9615 = vrot.lane.b32.xlu0 %v9521, 64
    %v9616 = vpop.permute.xlu0 %9615
    %9617 = vrot.lane.b32.xlu0 %v9522, 64
    %v9618 = vpop.permute.xlu0 %9617
    %vm9651 = vcmask 1048064
    %9652 = vst.msk [vmem:[%s21 + $0x8] sm:$0xff] %vm9651, %v9556
    %vm9653 = vcmask 293888
    %9654 = vst.msk [vmem:[%s21 + $0x10] sm:$0xff] %vm9653, %v9556
    %9655 = vst.msk [vmem:[%s21 + $0x20] sm:$0xff] %vm9651, %v9558
    %9656 = vst.msk [vmem:[%s21 + $0x28] sm:$0xff] %vm9653, %v9558
    %9657 = vst.msk [vmem:[%s21 + $0x38] sm:$0xff] %vm9651, %v9560
    %9658 = vst.msk [vmem:[%s21 + $0x40] sm:$0xff] %vm9653, %v9560
    %9659 = vst.msk [vmem:[%s21 + $0x50] sm:$0xff] %vm9651, %v9562
    %9660 = vst.msk [vmem:[%s21 + $0x58] sm:$0xff] %vm9653, %v9562
    %9661 = vst.msk [vmem:[%s21 + $0x68] sm:$0xff] %vm9651, %v9564
    %9662 = vst.msk [vmem:[%s21 + $0x70] sm:$0xff] %vm9653, %v9564
    %9663 = vst.msk [vmem:[%s21 + $0x80] sm:$0xff] %vm9651, %v9566
    %9664 = vst.msk [vmem:[%s21 + $0x88] sm:$0xff] %vm9653, %v9566
    %9665 = vst.msk [vmem:[%s21 + $0x98] sm:$0xff] %vm9651, %v9568
    %9666 = vst.msk [vmem:[%s21 + $0xa0] sm:$0xff] %vm9653, %v9568
    %9667 = vst.msk [vmem:[%s21 + $0xb0] sm:$0xff] %vm9651, %v9570
    %9668 = vst.msk [vmem:[%s21 + $0xb8] sm:$0xff] %vm9653, %v9570
    %9669 = vst.msk [vmem:[%s21 + $0xc8] sm:$0xff] %vm9651, %v9572
    %9670 = vst.msk [vmem:[%s21 + $0xd0] sm:$0xff] %vm9653, %v9572
    %9671 = vst.msk [vmem:[%s21 + $0xe0] sm:$0xff] %vm9651, %v9574
    %9672 = vst.msk [vmem:[%s21 + $0xe8] sm:$0xff] %vm9653, %v9574
    %9673 = vst.msk [vmem:[%s21 + $0xf8] sm:$0xff] %vm9651, %v9576
    %9674 = vst.msk [vmem:[%s21 + $0x100] sm:$0xff] %vm9653, %v9576
    %9675 = vst.msk [vmem:[%s21 + $0x110] sm:$0xff] %vm9651, %v9578
    %9676 = vst.msk [vmem:[%s21 + $0x118] sm:$0xff] %vm9653, %v9578
    %9677 = vst.msk [vmem:[%s21 + $0x128] sm:$0xff] %vm9651, %v9580
    %9678 = vst.msk [vmem:[%s21 + $0x130] sm:$0xff] %vm9653, %v9580
    %9679 = vst.msk [vmem:[%s21 + $0x140] sm:$0xff] %vm9651, %v9582
    %9680 = vst.msk [vmem:[%s21 + $0x148] sm:$0xff] %vm9653, %v9582
    %9681 = vst.msk [vmem:[%s21 + $0x158] sm:$0xff] %vm9651, %v9584
    %9682 = vst.msk [vmem:[%s21 + $0x160] sm:$0xff] %vm9653, %v9584
    %9683 = vst.msk [vmem:[%s21 + $0x170] sm:$0xff] %vm9651, %v9586
    %9684 = vst.msk [vmem:[%s21 + $0x178] sm:$0xff] %vm9653, %v9586
    %9685 = vst.msk [vmem:[%s21 + $0x188] sm:$0xff] %vm9651, %v9588
    %9686 = vst.msk [vmem:[%s21 + $0x190] sm:$0xff] %vm9653, %v9588
    %9687 = vst.msk [vmem:[%s21 + $0x1a0] sm:$0xff] %vm9651, %v9590
    %9688 = vst.msk [vmem:[%s21 + $0x1a8] sm:$0xff] %vm9653, %v9590
    %9689 = vst.msk [vmem:[%s21 + $0x1b8] sm:$0xff] %vm9651, %v9592
    %9690 = vst.msk [vmem:[%s21 + $0x1c0] sm:$0xff] %vm9653, %v9592
    %9691 = vst.msk [vmem:[%s21 + $0x1d0] sm:$0xff] %vm9651, %v9594
    %9692 = vst.msk [vmem:[%s21 + $0x1d8] sm:$0xff] %vm9653, %v9594
    %9693 = vst.msk [vmem:[%s21 + $0x1e8] sm:$0xff] %vm9651, %v9596
    %9694 = vst.msk [vmem:[%s21 + $0x1f0] sm:$0xff] %vm9653, %v9596
    %9695 = vst.msk [vmem:[%s21 + $0x200] sm:$0xff] %vm9651, %v9598
    %9696 = vst.msk [vmem:[%s21 + $0x208] sm:$0xff] %vm9653, %v9598
    %9697 = vst.msk [vmem:[%s21 + $0x218] sm:$0xff] %vm9651, %v9600
    %9698 = vst.msk [vmem:[%s21 + $0x220] sm:$0xff] %vm9653, %v9600
    %9699 = vst.msk [vmem:[%s21 + $0x230] sm:$0xff] %vm9651, %v9602
    %9700 = vst.msk [vmem:[%s21 + $0x238] sm:$0xff] %vm9653, %v9602
    %9701 = vst.msk [vmem:[%s21 + $0x248] sm:$0xff] %vm9651, %v9604
    %9702 = vst.msk [vmem:[%s21 + $0x250] sm:$0xff] %vm9653, %v9604
    %9703 = vst.msk [vmem:[%s21 + $0x260] sm:$0xff] %vm9651, %v9606
    %9704 = vst.msk [vmem:[%s21 + $0x268] sm:$0xff] %vm9653, %v9606
    %9705 = vst.msk [vmem:[%s21 + $0x278] sm:$0xff] %vm9651, %v9608
    %9706 = vst.msk [vmem:[%s21 + $0x280] sm:$0xff] %vm9653, %v9608
    %9707 = vst.msk [vmem:[%s21 + $0x290] sm:$0xff] %vm9651, %v9610
    %9708 = vst.msk [vmem:[%s21 + $0x298] sm:$0xff] %vm9653, %v9610
    %9709 = vst.msk [vmem:[%s21 + $0x2a8] sm:$0xff] %vm9651, %v9612
    %9710 = vst.msk [vmem:[%s21 + $0x2b0] sm:$0xff] %vm9653, %v9612
    %9711 = vst.msk [vmem:[%s21 + $0x2c0] sm:$0xff] %vm9651, %v9614
    %9712 = vst.msk [vmem:[%s21 + $0x2c8] sm:$0xff] %vm9653, %v9614
    %9713 = vst.msk [vmem:[%s21 + $0x2d8] sm:$0xff] %vm9651, %v9616
    %9714 = vst.msk [vmem:[%s21 + $0x2e0] sm:$0xff] %vm9653, %v9616
    %9715 = vst.msk [vmem:[%s21 + $0x2f0] sm:$0xff] %vm9651, %v9618
    %9716 = vst.msk [vmem:[%s21 + $0x2f8] sm:$0xff] %vm9653, %v9618
    %vm9717 = vcmask 1047840
    %9718 = vst.msk [vmem:[%s21 + $0x10] sm:$0xff] %vm9717, 0.0
    %9719 = vst.msk [vmem:[%s21 + $0x28] sm:$0xff] %vm9717, 0.0
    %9720 = vst.msk [vmem:[%s21 + $0x40] sm:$0xff] %vm9717, 0.0
    %9721 = vst.msk [vmem:[%s21 + $0x58] sm:$0xff] %vm9717, 0.0
    %9722 = vst.msk [vmem:[%s21 + $0x70] sm:$0xff] %vm9717, 0.0
    %9723 = vst.msk [vmem:[%s21 + $0x88] sm:$0xff] %vm9717, 0.0
    %9724 = vst.msk [vmem:[%s21 + $0xa0] sm:$0xff] %vm9717, 0.0
    %9725 = vst.msk [vmem:[%s21 + $0xb8] sm:$0xff] %vm9717, 0.0
    %9726 = vst.msk [vmem:[%s21 + $0xd0] sm:$0xff] %vm9717, 0.0
    %9727 = vst.msk [vmem:[%s21 + $0xe8] sm:$0xff] %vm9717, 0.0
    %9728 = vst.msk [vmem:[%s21 + $0x100] sm:$0xff] %vm9717, 0.0
    %9729 = vst.msk [vmem:[%s21 + $0x118] sm:$0xff] %vm9717, 0.0
    %9730 = vst.msk [vmem:[%s21 + $0x130] sm:$0xff] %vm9717, 0.0
    %9731 = vst.msk [vmem:[%s21 + $0x148] sm:$0xff] %vm9717, 0.0
    %9732 = vst.msk [vmem:[%s21 + $0x160] sm:$0xff] %vm9717, 0.0
    %9733 = vst.msk [vmem:[%s21 + $0x178] sm:$0xff] %vm9717, 0.0
    %9734 = vst.msk [vmem:[%s21 + $0x190] sm:$0xff] %vm9717, 0.0
    %9735 = vst.msk [vmem:[%s21 + $0x1a8] sm:$0xff] %vm9717, 0.0
    %9736 = vst.msk [vmem:[%s21 + $0x1c0] sm:$0xff] %vm9717, 0.0
    %9737 = vst.msk [vmem:[%s21 + $0x1d8] sm:$0xff] %vm9717, 0.0
    %9738 = vst.msk [vmem:[%s21 + $0x1f0] sm:$0xff] %vm9717, 0.0
    %9739 = vst.msk [vmem:[%s21 + $0x208] sm:$0xff] %vm9717, 0.0
    %9740 = vst.msk [vmem:[%s21 + $0x220] sm:$0xff] %vm9717, 0.0
    %9741 = vst.msk [vmem:[%s21 + $0x238] sm:$0xff] %vm9717, 0.0
    %9742 = vst.msk [vmem:[%s21 + $0x250] sm:$0xff] %vm9717, 0.0
    %9743 = vst.msk [vmem:[%s21 + $0x268] sm:$0xff] %vm9717, 0.0
    %9744 = vst.msk [vmem:[%s21 + $0x280] sm:$0xff] %vm9717, 0.0
    %9745 = vst.msk [vmem:[%s21 + $0x298] sm:$0xff] %vm9717, 0.0
    %9746 = vst.msk [vmem:[%s21 + $0x2b0] sm:$0xff] %vm9717, 0.0
    %9747 = vst.msk [vmem:[%s21 + $0x2c8] sm:$0xff] %vm9717, 0.0
    %9748 = vst.msk [vmem:[%s21 + $0x2e0] sm:$0xff] %vm9717, 0.0
    %9749 = vst.msk [vmem:[%s21 + $0x2f8] sm:$0xff] %vm9717, 0.0
    // Predicated region
    $region86: #{ocr_multimodal_forward.7} parent=1 // pred_check
      _
    $region87: #{ocr_multimodal_forward.7} parent=1 // pred_check_branch
      %9751 = sbr.rel (0) target = $region89
    $region88: #{ocr_multimodal_forward.7} parent=1 // pred_region
      _
    $region89: #{ocr_multimodal_forward.7} parent=1 // pred_fallthru
      _
    // Predicated region
    $region90: #{ocr_multimodal_forward.7} parent=1 // pred_check
      _
    $region91: #{ocr_multimodal_forward.7} parent=1 // pred_check_branch
      %9753 = sbr.rel (0) target = $region93
    $region92: #{ocr_multimodal_forward.7} parent=1 // pred_region
      _
    $region93: #{ocr_multimodal_forward.7} parent=1 // pred_fallthru
      _
    // Predicated region
    $region94: #{ocr_multimodal_forward.7} parent=1 // pred_check
      _
    $region95: #{ocr_multimodal_forward.7} parent=1 // pred_check_branch
      %9755 = sbr.rel (0) target = $region97
    $region96: #{ocr_multimodal_forward.7} parent=1 // pred_region
      _
    $region97: #{ocr_multimodal_forward.7} parent=1 // pred_fallthru
      _
    // Predicated region
    $region98: #{ocr_multimodal_forward.7} parent=1 // pred_check
      _
    $region99: #{ocr_multimodal_forward.7} parent=1 // pred_check_branch
      %9757 = sbr.rel (0) target = $region101
    $region100: #{ocr_multimodal_forward.7} parent=1 // pred_region
      _
    $region101: #{ocr_multimodal_forward.7} parent=1 // pred_fallthru
      _
    %9758 = vsyncpa [#allocation3], 1

</llo_original>
